<compile_context>
chip_gen: v7x
topology: tpu7x:2x2x1
jax: 0.10.0
libtpu: 0.0.40
codegen_flags: <defaults>
</compile_context>

<pallas_src>
import functools

import jax
import jax.numpy as jnp
import numpy as np
from jax import lax
from jax.experimental import pallas as pl
from jax.experimental.pallas import tpu as pltpu

EPS = 1e-5

# (param path, Hin, Win, Cin, Cout, k, stride, pad) for the 10 convolutions,
# in the order the fused kernel consumes them.
CONV_DEFS = (
    (("initial",),       16, 16,  1,  8, 3, 1, 1),
    (("layer1", "c1"),   16, 16,  8, 16, 3, 2, 1),
    (("layer1", "c2"),    8,  8, 16, 16, 3, 1, 1),
    (("layer1", "skip"), 16, 16,  8, 16, 1, 2, 0),
    (("layer2", "c1"),    8,  8, 16, 32, 3, 2, 1),
    (("layer2", "c2"),    4,  4, 32, 32, 3, 1, 1),
    (("layer2", "skip"),  8,  8, 16, 32, 1, 2, 0),
    (("layer3", "c1"),    4,  4, 32, 64, 3, 2, 1),
    (("layer3", "c2"),    2,  2, 64, 64, 3, 1, 1),
    (("layer3", "skip"),  4,  4, 32, 64, 1, 2, 0),
)
KH_SEQ = tuple(d[5] for d in CONV_DEFS)
HF, WF, CF = 2, 2, 64          # final feature map (per image) before the head


# --------------------------------- kernel -----------------------------------
def _fused_forward_kernel(*refs, kh_seq):
    """Entire BinaryCNN forward for one image, fully VMEM-resident."""
    x_ref = refs[0]
    out_ref = refs[-1]
    prm = refs[1:-1]
    n_conv = len(kh_seq)
    conv_prm = [prm[3 * i: 3 * i + 3] for i in range(n_conv)]          # (R, M, bias)
    prows_ref, pcols_ref, w1_ref, b1_ref, wh_ref, bh_ref = prm[3 * n_conv:]

    def conv(a, idx, relu=True, residual=None):
        r_ref, m_ref, b_ref = conv_prm[idx]
        acc = None
        for dy in range(kh_seq[idx]):
            t = jnp.dot(a, m_ref[dy], preferred_element_type=jnp.float32)
            t = jnp.dot(r_ref[dy], t, preferred_element_type=jnp.float32)
            acc = t if acc is None else acc + t
        y = acc + b_ref[...]                       # BatchNorm shift (scale folded in M)
        if residual is not None:
            y = y + residual
        if relu:
            y = jnp.maximum(y, 0.0)
        return y

    a = x_ref[0]                                   # (16, 16) = (H, W*Cin), Cin=1
    a = conv(a, 0)                                 # initial: 1 -> 8     (16, 128)
    for blk in range(3):                           # 3 residual blocks
        base = 1 + 3 * blk
        identity = conv(a, base + 2, relu=False)   # 1x1 skip conv + BN
        h = conv(a, base + 0)                      # conv1 + BN + ReLU
        a = conv(h, base + 1, residual=identity)   # conv2 + BN + residual + ReLU

    # Head: AdaptiveAvgPool2d((1,1)) as two matmuls, Linear(64,32)+ReLU,
    # Dropout(0.5)=identity (eval), then concatenated age/gender/group heads.
    pooled = jnp.dot(prows_ref[...], a, preferred_element_type=jnp.float32)   # (1, 128)
    pooled = jnp.dot(pooled, pcols_ref[...], preferred_element_type=jnp.float32)  # (1, 64)
    hfc = jnp.dot(pooled, w1_ref[...], preferred_element_type=jnp.float32) + b1_ref[...]
    hfc = jnp.maximum(hfc, 0.0)
    out_ref[0] = jnp.dot(hfc, wh_ref[...], preferred_element_type=jnp.float32) + bh_ref[...]


# ----------------------- host-side operand construction ----------------------
def _fold_conv(prm, hin, win, cin, cout, k, stride, pad):
    """Fold conv weights + BN(eval) into R/M selection matrices and a bias."""
    w4d = np.asarray(prm["w4d"], np.float32)                    # (k, k, cin, cout) HWIO
    scale = np.asarray(prm["scale"], np.float32).reshape(cout)
    shift = np.asarray(prm["shift"], np.float32).reshape(cout)
    ho = (hin + 2 * pad - k) // stride + 1
    wo = (win + 2 * pad - k) // stride + 1
    r = np.zeros((k, ho, hin), np.float32)
    m = np.zeros((k, win * cin, wo * cout), np.float32)
    wf = w4d * scale[None, None, None, :]                       # BN scale folded into W
    for dy in range(k):
        for i in range(ho):
            h = stride * i + dy - pad
            if 0 <= h < hin:                                    # zero padding folded in
                r[dy, i, h] = 1.0
        for j in range(wo):
            for dx in range(k):
                w = stride * j + dx - pad
                if 0 <= w < win:
                    m[dy, w * cin:(w + 1) * cin, j * cout:(j + 1) * cout] = wf[dy, dx]
    bias = np.tile(shift, wo)[None, :].astype(np.float32)       # (1, wo*cout)
    return [jnp.asarray(r), jnp.asarray(m), jnp.asarray(bias)]


def build_operands(params):
    ops = []
    for path, hin, win, cin, cout, k, stride, pad in CONV_DEFS:
        prm = params
        for name in path:
            prm = prm[name]
        ops += _fold_conv(prm, hin, win, cin, cout, k, stride, pad)
    # head pooling matrices: mean over H (prows) and over W per channel (pcols)
    prows = np.full((1, HF), 1.0 / HF, np.float32)
    pcols = np.zeros((WF * CF, CF), np.float32)
    for w in range(WF):
        pcols[w * CF:(w + 1) * CF, :] = np.eye(CF, dtype=np.float32) / WF
    hp = params["head"]
    ops += [jnp.asarray(prows), jnp.asarray(pcols), hp["w1"], hp["b1"], hp["wh"], hp["bh"]]
    return ops


def _const_index_map(ndim):
    zeros = (0,) * ndim
    return lambda i: zeros


def binary_cnn_forward(x_nchw, params):
    """x_nchw: (N, 1, 16, 16) float32 (PyTorch layout)."""
    n = x_nchw.shape[0]
    x = x_nchw[:, 0, :, :].astype(jnp.float32)        # (N, H, W*Cin) with Cin=1
    operands = build_operands(params)

    in_specs = [pl.BlockSpec((1,) + x.shape[1:], lambda i: (i, 0, 0))]
    in_specs += [pl.BlockSpec(a.shape, _const_index_map(a.ndim)) for a in operands]

    out = pl.pallas_call(
        functools.partial(_fused_forward_kernel, kh_seq=KH_SEQ),
        out_shape=jax.ShapeDtypeStruct((n, 1, 6), jnp.float32),
        grid=(n,),
        in_specs=in_specs,
        out_specs=pl.BlockSpec((1, 1, 6), lambda i: (i, 0, 0)),
        compiler_params=pltpu.CompilerParams(dimension_semantics=("parallel",)),
    )(x, *operands)

    out = out[:, 0, :]
    # TODO(synk): optional `mask` branch (downsample_mask + x*mask) not
    # implemented; this forward corresponds to the default mask=None call.
    return {"age": out[:, 0], "gender": out[:, 1], "group": out[:, 2:6]}


# --------------------------- deterministic parameters ------------------------
def make_conv_bn_params(key, kh, kw, cin, cout):
    ks = jax.random.split(key, 5)
    w4d = 0.1 * jax.random.normal(ks[0], (kh, kw, cin, cout), jnp.float32)
    gamma = 1.0 + 0.1 * jax.random.normal(ks[1], (cout,), jnp.float32)
    beta = 0.1 * jax.random.normal(ks[2], (cout,), jnp.float32)
    mean = 0.1 * jax.random.normal(ks[3], (cout,), jnp.float32)
    var = 1.0 + jnp.abs(0.1 * jax.random.normal(ks[4], (cout,), jnp.float32))
    scale = gamma / jnp.sqrt(var + EPS)
    shift = beta - mean * scale
    return {"w4d": w4d, "scale": scale.reshape(1, cout), "shift": shift.reshape(1, cout)}


def make_block_params(key, cin, cout):
    k1, k2, k3 = jax.random.split(key, 3)
    return {"c1": make_conv_bn_params(k1, 3, 3, cin, cout),
            "c2": make_conv_bn_params(k2, 3, 3, cout, cout),
            "skip": make_conv_bn_params(k3, 1, 1, cin, cout)}


def make_head_params(key):
    ks = jax.random.split(key, 8)
    w1 = 0.1 * jax.random.normal(ks[0], (64, 32), jnp.float32)
    b1 = 0.1 * jax.random.normal(ks[1], (1, 32), jnp.float32)
    w_age = 0.1 * jax.random.normal(ks[2], (32, 1), jnp.float32)
    b_age = 0.1 * jax.random.normal(ks[3], (1,), jnp.float32)
    w_gen = 0.1 * jax.random.normal(ks[4], (32, 1), jnp.float32)
    b_gen = 0.1 * jax.random.normal(ks[5], (1,), jnp.float32)
    w_grp = 0.1 * jax.random.normal(ks[6], (32, 4), jnp.float32)
    b_grp = 0.1 * jax.random.normal(ks[7], (4,), jnp.float32)
    wh = jnp.concatenate([w_age, w_gen, w_grp], axis=1)              # (32, 6)
    bh = jnp.concatenate([b_age, b_gen, b_grp]).reshape(1, 6)
    return {"w1": w1, "b1": b1, "wh": wh, "bh": bh}


def make_params(key):
    k0, k1, k2, k3, k4 = jax.random.split(key, 5)
    return {"initial": make_conv_bn_params(k0, 3, 3, 1, 8),
            "layer1": make_block_params(k1, 8, 16),
            "layer2": make_block_params(k2, 16, 32),
            "layer3": make_block_params(k3, 32, 64),
            "head": make_head_params(k4)}


# ------------------------------- pure-JAX reference --------------------------
def _ref_conv_bn(x, prm, stride, pad, relu=True, residual=None):
    y = lax.conv_general_dilated(x, prm["w4d"], (stride, stride),
                                 [(pad, pad), (pad, pad)],
                                 dimension_numbers=("NHWC", "HWIO", "NHWC"))
    y = y * prm["scale"].reshape(1, 1, 1, -1) + prm["shift"].reshape(1, 1, 1, -1)
    if residual is not None:
        y = y + residual
    if relu:
        y = jnp.maximum(y, 0.0)
    return y


def _ref_block(x, prm, stride):
    identity = _ref_conv_bn(x, prm["skip"], stride, 0, relu=False)
    out = _ref_conv_bn(x, prm["c1"], stride, 1, relu=True)
    out = _ref_conv_bn(out, prm["c2"], 1, 1, relu=True, residual=identity)
    return out


def ref_forward(x_nhwc, params):
    x = _ref_conv_bn(x_nhwc, params["initial"], 1, 1, relu=True)
    x = _ref_block(x, params["layer1"], 2)
    x = _ref_block(x, params["layer2"], 2)
    x = _ref_block(x, params["layer3"], 2)
    pooled = x.mean(axis=(1, 2))
    h = jnp.maximum(pooled @ params["head"]["w1"] + params["head"]["b1"], 0.0)
    out = h @ params["head"]["wh"] + params["head"]["bh"]
    return {"age": out[:, 0], "gender": out[:, 1], "group": out[:, 2:6]}


# ------------------------------------ main -----------------------------------
if __name__ == "__main__":
    key = jax.random.PRNGKey(0)
    kx, kp = jax.random.split(key)
    params = make_params(kp)

    # PyTorch input is NCHW: (batch=2, channels=1, H=16, W=16)
    x_nchw = jax.random.normal(kx, (2, 1, 16, 16), jnp.float32)

    outputs = binary_cnn_forward(x_nchw, params)
    jax.block_until_ready(outputs["age"])
    jax.block_until_ready(outputs["gender"])
    jax.block_until_ready(outputs["group"])

    x_nhwc = jnp.transpose(x_nchw, (0, 2, 3, 1))
    ref = ref_forward(x_nhwc, params)
    assert outputs["age"].shape == (2,)
    assert outputs["gender"].shape == (2,)
    assert outputs["group"].shape == (2, 4)
    for name in ("age", "gender", "group"):
        np.testing.assert_allclose(np.asarray(outputs[name]), np.asarray(ref[name]),
                                   rtol=1e-3, atol=1e-3)

    print("KERNEL_OK")
</pallas_src>

<mosaic_0001>
module attributes {stable_mosaic.version = 11 : i64} {
  func.func @_fused_forward_kernel(%arg0: i32, %arg1: memref<1x16x16xf32, #tpu.memory_space<vmem>>, %arg2: memref<3x16x16xf32, #tpu.memory_space<vmem>>, %arg3: memref<3x16x128xf32, #tpu.memory_space<vmem>>, %arg4: memref<1x128xf32, #tpu.memory_space<vmem>>, %arg5: memref<3x8x16xf32, #tpu.memory_space<vmem>>, %arg6: memref<3x128x128xf32, #tpu.memory_space<vmem>>, %arg7: memref<1x128xf32, #tpu.memory_space<vmem>>, %arg8: memref<3x8x8xf32, #tpu.memory_space<vmem>>, %arg9: memref<3x128x128xf32, #tpu.memory_space<vmem>>, %arg10: memref<1x128xf32, #tpu.memory_space<vmem>>, %arg11: memref<1x8x16xf32, #tpu.memory_space<vmem>>, %arg12: memref<1x128x128xf32, #tpu.memory_space<vmem>>, %arg13: memref<1x128xf32, #tpu.memory_space<vmem>>, %arg14: memref<3x4x8xf32, #tpu.memory_space<vmem>>, %arg15: memref<3x128x128xf32, #tpu.memory_space<vmem>>, %arg16: memref<1x128xf32, #tpu.memory_space<vmem>>, %arg17: memref<3x4x4xf32, #tpu.memory_space<vmem>>, %arg18: memref<3x128x128xf32, #tpu.memory_space<vmem>>, %arg19: memref<1x128xf32, #tpu.memory_space<vmem>>, %arg20: memref<1x4x8xf32, #tpu.memory_space<vmem>>, %arg21: memref<1x128x128xf32, #tpu.memory_space<vmem>>, %arg22: memref<1x128xf32, #tpu.memory_space<vmem>>, %arg23: memref<3x2x4xf32, #tpu.memory_space<vmem>>, %arg24: memref<3x128x128xf32, #tpu.memory_space<vmem>>, %arg25: memref<1x128xf32, #tpu.memory_space<vmem>>, %arg26: memref<3x2x2xf32, #tpu.memory_space<vmem>>, %arg27: memref<3x128x128xf32, #tpu.memory_space<vmem>>, %arg28: memref<1x128xf32, #tpu.memory_space<vmem>>, %arg29: memref<1x2x4xf32, #tpu.memory_space<vmem>>, %arg30: memref<1x128x128xf32, #tpu.memory_space<vmem>>, %arg31: memref<1x128xf32, #tpu.memory_space<vmem>>, %arg32: memref<1x2xf32, #tpu.memory_space<vmem>>, %arg33: memref<128x64xf32, #tpu.memory_space<vmem>>, %arg34: memref<64x32xf32, #tpu.memory_space<vmem>>, %arg35: memref<1x32xf32, #tpu.memory_space<vmem>>, %arg36: memref<32x6xf32, #tpu.memory_space<vmem>>, %arg37: memref<1x6xf32, #tpu.memory_space<vmem>>, %arg38: memref<1x1x6xf32, #tpu.memory_space<vmem>>) attributes {dimension_semantics = [#tpu.dimension_semantics<parallel>], iteration_bounds = array<i64: 2>, scalar_prefetch = 0 : i64, scratch_operands = 0 : i64, tpu.core_type = #tpu.core_type<tc>, window_params = [{transform_indices = @transform_0, window_bounds = array<i64: 1, 16, 16>}, {pipeline_mode = #tpu.pipeline_mode<synchronous>, transform_indices = @transform_1, window_bounds = array<i64: 3, 16, 16>}, {pipeline_mode = #tpu.pipeline_mode<synchronous>, transform_indices = @transform_2, window_bounds = array<i64: 3, 16, 128>}, {pipeline_mode = #tpu.pipeline_mode<synchronous>, transform_indices = @transform_3, window_bounds = array<i64: 1, 128>}, {pipeline_mode = #tpu.pipeline_mode<synchronous>, transform_indices = @transform_4, window_bounds = array<i64: 3, 8, 16>}, {pipeline_mode = #tpu.pipeline_mode<synchronous>, transform_indices = @transform_5, window_bounds = array<i64: 3, 128, 128>}, {pipeline_mode = #tpu.pipeline_mode<synchronous>, transform_indices = @transform_6, window_bounds = array<i64: 1, 128>}, {pipeline_mode = #tpu.pipeline_mode<synchronous>, transform_indices = @transform_7, window_bounds = array<i64: 3, 8, 8>}, {pipeline_mode = #tpu.pipeline_mode<synchronous>, transform_indices = @transform_8, window_bounds = array<i64: 3, 128, 128>}, {pipeline_mode = #tpu.pipeline_mode<synchronous>, transform_indices = @transform_9, window_bounds = array<i64: 1, 128>}, {pipeline_mode = #tpu.pipeline_mode<synchronous>, transform_indices = @transform_10, window_bounds = array<i64: 1, 8, 16>}, {pipeline_mode = #tpu.pipeline_mode<synchronous>, transform_indices = @transform_11, window_bounds = array<i64: 1, 128, 128>}, {pipeline_mode = #tpu.pipeline_mode<synchronous>, transform_indices = @transform_12, window_bounds = array<i64: 1, 128>}, {pipeline_mode = #tpu.pipeline_mode<synchronous>, transform_indices = @transform_13, window_bounds = array<i64: 3, 4, 8>}, {pipeline_mode = #tpu.pipeline_mode<synchronous>, transform_indices = @transform_14, window_bounds = array<i64: 3, 128, 128>}, {pipeline_mode = #tpu.pipeline_mode<synchronous>, transform_indices = @transform_15, window_bounds = array<i64: 1, 128>}, {pipeline_mode = #tpu.pipeline_mode<synchronous>, transform_indices = @transform_16, window_bounds = array<i64: 3, 4, 4>}, {pipeline_mode = #tpu.pipeline_mode<synchronous>, transform_indices = @transform_17, window_bounds = array<i64: 3, 128, 128>}, {pipeline_mode = #tpu.pipeline_mode<synchronous>, transform_indices = @transform_18, window_bounds = array<i64: 1, 128>}, {pipeline_mode = #tpu.pipeline_mode<synchronous>, transform_indices = @transform_19, window_bounds = array<i64: 1, 4, 8>}, {pipeline_mode = #tpu.pipeline_mode<synchronous>, transform_indices = @transform_20, window_bounds = array<i64: 1, 128, 128>}, {pipeline_mode = #tpu.pipeline_mode<synchronous>, transform_indices = @transform_21, window_bounds = array<i64: 1, 128>}, {pipeline_mode = #tpu.pipeline_mode<synchronous>, transform_indices = @transform_22, window_bounds = array<i64: 3, 2, 4>}, {pipeline_mode = #tpu.pipeline_mode<synchronous>, transform_indices = @transform_23, window_bounds = array<i64: 3, 128, 128>}, {pipeline_mode = #tpu.pipeline_mode<synchronous>, transform_indices = @transform_24, window_bounds = array<i64: 1, 128>}, {pipeline_mode = #tpu.pipeline_mode<synchronous>, transform_indices = @transform_25, window_bounds = array<i64: 3, 2, 2>}, {pipeline_mode = #tpu.pipeline_mode<synchronous>, transform_indices = @transform_26, window_bounds = array<i64: 3, 128, 128>}, {pipeline_mode = #tpu.pipeline_mode<synchronous>, transform_indices = @transform_27, window_bounds = array<i64: 1, 128>}, {pipeline_mode = #tpu.pipeline_mode<synchronous>, transform_indices = @transform_28, window_bounds = array<i64: 1, 2, 4>}, {pipeline_mode = #tpu.pipeline_mode<synchronous>, transform_indices = @transform_29, window_bounds = array<i64: 1, 128, 128>}, {pipeline_mode = #tpu.pipeline_mode<synchronous>, transform_indices = @transform_30, window_bounds = array<i64: 1, 128>}, {pipeline_mode = #tpu.pipeline_mode<synchronous>, transform_indices = @transform_31, window_bounds = array<i64: 1, 2>}, {pipeline_mode = #tpu.pipeline_mode<synchronous>, transform_indices = @transform_32, window_bounds = array<i64: 128, 64>}, {pipeline_mode = #tpu.pipeline_mode<synchronous>, transform_indices = @transform_33, window_bounds = array<i64: 64, 32>}, {pipeline_mode = #tpu.pipeline_mode<synchronous>, transform_indices = @transform_34, window_bounds = array<i64: 1, 32>}, {pipeline_mode = #tpu.pipeline_mode<synchronous>, transform_indices = @transform_35, window_bounds = array<i64: 32, 6>}, {pipeline_mode = #tpu.pipeline_mode<synchronous>, transform_indices = @transform_36, window_bounds = array<i64: 1, 6>}, {transform_indices = @transform_37, window_bounds = array<i64: 1, 1, 6>}]} {
    %c0 = arith.constant 0 : index
    %c0_0 = arith.constant 0 : index
    %c0_1 = arith.constant 0 : index
    %0 = vector.load %arg1[%c0, %c0_0, %c0_1] : memref<1x16x16xf32, #tpu.memory_space<vmem>>, vector<1x16x16xf32>
    %1 = vector.shape_cast %0 : vector<1x16x16xf32> to vector<16x16xf32>
    %c0_2 = arith.constant 0 : index
    %c0_3 = arith.constant 0 : index
    %c0_4 = arith.constant 0 : index
    %2 = vector.load %arg3[%c0_2, %c0_3, %c0_4] : memref<3x16x128xf32, #tpu.memory_space<vmem>>, vector<1x16x128xf32>
    %3 = vector.shape_cast %2 : vector<1x16x128xf32> to vector<16x128xf32>
    %cst = arith.constant dense<0.000000e+00> : vector<16x128xf32>
    %4 = tpu.matmul %1, %3, %cst {dimension_numbers = #tpu.dot_dimension_numbers<[1], [0], [0], [1], [0, 0, 1, 1], [], []>} : vector<16x16xf32>, vector<16x128xf32>, vector<16x128xf32> -> vector<16x128xf32>
    %c0_5 = arith.constant 0 : index
    %c0_6 = arith.constant 0 : index
    %c0_7 = arith.constant 0 : index
    %5 = vector.load %arg2[%c0_5, %c0_6, %c0_7] : memref<3x16x16xf32, #tpu.memory_space<vmem>>, vector<1x16x16xf32>
    %6 = vector.shape_cast %5 : vector<1x16x16xf32> to vector<16x16xf32>
    %cst_8 = arith.constant dense<0.000000e+00> : vector<16x128xf32>
    %7 = tpu.matmul %6, %4, %cst_8 {dimension_numbers = #tpu.dot_dimension_numbers<[1], [0], [0], [1], [0, 0, 1, 1], [], []>} : vector<16x16xf32>, vector<16x128xf32>, vector<16x128xf32> -> vector<16x128xf32>
    %c1 = arith.constant 1 : index
    %c0_9 = arith.constant 0 : index
    %c0_10 = arith.constant 0 : index
    %8 = vector.load %arg3[%c1, %c0_9, %c0_10] : memref<3x16x128xf32, #tpu.memory_space<vmem>>, vector<1x16x128xf32>
    %9 = vector.shape_cast %8 : vector<1x16x128xf32> to vector<16x128xf32>
    %cst_11 = arith.constant dense<0.000000e+00> : vector<16x128xf32>
    %10 = tpu.matmul %1, %9, %cst_11 {dimension_numbers = #tpu.dot_dimension_numbers<[1], [0], [0], [1], [0, 0, 1, 1], [], []>} : vector<16x16xf32>, vector<16x128xf32>, vector<16x128xf32> -> vector<16x128xf32>
    %c1_12 = arith.constant 1 : index
    %c0_13 = arith.constant 0 : index
    %c0_14 = arith.constant 0 : index
    %11 = vector.load %arg2[%c1_12, %c0_13, %c0_14] : memref<3x16x16xf32, #tpu.memory_space<vmem>>, vector<1x16x16xf32>
    %12 = vector.shape_cast %11 : vector<1x16x16xf32> to vector<16x16xf32>
    %cst_15 = arith.constant dense<0.000000e+00> : vector<16x128xf32>
    %13 = tpu.matmul %12, %10, %cst_15 {dimension_numbers = #tpu.dot_dimension_numbers<[1], [0], [0], [1], [0, 0, 1, 1], [], []>} : vector<16x16xf32>, vector<16x128xf32>, vector<16x128xf32> -> vector<16x128xf32>
    %14 = arith.addf %7, %13 : vector<16x128xf32>
    %c2 = arith.constant 2 : index
    %c0_16 = arith.constant 0 : index
    %c0_17 = arith.constant 0 : index
    %15 = vector.load %arg3[%c2, %c0_16, %c0_17] : memref<3x16x128xf32, #tpu.memory_space<vmem>>, vector<1x16x128xf32>
    %16 = vector.shape_cast %15 : vector<1x16x128xf32> to vector<16x128xf32>
    %cst_18 = arith.constant dense<0.000000e+00> : vector<16x128xf32>
    %17 = tpu.matmul %1, %16, %cst_18 {dimension_numbers = #tpu.dot_dimension_numbers<[1], [0], [0], [1], [0, 0, 1, 1], [], []>} : vector<16x16xf32>, vector<16x128xf32>, vector<16x128xf32> -> vector<16x128xf32>
    %c2_19 = arith.constant 2 : index
    %c0_20 = arith.constant 0 : index
    %c0_21 = arith.constant 0 : index
    %18 = vector.load %arg2[%c2_19, %c0_20, %c0_21] : memref<3x16x16xf32, #tpu.memory_space<vmem>>, vector<1x16x16xf32>
    %19 = vector.shape_cast %18 : vector<1x16x16xf32> to vector<16x16xf32>
    %cst_22 = arith.constant dense<0.000000e+00> : vector<16x128xf32>
    %20 = tpu.matmul %19, %17, %cst_22 {dimension_numbers = #tpu.dot_dimension_numbers<[1], [0], [0], [1], [0, 0, 1, 1], [], []>} : vector<16x16xf32>, vector<16x128xf32>, vector<16x128xf32> -> vector<16x128xf32>
    %21 = arith.addf %14, %20 : vector<16x128xf32>
    %c0_23 = arith.constant 0 : index
    %c0_24 = arith.constant 0 : index
    %22 = vector.load %arg4[%c0_23, %c0_24] : memref<1x128xf32, #tpu.memory_space<vmem>>, vector<1x128xf32>
    %23 = vector.broadcast %22 : vector<1x128xf32> to vector<16x128xf32>
    %24 = arith.addf %21, %23 : vector<16x128xf32>
    %cst_25 = arith.constant 0.000000e+00 : f32
    %25 = vector.broadcast %cst_25 : f32 to vector<16x128xf32>
    %26 = arith.maximumf %24, %25 : vector<16x128xf32>
    %c0_26 = arith.constant 0 : index
    %c0_27 = arith.constant 0 : index
    %c0_28 = arith.constant 0 : index
    %27 = vector.load %arg12[%c0_26, %c0_27, %c0_28] : memref<1x128x128xf32, #tpu.memory_space<vmem>>, vector<1x128x128xf32>
    %28 = vector.shape_cast %27 : vector<1x128x128xf32> to vector<128x128xf32>
    %cst_29 = arith.constant dense<0.000000e+00> : vector<16x128xf32>
    %29 = tpu.matmul %26, %28, %cst_29 {dimension_numbers = #tpu.dot_dimension_numbers<[1], [0], [0], [1], [0, 0, 1, 1], [], []>} : vector<16x128xf32>, vector<128x128xf32>, vector<16x128xf32> -> vector<16x128xf32>
    %c0_30 = arith.constant 0 : index
    %c0_31 = arith.constant 0 : index
    %c0_32 = arith.constant 0 : index
    %30 = vector.load %arg11[%c0_30, %c0_31, %c0_32] : memref<1x8x16xf32, #tpu.memory_space<vmem>>, vector<1x8x16xf32>
    %31 = vector.shape_cast %30 : vector<1x8x16xf32> to vector<8x16xf32>
    %cst_33 = arith.constant dense<0.000000e+00> : vector<8x128xf32>
    %32 = tpu.matmul %31, %29, %cst_33 {dimension_numbers = #tpu.dot_dimension_numbers<[1], [0], [0], [1], [0, 0, 1, 1], [], []>} : vector<8x16xf32>, vector<16x128xf32>, vector<8x128xf32> -> vector<8x128xf32>
    %c0_34 = arith.constant 0 : index
    %c0_35 = arith.constant 0 : index
    %33 = vector.load %arg13[%c0_34, %c0_35] : memref<1x128xf32, #tpu.memory_space<vmem>>, vector<1x128xf32>
    %34 = vector.broadcast %33 : vector<1x128xf32> to vector<8x128xf32>
    %35 = arith.addf %32, %34 : vector<8x128xf32>
    %c0_36 = arith.constant 0 : index
    %c0_37 = arith.constant 0 : index
    %c0_38 = arith.constant 0 : index
    %36 = vector.load %arg6[%c0_36, %c0_37, %c0_38] : memref<3x128x128xf32, #tpu.memory_space<vmem>>, vector<1x128x128xf32>
    %37 = vector.shape_cast %36 : vector<1x128x128xf32> to vector<128x128xf32>
    %cst_39 = arith.constant dense<0.000000e+00> : vector<16x128xf32>
    %38 = tpu.matmul %26, %37, %cst_39 {dimension_numbers = #tpu.dot_dimension_numbers<[1], [0], [0], [1], [0, 0, 1, 1], [], []>} : vector<16x128xf32>, vector<128x128xf32>, vector<16x128xf32> -> vector<16x128xf32>
    %c0_40 = arith.constant 0 : index
    %c0_41 = arith.constant 0 : index
    %c0_42 = arith.constant 0 : index
    %39 = vector.load %arg5[%c0_40, %c0_41, %c0_42] : memref<3x8x16xf32, #tpu.memory_space<vmem>>, vector<1x8x16xf32>
    %40 = vector.shape_cast %39 : vector<1x8x16xf32> to vector<8x16xf32>
    %cst_43 = arith.constant dense<0.000000e+00> : vector<8x128xf32>
    %41 = tpu.matmul %40, %38, %cst_43 {dimension_numbers = #tpu.dot_dimension_numbers<[1], [0], [0], [1], [0, 0, 1, 1], [], []>} : vector<8x16xf32>, vector<16x128xf32>, vector<8x128xf32> -> vector<8x128xf32>
    %c1_44 = arith.constant 1 : index
    %c0_45 = arith.constant 0 : index
    %c0_46 = arith.constant 0 : index
    %42 = vector.load %arg6[%c1_44, %c0_45, %c0_46] : memref<3x128x128xf32, #tpu.memory_space<vmem>>, vector<1x128x128xf32>
    %43 = vector.shape_cast %42 : vector<1x128x128xf32> to vector<128x128xf32>
    %cst_47 = arith.constant dense<0.000000e+00> : vector<16x128xf32>
    %44 = tpu.matmul %26, %43, %cst_47 {dimension_numbers = #tpu.dot_dimension_numbers<[1], [0], [0], [1], [0, 0, 1, 1], [], []>} : vector<16x128xf32>, vector<128x128xf32>, vector<16x128xf32> -> vector<16x128xf32>
    %c1_48 = arith.constant 1 : index
    %c0_49 = arith.constant 0 : index
    %c0_50 = arith.constant 0 : index
    %45 = vector.load %arg5[%c1_48, %c0_49, %c0_50] : memref<3x8x16xf32, #tpu.memory_space<vmem>>, vector<1x8x16xf32>
    %46 = vector.shape_cast %45 : vector<1x8x16xf32> to vector<8x16xf32>
    %cst_51 = arith.constant dense<0.000000e+00> : vector<8x128xf32>
    %47 = tpu.matmul %46, %44, %cst_51 {dimension_numbers = #tpu.dot_dimension_numbers<[1], [0], [0], [1], [0, 0, 1, 1], [], []>} : vector<8x16xf32>, vector<16x128xf32>, vector<8x128xf32> -> vector<8x128xf32>
    %48 = arith.addf %41, %47 : vector<8x128xf32>
    %c2_52 = arith.constant 2 : index
    %c0_53 = arith.constant 0 : index
    %c0_54 = arith.constant 0 : index
    %49 = vector.load %arg6[%c2_52, %c0_53, %c0_54] : memref<3x128x128xf32, #tpu.memory_space<vmem>>, vector<1x128x128xf32>
    %50 = vector.shape_cast %49 : vector<1x128x128xf32> to vector<128x128xf32>
    %cst_55 = arith.constant dense<0.000000e+00> : vector<16x128xf32>
    %51 = tpu.matmul %26, %50, %cst_55 {dimension_numbers = #tpu.dot_dimension_numbers<[1], [0], [0], [1], [0, 0, 1, 1], [], []>} : vector<16x128xf32>, vector<128x128xf32>, vector<16x128xf32> -> vector<16x128xf32>
    %c2_56 = arith.constant 2 : index
    %c0_57 = arith.constant 0 : index
    %c0_58 = arith.constant 0 : index
    %52 = vector.load %arg5[%c2_56, %c0_57, %c0_58] : memref<3x8x16xf32, #tpu.memory_space<vmem>>, vector<1x8x16xf32>
    %53 = vector.shape_cast %52 : vector<1x8x16xf32> to vector<8x16xf32>
    %cst_59 = arith.constant dense<0.000000e+00> : vector<8x128xf32>
    %54 = tpu.matmul %53, %51, %cst_59 {dimension_numbers = #tpu.dot_dimension_numbers<[1], [0], [0], [1], [0, 0, 1, 1], [], []>} : vector<8x16xf32>, vector<16x128xf32>, vector<8x128xf32> -> vector<8x128xf32>
    %55 = arith.addf %48, %54 : vector<8x128xf32>
    %c0_60 = arith.constant 0 : index
    %c0_61 = arith.constant 0 : index
    %56 = vector.load %arg7[%c0_60, %c0_61] : memref<1x128xf32, #tpu.memory_space<vmem>>, vector<1x128xf32>
    %57 = vector.broadcast %56 : vector<1x128xf32> to vector<8x128xf32>
    %58 = arith.addf %55, %57 : vector<8x128xf32>
    %cst_62 = arith.constant 0.000000e+00 : f32
    %59 = vector.broadcast %cst_62 : f32 to vector<8x128xf32>
    %60 = arith.maximumf %58, %59 : vector<8x128xf32>
    %c0_63 = arith.constant 0 : index
    %c0_64 = arith.constant 0 : index
    %c0_65 = arith.constant 0 : index
    %61 = vector.load %arg9[%c0_63, %c0_64, %c0_65] : memref<3x128x128xf32, #tpu.memory_space<vmem>>, vector<1x128x128xf32>
    %62 = vector.shape_cast %61 : vector<1x128x128xf32> to vector<128x128xf32>
    %cst_66 = arith.constant dense<0.000000e+00> : vector<8x128xf32>
    %63 = tpu.matmul %60, %62, %cst_66 {dimension_numbers = #tpu.dot_dimension_numbers<[1], [0], [0], [1], [0, 0, 1, 1], [], []>} : vector<8x128xf32>, vector<128x128xf32>, vector<8x128xf32> -> vector<8x128xf32>
    %c0_67 = arith.constant 0 : index
    %c0_68 = arith.constant 0 : index
    %c0_69 = arith.constant 0 : index
    %64 = vector.load %arg8[%c0_67, %c0_68, %c0_69] : memref<3x8x8xf32, #tpu.memory_space<vmem>>, vector<1x8x8xf32>
    %65 = vector.shape_cast %64 : vector<1x8x8xf32> to vector<8x8xf32>
    %cst_70 = arith.constant dense<0.000000e+00> : vector<8x128xf32>
    %66 = tpu.matmul %65, %63, %cst_70 {dimension_numbers = #tpu.dot_dimension_numbers<[1], [0], [0], [1], [0, 0, 1, 1], [], []>} : vector<8x8xf32>, vector<8x128xf32>, vector<8x128xf32> -> vector<8x128xf32>
    %c1_71 = arith.constant 1 : index
    %c0_72 = arith.constant 0 : index
    %c0_73 = arith.constant 0 : index
    %67 = vector.load %arg9[%c1_71, %c0_72, %c0_73] : memref<3x128x128xf32, #tpu.memory_space<vmem>>, vector<1x128x128xf32>
    %68 = vector.shape_cast %67 : vector<1x128x128xf32> to vector<128x128xf32>
    %cst_74 = arith.constant dense<0.000000e+00> : vector<8x128xf32>
    %69 = tpu.matmul %60, %68, %cst_74 {dimension_numbers = #tpu.dot_dimension_numbers<[1], [0], [0], [1], [0, 0, 1, 1], [], []>} : vector<8x128xf32>, vector<128x128xf32>, vector<8x128xf32> -> vector<8x128xf32>
    %c1_75 = arith.constant 1 : index
    %c0_76 = arith.constant 0 : index
    %c0_77 = arith.constant 0 : index
    %70 = vector.load %arg8[%c1_75, %c0_76, %c0_77] : memref<3x8x8xf32, #tpu.memory_space<vmem>>, vector<1x8x8xf32>
    %71 = vector.shape_cast %70 : vector<1x8x8xf32> to vector<8x8xf32>
    %cst_78 = arith.constant dense<0.000000e+00> : vector<8x128xf32>
    %72 = tpu.matmul %71, %69, %cst_78 {dimension_numbers = #tpu.dot_dimension_numbers<[1], [0], [0], [1], [0, 0, 1, 1], [], []>} : vector<8x8xf32>, vector<8x128xf32>, vector<8x128xf32> -> vector<8x128xf32>
    %73 = arith.addf %66, %72 : vector<8x128xf32>
    %c2_79 = arith.constant 2 : index
    %c0_80 = arith.constant 0 : index
    %c0_81 = arith.constant 0 : index
    %74 = vector.load %arg9[%c2_79, %c0_80, %c0_81] : memref<3x128x128xf32, #tpu.memory_space<vmem>>, vector<1x128x128xf32>
    %75 = vector.shape_cast %74 : vector<1x128x128xf32> to vector<128x128xf32>
    %cst_82 = arith.constant dense<0.000000e+00> : vector<8x128xf32>
    %76 = tpu.matmul %60, %75, %cst_82 {dimension_numbers = #tpu.dot_dimension_numbers<[1], [0], [0], [1], [0, 0, 1, 1], [], []>} : vector<8x128xf32>, vector<128x128xf32>, vector<8x128xf32> -> vector<8x128xf32>
    %c2_83 = arith.constant 2 : index
    %c0_84 = arith.constant 0 : index
    %c0_85 = arith.constant 0 : index
    %77 = vector.load %arg8[%c2_83, %c0_84, %c0_85] : memref<3x8x8xf32, #tpu.memory_space<vmem>>, vector<1x8x8xf32>
    %78 = vector.shape_cast %77 : vector<1x8x8xf32> to vector<8x8xf32>
    %cst_86 = arith.constant dense<0.000000e+00> : vector<8x128xf32>
    %79 = tpu.matmul %78, %76, %cst_86 {dimension_numbers = #tpu.dot_dimension_numbers<[1], [0], [0], [1], [0, 0, 1, 1], [], []>} : vector<8x8xf32>, vector<8x128xf32>, vector<8x128xf32> -> vector<8x128xf32>
    %80 = arith.addf %73, %79 : vector<8x128xf32>
    %c0_87 = arith.constant 0 : index
    %c0_88 = arith.constant 0 : index
    %81 = vector.load %arg10[%c0_87, %c0_88] : memref<1x128xf32, #tpu.memory_space<vmem>>, vector<1x128xf32>
    %82 = vector.broadcast %81 : vector<1x128xf32> to vector<8x128xf32>
    %83 = arith.addf %80, %82 : vector<8x128xf32>
    %84 = arith.addf %83, %35 : vector<8x128xf32>
    %cst_89 = arith.constant 0.000000e+00 : f32
    %85 = vector.broadcast %cst_89 : f32 to vector<8x128xf32>
    %86 = arith.maximumf %84, %85 : vector<8x128xf32>
    %c0_90 = arith.constant 0 : index
    %c0_91 = arith.constant 0 : index
    %c0_92 = arith.constant 0 : index
    %87 = vector.load %arg21[%c0_90, %c0_91, %c0_92] : memref<1x128x128xf32, #tpu.memory_space<vmem>>, vector<1x128x128xf32>
    %88 = vector.shape_cast %87 : vector<1x128x128xf32> to vector<128x128xf32>
    %cst_93 = arith.constant dense<0.000000e+00> : vector<8x128xf32>
    %89 = tpu.matmul %86, %88, %cst_93 {dimension_numbers = #tpu.dot_dimension_numbers<[1], [0], [0], [1], [0, 0, 1, 1], [], []>} : vector<8x128xf32>, vector<128x128xf32>, vector<8x128xf32> -> vector<8x128xf32>
    %c0_94 = arith.constant 0 : index
    %c0_95 = arith.constant 0 : index
    %c0_96 = arith.constant 0 : index
    %90 = vector.load %arg20[%c0_94, %c0_95, %c0_96] : memref<1x4x8xf32, #tpu.memory_space<vmem>>, vector<1x4x8xf32>
    %91 = vector.shape_cast %90 : vector<1x4x8xf32> to vector<4x8xf32>
    %cst_97 = arith.constant dense<0.000000e+00> : vector<4x128xf32>
    %92 = tpu.matmul %91, %89, %cst_97 {dimension_numbers = #tpu.dot_dimension_numbers<[1], [0], [0], [1], [0, 0, 1, 1], [], []>} : vector<4x8xf32>, vector<8x128xf32>, vector<4x128xf32> -> vector<4x128xf32>
    %c0_98 = arith.constant 0 : index
    %c0_99 = arith.constant 0 : index
    %93 = vector.load %arg22[%c0_98, %c0_99] : memref<1x128xf32, #tpu.memory_space<vmem>>, vector<1x128xf32>
    %94 = vector.broadcast %93 : vector<1x128xf32> to vector<4x128xf32>
    %95 = arith.addf %92, %94 : vector<4x128xf32>
    %c0_100 = arith.constant 0 : index
    %c0_101 = arith.constant 0 : index
    %c0_102 = arith.constant 0 : index
    %96 = vector.load %arg15[%c0_100, %c0_101, %c0_102] : memref<3x128x128xf32, #tpu.memory_space<vmem>>, vector<1x128x128xf32>
    %97 = vector.shape_cast %96 : vector<1x128x128xf32> to vector<128x128xf32>
    %cst_103 = arith.constant dense<0.000000e+00> : vector<8x128xf32>
    %98 = tpu.matmul %86, %97, %cst_103 {dimension_numbers = #tpu.dot_dimension_numbers<[1], [0], [0], [1], [0, 0, 1, 1], [], []>} : vector<8x128xf32>, vector<128x128xf32>, vector<8x128xf32> -> vector<8x128xf32>
    %c0_104 = arith.constant 0 : index
    %c0_105 = arith.constant 0 : index
    %c0_106 = arith.constant 0 : index
    %99 = vector.load %arg14[%c0_104, %c0_105, %c0_106] : memref<3x4x8xf32, #tpu.memory_space<vmem>>, vector<1x4x8xf32>
    %100 = vector.shape_cast %99 : vector<1x4x8xf32> to vector<4x8xf32>
    %cst_107 = arith.constant dense<0.000000e+00> : vector<4x128xf32>
    %101 = tpu.matmul %100, %98, %cst_107 {dimension_numbers = #tpu.dot_dimension_numbers<[1], [0], [0], [1], [0, 0, 1, 1], [], []>} : vector<4x8xf32>, vector<8x128xf32>, vector<4x128xf32> -> vector<4x128xf32>
    %c1_108 = arith.constant 1 : index
    %c0_109 = arith.constant 0 : index
    %c0_110 = arith.constant 0 : index
    %102 = vector.load %arg15[%c1_108, %c0_109, %c0_110] : memref<3x128x128xf32, #tpu.memory_space<vmem>>, vector<1x128x128xf32>
    %103 = vector.shape_cast %102 : vector<1x128x128xf32> to vector<128x128xf32>
    %cst_111 = arith.constant dense<0.000000e+00> : vector<8x128xf32>
    %104 = tpu.matmul %86, %103, %cst_111 {dimension_numbers = #tpu.dot_dimension_numbers<[1], [0], [0], [1], [0, 0, 1, 1], [], []>} : vector<8x128xf32>, vector<128x128xf32>, vector<8x128xf32> -> vector<8x128xf32>
    %c1_112 = arith.constant 1 : index
    %c0_113 = arith.constant 0 : index
    %c0_114 = arith.constant 0 : index
    %105 = vector.load %arg14[%c1_112, %c0_113, %c0_114] : memref<3x4x8xf32, #tpu.memory_space<vmem>>, vector<1x4x8xf32>
    %106 = vector.shape_cast %105 : vector<1x4x8xf32> to vector<4x8xf32>
    %cst_115 = arith.constant dense<0.000000e+00> : vector<4x128xf32>
    %107 = tpu.matmul %106, %104, %cst_115 {dimension_numbers = #tpu.dot_dimension_numbers<[1], [0], [0], [1], [0, 0, 1, 1], [], []>} : vector<4x8xf32>, vector<8x128xf32>, vector<4x128xf32> -> vector<4x128xf32>
    %108 = arith.addf %101, %107 : vector<4x128xf32>
    %c2_116 = arith.constant 2 : index
    %c0_117 = arith.constant 0 : index
    %c0_118 = arith.constant 0 : index
    %109 = vector.load %arg15[%c2_116, %c0_117, %c0_118] : memref<3x128x128xf32, #tpu.memory_space<vmem>>, vector<1x128x128xf32>
    %110 = vector.shape_cast %109 : vector<1x128x128xf32> to vector<128x128xf32>
    %cst_119 = arith.constant dense<0.000000e+00> : vector<8x128xf32>
    %111 = tpu.matmul %86, %110, %cst_119 {dimension_numbers = #tpu.dot_dimension_numbers<[1], [0], [0], [1], [0, 0, 1, 1], [], []>} : vector<8x128xf32>, vector<128x128xf32>, vector<8x128xf32> -> vector<8x128xf32>
    %c2_120 = arith.constant 2 : index
    %c0_121 = arith.constant 0 : index
    %c0_122 = arith.constant 0 : index
    %112 = vector.load %arg14[%c2_120, %c0_121, %c0_122] : memref<3x4x8xf32, #tpu.memory_space<vmem>>, vector<1x4x8xf32>
    %113 = vector.shape_cast %112 : vector<1x4x8xf32> to vector<4x8xf32>
    %cst_123 = arith.constant dense<0.000000e+00> : vector<4x128xf32>
    %114 = tpu.matmul %113, %111, %cst_123 {dimension_numbers = #tpu.dot_dimension_numbers<[1], [0], [0], [1], [0, 0, 1, 1], [], []>} : vector<4x8xf32>, vector<8x128xf32>, vector<4x128xf32> -> vector<4x128xf32>
    %115 = arith.addf %108, %114 : vector<4x128xf32>
    %c0_124 = arith.constant 0 : index
    %c0_125 = arith.constant 0 : index
    %116 = vector.load %arg16[%c0_124, %c0_125] : memref<1x128xf32, #tpu.memory_space<vmem>>, vector<1x128xf32>
    %117 = vector.broadcast %116 : vector<1x128xf32> to vector<4x128xf32>
    %118 = arith.addf %115, %117 : vector<4x128xf32>
    %cst_126 = arith.constant 0.000000e+00 : f32
    %119 = vector.broadcast %cst_126 : f32 to vector<4x128xf32>
    %120 = arith.maximumf %118, %119 : vector<4x128xf32>
    %c0_127 = arith.constant 0 : index
    %c0_128 = arith.constant 0 : index
    %c0_129 = arith.constant 0 : index
    %121 = vector.load %arg18[%c0_127, %c0_128, %c0_129] : memref<3x128x128xf32, #tpu.memory_space<vmem>>, vector<1x128x128xf32>
    %122 = vector.shape_cast %121 : vector<1x128x128xf32> to vector<128x128xf32>
    %cst_130 = arith.constant dense<0.000000e+00> : vector<4x128xf32>
    %123 = tpu.matmul %120, %122, %cst_130 {dimension_numbers = #tpu.dot_dimension_numbers<[1], [0], [0], [1], [0, 0, 1, 1], [], []>} : vector<4x128xf32>, vector<128x128xf32>, vector<4x128xf32> -> vector<4x128xf32>
    %c0_131 = arith.constant 0 : index
    %c0_132 = arith.constant 0 : index
    %c0_133 = arith.constant 0 : index
    %124 = vector.load %arg17[%c0_131, %c0_132, %c0_133] : memref<3x4x4xf32, #tpu.memory_space<vmem>>, vector<1x4x4xf32>
    %125 = vector.shape_cast %124 : vector<1x4x4xf32> to vector<4x4xf32>
    %cst_134 = arith.constant dense<0.000000e+00> : vector<4x128xf32>
    %126 = tpu.matmul %125, %123, %cst_134 {dimension_numbers = #tpu.dot_dimension_numbers<[1], [0], [0], [1], [0, 0, 1, 1], [], []>} : vector<4x4xf32>, vector<4x128xf32>, vector<4x128xf32> -> vector<4x128xf32>
    %c1_135 = arith.constant 1 : index
    %c0_136 = arith.constant 0 : index
    %c0_137 = arith.constant 0 : index
    %127 = vector.load %arg18[%c1_135, %c0_136, %c0_137] : memref<3x128x128xf32, #tpu.memory_space<vmem>>, vector<1x128x128xf32>
    %128 = vector.shape_cast %127 : vector<1x128x128xf32> to vector<128x128xf32>
    %cst_138 = arith.constant dense<0.000000e+00> : vector<4x128xf32>
    %129 = tpu.matmul %120, %128, %cst_138 {dimension_numbers = #tpu.dot_dimension_numbers<[1], [0], [0], [1], [0, 0, 1, 1], [], []>} : vector<4x128xf32>, vector<128x128xf32>, vector<4x128xf32> -> vector<4x128xf32>
    %c1_139 = arith.constant 1 : index
    %c0_140 = arith.constant 0 : index
    %c0_141 = arith.constant 0 : index
    %130 = vector.load %arg17[%c1_139, %c0_140, %c0_141] : memref<3x4x4xf32, #tpu.memory_space<vmem>>, vector<1x4x4xf32>
    %131 = vector.shape_cast %130 : vector<1x4x4xf32> to vector<4x4xf32>
    %cst_142 = arith.constant dense<0.000000e+00> : vector<4x128xf32>
    %132 = tpu.matmul %131, %129, %cst_142 {dimension_numbers = #tpu.dot_dimension_numbers<[1], [0], [0], [1], [0, 0, 1, 1], [], []>} : vector<4x4xf32>, vector<4x128xf32>, vector<4x128xf32> -> vector<4x128xf32>
    %133 = arith.addf %126, %132 : vector<4x128xf32>
    %c2_143 = arith.constant 2 : index
    %c0_144 = arith.constant 0 : index
    %c0_145 = arith.constant 0 : index
    %134 = vector.load %arg18[%c2_143, %c0_144, %c0_145] : memref<3x128x128xf32, #tpu.memory_space<vmem>>, vector<1x128x128xf32>
    %135 = vector.shape_cast %134 : vector<1x128x128xf32> to vector<128x128xf32>
    %cst_146 = arith.constant dense<0.000000e+00> : vector<4x128xf32>
    %136 = tpu.matmul %120, %135, %cst_146 {dimension_numbers = #tpu.dot_dimension_numbers<[1], [0], [0], [1], [0, 0, 1, 1], [], []>} : vector<4x128xf32>, vector<128x128xf32>, vector<4x128xf32> -> vector<4x128xf32>
    %c2_147 = arith.constant 2 : index
    %c0_148 = arith.constant 0 : index
    %c0_149 = arith.constant 0 : index
    %137 = vector.load %arg17[%c2_147, %c0_148, %c0_149] : memref<3x4x4xf32, #tpu.memory_space<vmem>>, vector<1x4x4xf32>
    %138 = vector.shape_cast %137 : vector<1x4x4xf32> to vector<4x4xf32>
    %cst_150 = arith.constant dense<0.000000e+00> : vector<4x128xf32>
    %139 = tpu.matmul %138, %136, %cst_150 {dimension_numbers = #tpu.dot_dimension_numbers<[1], [0], [0], [1], [0, 0, 1, 1], [], []>} : vector<4x4xf32>, vector<4x128xf32>, vector<4x128xf32> -> vector<4x128xf32>
    %140 = arith.addf %133, %139 : vector<4x128xf32>
    %c0_151 = arith.constant 0 : index
    %c0_152 = arith.constant 0 : index
    %141 = vector.load %arg19[%c0_151, %c0_152] : memref<1x128xf32, #tpu.memory_space<vmem>>, vector<1x128xf32>
    %142 = vector.broadcast %141 : vector<1x128xf32> to vector<4x128xf32>
    %143 = arith.addf %140, %142 : vector<4x128xf32>
    %144 = arith.addf %143, %95 : vector<4x128xf32>
    %cst_153 = arith.constant 0.000000e+00 : f32
    %145 = vector.broadcast %cst_153 : f32 to vector<4x128xf32>
    %146 = arith.maximumf %144, %145 : vector<4x128xf32>
    %c0_154 = arith.constant 0 : index
    %c0_155 = arith.constant 0 : index
    %c0_156 = arith.constant 0 : index
    %147 = vector.load %arg30[%c0_154, %c0_155, %c0_156] : memref<1x128x128xf32, #tpu.memory_space<vmem>>, vector<1x128x128xf32>
    %148 = vector.shape_cast %147 : vector<1x128x128xf32> to vector<128x128xf32>
    %cst_157 = arith.constant dense<0.000000e+00> : vector<4x128xf32>
    %149 = tpu.matmul %146, %148, %cst_157 {dimension_numbers = #tpu.dot_dimension_numbers<[1], [0], [0], [1], [0, 0, 1, 1], [], []>} : vector<4x128xf32>, vector<128x128xf32>, vector<4x128xf32> -> vector<4x128xf32>
    %c0_158 = arith.constant 0 : index
    %c0_159 = arith.constant 0 : index
    %c0_160 = arith.constant 0 : index
    %150 = vector.load %arg29[%c0_158, %c0_159, %c0_160] : memref<1x2x4xf32, #tpu.memory_space<vmem>>, vector<1x2x4xf32>
    %151 = vector.shape_cast %150 : vector<1x2x4xf32> to vector<2x4xf32>
    %cst_161 = arith.constant dense<0.000000e+00> : vector<2x128xf32>
    %152 = tpu.matmul %151, %149, %cst_161 {dimension_numbers = #tpu.dot_dimension_numbers<[1], [0], [0], [1], [0, 0, 1, 1], [], []>} : vector<2x4xf32>, vector<4x128xf32>, vector<2x128xf32> -> vector<2x128xf32>
    %c0_162 = arith.constant 0 : index
    %c0_163 = arith.constant 0 : index
    %153 = vector.load %arg31[%c0_162, %c0_163] : memref<1x128xf32, #tpu.memory_space<vmem>>, vector<1x128xf32>
    %154 = vector.broadcast %153 : vector<1x128xf32> to vector<2x128xf32>
    %155 = arith.addf %152, %154 : vector<2x128xf32>
    %c0_164 = arith.constant 0 : index
    %c0_165 = arith.constant 0 : index
    %c0_166 = arith.constant 0 : index
    %156 = vector.load %arg24[%c0_164, %c0_165, %c0_166] : memref<3x128x128xf32, #tpu.memory_space<vmem>>, vector<1x128x128xf32>
    %157 = vector.shape_cast %156 : vector<1x128x128xf32> to vector<128x128xf32>
    %cst_167 = arith.constant dense<0.000000e+00> : vector<4x128xf32>
    %158 = tpu.matmul %146, %157, %cst_167 {dimension_numbers = #tpu.dot_dimension_numbers<[1], [0], [0], [1], [0, 0, 1, 1], [], []>} : vector<4x128xf32>, vector<128x128xf32>, vector<4x128xf32> -> vector<4x128xf32>
    %c0_168 = arith.constant 0 : index
    %c0_169 = arith.constant 0 : index
    %c0_170 = arith.constant 0 : index
    %159 = vector.load %arg23[%c0_168, %c0_169, %c0_170] : memref<3x2x4xf32, #tpu.memory_space<vmem>>, vector<1x2x4xf32>
    %160 = vector.shape_cast %159 : vector<1x2x4xf32> to vector<2x4xf32>
    %cst_171 = arith.constant dense<0.000000e+00> : vector<2x128xf32>
    %161 = tpu.matmul %160, %158, %cst_171 {dimension_numbers = #tpu.dot_dimension_numbers<[1], [0], [0], [1], [0, 0, 1, 1], [], []>} : vector<2x4xf32>, vector<4x128xf32>, vector<2x128xf32> -> vector<2x128xf32>
    %c1_172 = arith.constant 1 : index
    %c0_173 = arith.constant 0 : index
    %c0_174 = arith.constant 0 : index
    %162 = vector.load %arg24[%c1_172, %c0_173, %c0_174] : memref<3x128x128xf32, #tpu.memory_space<vmem>>, vector<1x128x128xf32>
    %163 = vector.shape_cast %162 : vector<1x128x128xf32> to vector<128x128xf32>
    %cst_175 = arith.constant dense<0.000000e+00> : vector<4x128xf32>
    %164 = tpu.matmul %146, %163, %cst_175 {dimension_numbers = #tpu.dot_dimension_numbers<[1], [0], [0], [1], [0, 0, 1, 1], [], []>} : vector<4x128xf32>, vector<128x128xf32>, vector<4x128xf32> -> vector<4x128xf32>
    %c1_176 = arith.constant 1 : index
    %c0_177 = arith.constant 0 : index
    %c0_178 = arith.constant 0 : index
    %165 = vector.load %arg23[%c1_176, %c0_177, %c0_178] : memref<3x2x4xf32, #tpu.memory_space<vmem>>, vector<1x2x4xf32>
    %166 = vector.shape_cast %165 : vector<1x2x4xf32> to vector<2x4xf32>
    %cst_179 = arith.constant dense<0.000000e+00> : vector<2x128xf32>
    %167 = tpu.matmul %166, %164, %cst_179 {dimension_numbers = #tpu.dot_dimension_numbers<[1], [0], [0], [1], [0, 0, 1, 1], [], []>} : vector<2x4xf32>, vector<4x128xf32>, vector<2x128xf32> -> vector<2x128xf32>
    %168 = arith.addf %161, %167 : vector<2x128xf32>
    %c2_180 = arith.constant 2 : index
    %c0_181 = arith.constant 0 : index
    %c0_182 = arith.constant 0 : index
    %169 = vector.load %arg24[%c2_180, %c0_181, %c0_182] : memref<3x128x128xf32, #tpu.memory_space<vmem>>, vector<1x128x128xf32>
    %170 = vector.shape_cast %169 : vector<1x128x128xf32> to vector<128x128xf32>
    %cst_183 = arith.constant dense<0.000000e+00> : vector<4x128xf32>
    %171 = tpu.matmul %146, %170, %cst_183 {dimension_numbers = #tpu.dot_dimension_numbers<[1], [0], [0], [1], [0, 0, 1, 1], [], []>} : vector<4x128xf32>, vector<128x128xf32>, vector<4x128xf32> -> vector<4x128xf32>
    %c2_184 = arith.constant 2 : index
    %c0_185 = arith.constant 0 : index
    %c0_186 = arith.constant 0 : index
    %172 = vector.load %arg23[%c2_184, %c0_185, %c0_186] : memref<3x2x4xf32, #tpu.memory_space<vmem>>, vector<1x2x4xf32>
    %173 = vector.shape_cast %172 : vector<1x2x4xf32> to vector<2x4xf32>
    %cst_187 = arith.constant dense<0.000000e+00> : vector<2x128xf32>
    %174 = tpu.matmul %173, %171, %cst_187 {dimension_numbers = #tpu.dot_dimension_numbers<[1], [0], [0], [1], [0, 0, 1, 1], [], []>} : vector<2x4xf32>, vector<4x128xf32>, vector<2x128xf32> -> vector<2x128xf32>
    %175 = arith.addf %168, %174 : vector<2x128xf32>
    %c0_188 = arith.constant 0 : index
    %c0_189 = arith.constant 0 : index
    %176 = vector.load %arg25[%c0_188, %c0_189] : memref<1x128xf32, #tpu.memory_space<vmem>>, vector<1x128xf32>
    %177 = vector.broadcast %176 : vector<1x128xf32> to vector<2x128xf32>
    %178 = arith.addf %175, %177 : vector<2x128xf32>
    %cst_190 = arith.constant 0.000000e+00 : f32
    %179 = vector.broadcast %cst_190 : f32 to vector<2x128xf32>
    %180 = arith.maximumf %178, %179 : vector<2x128xf32>
    %c0_191 = arith.constant 0 : index
    %c0_192 = arith.constant 0 : index
    %c0_193 = arith.constant 0 : index
    %181 = vector.load %arg27[%c0_191, %c0_192, %c0_193] : memref<3x128x128xf32, #tpu.memory_space<vmem>>, vector<1x128x128xf32>
    %182 = vector.shape_cast %181 : vector<1x128x128xf32> to vector<128x128xf32>
    %cst_194 = arith.constant dense<0.000000e+00> : vector<2x128xf32>
    %183 = tpu.matmul %180, %182, %cst_194 {dimension_numbers = #tpu.dot_dimension_numbers<[1], [0], [0], [1], [0, 0, 1, 1], [], []>} : vector<2x128xf32>, vector<128x128xf32>, vector<2x128xf32> -> vector<2x128xf32>
    %c0_195 = arith.constant 0 : index
    %c0_196 = arith.constant 0 : index
    %c0_197 = arith.constant 0 : index
    %184 = vector.load %arg26[%c0_195, %c0_196, %c0_197] : memref<3x2x2xf32, #tpu.memory_space<vmem>>, vector<1x2x2xf32>
    %185 = vector.shape_cast %184 : vector<1x2x2xf32> to vector<2x2xf32>
    %cst_198 = arith.constant dense<0.000000e+00> : vector<2x128xf32>
    %186 = tpu.matmul %185, %183, %cst_198 {dimension_numbers = #tpu.dot_dimension_numbers<[1], [0], [0], [1], [0, 0, 1, 1], [], []>} : vector<2x2xf32>, vector<2x128xf32>, vector<2x128xf32> -> vector<2x128xf32>
    %c1_199 = arith.constant 1 : index
    %c0_200 = arith.constant 0 : index
    %c0_201 = arith.constant 0 : index
    %187 = vector.load %arg27[%c1_199, %c0_200, %c0_201] : memref<3x128x128xf32, #tpu.memory_space<vmem>>, vector<1x128x128xf32>
    %188 = vector.shape_cast %187 : vector<1x128x128xf32> to vector<128x128xf32>
    %cst_202 = arith.constant dense<0.000000e+00> : vector<2x128xf32>
    %189 = tpu.matmul %180, %188, %cst_202 {dimension_numbers = #tpu.dot_dimension_numbers<[1], [0], [0], [1], [0, 0, 1, 1], [], []>} : vector<2x128xf32>, vector<128x128xf32>, vector<2x128xf32> -> vector<2x128xf32>
    %c1_203 = arith.constant 1 : index
    %c0_204 = arith.constant 0 : index
    %c0_205 = arith.constant 0 : index
    %190 = vector.load %arg26[%c1_203, %c0_204, %c0_205] : memref<3x2x2xf32, #tpu.memory_space<vmem>>, vector<1x2x2xf32>
    %191 = vector.shape_cast %190 : vector<1x2x2xf32> to vector<2x2xf32>
    %cst_206 = arith.constant dense<0.000000e+00> : vector<2x128xf32>
    %192 = tpu.matmul %191, %189, %cst_206 {dimension_numbers = #tpu.dot_dimension_numbers<[1], [0], [0], [1], [0, 0, 1, 1], [], []>} : vector<2x2xf32>, vector<2x128xf32>, vector<2x128xf32> -> vector<2x128xf32>
    %193 = arith.addf %186, %192 : vector<2x128xf32>
    %c2_207 = arith.constant 2 : index
    %c0_208 = arith.constant 0 : index
    %c0_209 = arith.constant 0 : index
    %194 = vector.load %arg27[%c2_207, %c0_208, %c0_209] : memref<3x128x128xf32, #tpu.memory_space<vmem>>, vector<1x128x128xf32>
    %195 = vector.shape_cast %194 : vector<1x128x128xf32> to vector<128x128xf32>
    %cst_210 = arith.constant dense<0.000000e+00> : vector<2x128xf32>
    %196 = tpu.matmul %180, %195, %cst_210 {dimension_numbers = #tpu.dot_dimension_numbers<[1], [0], [0], [1], [0, 0, 1, 1], [], []>} : vector<2x128xf32>, vector<128x128xf32>, vector<2x128xf32> -> vector<2x128xf32>
    %c2_211 = arith.constant 2 : index
    %c0_212 = arith.constant 0 : index
    %c0_213 = arith.constant 0 : index
    %197 = vector.load %arg26[%c2_211, %c0_212, %c0_213] : memref<3x2x2xf32, #tpu.memory_space<vmem>>, vector<1x2x2xf32>
    %198 = vector.shape_cast %197 : vector<1x2x2xf32> to vector<2x2xf32>
    %cst_214 = arith.constant dense<0.000000e+00> : vector<2x128xf32>
    %199 = tpu.matmul %198, %196, %cst_214 {dimension_numbers = #tpu.dot_dimension_numbers<[1], [0], [0], [1], [0, 0, 1, 1], [], []>} : vector<2x2xf32>, vector<2x128xf32>, vector<2x128xf32> -> vector<2x128xf32>
    %200 = arith.addf %193, %199 : vector<2x128xf32>
    %c0_215 = arith.constant 0 : index
    %c0_216 = arith.constant 0 : index
    %201 = vector.load %arg28[%c0_215, %c0_216] : memref<1x128xf32, #tpu.memory_space<vmem>>, vector<1x128xf32>
    %202 = vector.broadcast %201 : vector<1x128xf32> to vector<2x128xf32>
    %203 = arith.addf %200, %202 : vector<2x128xf32>
    %204 = arith.addf %203, %155 : vector<2x128xf32>
    %cst_217 = arith.constant 0.000000e+00 : f32
    %205 = vector.broadcast %cst_217 : f32 to vector<2x128xf32>
    %206 = arith.maximumf %204, %205 : vector<2x128xf32>
    %c0_218 = arith.constant 0 : index
    %c0_219 = arith.constant 0 : index
    %207 = vector.load %arg32[%c0_218, %c0_219] : memref<1x2xf32, #tpu.memory_space<vmem>>, vector<1x2xf32>
    %cst_220 = arith.constant dense<0.000000e+00> : vector<1x128xf32>
    %208 = tpu.matmul %207, %206, %cst_220 {dimension_numbers = #tpu.dot_dimension_numbers<[1], [0], [0], [1], [0, 0, 1, 1], [], []>} : vector<1x2xf32>, vector<2x128xf32>, vector<1x128xf32> -> vector<1x128xf32>
    %c0_221 = arith.constant 0 : index
    %c0_222 = arith.constant 0 : index
    %209 = vector.load %arg33[%c0_221, %c0_222] : memref<128x64xf32, #tpu.memory_space<vmem>>, vector<128x64xf32>
    %cst_223 = arith.constant dense<0.000000e+00> : vector<1x64xf32>
    %210 = tpu.matmul %208, %209, %cst_223 {dimension_numbers = #tpu.dot_dimension_numbers<[1], [0], [0], [1], [0, 0, 1, 1], [], []>} : vector<1x128xf32>, vector<128x64xf32>, vector<1x64xf32> -> vector<1x64xf32>
    %c0_224 = arith.constant 0 : index
    %c0_225 = arith.constant 0 : index
    %211 = vector.load %arg34[%c0_224, %c0_225] : memref<64x32xf32, #tpu.memory_space<vmem>>, vector<64x32xf32>
    %cst_226 = arith.constant dense<0.000000e+00> : vector<1x32xf32>
    %212 = tpu.matmul %210, %211, %cst_226 {dimension_numbers = #tpu.dot_dimension_numbers<[1], [0], [0], [1], [0, 0, 1, 1], [], []>} : vector<1x64xf32>, vector<64x32xf32>, vector<1x32xf32> -> vector<1x32xf32>
    %c0_227 = arith.constant 0 : index
    %c0_228 = arith.constant 0 : index
    %213 = vector.load %arg35[%c0_227, %c0_228] : memref<1x32xf32, #tpu.memory_space<vmem>>, vector<1x32xf32>
    %214 = arith.addf %212, %213 : vector<1x32xf32>
    %cst_229 = arith.constant 0.000000e+00 : f32
    %215 = vector.broadcast %cst_229 : f32 to vector<1x32xf32>
    %216 = arith.maximumf %214, %215 : vector<1x32xf32>
    %c0_230 = arith.constant 0 : index
    %c0_231 = arith.constant 0 : index
    %217 = vector.load %arg36[%c0_230, %c0_231] : memref<32x6xf32, #tpu.memory_space<vmem>>, vector<32x6xf32>
    %cst_232 = arith.constant dense<0.000000e+00> : vector<1x6xf32>
    %218 = tpu.matmul %216, %217, %cst_232 {dimension_numbers = #tpu.dot_dimension_numbers<[1], [0], [0], [1], [0, 0, 1, 1], [], []>} : vector<1x32xf32>, vector<32x6xf32>, vector<1x6xf32> -> vector<1x6xf32>
    %c0_233 = arith.constant 0 : index
    %c0_234 = arith.constant 0 : index
    %219 = vector.load %arg37[%c0_233, %c0_234] : memref<1x6xf32, #tpu.memory_space<vmem>>, vector<1x6xf32>
    %220 = arith.addf %218, %219 : vector<1x6xf32>
    %c0_235 = arith.constant 0 : index
    %c0_236 = arith.constant 0 : index
    %c0_237 = arith.constant 0 : index
    %221 = vector.load %arg38[%c0_235, %c0_236, %c0_237] : memref<1x1x6xf32, #tpu.memory_space<vmem>>, vector<1x1x6xf32>
    %222 = vector.shape_cast %221 : vector<1x1x6xf32> to vector<1x6xf32>
    %223 = vector.shape_cast %220 : vector<1x6xf32> to vector<1x1x6xf32>
    tpu.vector_store %arg38[%c0_235, %c0_236, %c0_237], %223 {strides = array<i32>} : memref<1x1x6xf32, #tpu.memory_space<vmem>>, vector<1x1x6xf32>,
    return
  }
  func.func @transform_0(%arg0: i32) -> (i32, i32, i32) {
    %c0_i32 = arith.constant 0 : i32
    %c0_i32_0 = arith.constant 0 : i32
    %c0_i32_1 = arith.constant 0 : i32
    return %arg0, %c0_i32, %c0_i32_0 : i32, i32, i32
  }
  func.func @transform_1(%arg0: i32) -> (i32, i32, i32) {
    %c0_i32 = arith.constant 0 : i32
    %c0_i32_0 = arith.constant 0 : i32
    %c0_i32_1 = arith.constant 0 : i32
    %c0_i32_2 = arith.constant 0 : i32
    return %c0_i32, %c0_i32_0, %c0_i32_1 : i32, i32, i32
  }
  func.func @transform_2(%arg0: i32) -> (i32, i32, i32) {
    %c0_i32 = arith.constant 0 : i32
    %c0_i32_0 = arith.constant 0 : i32
    %c0_i32_1 = arith.constant 0 : i32
    %c0_i32_2 = arith.constant 0 : i32
    return %c0_i32, %c0_i32_0, %c0_i32_1 : i32, i32, i32
  }
  func.func @transform_3(%arg0: i32) -> (i32, i32) {
    %c0_i32 = arith.constant 0 : i32
    %c0_i32_0 = arith.constant 0 : i32
    %c0_i32_1 = arith.constant 0 : i32
    return %c0_i32, %c0_i32_0 : i32, i32
  }
  func.func @transform_4(%arg0: i32) -> (i32, i32, i32) {
    %c0_i32 = arith.constant 0 : i32
    %c0_i32_0 = arith.constant 0 : i32
    %c0_i32_1 = arith.constant 0 : i32
    %c0_i32_2 = arith.constant 0 : i32
    return %c0_i32, %c0_i32_0, %c0_i32_1 : i32, i32, i32
  }
  func.func @transform_5(%arg0: i32) -> (i32, i32, i32) {
    %c0_i32 = arith.constant 0 : i32
    %c0_i32_0 = arith.constant 0 : i32
    %c0_i32_1 = arith.constant 0 : i32
    %c0_i32_2 = arith.constant 0 : i32
    return %c0_i32, %c0_i32_0, %c0_i32_1 : i32, i32, i32
  }
  func.func @transform_6(%arg0: i32) -> (i32, i32) {
    %c0_i32 = arith.constant 0 : i32
    %c0_i32_0 = arith.constant 0 : i32
    %c0_i32_1 = arith.constant 0 : i32
    return %c0_i32, %c0_i32_0 : i32, i32
  }
  func.func @transform_7(%arg0: i32) -> (i32, i32, i32) {
    %c0_i32 = arith.constant 0 : i32
    %c0_i32_0 = arith.constant 0 : i32
    %c0_i32_1 = arith.constant 0 : i32
    %c0_i32_2 = arith.constant 0 : i32
    return %c0_i32, %c0_i32_0, %c0_i32_1 : i32, i32, i32
  }
  func.func @transform_8(%arg0: i32) -> (i32, i32, i32) {
    %c0_i32 = arith.constant 0 : i32
    %c0_i32_0 = arith.constant 0 : i32
    %c0_i32_1 = arith.constant 0 : i32
    %c0_i32_2 = arith.constant 0 : i32
    return %c0_i32, %c0_i32_0, %c0_i32_1 : i32, i32, i32
  }
  func.func @transform_9(%arg0: i32) -> (i32, i32) {
    %c0_i32 = arith.constant 0 : i32
    %c0_i32_0 = arith.constant 0 : i32
    %c0_i32_1 = arith.constant 0 : i32
    return %c0_i32, %c0_i32_0 : i32, i32
  }
  func.func @transform_10(%arg0: i32) -> (i32, i32, i32) {
    %c0_i32 = arith.constant 0 : i32
    %c0_i32_0 = arith.constant 0 : i32
    %c0_i32_1 = arith.constant 0 : i32
    %c0_i32_2 = arith.constant 0 : i32
    return %c0_i32, %c0_i32_0, %c0_i32_1 : i32, i32, i32
  }
  func.func @transform_11(%arg0: i32) -> (i32, i32, i32) {
    %c0_i32 = arith.constant 0 : i32
    %c0_i32_0 = arith.constant 0 : i32
    %c0_i32_1 = arith.constant 0 : i32
    %c0_i32_2 = arith.constant 0 : i32
    return %c0_i32, %c0_i32_0, %c0_i32_1 : i32, i32, i32
  }
  func.func @transform_12(%arg0: i32) -> (i32, i32) {
    %c0_i32 = arith.constant 0 : i32
    %c0_i32_0 = arith.constant 0 : i32
    %c0_i32_1 = arith.constant 0 : i32
    return %c0_i32, %c0_i32_0 : i32, i32
  }
  func.func @transform_13(%arg0: i32) -> (i32, i32, i32) {
    %c0_i32 = arith.constant 0 : i32
    %c0_i32_0 = arith.constant 0 : i32
    %c0_i32_1 = arith.constant 0 : i32
    %c0_i32_2 = arith.constant 0 : i32
    return %c0_i32, %c0_i32_0, %c0_i32_1 : i32, i32, i32
  }
  func.func @transform_14(%arg0: i32) -> (i32, i32, i32) {
    %c0_i32 = arith.constant 0 : i32
    %c0_i32_0 = arith.constant 0 : i32
    %c0_i32_1 = arith.constant 0 : i32
    %c0_i32_2 = arith.constant 0 : i32
    return %c0_i32, %c0_i32_0, %c0_i32_1 : i32, i32, i32
  }
  func.func @transform_15(%arg0: i32) -> (i32, i32) {
    %c0_i32 = arith.constant 0 : i32
    %c0_i32_0 = arith.constant 0 : i32
    %c0_i32_1 = arith.constant 0 : i32
    return %c0_i32, %c0_i32_0 : i32, i32
  }
  func.func @transform_16(%arg0: i32) -> (i32, i32, i32) {
    %c0_i32 = arith.constant 0 : i32
    %c0_i32_0 = arith.constant 0 : i32
    %c0_i32_1 = arith.constant 0 : i32
    %c0_i32_2 = arith.constant 0 : i32
    return %c0_i32, %c0_i32_0, %c0_i32_1 : i32, i32, i32
  }
  func.func @transform_17(%arg0: i32) -> (i32, i32, i32) {
    %c0_i32 = arith.constant 0 : i32
    %c0_i32_0 = arith.constant 0 : i32
    %c0_i32_1 = arith.constant 0 : i32
    %c0_i32_2 = arith.constant 0 : i32
    return %c0_i32, %c0_i32_0, %c0_i32_1 : i32, i32, i32
  }
  func.func @transform_18(%arg0: i32) -> (i32, i32) {
    %c0_i32 = arith.constant 0 : i32
    %c0_i32_0 = arith.constant 0 : i32
    %c0_i32_1 = arith.constant 0 : i32
    return %c0_i32, %c0_i32_0 : i32, i32
  }
  func.func @transform_19(%arg0: i32) -> (i32, i32, i32) {
    %c0_i32 = arith.constant 0 : i32
    %c0_i32_0 = arith.constant 0 : i32
    %c0_i32_1 = arith.constant 0 : i32
    %c0_i32_2 = arith.constant 0 : i32
    return %c0_i32, %c0_i32_0, %c0_i32_1 : i32, i32, i32
  }
  func.func @transform_20(%arg0: i32) -> (i32, i32, i32) {
    %c0_i32 = arith.constant 0 : i32
    %c0_i32_0 = arith.constant 0 : i32
    %c0_i32_1 = arith.constant 0 : i32
    %c0_i32_2 = arith.constant 0 : i32
    return %c0_i32, %c0_i32_0, %c0_i32_1 : i32, i32, i32
  }
  func.func @transform_21(%arg0: i32) -> (i32, i32) {
    %c0_i32 = arith.constant 0 : i32
    %c0_i32_0 = arith.constant 0 : i32
    %c0_i32_1 = arith.constant 0 : i32
    return %c0_i32, %c0_i32_0 : i32, i32
  }
  func.func @transform_22(%arg0: i32) -> (i32, i32, i32) {
    %c0_i32 = arith.constant 0 : i32
    %c0_i32_0 = arith.constant 0 : i32
    %c0_i32_1 = arith.constant 0 : i32
    %c0_i32_2 = arith.constant 0 : i32
    return %c0_i32, %c0_i32_0, %c0_i32_1 : i32, i32, i32
  }
  func.func @transform_23(%arg0: i32) -> (i32, i32, i32) {
    %c0_i32 = arith.constant 0 : i32
    %c0_i32_0 = arith.constant 0 : i32
    %c0_i32_1 = arith.constant 0 : i32
    %c0_i32_2 = arith.constant 0 : i32
    return %c0_i32, %c0_i32_0, %c0_i32_1 : i32, i32, i32
  }
  func.func @transform_24(%arg0: i32) -> (i32, i32) {
    %c0_i32 = arith.constant 0 : i32
    %c0_i32_0 = arith.constant 0 : i32
    %c0_i32_1 = arith.constant 0 : i32
    return %c0_i32, %c0_i32_0 : i32, i32
  }
  func.func @transform_25(%arg0: i32) -> (i32, i32, i32) {
    %c0_i32 = arith.constant 0 : i32
    %c0_i32_0 = arith.constant 0 : i32
    %c0_i32_1 = arith.constant 0 : i32
    %c0_i32_2 = arith.constant 0 : i32
    return %c0_i32, %c0_i32_0, %c0_i32_1 : i32, i32, i32
  }
  func.func @transform_26(%arg0: i32) -> (i32, i32, i32) {
    %c0_i32 = arith.constant 0 : i32
    %c0_i32_0 = arith.constant 0 : i32
    %c0_i32_1 = arith.constant 0 : i32
    %c0_i32_2 = arith.constant 0 : i32
    return %c0_i32, %c0_i32_0, %c0_i32_1 : i32, i32, i32
  }
  func.func @transform_27(%arg0: i32) -> (i32, i32) {
    %c0_i32 = arith.constant 0 : i32
    %c0_i32_0 = arith.constant 0 : i32
    %c0_i32_1 = arith.constant 0 : i32
    return %c0_i32, %c0_i32_0 : i32, i32
  }
  func.func @transform_28(%arg0: i32) -> (i32, i32, i32) {
    %c0_i32 = arith.constant 0 : i32
    %c0_i32_0 = arith.constant 0 : i32
    %c0_i32_1 = arith.constant 0 : i32
    %c0_i32_2 = arith.constant 0 : i32
    return %c0_i32, %c0_i32_0, %c0_i32_1 : i32, i32, i32
  }
  func.func @transform_29(%arg0: i32) -> (i32, i32, i32) {
    %c0_i32 = arith.constant 0 : i32
    %c0_i32_0 = arith.constant 0 : i32
    %c0_i32_1 = arith.constant 0 : i32
    %c0_i32_2 = arith.constant 0 : i32
    return %c0_i32, %c0_i32_0, %c0_i32_1 : i32, i32, i32
  }
  func.func @transform_30(%arg0: i32) -> (i32, i32) {
    %c0_i32 = arith.constant 0 : i32
    %c0_i32_0 = arith.constant 0 : i32
    %c0_i32_1 = arith.constant 0 : i32
    return %c0_i32, %c0_i32_0 : i32, i32
  }
  func.func @transform_31(%arg0: i32) -> (i32, i32) {
    %c0_i32 = arith.constant 0 : i32
    %c0_i32_0 = arith.constant 0 : i32
    %c0_i32_1 = arith.constant 0 : i32
    return %c0_i32, %c0_i32_0 : i32, i32
  }
  func.func @transform_32(%arg0: i32) -> (i32, i32) {
    %c0_i32 = arith.constant 0 : i32
    %c0_i32_0 = arith.constant 0 : i32
    %c0_i32_1 = arith.constant 0 : i32
    return %c0_i32, %c0_i32_0 : i32, i32
  }
  func.func @transform_33(%arg0: i32) -> (i32, i32) {
    %c0_i32 = arith.constant 0 : i32
    %c0_i32_0 = arith.constant 0 : i32
    %c0_i32_1 = arith.constant 0 : i32
    return %c0_i32, %c0_i32_0 : i32, i32
  }
  func.func @transform_34(%arg0: i32) -> (i32, i32) {
    %c0_i32 = arith.constant 0 : i32
    %c0_i32_0 = arith.constant 0 : i32
    %c0_i32_1 = arith.constant 0 : i32
    return %c0_i32, %c0_i32_0 : i32, i32
  }
  func.func @transform_35(%arg0: i32) -> (i32, i32) {
    %c0_i32 = arith.constant 0 : i32
    %c0_i32_0 = arith.constant 0 : i32
    %c0_i32_1 = arith.constant 0 : i32
    return %c0_i32, %c0_i32_0 : i32, i32
  }
  func.func @transform_36(%arg0: i32) -> (i32, i32) {
    %c0_i32 = arith.constant 0 : i32
    %c0_i32_0 = arith.constant 0 : i32
    %c0_i32_1 = arith.constant 0 : i32
    return %c0_i32, %c0_i32_0 : i32, i32
  }
  func.func @transform_37(%arg0: i32) -> (i32, i32, i32) {
    %c0_i32 = arith.constant 0 : i32
    %c0_i32_0 = arith.constant 0 : i32
    %c0_i32_1 = arith.constant 0 : i32
    return %arg0, %c0_i32, %c0_i32_0 : i32, i32, i32
  }
}

</mosaic_0001>

<llo_original>
// kernel: tpu_custom_call.1
$region0: #{tpu_custom_call.1}
  #allocation0 [shape = 'u32[]', space=smem, size = 0x4, offset = 0x4, fixed_abs, tag = 'smem constant byte address 0x4 - core index']
  #allocation1 [shape = 'u32[144,128]{1,0:T(1,128)}', space=vmem, size = 0x12000, scoped, tag = 'internal scratch']
  %s0 = inlined_call_operand.smem [shape: u32[38], index: -1, kind: input, shape index: {}]
  %s1 = sld [smem:[%s0]]
  %s2 = scalar_lea.smem %s0, 1
  %s3 = sld [smem:[%s2]]
  %s4 = scalar_lea.smem %s0, 2
  %s5 = sld [smem:[%s4]]
  %s6 = scalar_lea.smem %s0, 3
  %s7 = sld [smem:[%s6]]
  %s8 = scalar_lea.smem %s0, 4
  %s9 = sld [smem:[%s8]]
  %s10 = scalar_lea.smem %s0, 5
  %s11 = sld [smem:[%s10]]
  %s12 = scalar_lea.smem %s0, 6
  %s13 = sld [smem:[%s12]]
  %s14 = scalar_lea.smem %s0, 7
  %s15 = sld [smem:[%s14]]
  %s16 = scalar_lea.smem %s0, 8
  %s17 = sld [smem:[%s16]]
  %s18 = scalar_lea.smem %s0, 9
  %s19 = sld [smem:[%s18]]
  %s20 = scalar_lea.smem %s0, 10
  %s21 = sld [smem:[%s20]]
  %s22 = scalar_lea.smem %s0, 11
  %s23 = sld [smem:[%s22]]
  %s24 = scalar_lea.smem %s0, 12
  %s25 = sld [smem:[%s24]]
  %s26 = scalar_lea.smem %s0, 13
  %s27 = sld [smem:[%s26]]
  %s28 = scalar_lea.smem %s0, 14
  %s29 = sld [smem:[%s28]]
  %s30 = scalar_lea.smem %s0, 15
  %s31 = sld [smem:[%s30]]
  %s32 = scalar_lea.smem %s0, 16
  %s33 = sld [smem:[%s32]]
  %s34 = scalar_lea.smem %s0, 17
  %s35 = sld [smem:[%s34]]
  %s36 = scalar_lea.smem %s0, 18
  %s37 = sld [smem:[%s36]]
  %s38 = scalar_lea.smem %s0, 19
  %s39 = sld [smem:[%s38]]
  %s40 = scalar_lea.smem %s0, 20
  %s41 = sld [smem:[%s40]]
  %s42 = scalar_lea.smem %s0, 21
  %s43 = sld [smem:[%s42]]
  %s44 = scalar_lea.smem %s0, 22
  %s45 = sld [smem:[%s44]]
  %s46 = scalar_lea.smem %s0, 23
  %s47 = sld [smem:[%s46]]
  %s48 = scalar_lea.smem %s0, 24
  %s49 = sld [smem:[%s48]]
  %s50 = scalar_lea.smem %s0, 25
  %s51 = sld [smem:[%s50]]
  %s52 = scalar_lea.smem %s0, 26
  %s53 = sld [smem:[%s52]]
  %s54 = scalar_lea.smem %s0, 27
  %s55 = sld [smem:[%s54]]
  %s56 = scalar_lea.smem %s0, 28
  %s57 = sld [smem:[%s56]]
  %s58 = scalar_lea.smem %s0, 29
  %s59 = sld [smem:[%s58]]
  %s60 = scalar_lea.smem %s0, 30
  %s61 = sld [smem:[%s60]]
  %s62 = scalar_lea.smem %s0, 31
  %s63 = sld [smem:[%s62]]
  %s64 = scalar_lea.smem %s0, 32
  %s65 = sld [smem:[%s64]]
  %s66 = scalar_lea.smem %s0, 33
  %s67 = sld [smem:[%s66]]
  %s68 = scalar_lea.smem %s0, 34
  %s69 = sld [smem:[%s68]]
  %s70 = scalar_lea.smem %s0, 35
  %s71 = sld [smem:[%s70]]
  %s72 = scalar_lea.smem %s0, 36
  %s73 = sld [smem:[%s72]]
  %s74 = scalar_lea.smem %s0, 37
  %s75 = sld [smem:[%s74]]
  %s76 = sld [smem:[#allocation0]]
  $region293: #{tpu_custom_call.1} parent=0
    _
  %s78 = ssub.s32 1, %s76
  %s79 = scalar_select 0, %s78, %s76
  $region1: #{tpu_custom_call.1} parent=0
    #allocation2 [shape = 'u8[16384]{0}', space=vmem, size = 0x4000, scoped, tag = 'input window, operand 0']
    #allocation3 [shape = 's32[2]{0}', space=sflag, size = 0x8, scoped, tag = 'scoped memory for tpu_custom_call.1']
    #allocation4 [shape = 's32[2]{0}', space=sflag, size = 0x8, scoped, tag = 'scoped memory for tpu_custom_call.1']
    #allocation5 [shape = 'u8[24576]{0}', space=vmem, size = 0x6000, scoped, tag = 'input window, operand 1, single buffered']
    #allocation6 [shape = 's32[1]{0}', space=sflag, size = 0x4, scoped, tag = 'scoped memory for tpu_custom_call.1']
    #allocation7 [shape = 'u8[24576]{0}', space=vmem, size = 0x6000, scoped, tag = 'input window, operand 2, single buffered']
    #allocation8 [shape = 'u8[12288]{0}', space=vmem, size = 0x3000, scoped, tag = 'input window, operand 4, single buffered']
    #allocation9 [shape = 's32[1]{0}', space=sflag, size = 0x4, scoped, tag = 'scoped memory for tpu_custom_call.1']
    #allocation10 [shape = 'u8[196608]{0}', space=vmem, size = 0x30000, scoped, tag = 'input window, operand 5, single buffered']
    #allocation11 [shape = 'u8[512]{0}', space=vmem, size = 0x400, scoped, tag = 'input window, operand 6, single buffered']
    #allocation12 [shape = 's32[1]{0}', space=sflag, size = 0x4, scoped, tag = 'scoped memory for tpu_custom_call.1']
    #allocation13 [shape = 'u8[12288]{0}', space=vmem, size = 0x3000, scoped, tag = 'input window, operand 7, single buffered']
    #allocation14 [shape = 'u8[196608]{0}', space=vmem, size = 0x30000, scoped, tag = 'input window, operand 8, single buffered']
    #allocation15 [shape = 's32[1]{0}', space=sflag, size = 0x4, scoped, tag = 'scoped memory for tpu_custom_call.1']
    #allocation16 [shape = 'u8[512]{0}', space=vmem, size = 0x400, scoped, tag = 'input window, operand 9, single buffered']
    #allocation17 [shape = 'u8[4096]{0}', space=vmem, size = 0x1000, scoped, tag = 'input window, operand 10, single buffered']
    #allocation18 [shape = 's32[1]{0}', space=sflag, size = 0x4, scoped, tag = 'scoped memory for tpu_custom_call.1']
    #allocation19 [shape = 'u8[65536]{0}', space=vmem, size = 0x10000, scoped, tag = 'input window, operand 11, single buffered']
    #allocation20 [shape = 'u8[512]{0}', space=vmem, size = 0x400, scoped, tag = 'input window, operand 12, single buffered']
    #allocation21 [shape = 's32[1]{0}', space=sflag, size = 0x4, scoped, tag = 'scoped memory for tpu_custom_call.1']
    #allocation22 [shape = 'u8[6144]{0}', space=vmem, size = 0x1800, scoped, tag = 'input window, operand 13, single buffered']
    #allocation23 [shape = 'u8[512]{0}', space=vmem, size = 0x400, scoped, tag = 'input window, operand 15, single buffered']
    #allocation24 [shape = 's32[1]{0}', space=sflag, size = 0x4, scoped, tag = 'scoped memory for tpu_custom_call.1']
    #allocation25 [shape = 'u8[6144]{0}', space=vmem, size = 0x1800, scoped, tag = 'input window, operand 16, single buffered']
    #allocation26 [shape = 'u8[196608]{0}', space=vmem, size = 0x30000, scoped, tag = 'input window, operand 17, single buffered']
    #allocation27 [shape = 's32[1]{0}', space=sflag, size = 0x4, scoped, tag = 'scoped memory for tpu_custom_call.1']
    #allocation28 [shape = 'u8[512]{0}', space=vmem, size = 0x400, scoped, tag = 'input window, operand 18, single buffered']
    #allocation29 [shape = 'u8[2048]{0}', space=vmem, size = 0x800, scoped, tag = 'input window, operand 19, single buffered']
    #allocation30 [shape = 's32[1]{0}', space=sflag, size = 0x4, scoped, tag = 'scoped memory for tpu_custom_call.1']
    #allocation31 [shape = 'u8[65536]{0}', space=vmem, size = 0x10000, scoped, tag = 'input window, operand 20, single buffered']
    #allocation32 [shape = 'u8[512]{0}', space=vmem, size = 0x400, scoped, tag = 'input window, operand 21, single buffered']
    #allocation33 [shape = 's32[1]{0}', space=sflag, size = 0x4, scoped, tag = 'scoped memory for tpu_custom_call.1']
    #allocation34 [shape = 'u8[3072]{0}', space=vmem, size = 0xc00, scoped, tag = 'input window, operand 22, single buffered']
    #allocation35 [shape = 'u8[196608]{0}', space=vmem, size = 0x30000, scoped, tag = 'input window, operand 23, single buffered']
    #allocation36 [shape = 's32[1]{0}', space=sflag, size = 0x4, scoped, tag = 'scoped memory for tpu_custom_call.1']
    #allocation37 [shape = 'u8[512]{0}', space=vmem, size = 0x400, scoped, tag = 'input window, operand 24, single buffered']
    #allocation38 [shape = 'u8[196608]{0}', space=vmem, size = 0x30000, scoped, tag = 'input window, operand 26, single buffered']
    #allocation39 [shape = 's32[1]{0}', space=sflag, size = 0x4, scoped, tag = 'scoped memory for tpu_custom_call.1']
    #allocation40 [shape = 'u8[512]{0}', space=vmem, size = 0x400, scoped, tag = 'input window, operand 27, single buffered']
    #allocation41 [shape = 'u8[65536]{0}', space=vmem, size = 0x10000, scoped, tag = 'input window, operand 29, single buffered']
    #allocation42 [shape = 's32[1]{0}', space=sflag, size = 0x4, scoped, tag = 'scoped memory for tpu_custom_call.1']
    #allocation43 [shape = 'u8[512]{0}', space=vmem, size = 0x400, scoped, tag = 'input window, operand 30, single buffered']
    #allocation44 [shape = 'u8[512]{0}', space=vmem, size = 0x400, scoped, tag = 'input window, operand 31, single buffered']
    #allocation45 [shape = 's32[1]{0}', space=sflag, size = 0x4, scoped, tag = 'scoped memory for tpu_custom_call.1']
    #allocation46 [shape = 'u8[1024]{0}', space=vmem, size = 0x400, scoped, tag = 'output window, operand 0']
    %80 = vsyncpa [#allocation3], 0
    %s81 = scalar_lea.sflag [#allocation3], 1
    %82 = vsyncpa %s81, 0
    %83 = vsyncpa [#allocation6], 0
    %84 = vsyncpa [#allocation9], 0
    %85 = vsyncpa [#allocation12], 0
    %86 = vsyncpa [#allocation15], 0
    %87 = vsyncpa [#allocation18], 0
    %88 = vsyncpa [#allocation21], 0
    %89 = vsyncpa [#allocation24], 0
    %90 = vsyncpa [#allocation27], 0
    %91 = vsyncpa [#allocation30], 0
    %92 = vsyncpa [#allocation33], 0
    %93 = vsyncpa [#allocation36], 0
    %94 = vsyncpa [#allocation39], 0
    %95 = vsyncpa [#allocation42], 0
    %96 = vsyncpa [#allocation45], 0
    %97 = vsyncpa [#allocation4], 0
    %s98 = scalar_lea.sflag [#allocation4], 1
    %99 = vsyncpa %s98, 0
    loop: start=0, step=1, limit=4
    $region2: #{tpu_custom_call.1} parent=1 // loop_pre_header
      _
    $region3: #{tpu_custom_call.1} parent=1 // loop_header
      %s101 = sphi 0, %s105
      %p102 = scmp.ge.s32.totalorder %s101, 4
      %s111 = sphi 0, %s113
      %s114 = sphi 0, %s111
      %s115 = sphi 0, %s114
      %s131 = sphi 0, %s115
      %s135 = sphi 0, %s135
      %s137 = sphi 0, %s135
      %s138 = sphi 0, %s137
      %s152 = sphi 0, %s138
      %s156 = sphi 0, %s156
      %s158 = sphi 0, %s156
      %s159 = sphi 0, %s158
      %s173 = sphi 0, %s159
      %s177 = sphi 0, %s177
      %s179 = sphi 0, %s177
      %s180 = sphi 0, %s179
      %s194 = sphi 0, %s180
      %s198 = sphi 0, %s198
      %s200 = sphi 0, %s198
      %s201 = sphi 0, %s200
      %s215 = sphi 0, %s201
      %s219 = sphi 0, %s219
      %s221 = sphi 0, %s219
      %s222 = sphi 0, %s221
      %s236 = sphi 0, %s222
      %s240 = sphi 0, %s240
      %s242 = sphi 0, %s240
      %s243 = sphi 0, %s242
      %s257 = sphi 0, %s243
      %s261 = sphi 0, %s261
      %s263 = sphi 0, %s261
      %s264 = sphi 0, %s263
      %s278 = sphi 0, %s264
      %s282 = sphi 0, %s282
      %s284 = sphi 0, %s282
      %s285 = sphi 0, %s284
      %s299 = sphi 0, %s285
      %s303 = sphi 0, %s303
      %s305 = sphi 0, %s303
      %s306 = sphi 0, %s305
      %s320 = sphi 0, %s306
      %s324 = sphi 0, %s324
      %s326 = sphi 0, %s324
      %s327 = sphi 0, %s326
      %s341 = sphi 0, %s327
      %s345 = sphi 0, %s345
      %s347 = sphi 0, %s345
      %s348 = sphi 0, %s347
      %s362 = sphi 0, %s348
      %s366 = sphi 0, %s366
      %s368 = sphi 0, %s366
      %s369 = sphi 0, %s368
      %s383 = sphi 0, %s369
      %s387 = sphi 0, %s387
      %s389 = sphi 0, %s387
      %s390 = sphi 0, %s389
      %s404 = sphi 0, %s390
      %s408 = sphi 0, %s408
      %s410 = sphi 0, %s408
      %s411 = sphi 0, %s410
      %s425 = sphi 0, %s411
      %s429 = sphi 0, %s429
      %s431 = sphi 0, %s429
      %s432 = sphi 0, %s431
      %s446 = sphi 0, %s432
      %s450 = sphi 0, %s450
      %s452 = sphi 0, %s450
      %s453 = sphi 0, %s452
      %s467 = sphi 0, %s453
      %s471 = sphi 0, %s471
      %s473 = sphi 0, %s471
      %s474 = sphi 0, %s473
      %s488 = sphi 0, %s474
      %s492 = sphi 0, %s492
      %s494 = sphi 0, %s492
      %s495 = sphi 0, %s494
      %s509 = sphi 0, %s495
      %s513 = sphi 0, %s513
      %s515 = sphi 0, %s513
      %s516 = sphi 0, %s515
      %s530 = sphi 0, %s516
      %s534 = sphi 0, %s534
      %s536 = sphi 0, %s534
      %s537 = sphi 0, %s536
      %s551 = sphi 0, %s537
      %s555 = sphi 0, %s555
      %s557 = sphi 0, %s555
      %s558 = sphi 0, %s557
      %s572 = sphi 0, %s558
      %s576 = sphi 0, %s576
      %s578 = sphi 0, %s576
      %s579 = sphi 0, %s578
      %s593 = sphi 0, %s579
      %s597 = sphi 0, %s597
      %s599 = sphi 0, %s597
      %s600 = sphi 0, %s599
      %s614 = sphi 0, %s600
      %s618 = sphi 0, %s618
      %s620 = sphi 0, %s618
      %s621 = sphi 0, %s620
      %s635 = sphi 0, %s621
      %s639 = sphi 0, %s639
      %s641 = sphi 0, %s639
      %s642 = sphi 0, %s641
      %s656 = sphi 0, %s642
      %s660 = sphi 0, %s660
      %s662 = sphi 0, %s660
      %s663 = sphi 0, %s662
      %s677 = sphi 0, %s663
      %s681 = sphi 0, %s681
      %s683 = sphi 0, %s681
      %s684 = sphi 0, %s683
      %s698 = sphi 0, %s684
      %s702 = sphi 0, %s702
      %s704 = sphi 0, %s702
      %s705 = sphi 0, %s704
      %s719 = sphi 0, %s705
      %s723 = sphi 0, %s723
      %s725 = sphi 0, %s723
      %s726 = sphi 0, %s725
      %s740 = sphi 0, %s726
      %s744 = sphi 0, %s744
      %s746 = sphi 0, %s744
      %s747 = sphi 0, %s746
      %s761 = sphi 0, %s747
      %s765 = sphi 0, %s765
      %s767 = sphi 0, %s765
      %s768 = sphi 0, %s767
      %s782 = sphi 0, %s768
      %s786 = sphi 0, %s786
      %s788 = sphi 0, %s786
      %s789 = sphi 0, %s788
      %s803 = sphi 0, %s789
      %s807 = sphi 0, %s807
      %s809 = sphi 0, %s807
      %s810 = sphi 0, %s809
      %s824 = sphi 0, %s810
      %s828 = sphi 0, %s828
      %s830 = sphi 0, %s828
      %s831 = sphi 0, %s830
      %s845 = sphi 0, %s831
      %s849 = sphi 0, %s849
      %s851 = sphi 0, %s849
      %s852 = sphi 0, %s851
      %s866 = sphi 0, %s852
      %s870 = sphi 0, %s870
      %s872 = sphi 0, %s870
      %s873 = sphi 0, %s872
      %s887 = sphi 0, %s873
      %s893 = sphi 0, %s895
      %s896 = sphi 0, %s893
      %s897 = sphi 0, %s896
      %s913 = sphi 0, %s897
    $region4: #{tpu_custom_call.1} parent=1 // loop_header_branch
      %104 = sbr.rel (%p102) target = $region8
    $region5: #{tpu_custom_call.1} parent=1 // loop_body
      %s106 = ssub.s32 %s101, 1
      %s107 = ssub.s32 %s101, 2
      %s108 = sadd.s32 %s101, 1
      %s109 = ssub.s32 %s101, %s108
      %p110 = scmp.eq.s32.totalorder %s109, 0
      %s112 = sadd.s32 %s111, 1
      %s113 = scalar_select %p110, %s111, %s112
      %p116 = pneg %p110
      %p117 = scmp.eq.s32.totalorder %s101, 1
      %p118 = por %p116, %p117
      %p119 = scmp.ne.s32.totalorder %s111, %s114
      %p120 = scmp.eq.s32.totalorder %s101, 0
      %p121 = por %p119, %p120
      %p122 = scmp.ne.s32.totalorder %s111, %s114
      %p123 = scmp.eq.s32.totalorder %s106, 1
      %p124 = por %p122, %p123
      %p125 = scmp.ne.s32.totalorder %s114, %s115
      %p126 = scmp.eq.s32.totalorder %s106, 0
      %p127 = por %p125, %p126
      %p128 = scmp.ne.s32.totalorder %s114, %s115
      %p129 = scmp.eq.s32.totalorder %s107, 1
      %p130 = por %p128, %p129
      %p132 = scmp.ne.s32.totalorder %s115, %s131
      %p133 = scmp.eq.s32.totalorder %s107, 0
      %p134 = por %p132, %p133
      %s136 = sadd.s32 %s135, 1
      %p139 = scmp.eq.s32.totalorder %s101, 1
      %p140 = scmp.ne.s32.totalorder %s135, %s137
      %p141 = scmp.eq.s32.totalorder %s101, 0
      %p142 = por %p140, %p141
      %p143 = scmp.ne.s32.totalorder %s135, %s137
      %p144 = scmp.eq.s32.totalorder %s106, 1
      %p145 = por %p143, %p144
      %p146 = scmp.ne.s32.totalorder %s137, %s138
      %p147 = scmp.eq.s32.totalorder %s106, 0
      %p148 = por %p146, %p147
      %p149 = scmp.ne.s32.totalorder %s137, %s138
      %p150 = scmp.eq.s32.totalorder %s107, 1
      %p151 = por %p149, %p150
      %p153 = scmp.ne.s32.totalorder %s138, %s152
      %p154 = scmp.eq.s32.totalorder %s107, 0
      %p155 = por %p153, %p154
      %s157 = sadd.s32 %s156, 1
      %p160 = scmp.eq.s32.totalorder %s101, 1
      %p161 = scmp.ne.s32.totalorder %s156, %s158
      %p162 = scmp.eq.s32.totalorder %s101, 0
      %p163 = por %p161, %p162
      %p164 = scmp.ne.s32.totalorder %s156, %s158
      %p165 = scmp.eq.s32.totalorder %s106, 1
      %p166 = por %p164, %p165
      %p167 = scmp.ne.s32.totalorder %s158, %s159
      %p168 = scmp.eq.s32.totalorder %s106, 0
      %p169 = por %p167, %p168
      %p170 = scmp.ne.s32.totalorder %s158, %s159
      %p171 = scmp.eq.s32.totalorder %s107, 1
      %p172 = por %p170, %p171
      %p174 = scmp.ne.s32.totalorder %s159, %s173
      %p175 = scmp.eq.s32.totalorder %s107, 0
      %p176 = por %p174, %p175
      %s178 = sadd.s32 %s177, 1
      %p181 = scmp.eq.s32.totalorder %s101, 1
      %p182 = scmp.ne.s32.totalorder %s177, %s179
      %p183 = scmp.eq.s32.totalorder %s101, 0
      %p184 = por %p182, %p183
      %p185 = scmp.ne.s32.totalorder %s177, %s179
      %p186 = scmp.eq.s32.totalorder %s106, 1
      %p187 = por %p185, %p186
      %p188 = scmp.ne.s32.totalorder %s179, %s180
      %p189 = scmp.eq.s32.totalorder %s106, 0
      %p190 = por %p188, %p189
      %p191 = scmp.ne.s32.totalorder %s179, %s180
      %p192 = scmp.eq.s32.totalorder %s107, 1
      %p193 = por %p191, %p192
      %p195 = scmp.ne.s32.totalorder %s180, %s194
      %p196 = scmp.eq.s32.totalorder %s107, 0
      %p197 = por %p195, %p196
      %s199 = sadd.s32 %s198, 1
      %p202 = scmp.eq.s32.totalorder %s101, 1
      %p203 = scmp.ne.s32.totalorder %s198, %s200
      %p204 = scmp.eq.s32.totalorder %s101, 0
      %p205 = por %p203, %p204
      %p206 = scmp.ne.s32.totalorder %s198, %s200
      %p207 = scmp.eq.s32.totalorder %s106, 1
      %p208 = por %p206, %p207
      %p209 = scmp.ne.s32.totalorder %s200, %s201
      %p210 = scmp.eq.s32.totalorder %s106, 0
      %p211 = por %p209, %p210
      %p212 = scmp.ne.s32.totalorder %s200, %s201
      %p213 = scmp.eq.s32.totalorder %s107, 1
      %p214 = por %p212, %p213
      %p216 = scmp.ne.s32.totalorder %s201, %s215
      %p217 = scmp.eq.s32.totalorder %s107, 0
      %p218 = por %p216, %p217
      %s220 = sadd.s32 %s219, 1
      %p223 = scmp.eq.s32.totalorder %s101, 1
      %p224 = scmp.ne.s32.totalorder %s219, %s221
      %p225 = scmp.eq.s32.totalorder %s101, 0
      %p226 = por %p224, %p225
      %p227 = scmp.ne.s32.totalorder %s219, %s221
      %p228 = scmp.eq.s32.totalorder %s106, 1
      %p229 = por %p227, %p228
      %p230 = scmp.ne.s32.totalorder %s221, %s222
      %p231 = scmp.eq.s32.totalorder %s106, 0
      %p232 = por %p230, %p231
      %p233 = scmp.ne.s32.totalorder %s221, %s222
      %p234 = scmp.eq.s32.totalorder %s107, 1
      %p235 = por %p233, %p234
      %p237 = scmp.ne.s32.totalorder %s222, %s236
      %p238 = scmp.eq.s32.totalorder %s107, 0
      %p239 = por %p237, %p238
      %s241 = sadd.s32 %s240, 1
      %p244 = scmp.eq.s32.totalorder %s101, 1
      %p245 = scmp.ne.s32.totalorder %s240, %s242
      %p246 = scmp.eq.s32.totalorder %s101, 0
      %p247 = por %p245, %p246
      %p248 = scmp.ne.s32.totalorder %s240, %s242
      %p249 = scmp.eq.s32.totalorder %s106, 1
      %p250 = por %p248, %p249
      %p251 = scmp.ne.s32.totalorder %s242, %s243
      %p252 = scmp.eq.s32.totalorder %s106, 0
      %p253 = por %p251, %p252
      %p254 = scmp.ne.s32.totalorder %s242, %s243
      %p255 = scmp.eq.s32.totalorder %s107, 1
      %p256 = por %p254, %p255
      %p258 = scmp.ne.s32.totalorder %s243, %s257
      %p259 = scmp.eq.s32.totalorder %s107, 0
      %p260 = por %p258, %p259
      %s262 = sadd.s32 %s261, 1
      %p265 = scmp.eq.s32.totalorder %s101, 1
      %p266 = scmp.ne.s32.totalorder %s261, %s263
      %p267 = scmp.eq.s32.totalorder %s101, 0
      %p268 = por %p266, %p267
      %p269 = scmp.ne.s32.totalorder %s261, %s263
      %p270 = scmp.eq.s32.totalorder %s106, 1
      %p271 = por %p269, %p270
      %p272 = scmp.ne.s32.totalorder %s263, %s264
      %p273 = scmp.eq.s32.totalorder %s106, 0
      %p274 = por %p272, %p273
      %p275 = scmp.ne.s32.totalorder %s263, %s264
      %p276 = scmp.eq.s32.totalorder %s107, 1
      %p277 = por %p275, %p276
      %p279 = scmp.ne.s32.totalorder %s264, %s278
      %p280 = scmp.eq.s32.totalorder %s107, 0
      %p281 = por %p279, %p280
      %s283 = sadd.s32 %s282, 1
      %p286 = scmp.eq.s32.totalorder %s101, 1
      %p287 = scmp.ne.s32.totalorder %s282, %s284
      %p288 = scmp.eq.s32.totalorder %s101, 0
      %p289 = por %p287, %p288
      %p290 = scmp.ne.s32.totalorder %s282, %s284
      %p291 = scmp.eq.s32.totalorder %s106, 1
      %p292 = por %p290, %p291
      %p293 = scmp.ne.s32.totalorder %s284, %s285
      %p294 = scmp.eq.s32.totalorder %s106, 0
      %p295 = por %p293, %p294
      %p296 = scmp.ne.s32.totalorder %s284, %s285
      %p297 = scmp.eq.s32.totalorder %s107, 1
      %p298 = por %p296, %p297
      %p300 = scmp.ne.s32.totalorder %s285, %s299
      %p301 = scmp.eq.s32.totalorder %s107, 0
      %p302 = por %p300, %p301
      %s304 = sadd.s32 %s303, 1
      %p307 = scmp.eq.s32.totalorder %s101, 1
      %p308 = scmp.ne.s32.totalorder %s303, %s305
      %p309 = scmp.eq.s32.totalorder %s101, 0
      %p310 = por %p308, %p309
      %p311 = scmp.ne.s32.totalorder %s303, %s305
      %p312 = scmp.eq.s32.totalorder %s106, 1
      %p313 = por %p311, %p312
      %p314 = scmp.ne.s32.totalorder %s305, %s306
      %p315 = scmp.eq.s32.totalorder %s106, 0
      %p316 = por %p314, %p315
      %p317 = scmp.ne.s32.totalorder %s305, %s306
      %p318 = scmp.eq.s32.totalorder %s107, 1
      %p319 = por %p317, %p318
      %p321 = scmp.ne.s32.totalorder %s306, %s320
      %p322 = scmp.eq.s32.totalorder %s107, 0
      %p323 = por %p321, %p322
      %s325 = sadd.s32 %s324, 1
      %p328 = scmp.eq.s32.totalorder %s101, 1
      %p329 = scmp.ne.s32.totalorder %s324, %s326
      %p330 = scmp.eq.s32.totalorder %s101, 0
      %p331 = por %p329, %p330
      %p332 = scmp.ne.s32.totalorder %s324, %s326
      %p333 = scmp.eq.s32.totalorder %s106, 1
      %p334 = por %p332, %p333
      %p335 = scmp.ne.s32.totalorder %s326, %s327
      %p336 = scmp.eq.s32.totalorder %s106, 0
      %p337 = por %p335, %p336
      %p338 = scmp.ne.s32.totalorder %s326, %s327
      %p339 = scmp.eq.s32.totalorder %s107, 1
      %p340 = por %p338, %p339
      %p342 = scmp.ne.s32.totalorder %s327, %s341
      %p343 = scmp.eq.s32.totalorder %s107, 0
      %p344 = por %p342, %p343
      %s346 = sadd.s32 %s345, 1
      %p349 = scmp.eq.s32.totalorder %s101, 1
      %p350 = scmp.ne.s32.totalorder %s345, %s347
      %p351 = scmp.eq.s32.totalorder %s101, 0
      %p352 = por %p350, %p351
      %p353 = scmp.ne.s32.totalorder %s345, %s347
      %p354 = scmp.eq.s32.totalorder %s106, 1
      %p355 = por %p353, %p354
      %p356 = scmp.ne.s32.totalorder %s347, %s348
      %p357 = scmp.eq.s32.totalorder %s106, 0
      %p358 = por %p356, %p357
      %p359 = scmp.ne.s32.totalorder %s347, %s348
      %p360 = scmp.eq.s32.totalorder %s107, 1
      %p361 = por %p359, %p360
      %p363 = scmp.ne.s32.totalorder %s348, %s362
      %p364 = scmp.eq.s32.totalorder %s107, 0
      %p365 = por %p363, %p364
      %s367 = sadd.s32 %s366, 1
      %p370 = scmp.eq.s32.totalorder %s101, 1
      %p371 = scmp.ne.s32.totalorder %s366, %s368
      %p372 = scmp.eq.s32.totalorder %s101, 0
      %p373 = por %p371, %p372
      %p374 = scmp.ne.s32.totalorder %s366, %s368
      %p375 = scmp.eq.s32.totalorder %s106, 1
      %p376 = por %p374, %p375
      %p377 = scmp.ne.s32.totalorder %s368, %s369
      %p378 = scmp.eq.s32.totalorder %s106, 0
      %p379 = por %p377, %p378
      %p380 = scmp.ne.s32.totalorder %s368, %s369
      %p381 = scmp.eq.s32.totalorder %s107, 1
      %p382 = por %p380, %p381
      %p384 = scmp.ne.s32.totalorder %s369, %s383
      %p385 = scmp.eq.s32.totalorder %s107, 0
      %p386 = por %p384, %p385
      %s388 = sadd.s32 %s387, 1
      %p391 = scmp.eq.s32.totalorder %s101, 1
      %p392 = scmp.ne.s32.totalorder %s387, %s389
      %p393 = scmp.eq.s32.totalorder %s101, 0
      %p394 = por %p392, %p393
      %p395 = scmp.ne.s32.totalorder %s387, %s389
      %p396 = scmp.eq.s32.totalorder %s106, 1
      %p397 = por %p395, %p396
      %p398 = scmp.ne.s32.totalorder %s389, %s390
      %p399 = scmp.eq.s32.totalorder %s106, 0
      %p400 = por %p398, %p399
      %p401 = scmp.ne.s32.totalorder %s389, %s390
      %p402 = scmp.eq.s32.totalorder %s107, 1
      %p403 = por %p401, %p402
      %p405 = scmp.ne.s32.totalorder %s390, %s404
      %p406 = scmp.eq.s32.totalorder %s107, 0
      %p407 = por %p405, %p406
      %s409 = sadd.s32 %s408, 1
      %p412 = scmp.eq.s32.totalorder %s101, 1
      %p413 = scmp.ne.s32.totalorder %s408, %s410
      %p414 = scmp.eq.s32.totalorder %s101, 0
      %p415 = por %p413, %p414
      %p416 = scmp.ne.s32.totalorder %s408, %s410
      %p417 = scmp.eq.s32.totalorder %s106, 1
      %p418 = por %p416, %p417
      %p419 = scmp.ne.s32.totalorder %s410, %s411
      %p420 = scmp.eq.s32.totalorder %s106, 0
      %p421 = por %p419, %p420
      %p422 = scmp.ne.s32.totalorder %s410, %s411
      %p423 = scmp.eq.s32.totalorder %s107, 1
      %p424 = por %p422, %p423
      %p426 = scmp.ne.s32.totalorder %s411, %s425
      %p427 = scmp.eq.s32.totalorder %s107, 0
      %p428 = por %p426, %p427
      %s430 = sadd.s32 %s429, 1
      %p433 = scmp.eq.s32.totalorder %s101, 1
      %p434 = scmp.ne.s32.totalorder %s429, %s431
      %p435 = scmp.eq.s32.totalorder %s101, 0
      %p436 = por %p434, %p435
      %p437 = scmp.ne.s32.totalorder %s429, %s431
      %p438 = scmp.eq.s32.totalorder %s106, 1
      %p439 = por %p437, %p438
      %p440 = scmp.ne.s32.totalorder %s431, %s432
      %p441 = scmp.eq.s32.totalorder %s106, 0
      %p442 = por %p440, %p441
      %p443 = scmp.ne.s32.totalorder %s431, %s432
      %p444 = scmp.eq.s32.totalorder %s107, 1
      %p445 = por %p443, %p444
      %p447 = scmp.ne.s32.totalorder %s432, %s446
      %p448 = scmp.eq.s32.totalorder %s107, 0
      %p449 = por %p447, %p448
      %s451 = sadd.s32 %s450, 1
      %p454 = scmp.eq.s32.totalorder %s101, 1
      %p455 = scmp.ne.s32.totalorder %s450, %s452
      %p456 = scmp.eq.s32.totalorder %s101, 0
      %p457 = por %p455, %p456
      %p458 = scmp.ne.s32.totalorder %s450, %s452
      %p459 = scmp.eq.s32.totalorder %s106, 1
      %p460 = por %p458, %p459
      %p461 = scmp.ne.s32.totalorder %s452, %s453
      %p462 = scmp.eq.s32.totalorder %s106, 0
      %p463 = por %p461, %p462
      %p464 = scmp.ne.s32.totalorder %s452, %s453
      %p465 = scmp.eq.s32.totalorder %s107, 1
      %p466 = por %p464, %p465
      %p468 = scmp.ne.s32.totalorder %s453, %s467
      %p469 = scmp.eq.s32.totalorder %s107, 0
      %p470 = por %p468, %p469
      %s472 = sadd.s32 %s471, 1
      %p475 = scmp.eq.s32.totalorder %s101, 1
      %p476 = scmp.ne.s32.totalorder %s471, %s473
      %p477 = scmp.eq.s32.totalorder %s101, 0
      %p478 = por %p476, %p477
      %p479 = scmp.ne.s32.totalorder %s471, %s473
      %p480 = scmp.eq.s32.totalorder %s106, 1
      %p481 = por %p479, %p480
      %p482 = scmp.ne.s32.totalorder %s473, %s474
      %p483 = scmp.eq.s32.totalorder %s106, 0
      %p484 = por %p482, %p483
      %p485 = scmp.ne.s32.totalorder %s473, %s474
      %p486 = scmp.eq.s32.totalorder %s107, 1
      %p487 = por %p485, %p486
      %p489 = scmp.ne.s32.totalorder %s474, %s488
      %p490 = scmp.eq.s32.totalorder %s107, 0
      %p491 = por %p489, %p490
      %s493 = sadd.s32 %s492, 1
      %p496 = scmp.eq.s32.totalorder %s101, 1
      %p497 = scmp.ne.s32.totalorder %s492, %s494
      %p498 = scmp.eq.s32.totalorder %s101, 0
      %p499 = por %p497, %p498
      %p500 = scmp.ne.s32.totalorder %s492, %s494
      %p501 = scmp.eq.s32.totalorder %s106, 1
      %p502 = por %p500, %p501
      %p503 = scmp.ne.s32.totalorder %s494, %s495
      %p504 = scmp.eq.s32.totalorder %s106, 0
      %p505 = por %p503, %p504
      %p506 = scmp.ne.s32.totalorder %s494, %s495
      %p507 = scmp.eq.s32.totalorder %s107, 1
      %p508 = por %p506, %p507
      %p510 = scmp.ne.s32.totalorder %s495, %s509
      %p511 = scmp.eq.s32.totalorder %s107, 0
      %p512 = por %p510, %p511
      %s514 = sadd.s32 %s513, 1
      %p517 = scmp.eq.s32.totalorder %s101, 1
      %p518 = scmp.ne.s32.totalorder %s513, %s515
      %p519 = scmp.eq.s32.totalorder %s101, 0
      %p520 = por %p518, %p519
      %p521 = scmp.ne.s32.totalorder %s513, %s515
      %p522 = scmp.eq.s32.totalorder %s106, 1
      %p523 = por %p521, %p522
      %p524 = scmp.ne.s32.totalorder %s515, %s516
      %p525 = scmp.eq.s32.totalorder %s106, 0
      %p526 = por %p524, %p525
      %p527 = scmp.ne.s32.totalorder %s515, %s516
      %p528 = scmp.eq.s32.totalorder %s107, 1
      %p529 = por %p527, %p528
      %p531 = scmp.ne.s32.totalorder %s516, %s530
      %p532 = scmp.eq.s32.totalorder %s107, 0
      %p533 = por %p531, %p532
      %s535 = sadd.s32 %s534, 1
      %p538 = scmp.eq.s32.totalorder %s101, 1
      %p539 = scmp.ne.s32.totalorder %s534, %s536
      %p540 = scmp.eq.s32.totalorder %s101, 0
      %p541 = por %p539, %p540
      %p542 = scmp.ne.s32.totalorder %s534, %s536
      %p543 = scmp.eq.s32.totalorder %s106, 1
      %p544 = por %p542, %p543
      %p545 = scmp.ne.s32.totalorder %s536, %s537
      %p546 = scmp.eq.s32.totalorder %s106, 0
      %p547 = por %p545, %p546
      %p548 = scmp.ne.s32.totalorder %s536, %s537
      %p549 = scmp.eq.s32.totalorder %s107, 1
      %p550 = por %p548, %p549
      %p552 = scmp.ne.s32.totalorder %s537, %s551
      %p553 = scmp.eq.s32.totalorder %s107, 0
      %p554 = por %p552, %p553
      %s556 = sadd.s32 %s555, 1
      %p559 = scmp.eq.s32.totalorder %s101, 1
      %p560 = scmp.ne.s32.totalorder %s555, %s557
      %p561 = scmp.eq.s32.totalorder %s101, 0
      %p562 = por %p560, %p561
      %p563 = scmp.ne.s32.totalorder %s555, %s557
      %p564 = scmp.eq.s32.totalorder %s106, 1
      %p565 = por %p563, %p564
      %p566 = scmp.ne.s32.totalorder %s557, %s558
      %p567 = scmp.eq.s32.totalorder %s106, 0
      %p568 = por %p566, %p567
      %p569 = scmp.ne.s32.totalorder %s557, %s558
      %p570 = scmp.eq.s32.totalorder %s107, 1
      %p571 = por %p569, %p570
      %p573 = scmp.ne.s32.totalorder %s558, %s572
      %p574 = scmp.eq.s32.totalorder %s107, 0
      %p575 = por %p573, %p574
      %s577 = sadd.s32 %s576, 1
      %p580 = scmp.eq.s32.totalorder %s101, 1
      %p581 = scmp.ne.s32.totalorder %s576, %s578
      %p582 = scmp.eq.s32.totalorder %s101, 0
      %p583 = por %p581, %p582
      %p584 = scmp.ne.s32.totalorder %s576, %s578
      %p585 = scmp.eq.s32.totalorder %s106, 1
      %p586 = por %p584, %p585
      %p587 = scmp.ne.s32.totalorder %s578, %s579
      %p588 = scmp.eq.s32.totalorder %s106, 0
      %p589 = por %p587, %p588
      %p590 = scmp.ne.s32.totalorder %s578, %s579
      %p591 = scmp.eq.s32.totalorder %s107, 1
      %p592 = por %p590, %p591
      %p594 = scmp.ne.s32.totalorder %s579, %s593
      %p595 = scmp.eq.s32.totalorder %s107, 0
      %p596 = por %p594, %p595
      %s598 = sadd.s32 %s597, 1
      %p601 = scmp.eq.s32.totalorder %s101, 1
      %p602 = scmp.ne.s32.totalorder %s597, %s599
      %p603 = scmp.eq.s32.totalorder %s101, 0
      %p604 = por %p602, %p603
      %p605 = scmp.ne.s32.totalorder %s597, %s599
      %p606 = scmp.eq.s32.totalorder %s106, 1
      %p607 = por %p605, %p606
      %p608 = scmp.ne.s32.totalorder %s599, %s600
      %p609 = scmp.eq.s32.totalorder %s106, 0
      %p610 = por %p608, %p609
      %p611 = scmp.ne.s32.totalorder %s599, %s600
      %p612 = scmp.eq.s32.totalorder %s107, 1
      %p613 = por %p611, %p612
      %p615 = scmp.ne.s32.totalorder %s600, %s614
      %p616 = scmp.eq.s32.totalorder %s107, 0
      %p617 = por %p615, %p616
      %s619 = sadd.s32 %s618, 1
      %p622 = scmp.eq.s32.totalorder %s101, 1
      %p623 = scmp.ne.s32.totalorder %s618, %s620
      %p624 = scmp.eq.s32.totalorder %s101, 0
      %p625 = por %p623, %p624
      %p626 = scmp.ne.s32.totalorder %s618, %s620
      %p627 = scmp.eq.s32.totalorder %s106, 1
      %p628 = por %p626, %p627
      %p629 = scmp.ne.s32.totalorder %s620, %s621
      %p630 = scmp.eq.s32.totalorder %s106, 0
      %p631 = por %p629, %p630
      %p632 = scmp.ne.s32.totalorder %s620, %s621
      %p633 = scmp.eq.s32.totalorder %s107, 1
      %p634 = por %p632, %p633
      %p636 = scmp.ne.s32.totalorder %s621, %s635
      %p637 = scmp.eq.s32.totalorder %s107, 0
      %p638 = por %p636, %p637
      %s640 = sadd.s32 %s639, 1
      %p643 = scmp.eq.s32.totalorder %s101, 1
      %p644 = scmp.ne.s32.totalorder %s639, %s641
      %p645 = scmp.eq.s32.totalorder %s101, 0
      %p646 = por %p644, %p645
      %p647 = scmp.ne.s32.totalorder %s639, %s641
      %p648 = scmp.eq.s32.totalorder %s106, 1
      %p649 = por %p647, %p648
      %p650 = scmp.ne.s32.totalorder %s641, %s642
      %p651 = scmp.eq.s32.totalorder %s106, 0
      %p652 = por %p650, %p651
      %p653 = scmp.ne.s32.totalorder %s641, %s642
      %p654 = scmp.eq.s32.totalorder %s107, 1
      %p655 = por %p653, %p654
      %p657 = scmp.ne.s32.totalorder %s642, %s656
      %p658 = scmp.eq.s32.totalorder %s107, 0
      %p659 = por %p657, %p658
      %s661 = sadd.s32 %s660, 1
      %p664 = scmp.eq.s32.totalorder %s101, 1
      %p665 = scmp.ne.s32.totalorder %s660, %s662
      %p666 = scmp.eq.s32.totalorder %s101, 0
      %p667 = por %p665, %p666
      %p668 = scmp.ne.s32.totalorder %s660, %s662
      %p669 = scmp.eq.s32.totalorder %s106, 1
      %p670 = por %p668, %p669
      %p671 = scmp.ne.s32.totalorder %s662, %s663
      %p672 = scmp.eq.s32.totalorder %s106, 0
      %p673 = por %p671, %p672
      %p674 = scmp.ne.s32.totalorder %s662, %s663
      %p675 = scmp.eq.s32.totalorder %s107, 1
      %p676 = por %p674, %p675
      %p678 = scmp.ne.s32.totalorder %s663, %s677
      %p679 = scmp.eq.s32.totalorder %s107, 0
      %p680 = por %p678, %p679
      %s682 = sadd.s32 %s681, 1
      %p685 = scmp.eq.s32.totalorder %s101, 1
      %p686 = scmp.ne.s32.totalorder %s681, %s683
      %p687 = scmp.eq.s32.totalorder %s101, 0
      %p688 = por %p686, %p687
      %p689 = scmp.ne.s32.totalorder %s681, %s683
      %p690 = scmp.eq.s32.totalorder %s106, 1
      %p691 = por %p689, %p690
      %p692 = scmp.ne.s32.totalorder %s683, %s684
      %p693 = scmp.eq.s32.totalorder %s106, 0
      %p694 = por %p692, %p693
      %p695 = scmp.ne.s32.totalorder %s683, %s684
      %p696 = scmp.eq.s32.totalorder %s107, 1
      %p697 = por %p695, %p696
      %p699 = scmp.ne.s32.totalorder %s684, %s698
      %p700 = scmp.eq.s32.totalorder %s107, 0
      %p701 = por %p699, %p700
      %s703 = sadd.s32 %s702, 1
      %p706 = scmp.eq.s32.totalorder %s101, 1
      %p707 = scmp.ne.s32.totalorder %s702, %s704
      %p708 = scmp.eq.s32.totalorder %s101, 0
      %p709 = por %p707, %p708
      %p710 = scmp.ne.s32.totalorder %s702, %s704
      %p711 = scmp.eq.s32.totalorder %s106, 1
      %p712 = por %p710, %p711
      %p713 = scmp.ne.s32.totalorder %s704, %s705
      %p714 = scmp.eq.s32.totalorder %s106, 0
      %p715 = por %p713, %p714
      %p716 = scmp.ne.s32.totalorder %s704, %s705
      %p717 = scmp.eq.s32.totalorder %s107, 1
      %p718 = por %p716, %p717
      %p720 = scmp.ne.s32.totalorder %s705, %s719
      %p721 = scmp.eq.s32.totalorder %s107, 0
      %p722 = por %p720, %p721
      %s724 = sadd.s32 %s723, 1
      %p727 = scmp.eq.s32.totalorder %s101, 1
      %p728 = scmp.ne.s32.totalorder %s723, %s725
      %p729 = scmp.eq.s32.totalorder %s101, 0
      %p730 = por %p728, %p729
      %p731 = scmp.ne.s32.totalorder %s723, %s725
      %p732 = scmp.eq.s32.totalorder %s106, 1
      %p733 = por %p731, %p732
      %p734 = scmp.ne.s32.totalorder %s725, %s726
      %p735 = scmp.eq.s32.totalorder %s106, 0
      %p736 = por %p734, %p735
      %p737 = scmp.ne.s32.totalorder %s725, %s726
      %p738 = scmp.eq.s32.totalorder %s107, 1
      %p739 = por %p737, %p738
      %p741 = scmp.ne.s32.totalorder %s726, %s740
      %p742 = scmp.eq.s32.totalorder %s107, 0
      %p743 = por %p741, %p742
      %s745 = sadd.s32 %s744, 1
      %p748 = scmp.eq.s32.totalorder %s101, 1
      %p749 = scmp.ne.s32.totalorder %s744, %s746
      %p750 = scmp.eq.s32.totalorder %s101, 0
      %p751 = por %p749, %p750
      %p752 = scmp.ne.s32.totalorder %s744, %s746
      %p753 = scmp.eq.s32.totalorder %s106, 1
      %p754 = por %p752, %p753
      %p755 = scmp.ne.s32.totalorder %s746, %s747
      %p756 = scmp.eq.s32.totalorder %s106, 0
      %p757 = por %p755, %p756
      %p758 = scmp.ne.s32.totalorder %s746, %s747
      %p759 = scmp.eq.s32.totalorder %s107, 1
      %p760 = por %p758, %p759
      %p762 = scmp.ne.s32.totalorder %s747, %s761
      %p763 = scmp.eq.s32.totalorder %s107, 0
      %p764 = por %p762, %p763
      %s766 = sadd.s32 %s765, 1
      %p769 = scmp.eq.s32.totalorder %s101, 1
      %p770 = scmp.ne.s32.totalorder %s765, %s767
      %p771 = scmp.eq.s32.totalorder %s101, 0
      %p772 = por %p770, %p771
      %p773 = scmp.ne.s32.totalorder %s765, %s767
      %p774 = scmp.eq.s32.totalorder %s106, 1
      %p775 = por %p773, %p774
      %p776 = scmp.ne.s32.totalorder %s767, %s768
      %p777 = scmp.eq.s32.totalorder %s106, 0
      %p778 = por %p776, %p777
      %p779 = scmp.ne.s32.totalorder %s767, %s768
      %p780 = scmp.eq.s32.totalorder %s107, 1
      %p781 = por %p779, %p780
      %p783 = scmp.ne.s32.totalorder %s768, %s782
      %p784 = scmp.eq.s32.totalorder %s107, 0
      %p785 = por %p783, %p784
      %s787 = sadd.s32 %s786, 1
      %p790 = scmp.eq.s32.totalorder %s101, 1
      %p791 = scmp.ne.s32.totalorder %s786, %s788
      %p792 = scmp.eq.s32.totalorder %s101, 0
      %p793 = por %p791, %p792
      %p794 = scmp.ne.s32.totalorder %s786, %s788
      %p795 = scmp.eq.s32.totalorder %s106, 1
      %p796 = por %p794, %p795
      %p797 = scmp.ne.s32.totalorder %s788, %s789
      %p798 = scmp.eq.s32.totalorder %s106, 0
      %p799 = por %p797, %p798
      %p800 = scmp.ne.s32.totalorder %s788, %s789
      %p801 = scmp.eq.s32.totalorder %s107, 1
      %p802 = por %p800, %p801
      %p804 = scmp.ne.s32.totalorder %s789, %s803
      %p805 = scmp.eq.s32.totalorder %s107, 0
      %p806 = por %p804, %p805
      %s808 = sadd.s32 %s807, 1
      %p811 = scmp.eq.s32.totalorder %s101, 1
      %p812 = scmp.ne.s32.totalorder %s807, %s809
      %p813 = scmp.eq.s32.totalorder %s101, 0
      %p814 = por %p812, %p813
      %p815 = scmp.ne.s32.totalorder %s807, %s809
      %p816 = scmp.eq.s32.totalorder %s106, 1
      %p817 = por %p815, %p816
      %p818 = scmp.ne.s32.totalorder %s809, %s810
      %p819 = scmp.eq.s32.totalorder %s106, 0
      %p820 = por %p818, %p819
      %p821 = scmp.ne.s32.totalorder %s809, %s810
      %p822 = scmp.eq.s32.totalorder %s107, 1
      %p823 = por %p821, %p822
      %p825 = scmp.ne.s32.totalorder %s810, %s824
      %p826 = scmp.eq.s32.totalorder %s107, 0
      %p827 = por %p825, %p826
      %s829 = sadd.s32 %s828, 1
      %p832 = scmp.eq.s32.totalorder %s101, 1
      %p833 = scmp.ne.s32.totalorder %s828, %s830
      %p834 = scmp.eq.s32.totalorder %s101, 0
      %p835 = por %p833, %p834
      %p836 = scmp.ne.s32.totalorder %s828, %s830
      %p837 = scmp.eq.s32.totalorder %s106, 1
      %p838 = por %p836, %p837
      %p839 = scmp.ne.s32.totalorder %s830, %s831
      %p840 = scmp.eq.s32.totalorder %s106, 0
      %p841 = por %p839, %p840
      %p842 = scmp.ne.s32.totalorder %s830, %s831
      %p843 = scmp.eq.s32.totalorder %s107, 1
      %p844 = por %p842, %p843
      %p846 = scmp.ne.s32.totalorder %s831, %s845
      %p847 = scmp.eq.s32.totalorder %s107, 0
      %p848 = por %p846, %p847
      %s850 = sadd.s32 %s849, 1
      %p853 = scmp.eq.s32.totalorder %s101, 1
      %p854 = scmp.ne.s32.totalorder %s849, %s851
      %p855 = scmp.eq.s32.totalorder %s101, 0
      %p856 = por %p854, %p855
      %p857 = scmp.ne.s32.totalorder %s849, %s851
      %p858 = scmp.eq.s32.totalorder %s106, 1
      %p859 = por %p857, %p858
      %p860 = scmp.ne.s32.totalorder %s851, %s852
      %p861 = scmp.eq.s32.totalorder %s106, 0
      %p862 = por %p860, %p861
      %p863 = scmp.ne.s32.totalorder %s851, %s852
      %p864 = scmp.eq.s32.totalorder %s107, 1
      %p865 = por %p863, %p864
      %p867 = scmp.ne.s32.totalorder %s852, %s866
      %p868 = scmp.eq.s32.totalorder %s107, 0
      %p869 = por %p867, %p868
      %s871 = sadd.s32 %s870, 1
      %p874 = scmp.eq.s32.totalorder %s101, 1
      %p875 = scmp.ne.s32.totalorder %s870, %s872
      %p876 = scmp.eq.s32.totalorder %s101, 0
      %p877 = por %p875, %p876
      %p878 = scmp.ne.s32.totalorder %s870, %s872
      %p879 = scmp.eq.s32.totalorder %s106, 1
      %p880 = por %p878, %p879
      %p881 = scmp.ne.s32.totalorder %s872, %s873
      %p882 = scmp.eq.s32.totalorder %s106, 0
      %p883 = por %p881, %p882
      %p884 = scmp.ne.s32.totalorder %s872, %s873
      %p885 = scmp.eq.s32.totalorder %s107, 1
      %p886 = por %p884, %p885
      %p888 = scmp.ne.s32.totalorder %s873, %s887
      %p889 = scmp.eq.s32.totalorder %s107, 0
      %p890 = por %p888, %p889
      %s891 = ssub.s32 %s101, %s108
      %p892 = scmp.eq.s32.totalorder %s891, 0
      %s894 = sadd.s32 %s893, 1
      %s895 = scalar_select %p892, %s893, %s894
      %p898 = pneg %p892
      %p899 = scmp.eq.s32.totalorder %s101, 1
      %p900 = por %p898, %p899
      %p901 = scmp.ne.s32.totalorder %s893, %s896
      %p902 = scmp.eq.s32.totalorder %s101, 0
      %p903 = por %p901, %p902
      %p904 = scmp.ne.s32.totalorder %s893, %s896
      %p905 = scmp.eq.s32.totalorder %s106, 1
      %p906 = por %p904, %p905
      %p907 = scmp.ne.s32.totalorder %s896, %s897
      %p908 = scmp.eq.s32.totalorder %s106, 0
      %p909 = por %p907, %p908
      %p910 = scmp.ne.s32.totalorder %s896, %s897
      %p911 = scmp.eq.s32.totalorder %s107, 1
      %p912 = por %p910, %p911
      %p914 = scmp.ne.s32.totalorder %s897, %s913
      %p915 = scmp.eq.s32.totalorder %s107, 0
      %p916 = por %p914, %p915
      %p917 = scmp.le.s32.totalorder 1, %s101
      %p918 = scmp.lt.s32.totalorder %s101, 3
      %p919 = pnand %p917, %p918
      %p920 = pneg %p919
      // Predicated region
      $region9: #{tpu_custom_call.1} parent=5 // pred_check
        _
      $region10: #{tpu_custom_call.1} parent=5 // pred_check_branch
        %922 = sbr.rel (%p919) target = $region12
      $region11: #{tpu_custom_call.1} parent=5 // pred_region
        %s923 = ssub.s32 %s101, 1
        // Predicated region
        $region13: #{tpu_custom_call.1} parent=11 // pred_check
          %p924 = pneg %p148
        $region14: #{tpu_custom_call.1} parent=11 // pred_check_branch
          %926 = sbr.rel (%p924) target = $region16
        $region15: #{tpu_custom_call.1} parent=11 // pred_region
          %s928 = ssub.s32 768, 768
          %929 = vsyncadd [#allocation6], %s928
          %s930 = sshll.u32 [#allocation5], 4
          %s931 = int_to_ptr.vmem [resolvable:$true] %s930
          %936 = dma.hbm_to_vmem [thread:$0]  %s3, 768, %s931, [#allocation6], 128, 128, 8
        $region16: #{tpu_custom_call.1} parent=11 // pred_fallthru
          _
        // Predicated region
        $region17: #{tpu_custom_call.1} parent=11 // pred_check
          %p937 = pneg %p169
        $region18: #{tpu_custom_call.1} parent=11 // pred_check_branch
          %939 = sbr.rel (%p937) target = $region20
        $region19: #{tpu_custom_call.1} parent=11 // pred_region
          %s941 = ssub.s32 768, 768
          %942 = vsyncadd [#allocation6], %s941
          %s943 = sshll.u32 [#allocation7], 4
          %s944 = int_to_ptr.vmem [resolvable:$true] %s943
          %949 = dma.hbm_to_vmem [thread:$0]  %s5, 768, %s944, [#allocation6], 128, 128, 8
        $region20: #{tpu_custom_call.1} parent=11 // pred_fallthru
          _
        // Predicated region
        $region21: #{tpu_custom_call.1} parent=11 // pred_check
          %p950 = pneg %p190
        $region22: #{tpu_custom_call.1} parent=11 // pred_check_branch
          %952 = sbr.rel (%p950) target = $region24
        $region23: #{tpu_custom_call.1} parent=11 // pred_region
          _
        $region24: #{tpu_custom_call.1} parent=11 // pred_fallthru
          _
        // Predicated region
        $region25: #{tpu_custom_call.1} parent=11 // pred_check
          %p953 = pneg %p211
        $region26: #{tpu_custom_call.1} parent=11 // pred_check_branch
          %955 = sbr.rel (%p953) target = $region28
        $region27: #{tpu_custom_call.1} parent=11 // pred_region
          %s957 = ssub.s32 384, 384
          %958 = vsyncadd [#allocation9], %s957
          %s959 = sshll.u32 [#allocation8], 4
          %s960 = int_to_ptr.vmem [resolvable:$true] %s959
          %965 = dma.hbm_to_vmem [thread:$0]  %s9, 384, %s960, [#allocation9], 128, 128, 8
        $region28: #{tpu_custom_call.1} parent=11 // pred_fallthru
          _
        // Predicated region
        $region29: #{tpu_custom_call.1} parent=11 // pred_check
          %p966 = pneg %p232
        $region30: #{tpu_custom_call.1} parent=11 // pred_check_branch
          %968 = sbr.rel (%p966) target = $region32
        $region31: #{tpu_custom_call.1} parent=11 // pred_region
          %s970 = ssub.s32 6144, 6144
          %971 = vsyncadd [#allocation9], %s970
          %s972 = sshll.u32 [#allocation10], 4
          %s973 = int_to_ptr.vmem [resolvable:$true] %s972
          %978 = dma.hbm_to_vmem [thread:$0]  %s11, 6144, %s973, [#allocation9], 128, 128, 8
        $region32: #{tpu_custom_call.1} parent=11 // pred_fallthru
          _
        // Predicated region
        $region33: #{tpu_custom_call.1} parent=11 // pred_check
          %p979 = pneg %p253
        $region34: #{tpu_custom_call.1} parent=11 // pred_check_branch
          %981 = sbr.rel (%p979) target = $region36
        $region35: #{tpu_custom_call.1} parent=11 // pred_region
          %s983 = ssub.s32 16, 16
          %984 = vsyncadd [#allocation12], %s983
          %s986 = sshll.u32 [#allocation11], 4
          %s987 = int_to_ptr.vmem [resolvable:$true] %s986
          %989 = dma.hbm_to_vmem [thread:$0]  %s13, 16, %s987, [#allocation12]
        $region36: #{tpu_custom_call.1} parent=11 // pred_fallthru
          _
        // Predicated region
        $region37: #{tpu_custom_call.1} parent=11 // pred_check
          %p990 = pneg %p274
        $region38: #{tpu_custom_call.1} parent=11 // pred_check_branch
          %992 = sbr.rel (%p990) target = $region40
        $region39: #{tpu_custom_call.1} parent=11 // pred_region
          %s994 = ssub.s32 384, 384
          %995 = vsyncadd [#allocation12], %s994
          %s996 = sshll.u32 [#allocation13], 4
          %s997 = int_to_ptr.vmem [resolvable:$true] %s996
          %1002 = dma.hbm_to_vmem [thread:$0]  %s15, 384, %s997, [#allocation12], 128, 128, 8
        $region40: #{tpu_custom_call.1} parent=11 // pred_fallthru
          _
        // Predicated region
        $region41: #{tpu_custom_call.1} parent=11 // pred_check
          %p1003 = pneg %p295
        $region42: #{tpu_custom_call.1} parent=11 // pred_check_branch
          %1005 = sbr.rel (%p1003) target = $region44
        $region43: #{tpu_custom_call.1} parent=11 // pred_region
          %s1007 = ssub.s32 6144, 6144
          %1008 = vsyncadd [#allocation15], %s1007
          %s1009 = sshll.u32 [#allocation14], 4
          %s1010 = int_to_ptr.vmem [resolvable:$true] %s1009
          %1015 = dma.hbm_to_vmem [thread:$0]  %s17, 6144, %s1010, [#allocation15], 128, 128, 8
        $region44: #{tpu_custom_call.1} parent=11 // pred_fallthru
          _
        // Predicated region
        $region45: #{tpu_custom_call.1} parent=11 // pred_check
          %p1016 = pneg %p316
        $region46: #{tpu_custom_call.1} parent=11 // pred_check_branch
          %1018 = sbr.rel (%p1016) target = $region48
        $region47: #{tpu_custom_call.1} parent=11 // pred_region
          %s1020 = ssub.s32 16, 16
          %1021 = vsyncadd [#allocation15], %s1020
          %s1023 = sshll.u32 [#allocation16], 4
          %s1024 = int_to_ptr.vmem [resolvable:$true] %s1023
          %1026 = dma.hbm_to_vmem [thread:$0]  %s19, 16, %s1024, [#allocation15]
        $region48: #{tpu_custom_call.1} parent=11 // pred_fallthru
          _
        // Predicated region
        $region49: #{tpu_custom_call.1} parent=11 // pred_check
          %p1027 = pneg %p337
        $region50: #{tpu_custom_call.1} parent=11 // pred_check_branch
          %1029 = sbr.rel (%p1027) target = $region52
        $region51: #{tpu_custom_call.1} parent=11 // pred_region
          %s1031 = ssub.s32 128, 128
          %1032 = vsyncadd [#allocation18], %s1031
          %s1034 = sshll.u32 [#allocation17], 4
          %s1035 = int_to_ptr.vmem [resolvable:$true] %s1034
          %1037 = dma.hbm_to_vmem [thread:$0]  %s21, 128, %s1035, [#allocation18]
        $region52: #{tpu_custom_call.1} parent=11 // pred_fallthru
          _
        // Predicated region
        $region53: #{tpu_custom_call.1} parent=11 // pred_check
          %p1038 = pneg %p358
        $region54: #{tpu_custom_call.1} parent=11 // pred_check_branch
          %1040 = sbr.rel (%p1038) target = $region56
        $region55: #{tpu_custom_call.1} parent=11 // pred_region
          %s1042 = ssub.s32 2048, 2048
          %1043 = vsyncadd [#allocation18], %s1042
          %s1044 = sshll.u32 [#allocation19], 4
          %s1045 = int_to_ptr.vmem [resolvable:$true] %s1044
          %1050 = dma.hbm_to_vmem [thread:$0]  %s23, 2048, %s1045, [#allocation18], 128, 128, 8
        $region56: #{tpu_custom_call.1} parent=11 // pred_fallthru
          _
        // Predicated region
        $region57: #{tpu_custom_call.1} parent=11 // pred_check
          %p1051 = pneg %p379
        $region58: #{tpu_custom_call.1} parent=11 // pred_check_branch
          %1053 = sbr.rel (%p1051) target = $region60
        $region59: #{tpu_custom_call.1} parent=11 // pred_region
          %s1055 = ssub.s32 16, 16
          %1056 = vsyncadd [#allocation21], %s1055
          %s1058 = sshll.u32 [#allocation20], 4
          %s1059 = int_to_ptr.vmem [resolvable:$true] %s1058
          %1061 = dma.hbm_to_vmem [thread:$0]  %s25, 16, %s1059, [#allocation21]
        $region60: #{tpu_custom_call.1} parent=11 // pred_fallthru
          _
        // Predicated region
        $region61: #{tpu_custom_call.1} parent=11 // pred_check
          %p1062 = pneg %p400
        $region62: #{tpu_custom_call.1} parent=11 // pred_check_branch
          %1064 = sbr.rel (%p1062) target = $region64
        $region63: #{tpu_custom_call.1} parent=11 // pred_region
          %s1066 = ssub.s32 192, 192
          %1067 = vsyncadd [#allocation21], %s1066
          %s1068 = sshll.u32 [#allocation22], 4
          %s1069 = int_to_ptr.vmem [resolvable:$true] %s1068
          %1074 = dma.hbm_to_vmem [thread:$0]  %s27, 192, %s1069, [#allocation21], 64, 64, 4
        $region64: #{tpu_custom_call.1} parent=11 // pred_fallthru
          _
        // Predicated region
        $region65: #{tpu_custom_call.1} parent=11 // pred_check
          %p1075 = pneg %p421
        $region66: #{tpu_custom_call.1} parent=11 // pred_check_branch
          %1077 = sbr.rel (%p1075) target = $region68
        $region67: #{tpu_custom_call.1} parent=11 // pred_region
          _
        $region68: #{tpu_custom_call.1} parent=11 // pred_fallthru
          _
        // Predicated region
        $region69: #{tpu_custom_call.1} parent=11 // pred_check
          %p1078 = pneg %p442
        $region70: #{tpu_custom_call.1} parent=11 // pred_check_branch
          %1080 = sbr.rel (%p1078) target = $region72
        $region71: #{tpu_custom_call.1} parent=11 // pred_region
          %s1082 = ssub.s32 16, 16
          %1083 = vsyncadd [#allocation24], %s1082
          %s1085 = sshll.u32 [#allocation23], 4
          %s1086 = int_to_ptr.vmem [resolvable:$true] %s1085
          %1088 = dma.hbm_to_vmem [thread:$0]  %s31, 16, %s1086, [#allocation24]
        $region72: #{tpu_custom_call.1} parent=11 // pred_fallthru
          _
        // Predicated region
        $region73: #{tpu_custom_call.1} parent=11 // pred_check
          %p1089 = pneg %p463
        $region74: #{tpu_custom_call.1} parent=11 // pred_check_branch
          %1091 = sbr.rel (%p1089) target = $region76
        $region75: #{tpu_custom_call.1} parent=11 // pred_region
          %s1093 = ssub.s32 192, 192
          %1094 = vsyncadd [#allocation24], %s1093
          %s1095 = sshll.u32 [#allocation25], 4
          %s1096 = int_to_ptr.vmem [resolvable:$true] %s1095
          %1101 = dma.hbm_to_vmem [thread:$0]  %s33, 192, %s1096, [#allocation24], 64, 64, 4
        $region76: #{tpu_custom_call.1} parent=11 // pred_fallthru
          _
        // Predicated region
        $region77: #{tpu_custom_call.1} parent=11 // pred_check
          %p1102 = pneg %p484
        $region78: #{tpu_custom_call.1} parent=11 // pred_check_branch
          %1104 = sbr.rel (%p1102) target = $region80
        $region79: #{tpu_custom_call.1} parent=11 // pred_region
          %s1106 = ssub.s32 6144, 6144
          %1107 = vsyncadd [#allocation27], %s1106
          %s1108 = sshll.u32 [#allocation26], 4
          %s1109 = int_to_ptr.vmem [resolvable:$true] %s1108
          %1114 = dma.hbm_to_vmem [thread:$0]  %s35, 6144, %s1109, [#allocation27], 128, 128, 8
        $region80: #{tpu_custom_call.1} parent=11 // pred_fallthru
          _
        // Predicated region
        $region81: #{tpu_custom_call.1} parent=11 // pred_check
          %p1115 = pneg %p505
        $region82: #{tpu_custom_call.1} parent=11 // pred_check_branch
          %1117 = sbr.rel (%p1115) target = $region84
        $region83: #{tpu_custom_call.1} parent=11 // pred_region
          %s1119 = ssub.s32 16, 16
          %1120 = vsyncadd [#allocation27], %s1119
          %s1122 = sshll.u32 [#allocation28], 4
          %s1123 = int_to_ptr.vmem [resolvable:$true] %s1122
          %1125 = dma.hbm_to_vmem [thread:$0]  %s37, 16, %s1123, [#allocation27]
        $region84: #{tpu_custom_call.1} parent=11 // pred_fallthru
          _
        // Predicated region
        $region85: #{tpu_custom_call.1} parent=11 // pred_check
          %p1126 = pneg %p526
        $region86: #{tpu_custom_call.1} parent=11 // pred_check_branch
          %1128 = sbr.rel (%p1126) target = $region88
        $region87: #{tpu_custom_call.1} parent=11 // pred_region
          %s1130 = ssub.s32 64, 64
          %1131 = vsyncadd [#allocation30], %s1130
          %s1133 = sshll.u32 [#allocation29], 4
          %s1134 = int_to_ptr.vmem [resolvable:$true] %s1133
          %1136 = dma.hbm_to_vmem [thread:$0]  %s39, 64, %s1134, [#allocation30]
        $region88: #{tpu_custom_call.1} parent=11 // pred_fallthru
          _
        // Predicated region
        $region89: #{tpu_custom_call.1} parent=11 // pred_check
          %p1137 = pneg %p547
        $region90: #{tpu_custom_call.1} parent=11 // pred_check_branch
          %1139 = sbr.rel (%p1137) target = $region92
        $region91: #{tpu_custom_call.1} parent=11 // pred_region
          %s1141 = ssub.s32 2048, 2048
          %1142 = vsyncadd [#allocation30], %s1141
          %s1143 = sshll.u32 [#allocation31], 4
          %s1144 = int_to_ptr.vmem [resolvable:$true] %s1143
          %1149 = dma.hbm_to_vmem [thread:$0]  %s41, 2048, %s1144, [#allocation30], 128, 128, 8
        $region92: #{tpu_custom_call.1} parent=11 // pred_fallthru
          _
        // Predicated region
        $region93: #{tpu_custom_call.1} parent=11 // pred_check
          %p1150 = pneg %p568
        $region94: #{tpu_custom_call.1} parent=11 // pred_check_branch
          %1152 = sbr.rel (%p1150) target = $region96
        $region95: #{tpu_custom_call.1} parent=11 // pred_region
          %s1154 = ssub.s32 16, 16
          %1155 = vsyncadd [#allocation33], %s1154
          %s1157 = sshll.u32 [#allocation32], 4
          %s1158 = int_to_ptr.vmem [resolvable:$true] %s1157
          %1160 = dma.hbm_to_vmem [thread:$0]  %s43, 16, %s1158, [#allocation33]
        $region96: #{tpu_custom_call.1} parent=11 // pred_fallthru
          _
        // Predicated region
        $region97: #{tpu_custom_call.1} parent=11 // pred_check
          %p1161 = pneg %p589
        $region98: #{tpu_custom_call.1} parent=11 // pred_check_branch
          %1163 = sbr.rel (%p1161) target = $region100
        $region99: #{tpu_custom_call.1} parent=11 // pred_region
          %s1165 = ssub.s32 96, 96
          %1166 = vsyncadd [#allocation33], %s1165
          %s1167 = sshll.u32 [#allocation34], 4
          %s1168 = int_to_ptr.vmem [resolvable:$true] %s1167
          %1173 = dma.hbm_to_vmem [thread:$0]  %s45, 96, %s1168, [#allocation33], 32, 32, 2
        $region100: #{tpu_custom_call.1} parent=11 // pred_fallthru
          _
        // Predicated region
        $region101: #{tpu_custom_call.1} parent=11 // pred_check
          %p1174 = pneg %p610
        $region102: #{tpu_custom_call.1} parent=11 // pred_check_branch
          %1176 = sbr.rel (%p1174) target = $region104
        $region103: #{tpu_custom_call.1} parent=11 // pred_region
          %s1178 = ssub.s32 6144, 6144
          %1179 = vsyncadd [#allocation36], %s1178
          %s1180 = sshll.u32 [#allocation35], 4
          %s1181 = int_to_ptr.vmem [resolvable:$true] %s1180
          %1186 = dma.hbm_to_vmem [thread:$0]  %s47, 6144, %s1181, [#allocation36], 128, 128, 8
        $region104: #{tpu_custom_call.1} parent=11 // pred_fallthru
          _
        // Predicated region
        $region105: #{tpu_custom_call.1} parent=11 // pred_check
          %p1187 = pneg %p631
        $region106: #{tpu_custom_call.1} parent=11 // pred_check_branch
          %1189 = sbr.rel (%p1187) target = $region108
        $region107: #{tpu_custom_call.1} parent=11 // pred_region
          %s1191 = ssub.s32 16, 16
          %1192 = vsyncadd [#allocation36], %s1191
          %s1194 = sshll.u32 [#allocation37], 4
          %s1195 = int_to_ptr.vmem [resolvable:$true] %s1194
          %1197 = dma.hbm_to_vmem [thread:$0]  %s49, 16, %s1195, [#allocation36]
        $region108: #{tpu_custom_call.1} parent=11 // pred_fallthru
          _
        // Predicated region
        $region109: #{tpu_custom_call.1} parent=11 // pred_check
          %p1198 = pneg %p652
        $region110: #{tpu_custom_call.1} parent=11 // pred_check_branch
          %1200 = sbr.rel (%p1198) target = $region112
        $region111: #{tpu_custom_call.1} parent=11 // pred_region
          _
        $region112: #{tpu_custom_call.1} parent=11 // pred_fallthru
          _
        // Predicated region
        $region113: #{tpu_custom_call.1} parent=11 // pred_check
          %p1201 = pneg %p673
        $region114: #{tpu_custom_call.1} parent=11 // pred_check_branch
          %1203 = sbr.rel (%p1201) target = $region116
        $region115: #{tpu_custom_call.1} parent=11 // pred_region
          %s1205 = ssub.s32 6144, 6144
          %1206 = vsyncadd [#allocation39], %s1205
          %s1207 = sshll.u32 [#allocation38], 4
          %s1208 = int_to_ptr.vmem [resolvable:$true] %s1207
          %1213 = dma.hbm_to_vmem [thread:$0]  %s53, 6144, %s1208, [#allocation39], 128, 128, 8
        $region116: #{tpu_custom_call.1} parent=11 // pred_fallthru
          _
        // Predicated region
        $region117: #{tpu_custom_call.1} parent=11 // pred_check
          %p1214 = pneg %p694
        $region118: #{tpu_custom_call.1} parent=11 // pred_check_branch
          %1216 = sbr.rel (%p1214) target = $region120
        $region119: #{tpu_custom_call.1} parent=11 // pred_region
          %s1218 = ssub.s32 16, 16
          %1219 = vsyncadd [#allocation39], %s1218
          %s1221 = sshll.u32 [#allocation40], 4
          %s1222 = int_to_ptr.vmem [resolvable:$true] %s1221
          %1224 = dma.hbm_to_vmem [thread:$0]  %s55, 16, %s1222, [#allocation39]
        $region120: #{tpu_custom_call.1} parent=11 // pred_fallthru
          _
        // Predicated region
        $region121: #{tpu_custom_call.1} parent=11 // pred_check
          %p1225 = pneg %p715
        $region122: #{tpu_custom_call.1} parent=11 // pred_check_branch
          %1227 = sbr.rel (%p1225) target = $region124
        $region123: #{tpu_custom_call.1} parent=11 // pred_region
          _
        $region124: #{tpu_custom_call.1} parent=11 // pred_fallthru
          _
        // Predicated region
        $region125: #{tpu_custom_call.1} parent=11 // pred_check
          %p1228 = pneg %p736
        $region126: #{tpu_custom_call.1} parent=11 // pred_check_branch
          %1230 = sbr.rel (%p1228) target = $region128
        $region127: #{tpu_custom_call.1} parent=11 // pred_region
          %s1232 = ssub.s32 2048, 2048
          %1233 = vsyncadd [#allocation42], %s1232
          %s1234 = sshll.u32 [#allocation41], 4
          %s1235 = int_to_ptr.vmem [resolvable:$true] %s1234
          %1240 = dma.hbm_to_vmem [thread:$0]  %s59, 2048, %s1235, [#allocation42], 128, 128, 8
        $region128: #{tpu_custom_call.1} parent=11 // pred_fallthru
          _
        // Predicated region
        $region129: #{tpu_custom_call.1} parent=11 // pred_check
          %p1241 = pneg %p757
        $region130: #{tpu_custom_call.1} parent=11 // pred_check_branch
          %1243 = sbr.rel (%p1241) target = $region132
        $region131: #{tpu_custom_call.1} parent=11 // pred_region
          %s1245 = ssub.s32 16, 16
          %1246 = vsyncadd [#allocation42], %s1245
          %s1248 = sshll.u32 [#allocation43], 4
          %s1249 = int_to_ptr.vmem [resolvable:$true] %s1248
          %1251 = dma.hbm_to_vmem [thread:$0]  %s61, 16, %s1249, [#allocation42]
        $region132: #{tpu_custom_call.1} parent=11 // pred_fallthru
          _
        // Predicated region
        $region133: #{tpu_custom_call.1} parent=11 // pred_check
          %p1252 = pneg %p778
        $region134: #{tpu_custom_call.1} parent=11 // pred_check_branch
          %1254 = sbr.rel (%p1252) target = $region136
        $region135: #{tpu_custom_call.1} parent=11 // pred_region
          %s1256 = ssub.s32 16, 16
          %1257 = vsyncadd [#allocation45], %s1256
          %s1259 = sshll.u32 [#allocation44], 4
          %s1260 = int_to_ptr.vmem [resolvable:$true] %s1259
          %1262 = dma.hbm_to_vmem [thread:$0]  %s63, 16, %s1260, [#allocation45]
        $region136: #{tpu_custom_call.1} parent=11 // pred_fallthru
          _
        // Predicated region
        $region137: #{tpu_custom_call.1} parent=11 // pred_check
          %p1263 = pneg %p799
        $region138: #{tpu_custom_call.1} parent=11 // pred_check_branch
          %1265 = sbr.rel (%p1263) target = $region140
        $region139: #{tpu_custom_call.1} parent=11 // pred_region
          _
        $region140: #{tpu_custom_call.1} parent=11 // pred_fallthru
          _
        // Predicated region
        $region141: #{tpu_custom_call.1} parent=11 // pred_check
          %p1266 = pneg %p820
        $region142: #{tpu_custom_call.1} parent=11 // pred_check_branch
          %1268 = sbr.rel (%p1266) target = $region144
        $region143: #{tpu_custom_call.1} parent=11 // pred_region
          _
        $region144: #{tpu_custom_call.1} parent=11 // pred_fallthru
          _
        // Predicated region
        $region145: #{tpu_custom_call.1} parent=11 // pred_check
          %p1269 = pneg %p841
        $region146: #{tpu_custom_call.1} parent=11 // pred_check_branch
          %1271 = sbr.rel (%p1269) target = $region148
        $region147: #{tpu_custom_call.1} parent=11 // pred_region
          _
        $region148: #{tpu_custom_call.1} parent=11 // pred_fallthru
          _
        // Predicated region
        $region149: #{tpu_custom_call.1} parent=11 // pred_check
          %p1272 = pneg %p862
        $region150: #{tpu_custom_call.1} parent=11 // pred_check_branch
          %1274 = sbr.rel (%p1272) target = $region152
        $region151: #{tpu_custom_call.1} parent=11 // pred_region
          _
        $region152: #{tpu_custom_call.1} parent=11 // pred_fallthru
          _
        // Predicated region
        $region153: #{tpu_custom_call.1} parent=11 // pred_check
          %p1275 = pneg %p883
        $region154: #{tpu_custom_call.1} parent=11 // pred_check_branch
          %1277 = sbr.rel (%p1275) target = $region156
        $region155: #{tpu_custom_call.1} parent=11 // pred_region
          _
        $region156: #{tpu_custom_call.1} parent=11 // pred_fallthru
          _
      $region12: #{tpu_custom_call.1} parent=5 // pred_fallthru
        _
      %p1278 = scmp.lt.s32.totalorder %s101, 2
      // Predicated region
      $region157: #{tpu_custom_call.1} parent=5 // pred_check
        %p1279 = pneg %p1278
      $region158: #{tpu_custom_call.1} parent=5 // pred_check_branch
        %1281 = sbr.rel (%p1279) target = $region160
      $region159: #{tpu_custom_call.1} parent=5 // pred_region
        // Predicated region
        $region161: #{tpu_custom_call.1} parent=159 // pred_check
          %p1282 = pneg %p121
        $region162: #{tpu_custom_call.1} parent=159 // pred_check_branch
          %1284 = sbr.rel (%p1282) target = $region164
        $region163: #{tpu_custom_call.1} parent=159 // pred_region
          %s1285 = sand.u32 %s111, 1
          %s1286 = scalar_lea.sflag [#allocation3], %s1285
          %s1287 = sand.u32 %s111, 1
          %s1288 = smul.addr %s1287, 16
          %s1289 = scalar_lea.vmem [#allocation2], %s1288
          %s1291 = ssub.s32 256, 256
          %1292 = vsyncadd %s1286, %s1291
          %s1293 = smul.addr %s101, 2
          %s1294 = smul.addr %s1293, 128
          %s1295 = scalar_lea.hbm %s1, %s1294
          %s1296 = sshll.u32 %s1289, 4
          %s1297 = int_to_ptr.vmem [resolvable:$true] %s1296
          %1302 = dma.hbm_to_vmem [thread:$0]  %s1295, 256, %s1297, %s1286, 128, 128, 8
        $region164: #{tpu_custom_call.1} parent=159 // pred_fallthru
          _
      $region160: #{tpu_custom_call.1} parent=5 // pred_fallthru
        _
      %p1303 = scmp.le.s32.totalorder 1, %s101
      %p1304 = scmp.lt.s32.totalorder %s101, 3
      %p1305 = pnand %p1303, %p1304
      %p1306 = pneg %p1305
      // Predicated region
      $region165: #{tpu_custom_call.1} parent=5 // pred_check
        _
      $region166: #{tpu_custom_call.1} parent=5 // pred_check_branch
        %1308 = sbr.rel (%p1305) target = $region168
      $region167: #{tpu_custom_call.1} parent=5 // pred_region
        %s1309 = ssub.s32 %s101, 1
        %s1310 = sand.u32 %s114, 1
        %s1311 = scalar_lea.sflag [#allocation3], %s1310
        %s1312 = sand.u32 %s114, 1
        %s1313 = smul.addr %s1312, 16
        %s1314 = scalar_lea.vmem [#allocation2], %s1313
        // Predicated region
        $region169: #{tpu_custom_call.1} parent=167 // pred_check
          %p1315 = pneg %p127
        $region170: #{tpu_custom_call.1} parent=167 // pred_check_branch
          %1317 = sbr.rel (%p1315) target = $region172
        $region171: #{tpu_custom_call.1} parent=167 // pred_region
          %1318 = dma.done %s1311, 256
        $region172: #{tpu_custom_call.1} parent=167 // pred_fallthru
          _
        // Predicated region
        $region173: #{tpu_custom_call.1} parent=167 // pred_check
          %p1319 = pneg %p148
        $region174: #{tpu_custom_call.1} parent=167 // pred_check_branch
          %1321 = sbr.rel (%p1319) target = $region176
        $region175: #{tpu_custom_call.1} parent=167 // pred_region
          %1322 = dma.done [#allocation6], 768
        $region176: #{tpu_custom_call.1} parent=167 // pred_fallthru
          _
        // Predicated region
        $region177: #{tpu_custom_call.1} parent=167 // pred_check
          %p1323 = pneg %p169
        $region178: #{tpu_custom_call.1} parent=167 // pred_check_branch
          %1325 = sbr.rel (%p1323) target = $region180
        $region179: #{tpu_custom_call.1} parent=167 // pred_region
          %1326 = dma.done [#allocation6], 768
        $region180: #{tpu_custom_call.1} parent=167 // pred_fallthru
          _
        // Predicated region
        $region181: #{tpu_custom_call.1} parent=167 // pred_check
          %p1327 = pneg %p211
        $region182: #{tpu_custom_call.1} parent=167 // pred_check_branch
          %1329 = sbr.rel (%p1327) target = $region184
        $region183: #{tpu_custom_call.1} parent=167 // pred_region
          %1330 = dma.done [#allocation9], 384
        $region184: #{tpu_custom_call.1} parent=167 // pred_fallthru
          _
        // Predicated region
        $region185: #{tpu_custom_call.1} parent=167 // pred_check
          %p1331 = pneg %p232
        $region186: #{tpu_custom_call.1} parent=167 // pred_check_branch
          %1333 = sbr.rel (%p1331) target = $region188
        $region187: #{tpu_custom_call.1} parent=167 // pred_region
          %1334 = dma.done [#allocation9], 6144
        $region188: #{tpu_custom_call.1} parent=167 // pred_fallthru
          _
        // Predicated region
        $region189: #{tpu_custom_call.1} parent=167 // pred_check
          %p1335 = pneg %p253
        $region190: #{tpu_custom_call.1} parent=167 // pred_check_branch
          %1337 = sbr.rel (%p1335) target = $region192
        $region191: #{tpu_custom_call.1} parent=167 // pred_region
          %1338 = dma.done [#allocation12], 16
        $region192: #{tpu_custom_call.1} parent=167 // pred_fallthru
          _
        // Predicated region
        $region193: #{tpu_custom_call.1} parent=167 // pred_check
          %p1339 = pneg %p274
        $region194: #{tpu_custom_call.1} parent=167 // pred_check_branch
          %1341 = sbr.rel (%p1339) target = $region196
        $region195: #{tpu_custom_call.1} parent=167 // pred_region
          %1342 = dma.done [#allocation12], 384
        $region196: #{tpu_custom_call.1} parent=167 // pred_fallthru
          _
        // Predicated region
        $region197: #{tpu_custom_call.1} parent=167 // pred_check
          %p1343 = pneg %p295
        $region198: #{tpu_custom_call.1} parent=167 // pred_check_branch
          %1345 = sbr.rel (%p1343) target = $region200
        $region199: #{tpu_custom_call.1} parent=167 // pred_region
          %1346 = dma.done [#allocation15], 6144
        $region200: #{tpu_custom_call.1} parent=167 // pred_fallthru
          _
        // Predicated region
        $region201: #{tpu_custom_call.1} parent=167 // pred_check
          %p1347 = pneg %p316
        $region202: #{tpu_custom_call.1} parent=167 // pred_check_branch
          %1349 = sbr.rel (%p1347) target = $region204
        $region203: #{tpu_custom_call.1} parent=167 // pred_region
          %1350 = dma.done [#allocation15], 16
        $region204: #{tpu_custom_call.1} parent=167 // pred_fallthru
          _
        // Predicated region
        $region205: #{tpu_custom_call.1} parent=167 // pred_check
          %p1351 = pneg %p337
        $region206: #{tpu_custom_call.1} parent=167 // pred_check_branch
          %1353 = sbr.rel (%p1351) target = $region208
        $region207: #{tpu_custom_call.1} parent=167 // pred_region
          %1354 = dma.done [#allocation18], 128
        $region208: #{tpu_custom_call.1} parent=167 // pred_fallthru
          _
        // Predicated region
        $region209: #{tpu_custom_call.1} parent=167 // pred_check
          %p1355 = pneg %p358
        $region210: #{tpu_custom_call.1} parent=167 // pred_check_branch
          %1357 = sbr.rel (%p1355) target = $region212
        $region211: #{tpu_custom_call.1} parent=167 // pred_region
          %1358 = dma.done [#allocation18], 2048
        $region212: #{tpu_custom_call.1} parent=167 // pred_fallthru
          _
        // Predicated region
        $region213: #{tpu_custom_call.1} parent=167 // pred_check
          %p1359 = pneg %p379
        $region214: #{tpu_custom_call.1} parent=167 // pred_check_branch
          %1361 = sbr.rel (%p1359) target = $region216
        $region215: #{tpu_custom_call.1} parent=167 // pred_region
          %1362 = dma.done [#allocation21], 16
        $region216: #{tpu_custom_call.1} parent=167 // pred_fallthru
          _
        // Predicated region
        $region217: #{tpu_custom_call.1} parent=167 // pred_check
          %p1363 = pneg %p400
        $region218: #{tpu_custom_call.1} parent=167 // pred_check_branch
          %1365 = sbr.rel (%p1363) target = $region220
        $region219: #{tpu_custom_call.1} parent=167 // pred_region
          %1366 = dma.done [#allocation21], 192
        $region220: #{tpu_custom_call.1} parent=167 // pred_fallthru
          _
        // Predicated region
        $region221: #{tpu_custom_call.1} parent=167 // pred_check
          %p1367 = pneg %p442
        $region222: #{tpu_custom_call.1} parent=167 // pred_check_branch
          %1369 = sbr.rel (%p1367) target = $region224
        $region223: #{tpu_custom_call.1} parent=167 // pred_region
          %1370 = dma.done [#allocation24], 16
        $region224: #{tpu_custom_call.1} parent=167 // pred_fallthru
          _
        // Predicated region
        $region225: #{tpu_custom_call.1} parent=167 // pred_check
          %p1371 = pneg %p463
        $region226: #{tpu_custom_call.1} parent=167 // pred_check_branch
          %1373 = sbr.rel (%p1371) target = $region228
        $region227: #{tpu_custom_call.1} parent=167 // pred_region
          %1374 = dma.done [#allocation24], 192
        $region228: #{tpu_custom_call.1} parent=167 // pred_fallthru
          _
        // Predicated region
        $region229: #{tpu_custom_call.1} parent=167 // pred_check
          %p1375 = pneg %p484
        $region230: #{tpu_custom_call.1} parent=167 // pred_check_branch
          %1377 = sbr.rel (%p1375) target = $region232
        $region231: #{tpu_custom_call.1} parent=167 // pred_region
          %1378 = dma.done [#allocation27], 6144
        $region232: #{tpu_custom_call.1} parent=167 // pred_fallthru
          _
        // Predicated region
        $region233: #{tpu_custom_call.1} parent=167 // pred_check
          %p1379 = pneg %p505
        $region234: #{tpu_custom_call.1} parent=167 // pred_check_branch
          %1381 = sbr.rel (%p1379) target = $region236
        $region235: #{tpu_custom_call.1} parent=167 // pred_region
          %1382 = dma.done [#allocation27], 16
        $region236: #{tpu_custom_call.1} parent=167 // pred_fallthru
          _
        // Predicated region
        $region237: #{tpu_custom_call.1} parent=167 // pred_check
          %p1383 = pneg %p526
        $region238: #{tpu_custom_call.1} parent=167 // pred_check_branch
          %1385 = sbr.rel (%p1383) target = $region240
        $region239: #{tpu_custom_call.1} parent=167 // pred_region
          %1386 = dma.done [#allocation30], 64
        $region240: #{tpu_custom_call.1} parent=167 // pred_fallthru
          _
        // Predicated region
        $region241: #{tpu_custom_call.1} parent=167 // pred_check
          %p1387 = pneg %p547
        $region242: #{tpu_custom_call.1} parent=167 // pred_check_branch
          %1389 = sbr.rel (%p1387) target = $region244
        $region243: #{tpu_custom_call.1} parent=167 // pred_region
          %1390 = dma.done [#allocation30], 2048
        $region244: #{tpu_custom_call.1} parent=167 // pred_fallthru
          _
        // Predicated region
        $region245: #{tpu_custom_call.1} parent=167 // pred_check
          %p1391 = pneg %p568
        $region246: #{tpu_custom_call.1} parent=167 // pred_check_branch
          %1393 = sbr.rel (%p1391) target = $region248
        $region247: #{tpu_custom_call.1} parent=167 // pred_region
          %1394 = dma.done [#allocation33], 16
        $region248: #{tpu_custom_call.1} parent=167 // pred_fallthru
          _
        // Predicated region
        $region249: #{tpu_custom_call.1} parent=167 // pred_check
          %p1395 = pneg %p589
        $region250: #{tpu_custom_call.1} parent=167 // pred_check_branch
          %1397 = sbr.rel (%p1395) target = $region252
        $region251: #{tpu_custom_call.1} parent=167 // pred_region
          %1398 = dma.done [#allocation33], 96
        $region252: #{tpu_custom_call.1} parent=167 // pred_fallthru
          _
        // Predicated region
        $region253: #{tpu_custom_call.1} parent=167 // pred_check
          %p1399 = pneg %p610
        $region254: #{tpu_custom_call.1} parent=167 // pred_check_branch
          %1401 = sbr.rel (%p1399) target = $region256
        $region255: #{tpu_custom_call.1} parent=167 // pred_region
          %1402 = dma.done [#allocation36], 6144
        $region256: #{tpu_custom_call.1} parent=167 // pred_fallthru
          _
        // Predicated region
        $region257: #{tpu_custom_call.1} parent=167 // pred_check
          %p1403 = pneg %p631
        $region258: #{tpu_custom_call.1} parent=167 // pred_check_branch
          %1405 = sbr.rel (%p1403) target = $region260
        $region259: #{tpu_custom_call.1} parent=167 // pred_region
          %1406 = dma.done [#allocation36], 16
        $region260: #{tpu_custom_call.1} parent=167 // pred_fallthru
          _
        // Predicated region
        $region261: #{tpu_custom_call.1} parent=167 // pred_check
          %p1407 = pneg %p673
        $region262: #{tpu_custom_call.1} parent=167 // pred_check_branch
          %1409 = sbr.rel (%p1407) target = $region264
        $region263: #{tpu_custom_call.1} parent=167 // pred_region
          %1410 = dma.done [#allocation39], 6144
        $region264: #{tpu_custom_call.1} parent=167 // pred_fallthru
          _
        // Predicated region
        $region265: #{tpu_custom_call.1} parent=167 // pred_check
          %p1411 = pneg %p694
        $region266: #{tpu_custom_call.1} parent=167 // pred_check_branch
          %1413 = sbr.rel (%p1411) target = $region268
        $region267: #{tpu_custom_call.1} parent=167 // pred_region
          %1414 = dma.done [#allocation39], 16
        $region268: #{tpu_custom_call.1} parent=167 // pred_fallthru
          _
        // Predicated region
        $region269: #{tpu_custom_call.1} parent=167 // pred_check
          %p1415 = pneg %p736
        $region270: #{tpu_custom_call.1} parent=167 // pred_check_branch
          %1417 = sbr.rel (%p1415) target = $region272
        $region271: #{tpu_custom_call.1} parent=167 // pred_region
          %1418 = dma.done [#allocation42], 2048
        $region272: #{tpu_custom_call.1} parent=167 // pred_fallthru
          _
        // Predicated region
        $region273: #{tpu_custom_call.1} parent=167 // pred_check
          %p1419 = pneg %p757
        $region274: #{tpu_custom_call.1} parent=167 // pred_check_branch
          %1421 = sbr.rel (%p1419) target = $region276
        $region275: #{tpu_custom_call.1} parent=167 // pred_region
          %1422 = dma.done [#allocation42], 16
        $region276: #{tpu_custom_call.1} parent=167 // pred_fallthru
          _
        // Predicated region
        $region277: #{tpu_custom_call.1} parent=167 // pred_check
          %p1423 = pneg %p778
        $region278: #{tpu_custom_call.1} parent=167 // pred_check_branch
          %1425 = sbr.rel (%p1423) target = $region280
        $region279: #{tpu_custom_call.1} parent=167 // pred_region
          %1426 = dma.done [#allocation45], 16
        $region280: #{tpu_custom_call.1} parent=167 // pred_fallthru
          _
        %s1427 = sand.u32 %s114, 1
        %s1428 = scalar_lea.sflag [#allocation3], %s1427
        %s1429 = sand.u32 %s114, 1
        %s1430 = smul.addr %s1429, 16
        %s1431 = scalar_lea.vmem [#allocation2], %s1430
        %p1432 = pneg %p127
        %p1433 = pneg %p124
        %p1434 = pneg %p148
        %p1435 = pneg %p145
        %p1436 = pneg %p169
        %p1437 = pneg %p166
        %p1438 = pneg %p190
        %p1439 = pneg %p187
        %p1440 = pneg %p211
        %p1441 = pneg %p208
        %p1442 = pneg %p232
        %p1443 = pneg %p229
        %p1444 = pneg %p253
        %p1445 = pneg %p250
        %p1446 = pneg %p274
        %p1447 = pneg %p271
        %p1448 = pneg %p295
        %p1449 = pneg %p292
        %p1450 = pneg %p316
        %p1451 = pneg %p313
        %p1452 = pneg %p337
        %p1453 = pneg %p334
        %p1454 = pneg %p358
        %p1455 = pneg %p355
        %p1456 = pneg %p379
        %p1457 = pneg %p376
        %p1458 = pneg %p400
        %p1459 = pneg %p397
        %p1460 = pneg %p421
        %p1461 = pneg %p418
        %p1462 = pneg %p442
        %p1463 = pneg %p439
        %p1464 = pneg %p463
        %p1465 = pneg %p460
        %p1466 = pneg %p484
        %p1467 = pneg %p481
        %p1468 = pneg %p505
        %p1469 = pneg %p502
        %p1470 = pneg %p526
        %p1471 = pneg %p523
        %p1472 = pneg %p547
        %p1473 = pneg %p544
        %p1474 = pneg %p568
        %p1475 = pneg %p565
        %p1476 = pneg %p589
        %p1477 = pneg %p586
        %p1478 = pneg %p610
        %p1479 = pneg %p607
        %p1480 = pneg %p631
        %p1481 = pneg %p628
        %p1482 = pneg %p652
        %p1483 = pneg %p649
        %p1484 = pneg %p673
        %p1485 = pneg %p670
        %p1486 = pneg %p694
        %p1487 = pneg %p691
        %p1488 = pneg %p715
        %p1489 = pneg %p712
        %p1490 = pneg %p736
        %p1491 = pneg %p733
        %p1492 = pneg %p757
        %p1493 = pneg %p754
        %p1494 = pneg %p778
        %p1495 = pneg %p775
        %p1496 = pneg %p799
        %p1497 = pneg %p796
        %p1498 = pneg %p820
        %p1499 = pneg %p817
        %p1500 = pneg %p841
        %p1501 = pneg %p838
        %p1502 = pneg %p862
        %p1503 = pneg %p859
        %p1504 = pneg %p883
        %p1505 = pneg %p880
        %p1506 = pneg %p909
        %p1507 = pneg %p906
        %s1508 = sand.u32 %s896, 1
        %s1509 = scalar_lea.sflag [#allocation4], %s1508
        %s1510 = sand.u32 %s896, 1
        %s1511 = scalar_lea.vmem [#allocation46], %s1510
        %v1512 = vld [vmem:[%s1314] sm:$0xff]
        %v1513 = vld [vmem:[%s1314 + $0x8] sm:$0xff]
        %v1514 = vld [vmem:[#allocation7] sm:$0xff]
        %v1515 = vld [vmem:[#allocation7 + $0x8] sm:$0xff]
        %vm1516 = vcmask 130048
        %v1518 = vsel %vm1516, %v1512, 0
        %v1521 = vsel %vm1516, %v1513, 0
        %1523 = vmatprep.subr.mxu0 0.0
        %1524 = vmatpush1.msra.mxu0 %v1514
        %1525 = vmatprep.subr.mxu0 0.0
        %1526 = vmatpush1.msra.mxu0 %v1515
        %1527 = vmatprep.subr.mxu0 0.0
        %1528 = vmatpush1.msra.mxu0 0.0
        %1529 = vmatprep.subr.mxu0 0.0
        %1530 = vmatpush1.msra.mxu0 0.0
        %1531 = vmatprep.subr.mxu0 0.0
        %1532 = vmatpush1.msra.mxu0 0.0
        %1533 = vmatprep.subr.mxu0 0.0
        %1534 = vmatpush1.msra.mxu0 0.0
        %1535 = vmatprep.subr.mxu0 0.0
        %1536 = vmatpush1.msra.mxu0 0.0
        %1537 = vmatprep.subr.mxu0 0.0
        %1538 = vmatpush1.msra.mxu0 0.0
        %1539 = vmatprep.subr.mxu0 0.0
        %1540 = vmatpush1.msra.mxu0 0.0
        %1541 = vmatprep.subr.mxu0 0.0
        %1542 = vmatpush1.msra.mxu0 0.0
        %1543 = vmatprep.subr.mxu0 0.0
        %1544 = vmatpush1.msra.mxu0 0.0
        %1545 = vmatprep.subr.mxu0 0.0
        %1546 = vmatpush1.msra.mxu0 0.0
        %1547 = vmatprep.subr.mxu0 0.0
        %1548 = vmatpush1.msra.mxu0 0.0
        %1549 = vmatprep.subr.mxu0 0.0
        %1550 = vmatpush1.msra.mxu0 0.0
        %1551 = vmatprep.subr.mxu0 0.0
        %1552 = vmatpush1.msra.mxu0 0.0
        %1553 = vmatprep.subr.mxu0 0.0
        %1554 = vmatpush1.msra.mxu0 0.0
        %1555 = vmatprep.subr.mxu0 0.0
        %1556 = vmatpush1.msra.mxu0 0.0
        %1557 = vmatprep.subr.mxu0 0.0
        %1558 = vmatpush1.msra.mxu0 0.0
        %1559 = vmatprep.subr.mxu0 0.0
        %1560 = vmatpush1.msra.mxu0 0.0
        %1561 = vmatprep.subr.mxu0 0.0
        %1562 = vmatpush1.msra.mxu0 0.0
        %1563 = vmatprep.subr.mxu0 0.0
        %1564 = vmatpush1.msra.mxu0 0.0
        %1565 = vmatprep.subr.mxu0 0.0
        %1566 = vmatpush1.msra.mxu0 0.0
        %1567 = vmatprep.subr.mxu0 0.0
        %1568 = vmatpush1.msra.mxu0 0.0
        %1569 = vmatprep.subr.mxu0 0.0
        %1570 = vmatpush1.msra.mxu0 0.0
        %1571 = vmatprep.subr.mxu0 0.0
        %1572 = vmatpush1.msra.mxu0 0.0
        %1573 = vmatprep.subr.mxu0 0.0
        %1574 = vmatpush1.msra.mxu0 0.0
        %1575 = vmatprep.subr.mxu0 0.0
        %1576 = vmatpush1.msra.mxu0 0.0
        %1577 = vmatprep.subr.mxu0 0.0
        %1578 = vmatpush1.msra.mxu0 0.0
        %1579 = vmatprep.subr.mxu0 0.0
        %1580 = vmatpush1.msra.mxu0 0.0
        %1581 = vmatprep.subr.mxu0 0.0
        %1582 = vmatpush1.msra.mxu0 0.0
        %1583 = vmatprep.subr.mxu0 0.0
        %1584 = vmatpush1.msra.mxu0 0.0
        %1585 = vmatprep.subr.mxu0 0.0
        %1586 = vmatpush1.msra.mxu0 0.0
        %1587 = vmatprep.mubr.f32.mxu0 0.0
        %1588 = vmatmul.mubr.f32.gmra.mrb[0].mxu0 %v1518
        %v1589 = vpop.f32.mrb[0].mxu0
        %v1590 = vadd.f32 0.0, %v1589
        %v1591 = vpop.f32.mrb[0].mxu0
        %1592 = vmatprep.mubr.f32.mxu0 0.0
        %1593 = vmatmul.mubr.f32.gmra.mrb[0].mxu0 %v1521
        %v1594 = vpop.f32.mrb[0].mxu0
        %v1595 = vadd.f32 0.0, %v1594
        %v1596 = vpop.f32.mrb[0].mxu0
        %1597 = vdwg.mxu0
        %v1598 = vld [vmem:[#allocation5] sm:$0xff]
        %v1599 = vld [vmem:[#allocation5 + $0x8] sm:$0xff]
        %s1600 = scalar_lea.vmem [#allocation7], 16
        %v1601 = vld [vmem:[%s1600] sm:$0xff]
        %v1602 = vld [vmem:[%s1600 + $0x8] sm:$0xff]
        %1603 = vmatprep.subr.mxu0 0.0
        %1604 = vmatpush1.msra.mxu0 %v1601
        %1605 = vmatprep.subr.mxu0 0.0
        %1606 = vmatpush1.msra.mxu0 %v1602
        %1607 = vmatprep.subr.mxu0 0.0
        %1608 = vmatpush1.msra.mxu0 0.0
        %1609 = vmatprep.subr.mxu0 0.0
        %1610 = vmatpush1.msra.mxu0 0.0
        %1611 = vmatprep.subr.mxu0 0.0
        %1612 = vmatpush1.msra.mxu0 0.0
        %1613 = vmatprep.subr.mxu0 0.0
        %1614 = vmatpush1.msra.mxu0 0.0
        %1615 = vmatprep.subr.mxu0 0.0
        %1616 = vmatpush1.msra.mxu0 0.0
        %1617 = vmatprep.subr.mxu0 0.0
        %1618 = vmatpush1.msra.mxu0 0.0
        %1619 = vmatprep.subr.mxu0 0.0
        %1620 = vmatpush1.msra.mxu0 0.0
        %1621 = vmatprep.subr.mxu0 0.0
        %1622 = vmatpush1.msra.mxu0 0.0
        %1623 = vmatprep.subr.mxu0 0.0
        %1624 = vmatpush1.msra.mxu0 0.0
        %1625 = vmatprep.subr.mxu0 0.0
        %1626 = vmatpush1.msra.mxu0 0.0
        %1627 = vmatprep.subr.mxu0 0.0
        %1628 = vmatpush1.msra.mxu0 0.0
        %1629 = vmatprep.subr.mxu0 0.0
        %1630 = vmatpush1.msra.mxu0 0.0
        %1631 = vmatprep.subr.mxu0 0.0
        %1632 = vmatpush1.msra.mxu0 0.0
        %1633 = vmatprep.subr.mxu0 0.0
        %1634 = vmatpush1.msra.mxu0 0.0
        %1635 = vmatprep.subr.mxu0 0.0
        %1636 = vmatpush1.msra.mxu0 0.0
        %1637 = vmatprep.subr.mxu0 0.0
        %1638 = vmatpush1.msra.mxu0 0.0
        %1639 = vmatprep.subr.mxu0 0.0
        %1640 = vmatpush1.msra.mxu0 0.0
        %1641 = vmatprep.subr.mxu0 0.0
        %1642 = vmatpush1.msra.mxu0 0.0
        %1643 = vmatprep.subr.mxu0 0.0
        %1644 = vmatpush1.msra.mxu0 0.0
        %1645 = vmatprep.subr.mxu0 0.0
        %1646 = vmatpush1.msra.mxu0 0.0
        %1647 = vmatprep.subr.mxu0 0.0
        %1648 = vmatpush1.msra.mxu0 0.0
        %1649 = vmatprep.subr.mxu0 0.0
        %1650 = vmatpush1.msra.mxu0 0.0
        %1651 = vmatprep.subr.mxu0 0.0
        %1652 = vmatpush1.msra.mxu0 0.0
        %1653 = vmatprep.subr.mxu0 0.0
        %1654 = vmatpush1.msra.mxu0 0.0
        %1655 = vmatprep.subr.mxu0 0.0
        %1656 = vmatpush1.msra.mxu0 0.0
        %1657 = vmatprep.subr.mxu0 0.0
        %1658 = vmatpush1.msra.mxu0 0.0
        %1659 = vmatprep.subr.mxu0 0.0
        %1660 = vmatpush1.msra.mxu0 0.0
        %1661 = vmatprep.subr.mxu0 0.0
        %1662 = vmatpush1.msra.mxu0 0.0
        %1663 = vmatprep.subr.mxu0 0.0
        %1664 = vmatpush1.msra.mxu0 0.0
        %1665 = vmatprep.subr.mxu0 0.0
        %1666 = vmatpush1.msra.mxu0 0.0
        %1667 = vmatprep.mubr.f32.mxu0 0.0
        %1668 = vmatmul.mubr.f32.gmra.mrb[0].mxu0 %v1518
        %v1669 = vpop.f32.mrb[0].mxu0
        %v1670 = vadd.f32 0.0, %v1669
        %v1671 = vpop.f32.mrb[0].mxu0
        %1672 = vmatprep.mubr.f32.mxu0 0.0
        %1673 = vmatmul.mubr.f32.gmra.mrb[0].mxu0 %v1521
        %v1674 = vpop.f32.mrb[0].mxu0
        %v1675 = vadd.f32 0.0, %v1674
        %v1676 = vpop.f32.mrb[0].mxu0
        %1677 = vdwg.mxu0
        %s1678 = scalar_lea.vmem [#allocation5], 16
        %v1679 = vld [vmem:[%s1678] sm:$0xff]
        %v1680 = vld [vmem:[%s1678 + $0x8] sm:$0xff]
        %v1682 = vsel %vm1516, %v1679, 0
        %v1685 = vsel %vm1516, %v1680, 0
        %1687 = vmatprep.subr.mxu0 0.0
        %1688 = vmatpush1.msra.mxu0 %v1670
        %1689 = vmatprep.subr.mxu0 0.0
        %1690 = vmatpush1.msra.mxu0 %v1675
        %1691 = vmatprep.subr.mxu0 0.0
        %1692 = vmatpush1.msra.mxu0 0.0
        %1693 = vmatprep.subr.mxu0 0.0
        %1694 = vmatpush1.msra.mxu0 0.0
        %1695 = vmatprep.subr.mxu0 0.0
        %1696 = vmatpush1.msra.mxu0 0.0
        %1697 = vmatprep.subr.mxu0 0.0
        %1698 = vmatpush1.msra.mxu0 0.0
        %1699 = vmatprep.subr.mxu0 0.0
        %1700 = vmatpush1.msra.mxu0 0.0
        %1701 = vmatprep.subr.mxu0 0.0
        %1702 = vmatpush1.msra.mxu0 0.0
        %1703 = vmatprep.subr.mxu0 0.0
        %1704 = vmatpush1.msra.mxu0 0.0
        %1705 = vmatprep.subr.mxu0 0.0
        %1706 = vmatpush1.msra.mxu0 0.0
        %1707 = vmatprep.subr.mxu0 0.0
        %1708 = vmatpush1.msra.mxu0 0.0
        %1709 = vmatprep.subr.mxu0 0.0
        %1710 = vmatpush1.msra.mxu0 0.0
        %1711 = vmatprep.subr.mxu0 0.0
        %1712 = vmatpush1.msra.mxu0 0.0
        %1713 = vmatprep.subr.mxu0 0.0
        %1714 = vmatpush1.msra.mxu0 0.0
        %1715 = vmatprep.subr.mxu0 0.0
        %1716 = vmatpush1.msra.mxu0 0.0
        %1717 = vmatprep.subr.mxu0 0.0
        %1718 = vmatpush1.msra.mxu0 0.0
        %1719 = vmatprep.subr.mxu0 0.0
        %1720 = vmatpush1.msra.mxu0 0.0
        %1721 = vmatprep.subr.mxu0 0.0
        %1722 = vmatpush1.msra.mxu0 0.0
        %1723 = vmatprep.subr.mxu0 0.0
        %1724 = vmatpush1.msra.mxu0 0.0
        %1725 = vmatprep.subr.mxu0 0.0
        %1726 = vmatpush1.msra.mxu0 0.0
        %1727 = vmatprep.subr.mxu0 0.0
        %1728 = vmatpush1.msra.mxu0 0.0
        %1729 = vmatprep.subr.mxu0 0.0
        %1730 = vmatpush1.msra.mxu0 0.0
        %1731 = vmatprep.subr.mxu0 0.0
        %1732 = vmatpush1.msra.mxu0 0.0
        %1733 = vmatprep.subr.mxu0 0.0
        %1734 = vmatpush1.msra.mxu0 0.0
        %1735 = vmatprep.subr.mxu0 0.0
        %1736 = vmatpush1.msra.mxu0 0.0
        %1737 = vmatprep.subr.mxu0 0.0
        %1738 = vmatpush1.msra.mxu0 0.0
        %1739 = vmatprep.subr.mxu0 0.0
        %1740 = vmatpush1.msra.mxu0 0.0
        %1741 = vmatprep.subr.mxu0 0.0
        %1742 = vmatpush1.msra.mxu0 0.0
        %1743 = vmatprep.subr.mxu0 0.0
        %1744 = vmatpush1.msra.mxu0 0.0
        %1745 = vmatprep.subr.mxu0 0.0
        %1746 = vmatpush1.msra.mxu0 0.0
        %1747 = vmatprep.subr.mxu0 0.0
        %1748 = vmatpush1.msra.mxu0 0.0
        %1749 = vmatprep.subr.mxu0 0.0
        %1750 = vmatpush1.msra.mxu0 0.0
        %1751 = vmatprep.mubr.f32.mxu0 0.0
        %1752 = vmatmul.mubr.f32.gmra.mrb[0].mxu0 %v1682
        %v1753 = vpop.f32.mrb[0].mxu0
        %v1754 = vadd.f32 0.0, %v1753
        %v1755 = vpop.f32.mrb[0].mxu0
        %1756 = vmatprep.mubr.f32.mxu0 0.0
        %1757 = vmatmul.mubr.f32.gmra.mrb[0].mxu0 %v1685
        %v1758 = vpop.f32.mrb[0].mxu0
        %v1759 = vadd.f32 0.0, %v1758
        %v1760 = vpop.f32.mrb[0].mxu0
        %1761 = vdwg.mxu0
        %v1763 = vsel %vm1516, %v1598, 0
        %v1766 = vsel %vm1516, %v1599, 0
        %1768 = vmatprep.subr.mxu0 0.0
        %1769 = vmatpush1.msra.mxu0 %v1590
        %1770 = vmatprep.subr.mxu0 0.0
        %1771 = vmatpush1.msra.mxu0 %v1595
        %1772 = vmatprep.subr.mxu0 0.0
        %1773 = vmatpush1.msra.mxu0 0.0
        %1774 = vmatprep.subr.mxu0 0.0
        %1775 = vmatpush1.msra.mxu0 0.0
        %1776 = vmatprep.subr.mxu0 0.0
        %1777 = vmatpush1.msra.mxu0 0.0
        %1778 = vmatprep.subr.mxu0 0.0
        %1779 = vmatpush1.msra.mxu0 0.0
        %1780 = vmatprep.subr.mxu0 0.0
        %1781 = vmatpush1.msra.mxu0 0.0
        %1782 = vmatprep.subr.mxu0 0.0
        %1783 = vmatpush1.msra.mxu0 0.0
        %1784 = vmatprep.subr.mxu0 0.0
        %1785 = vmatpush1.msra.mxu0 0.0
        %1786 = vmatprep.subr.mxu0 0.0
        %1787 = vmatpush1.msra.mxu0 0.0
        %1788 = vmatprep.subr.mxu0 0.0
        %1789 = vmatpush1.msra.mxu0 0.0
        %1790 = vmatprep.subr.mxu0 0.0
        %1791 = vmatpush1.msra.mxu0 0.0
        %1792 = vmatprep.subr.mxu0 0.0
        %1793 = vmatpush1.msra.mxu0 0.0
        %1794 = vmatprep.subr.mxu0 0.0
        %1795 = vmatpush1.msra.mxu0 0.0
        %1796 = vmatprep.subr.mxu0 0.0
        %1797 = vmatpush1.msra.mxu0 0.0
        %1798 = vmatprep.subr.mxu0 0.0
        %1799 = vmatpush1.msra.mxu0 0.0
        %1800 = vmatprep.subr.mxu0 0.0
        %1801 = vmatpush1.msra.mxu0 0.0
        %1802 = vmatprep.subr.mxu0 0.0
        %1803 = vmatpush1.msra.mxu0 0.0
        %1804 = vmatprep.subr.mxu0 0.0
        %1805 = vmatpush1.msra.mxu0 0.0
        %1806 = vmatprep.subr.mxu0 0.0
        %1807 = vmatpush1.msra.mxu0 0.0
        %1808 = vmatprep.subr.mxu0 0.0
        %1809 = vmatpush1.msra.mxu0 0.0
        %1810 = vmatprep.subr.mxu0 0.0
        %1811 = vmatpush1.msra.mxu0 0.0
        %1812 = vmatprep.subr.mxu0 0.0
        %1813 = vmatpush1.msra.mxu0 0.0
        %1814 = vmatprep.subr.mxu0 0.0
        %1815 = vmatpush1.msra.mxu0 0.0
        %1816 = vmatprep.subr.mxu0 0.0
        %1817 = vmatpush1.msra.mxu0 0.0
        %1818 = vmatprep.subr.mxu0 0.0
        %1819 = vmatpush1.msra.mxu0 0.0
        %1820 = vmatprep.subr.mxu0 0.0
        %1821 = vmatpush1.msra.mxu0 0.0
        %1822 = vmatprep.subr.mxu0 0.0
        %1823 = vmatpush1.msra.mxu0 0.0
        %1824 = vmatprep.subr.mxu0 0.0
        %1825 = vmatpush1.msra.mxu0 0.0
        %1826 = vmatprep.subr.mxu0 0.0
        %1827 = vmatpush1.msra.mxu0 0.0
        %1828 = vmatprep.subr.mxu0 0.0
        %1829 = vmatpush1.msra.mxu0 0.0
        %1830 = vmatprep.subr.mxu0 0.0
        %1831 = vmatpush1.msra.mxu0 0.0
        %1832 = vmatprep.mubr.f32.mxu0 0.0
        %1833 = vmatmul.mubr.f32.gmra.mrb[0].mxu0 %v1763
        %v1834 = vpop.f32.mrb[0].mxu0
        %v1835 = vadd.f32 %v1754, %v1834
        %v1836 = vpop.f32.mrb[0].mxu0
        %1837 = vmatprep.mubr.f32.mxu0 0.0
        %1838 = vmatmul.mubr.f32.gmra.mrb[0].mxu0 %v1766
        %v1839 = vpop.f32.mrb[0].mxu0
        %v1840 = vadd.f32 %v1759, %v1839
        %v1841 = vpop.f32.mrb[0].mxu0
        %1842 = vdwg.mxu0
        %s1843 = scalar_lea.vmem [#allocation7], 32
        %v1844 = vld [vmem:[%s1843] sm:$0xff]
        %v1845 = vld [vmem:[%s1843 + $0x8] sm:$0xff]
        %1846 = vmatprep.subr.mxu0 0.0
        %1847 = vmatpush1.msra.mxu0 %v1844
        %1848 = vmatprep.subr.mxu0 0.0
        %1849 = vmatpush1.msra.mxu0 %v1845
        %1850 = vmatprep.subr.mxu0 0.0
        %1851 = vmatpush1.msra.mxu0 0.0
        %1852 = vmatprep.subr.mxu0 0.0
        %1853 = vmatpush1.msra.mxu0 0.0
        %1854 = vmatprep.subr.mxu0 0.0
        %1855 = vmatpush1.msra.mxu0 0.0
        %1856 = vmatprep.subr.mxu0 0.0
        %1857 = vmatpush1.msra.mxu0 0.0
        %1858 = vmatprep.subr.mxu0 0.0
        %1859 = vmatpush1.msra.mxu0 0.0
        %1860 = vmatprep.subr.mxu0 0.0
        %1861 = vmatpush1.msra.mxu0 0.0
        %1862 = vmatprep.subr.mxu0 0.0
        %1863 = vmatpush1.msra.mxu0 0.0
        %1864 = vmatprep.subr.mxu0 0.0
        %1865 = vmatpush1.msra.mxu0 0.0
        %1866 = vmatprep.subr.mxu0 0.0
        %1867 = vmatpush1.msra.mxu0 0.0
        %1868 = vmatprep.subr.mxu0 0.0
        %1869 = vmatpush1.msra.mxu0 0.0
        %1870 = vmatprep.subr.mxu0 0.0
        %1871 = vmatpush1.msra.mxu0 0.0
        %1872 = vmatprep.subr.mxu0 0.0
        %1873 = vmatpush1.msra.mxu0 0.0
        %1874 = vmatprep.subr.mxu0 0.0
        %1875 = vmatpush1.msra.mxu0 0.0
        %1876 = vmatprep.subr.mxu0 0.0
        %1877 = vmatpush1.msra.mxu0 0.0
        %1878 = vmatprep.subr.mxu0 0.0
        %1879 = vmatpush1.msra.mxu0 0.0
        %1880 = vmatprep.subr.mxu0 0.0
        %1881 = vmatpush1.msra.mxu0 0.0
        %1882 = vmatprep.subr.mxu0 0.0
        %1883 = vmatpush1.msra.mxu0 0.0
        %1884 = vmatprep.subr.mxu0 0.0
        %1885 = vmatpush1.msra.mxu0 0.0
        %1886 = vmatprep.subr.mxu0 0.0
        %1887 = vmatpush1.msra.mxu0 0.0
        %1888 = vmatprep.subr.mxu0 0.0
        %1889 = vmatpush1.msra.mxu0 0.0
        %1890 = vmatprep.subr.mxu0 0.0
        %1891 = vmatpush1.msra.mxu0 0.0
        %1892 = vmatprep.subr.mxu0 0.0
        %1893 = vmatpush1.msra.mxu0 0.0
        %1894 = vmatprep.subr.mxu0 0.0
        %1895 = vmatpush1.msra.mxu0 0.0
        %1896 = vmatprep.subr.mxu0 0.0
        %1897 = vmatpush1.msra.mxu0 0.0
        %1898 = vmatprep.subr.mxu0 0.0
        %1899 = vmatpush1.msra.mxu0 0.0
        %1900 = vmatprep.subr.mxu0 0.0
        %1901 = vmatpush1.msra.mxu0 0.0
        %1902 = vmatprep.subr.mxu0 0.0
        %1903 = vmatpush1.msra.mxu0 0.0
        %1904 = vmatprep.subr.mxu0 0.0
        %1905 = vmatpush1.msra.mxu0 0.0
        %1906 = vmatprep.subr.mxu0 0.0
        %1907 = vmatpush1.msra.mxu0 0.0
        %1908 = vmatprep.subr.mxu0 0.0
        %1909 = vmatpush1.msra.mxu0 0.0
        %1910 = vmatprep.mubr.f32.mxu0 0.0
        %1911 = vmatmul.mubr.f32.gmra.mrb[0].mxu0 %v1518
        %v1912 = vpop.f32.mrb[0].mxu0
        %v1913 = vadd.f32 0.0, %v1912
        %v1914 = vpop.f32.mrb[0].mxu0
        %1915 = vmatprep.mubr.f32.mxu0 0.0
        %1916 = vmatmul.mubr.f32.gmra.mrb[0].mxu0 %v1521
        %v1917 = vpop.f32.mrb[0].mxu0
        %v1918 = vadd.f32 0.0, %v1917
        %v1919 = vpop.f32.mrb[0].mxu0
        %1920 = vdwg.mxu0
        %s1921 = scalar_lea.vmem [#allocation5], 32
        %v1922 = vld [vmem:[%s1921] sm:$0xff]
        %v1923 = vld [vmem:[%s1921 + $0x8] sm:$0xff]
        %v1925 = vsel %vm1516, %v1922, 0
        %v1928 = vsel %vm1516, %v1923, 0
        %1930 = vmatprep.subr.mxu0 0.0
        %1931 = vmatpush1.msra.mxu0 %v1913
        %1932 = vmatprep.subr.mxu0 0.0
        %1933 = vmatpush1.msra.mxu0 %v1918
        %1934 = vmatprep.subr.mxu0 0.0
        %1935 = vmatpush1.msra.mxu0 0.0
        %1936 = vmatprep.subr.mxu0 0.0
        %1937 = vmatpush1.msra.mxu0 0.0
        %1938 = vmatprep.subr.mxu0 0.0
        %1939 = vmatpush1.msra.mxu0 0.0
        %1940 = vmatprep.subr.mxu0 0.0
        %1941 = vmatpush1.msra.mxu0 0.0
        %1942 = vmatprep.subr.mxu0 0.0
        %1943 = vmatpush1.msra.mxu0 0.0
        %1944 = vmatprep.subr.mxu0 0.0
        %1945 = vmatpush1.msra.mxu0 0.0
        %1946 = vmatprep.subr.mxu0 0.0
        %1947 = vmatpush1.msra.mxu0 0.0
        %1948 = vmatprep.subr.mxu0 0.0
        %1949 = vmatpush1.msra.mxu0 0.0
        %1950 = vmatprep.subr.mxu0 0.0
        %1951 = vmatpush1.msra.mxu0 0.0
        %1952 = vmatprep.subr.mxu0 0.0
        %1953 = vmatpush1.msra.mxu0 0.0
        %1954 = vmatprep.subr.mxu0 0.0
        %1955 = vmatpush1.msra.mxu0 0.0
        %1956 = vmatprep.subr.mxu0 0.0
        %1957 = vmatpush1.msra.mxu0 0.0
        %1958 = vmatprep.subr.mxu0 0.0
        %1959 = vmatpush1.msra.mxu0 0.0
        %1960 = vmatprep.subr.mxu0 0.0
        %1961 = vmatpush1.msra.mxu0 0.0
        %1962 = vmatprep.subr.mxu0 0.0
        %1963 = vmatpush1.msra.mxu0 0.0
        %1964 = vmatprep.subr.mxu0 0.0
        %1965 = vmatpush1.msra.mxu0 0.0
        %1966 = vmatprep.subr.mxu0 0.0
        %1967 = vmatpush1.msra.mxu0 0.0
        %1968 = vmatprep.subr.mxu0 0.0
        %1969 = vmatpush1.msra.mxu0 0.0
        %1970 = vmatprep.subr.mxu0 0.0
        %1971 = vmatpush1.msra.mxu0 0.0
        %1972 = vmatprep.subr.mxu0 0.0
        %1973 = vmatpush1.msra.mxu0 0.0
        %1974 = vmatprep.subr.mxu0 0.0
        %1975 = vmatpush1.msra.mxu0 0.0
        %1976 = vmatprep.subr.mxu0 0.0
        %1977 = vmatpush1.msra.mxu0 0.0
        %1978 = vmatprep.subr.mxu0 0.0
        %1979 = vmatpush1.msra.mxu0 0.0
        %1980 = vmatprep.subr.mxu0 0.0
        %1981 = vmatpush1.msra.mxu0 0.0
        %1982 = vmatprep.subr.mxu0 0.0
        %1983 = vmatpush1.msra.mxu0 0.0
        %1984 = vmatprep.subr.mxu0 0.0
        %1985 = vmatpush1.msra.mxu0 0.0
        %1986 = vmatprep.subr.mxu0 0.0
        %1987 = vmatpush1.msra.mxu0 0.0
        %1988 = vmatprep.subr.mxu0 0.0
        %1989 = vmatpush1.msra.mxu0 0.0
        %1990 = vmatprep.subr.mxu0 0.0
        %1991 = vmatpush1.msra.mxu0 0.0
        %1992 = vmatprep.subr.mxu0 0.0
        %1993 = vmatpush1.msra.mxu0 0.0
        %1994 = vmatprep.mubr.f32.mxu0 0.0
        %1995 = vmatmul.mubr.f32.gmra.mrb[0].mxu0 %v1925
        %v1996 = vpop.f32.mrb[0].mxu0
        %v1997 = vadd.f32 0.0, %v1996
        %v1998 = vpop.f32.mrb[0].mxu0
        %1999 = vmatprep.mubr.f32.mxu0 0.0
        %2000 = vmatmul.mubr.f32.gmra.mrb[0].mxu0 %v1928
        %v2001 = vpop.f32.mrb[0].mxu0
        %v2002 = vadd.f32 0.0, %v2001
        %v2003 = vpop.f32.mrb[0].mxu0
        %2004 = vdwg.mxu0
        %v2005 = vadd.f32 %v1835, %v1997
        %v2006 = vadd.f32 %v1840, %v2002
        %v2007 = vld [vmem:[%s7] sm:$0x1]
        %v2009 = vlaneseq
        %v2010 = vshrl.u32 %v2009, 7
        %v2011 = vsub.s32 0, %v2010
        %v2012 = vrot.slane %v2007, %v2011
        %v2014 = vadd.f32 %v2005, %v2012
        %v2015 = vadd.f32 %v2006, %v2012
        %v2016 = vmax.f32 %v2014, 0.0
        %v2017 = vmax.f32 %v2015, 0.0
        %v2018 = vld [vmem:[#allocation19] sm:$0xff]
        %v2019 = vld [vmem:[#allocation19 + $0x8] sm:$0xff]
        %v2020 = vld [vmem:[#allocation19 + $0x10] sm:$0xff]
        %v2021 = vld [vmem:[#allocation19 + $0x18] sm:$0xff]
        %v2022 = vld [vmem:[#allocation19 + $0x20] sm:$0xff]
        %v2023 = vld [vmem:[#allocation19 + $0x28] sm:$0xff]
        %v2024 = vld [vmem:[#allocation19 + $0x30] sm:$0xff]
        %v2025 = vld [vmem:[#allocation19 + $0x38] sm:$0xff]
        %v2026 = vld [vmem:[#allocation19 + $0x40] sm:$0xff]
        %v2027 = vld [vmem:[#allocation19 + $0x48] sm:$0xff]
        %v2028 = vld [vmem:[#allocation19 + $0x50] sm:$0xff]
        %v2029 = vld [vmem:[#allocation19 + $0x58] sm:$0xff]
        %v2030 = vld [vmem:[#allocation19 + $0x60] sm:$0xff]
        %v2031 = vld [vmem:[#allocation19 + $0x68] sm:$0xff]
        %v2032 = vld [vmem:[#allocation19 + $0x70] sm:$0xff]
        %v2033 = vld [vmem:[#allocation19 + $0x78] sm:$0xff]
        %2034 = vmatprep.subr.mxu0 0.0
        %2035 = vmatpush1.msra.mxu0 %v2018
        %2036 = vmatprep.subr.mxu0 0.0
        %2037 = vmatpush1.msra.mxu0 %v2019
        %2038 = vmatprep.subr.mxu0 0.0
        %2039 = vmatpush1.msra.mxu0 %v2020
        %2040 = vmatprep.subr.mxu0 0.0
        %2041 = vmatpush1.msra.mxu0 %v2021
        %2042 = vmatprep.subr.mxu0 0.0
        %2043 = vmatpush1.msra.mxu0 %v2022
        %2044 = vmatprep.subr.mxu0 0.0
        %2045 = vmatpush1.msra.mxu0 %v2023
        %2046 = vmatprep.subr.mxu0 0.0
        %2047 = vmatpush1.msra.mxu0 %v2024
        %2048 = vmatprep.subr.mxu0 0.0
        %2049 = vmatpush1.msra.mxu0 %v2025
        %2050 = vmatprep.subr.mxu0 0.0
        %2051 = vmatpush1.msra.mxu0 %v2026
        %2052 = vmatprep.subr.mxu0 0.0
        %2053 = vmatpush1.msra.mxu0 %v2027
        %2054 = vmatprep.subr.mxu0 0.0
        %2055 = vmatpush1.msra.mxu0 %v2028
        %2056 = vmatprep.subr.mxu0 0.0
        %2057 = vmatpush1.msra.mxu0 %v2029
        %2058 = vmatprep.subr.mxu0 0.0
        %2059 = vmatpush1.msra.mxu0 %v2030
        %2060 = vmatprep.subr.mxu0 0.0
        %2061 = vmatpush1.msra.mxu0 %v2031
        %2062 = vmatprep.subr.mxu0 0.0
        %2063 = vmatpush1.msra.mxu0 %v2032
        %2064 = vmatprep.subr.mxu0 0.0
        %2065 = vmatpush1.msra.mxu0 %v2033
        %2066 = vmatprep.subr.mxu0 0.0
        %2067 = vmatpush1.msra.mxu0 0.0
        %2068 = vmatprep.subr.mxu0 0.0
        %2069 = vmatpush1.msra.mxu0 0.0
        %2070 = vmatprep.subr.mxu0 0.0
        %2071 = vmatpush1.msra.mxu0 0.0
        %2072 = vmatprep.subr.mxu0 0.0
        %2073 = vmatpush1.msra.mxu0 0.0
        %2074 = vmatprep.subr.mxu0 0.0
        %2075 = vmatpush1.msra.mxu0 0.0
        %2076 = vmatprep.subr.mxu0 0.0
        %2077 = vmatpush1.msra.mxu0 0.0
        %2078 = vmatprep.subr.mxu0 0.0
        %2079 = vmatpush1.msra.mxu0 0.0
        %2080 = vmatprep.subr.mxu0 0.0
        %2081 = vmatpush1.msra.mxu0 0.0
        %2082 = vmatprep.subr.mxu0 0.0
        %2083 = vmatpush1.msra.mxu0 0.0
        %2084 = vmatprep.subr.mxu0 0.0
        %2085 = vmatpush1.msra.mxu0 0.0
        %2086 = vmatprep.subr.mxu0 0.0
        %2087 = vmatpush1.msra.mxu0 0.0
        %2088 = vmatprep.subr.mxu0 0.0
        %2089 = vmatpush1.msra.mxu0 0.0
        %2090 = vmatprep.subr.mxu0 0.0
        %2091 = vmatpush1.msra.mxu0 0.0
        %2092 = vmatprep.subr.mxu0 0.0
        %2093 = vmatpush1.msra.mxu0 0.0
        %2094 = vmatprep.subr.mxu0 0.0
        %2095 = vmatpush1.msra.mxu0 0.0
        %2096 = vmatprep.subr.mxu0 0.0
        %2097 = vmatpush1.msra.mxu0 0.0
        %2098 = vmatprep.mubr.f32.mxu0 0.0
        %2099 = vmatmul.mubr.f32.gmra.mrb[0].mxu0 %v2016
        %v2100 = vpop.f32.mrb[0].mxu0
        %v2101 = vadd.f32 0.0, %v2100
        %v2102 = vpop.f32.mrb[0].mxu0
        %2103 = vmatprep.mubr.f32.mxu0 0.0
        %2104 = vmatmul.mubr.f32.gmra.mrb[0].mxu0 %v2017
        %v2105 = vpop.f32.mrb[0].mxu0
        %v2106 = vadd.f32 0.0, %v2105
        %v2107 = vpop.f32.mrb[0].mxu0
        %2108 = vdwg.mxu0
        %v2109 = vld [vmem:[#allocation17] sm:$0xff]
        %v2110 = vld [vmem:[#allocation20] sm:$0x1]
        %v2112 = vlaneseq
        %v2113 = vshrl.u32 %v2112, 7
        %v2114 = vsub.s32 0, %v2113
        %v2115 = vrot.slane %v2110, %v2114
        %v2118 = vsel %vm1516, %v2109, 0
        %2120 = vmatprep.subr.mxu0 0.0
        %2121 = vmatpush1.msra.mxu0 %v2101
        %2122 = vmatprep.subr.mxu0 0.0
        %2123 = vmatpush1.msra.mxu0 %v2106
        %2124 = vmatprep.subr.mxu0 0.0
        %2125 = vmatpush1.msra.mxu0 0.0
        %2126 = vmatprep.subr.mxu0 0.0
        %2127 = vmatpush1.msra.mxu0 0.0
        %2128 = vmatprep.subr.mxu0 0.0
        %2129 = vmatpush1.msra.mxu0 0.0
        %2130 = vmatprep.subr.mxu0 0.0
        %2131 = vmatpush1.msra.mxu0 0.0
        %2132 = vmatprep.subr.mxu0 0.0
        %2133 = vmatpush1.msra.mxu0 0.0
        %2134 = vmatprep.subr.mxu0 0.0
        %2135 = vmatpush1.msra.mxu0 0.0
        %2136 = vmatprep.subr.mxu0 0.0
        %2137 = vmatpush1.msra.mxu0 0.0
        %2138 = vmatprep.subr.mxu0 0.0
        %2139 = vmatpush1.msra.mxu0 0.0
        %2140 = vmatprep.subr.mxu0 0.0
        %2141 = vmatpush1.msra.mxu0 0.0
        %2142 = vmatprep.subr.mxu0 0.0
        %2143 = vmatpush1.msra.mxu0 0.0
        %2144 = vmatprep.subr.mxu0 0.0
        %2145 = vmatpush1.msra.mxu0 0.0
        %2146 = vmatprep.subr.mxu0 0.0
        %2147 = vmatpush1.msra.mxu0 0.0
        %2148 = vmatprep.subr.mxu0 0.0
        %2149 = vmatpush1.msra.mxu0 0.0
        %2150 = vmatprep.subr.mxu0 0.0
        %2151 = vmatpush1.msra.mxu0 0.0
        %2152 = vmatprep.subr.mxu0 0.0
        %2153 = vmatpush1.msra.mxu0 0.0
        %2154 = vmatprep.subr.mxu0 0.0
        %2155 = vmatpush1.msra.mxu0 0.0
        %2156 = vmatprep.subr.mxu0 0.0
        %2157 = vmatpush1.msra.mxu0 0.0
        %2158 = vmatprep.subr.mxu0 0.0
        %2159 = vmatpush1.msra.mxu0 0.0
        %2160 = vmatprep.subr.mxu0 0.0
        %2161 = vmatpush1.msra.mxu0 0.0
        %2162 = vmatprep.subr.mxu0 0.0
        %2163 = vmatpush1.msra.mxu0 0.0
        %2164 = vmatprep.subr.mxu0 0.0
        %2165 = vmatpush1.msra.mxu0 0.0
        %2166 = vmatprep.subr.mxu0 0.0
        %2167 = vmatpush1.msra.mxu0 0.0
        %2168 = vmatprep.subr.mxu0 0.0
        %2169 = vmatpush1.msra.mxu0 0.0
        %2170 = vmatprep.subr.mxu0 0.0
        %2171 = vmatpush1.msra.mxu0 0.0
        %2172 = vmatprep.subr.mxu0 0.0
        %2173 = vmatpush1.msra.mxu0 0.0
        %2174 = vmatprep.subr.mxu0 0.0
        %2175 = vmatpush1.msra.mxu0 0.0
        %2176 = vmatprep.subr.mxu0 0.0
        %2177 = vmatpush1.msra.mxu0 0.0
        %2178 = vmatprep.subr.mxu0 0.0
        %2179 = vmatpush1.msra.mxu0 0.0
        %2180 = vmatprep.subr.mxu0 0.0
        %2181 = vmatpush1.msra.mxu0 0.0
        %2182 = vmatprep.subr.mxu0 0.0
        %2183 = vmatpush1.msra.mxu0 0.0
        %2184 = vmatprep.mubr.f32.mxu0 0.0
        %2185 = vmatmul.mubr.f32.gmra.mrb[0].mxu0 %v2118
        %v2186 = vpop.f32.mrb[0].mxu0
        %v2187 = vadd.f32 %v2115, %v2186
        %v2188 = vpop.f32.mrb[0].mxu0
        %2189 = vdwg.mxu0
        %v2190 = vld [vmem:[#allocation10] sm:$0xff]
        %v2191 = vld [vmem:[#allocation10 + $0x8] sm:$0xff]
        %v2192 = vld [vmem:[#allocation10 + $0x10] sm:$0xff]
        %v2193 = vld [vmem:[#allocation10 + $0x18] sm:$0xff]
        %v2194 = vld [vmem:[#allocation10 + $0x20] sm:$0xff]
        %v2195 = vld [vmem:[#allocation10 + $0x28] sm:$0xff]
        %v2196 = vld [vmem:[#allocation10 + $0x30] sm:$0xff]
        %v2197 = vld [vmem:[#allocation10 + $0x38] sm:$0xff]
        %v2198 = vld [vmem:[#allocation10 + $0x40] sm:$0xff]
        %v2199 = vld [vmem:[#allocation10 + $0x48] sm:$0xff]
        %v2200 = vld [vmem:[#allocation10 + $0x50] sm:$0xff]
        %v2201 = vld [vmem:[#allocation10 + $0x58] sm:$0xff]
        %v2202 = vld [vmem:[#allocation10 + $0x60] sm:$0xff]
        %v2203 = vld [vmem:[#allocation10 + $0x68] sm:$0xff]
        %v2204 = vld [vmem:[#allocation10 + $0x70] sm:$0xff]
        %v2205 = vld [vmem:[#allocation10 + $0x78] sm:$0xff]
        %2206 = vmatprep.subr.mxu0 0.0
        %2207 = vmatpush1.msra.mxu0 %v2190
        %2208 = vmatprep.subr.mxu0 0.0
        %2209 = vmatpush1.msra.mxu0 %v2191
        %2210 = vmatprep.subr.mxu0 0.0
        %2211 = vmatpush1.msra.mxu0 %v2192
        %2212 = vmatprep.subr.mxu0 0.0
        %2213 = vmatpush1.msra.mxu0 %v2193
        %2214 = vmatprep.subr.mxu0 0.0
        %2215 = vmatpush1.msra.mxu0 %v2194
        %2216 = vmatprep.subr.mxu0 0.0
        %2217 = vmatpush1.msra.mxu0 %v2195
        %2218 = vmatprep.subr.mxu0 0.0
        %2219 = vmatpush1.msra.mxu0 %v2196
        %2220 = vmatprep.subr.mxu0 0.0
        %2221 = vmatpush1.msra.mxu0 %v2197
        %2222 = vmatprep.subr.mxu0 0.0
        %2223 = vmatpush1.msra.mxu0 %v2198
        %2224 = vmatprep.subr.mxu0 0.0
        %2225 = vmatpush1.msra.mxu0 %v2199
        %2226 = vmatprep.subr.mxu0 0.0
        %2227 = vmatpush1.msra.mxu0 %v2200
        %2228 = vmatprep.subr.mxu0 0.0
        %2229 = vmatpush1.msra.mxu0 %v2201
        %2230 = vmatprep.subr.mxu0 0.0
        %2231 = vmatpush1.msra.mxu0 %v2202
        %2232 = vmatprep.subr.mxu0 0.0
        %2233 = vmatpush1.msra.mxu0 %v2203
        %2234 = vmatprep.subr.mxu0 0.0
        %2235 = vmatpush1.msra.mxu0 %v2204
        %2236 = vmatprep.subr.mxu0 0.0
        %2237 = vmatpush1.msra.mxu0 %v2205
        %2238 = vmatprep.subr.mxu0 0.0
        %2239 = vmatpush1.msra.mxu0 0.0
        %2240 = vmatprep.subr.mxu0 0.0
        %2241 = vmatpush1.msra.mxu0 0.0
        %2242 = vmatprep.subr.mxu0 0.0
        %2243 = vmatpush1.msra.mxu0 0.0
        %2244 = vmatprep.subr.mxu0 0.0
        %2245 = vmatpush1.msra.mxu0 0.0
        %2246 = vmatprep.subr.mxu0 0.0
        %2247 = vmatpush1.msra.mxu0 0.0
        %2248 = vmatprep.subr.mxu0 0.0
        %2249 = vmatpush1.msra.mxu0 0.0
        %2250 = vmatprep.subr.mxu0 0.0
        %2251 = vmatpush1.msra.mxu0 0.0
        %2252 = vmatprep.subr.mxu0 0.0
        %2253 = vmatpush1.msra.mxu0 0.0
        %2254 = vmatprep.subr.mxu0 0.0
        %2255 = vmatpush1.msra.mxu0 0.0
        %2256 = vmatprep.subr.mxu0 0.0
        %2257 = vmatpush1.msra.mxu0 0.0
        %2258 = vmatprep.subr.mxu0 0.0
        %2259 = vmatpush1.msra.mxu0 0.0
        %2260 = vmatprep.subr.mxu0 0.0
        %2261 = vmatpush1.msra.mxu0 0.0
        %2262 = vmatprep.subr.mxu0 0.0
        %2263 = vmatpush1.msra.mxu0 0.0
        %2264 = vmatprep.subr.mxu0 0.0
        %2265 = vmatpush1.msra.mxu0 0.0
        %2266 = vmatprep.subr.mxu0 0.0
        %2267 = vmatpush1.msra.mxu0 0.0
        %2268 = vmatprep.subr.mxu0 0.0
        %2269 = vmatpush1.msra.mxu0 0.0
        %2270 = vmatprep.mubr.f32.mxu0 0.0
        %2271 = vmatmul.mubr.f32.gmra.mrb[0].mxu0 %v2016
        %v2272 = vpop.f32.mrb[0].mxu0
        %v2273 = vadd.f32 0.0, %v2272
        %v2274 = vpop.f32.mrb[0].mxu0
        %2275 = vmatprep.mubr.f32.mxu0 0.0
        %2276 = vmatmul.mubr.f32.gmra.mrb[0].mxu0 %v2017
        %v2277 = vpop.f32.mrb[0].mxu0
        %v2278 = vadd.f32 0.0, %v2277
        %v2279 = vpop.f32.mrb[0].mxu0
        %2280 = vdwg.mxu0
        %v2281 = vld [vmem:[#allocation8] sm:$0xff]
        %s2282 = scalar_lea.vmem [#allocation10], 128
        %v2283 = vld [vmem:[%s2282] sm:$0xff]
        %v2284 = vld [vmem:[%s2282 + $0x8] sm:$0xff]
        %v2285 = vld [vmem:[%s2282 + $0x10] sm:$0xff]
        %v2286 = vld [vmem:[%s2282 + $0x18] sm:$0xff]
        %v2287 = vld [vmem:[%s2282 + $0x20] sm:$0xff]
        %v2288 = vld [vmem:[%s2282 + $0x28] sm:$0xff]
        %v2289 = vld [vmem:[%s2282 + $0x30] sm:$0xff]
        %v2290 = vld [vmem:[%s2282 + $0x38] sm:$0xff]
        %v2291 = vld [vmem:[%s2282 + $0x40] sm:$0xff]
        %v2292 = vld [vmem:[%s2282 + $0x48] sm:$0xff]
        %v2293 = vld [vmem:[%s2282 + $0x50] sm:$0xff]
        %v2294 = vld [vmem:[%s2282 + $0x58] sm:$0xff]
        %v2295 = vld [vmem:[%s2282 + $0x60] sm:$0xff]
        %v2296 = vld [vmem:[%s2282 + $0x68] sm:$0xff]
        %v2297 = vld [vmem:[%s2282 + $0x70] sm:$0xff]
        %v2298 = vld [vmem:[%s2282 + $0x78] sm:$0xff]
        %2299 = vmatprep.subr.mxu0 0.0
        %2300 = vmatpush1.msra.mxu0 %v2283
        %2301 = vmatprep.subr.mxu0 0.0
        %2302 = vmatpush1.msra.mxu0 %v2284
        %2303 = vmatprep.subr.mxu0 0.0
        %2304 = vmatpush1.msra.mxu0 %v2285
        %2305 = vmatprep.subr.mxu0 0.0
        %2306 = vmatpush1.msra.mxu0 %v2286
        %2307 = vmatprep.subr.mxu0 0.0
        %2308 = vmatpush1.msra.mxu0 %v2287
        %2309 = vmatprep.subr.mxu0 0.0
        %2310 = vmatpush1.msra.mxu0 %v2288
        %2311 = vmatprep.subr.mxu0 0.0
        %2312 = vmatpush1.msra.mxu0 %v2289
        %2313 = vmatprep.subr.mxu0 0.0
        %2314 = vmatpush1.msra.mxu0 %v2290
        %2315 = vmatprep.subr.mxu0 0.0
        %2316 = vmatpush1.msra.mxu0 %v2291
        %2317 = vmatprep.subr.mxu0 0.0
        %2318 = vmatpush1.msra.mxu0 %v2292
        %2319 = vmatprep.subr.mxu0 0.0
        %2320 = vmatpush1.msra.mxu0 %v2293
        %2321 = vmatprep.subr.mxu0 0.0
        %2322 = vmatpush1.msra.mxu0 %v2294
        %2323 = vmatprep.subr.mxu0 0.0
        %2324 = vmatpush1.msra.mxu0 %v2295
        %2325 = vmatprep.subr.mxu0 0.0
        %2326 = vmatpush1.msra.mxu0 %v2296
        %2327 = vmatprep.subr.mxu0 0.0
        %2328 = vmatpush1.msra.mxu0 %v2297
        %2329 = vmatprep.subr.mxu0 0.0
        %2330 = vmatpush1.msra.mxu0 %v2298
        %2331 = vmatprep.subr.mxu0 0.0
        %2332 = vmatpush1.msra.mxu0 0.0
        %2333 = vmatprep.subr.mxu0 0.0
        %2334 = vmatpush1.msra.mxu0 0.0
        %2335 = vmatprep.subr.mxu0 0.0
        %2336 = vmatpush1.msra.mxu0 0.0
        %2337 = vmatprep.subr.mxu0 0.0
        %2338 = vmatpush1.msra.mxu0 0.0
        %2339 = vmatprep.subr.mxu0 0.0
        %2340 = vmatpush1.msra.mxu0 0.0
        %2341 = vmatprep.subr.mxu0 0.0
        %2342 = vmatpush1.msra.mxu0 0.0
        %2343 = vmatprep.subr.mxu0 0.0
        %2344 = vmatpush1.msra.mxu0 0.0
        %2345 = vmatprep.subr.mxu0 0.0
        %2346 = vmatpush1.msra.mxu0 0.0
        %2347 = vmatprep.subr.mxu0 0.0
        %2348 = vmatpush1.msra.mxu0 0.0
        %2349 = vmatprep.subr.mxu0 0.0
        %2350 = vmatpush1.msra.mxu0 0.0
        %2351 = vmatprep.subr.mxu0 0.0
        %2352 = vmatpush1.msra.mxu0 0.0
        %2353 = vmatprep.subr.mxu0 0.0
        %2354 = vmatpush1.msra.mxu0 0.0
        %2355 = vmatprep.subr.mxu0 0.0
        %2356 = vmatpush1.msra.mxu0 0.0
        %2357 = vmatprep.subr.mxu0 0.0
        %2358 = vmatpush1.msra.mxu0 0.0
        %2359 = vmatprep.subr.mxu0 0.0
        %2360 = vmatpush1.msra.mxu0 0.0
        %2361 = vmatprep.subr.mxu0 0.0
        %2362 = vmatpush1.msra.mxu0 0.0
        %2363 = vmatprep.mubr.f32.mxu0 0.0
        %2364 = vmatmul.mubr.f32.gmra.mrb[0].mxu0 %v2016
        %v2365 = vpop.f32.mrb[0].mxu0
        %v2366 = vadd.f32 0.0, %v2365
        %v2367 = vpop.f32.mrb[0].mxu0
        %2368 = vmatprep.mubr.f32.mxu0 0.0
        %2369 = vmatmul.mubr.f32.gmra.mrb[0].mxu0 %v2017
        %v2370 = vpop.f32.mrb[0].mxu0
        %v2371 = vadd.f32 0.0, %v2370
        %v2372 = vpop.f32.mrb[0].mxu0
        %2373 = vdwg.mxu0
        %s2374 = scalar_lea.vmem [#allocation8], 8
        %v2375 = vld [vmem:[%s2374] sm:$0xff]
        %v2377 = vsel %vm1516, %v2375, 0
        %2379 = vmatprep.subr.mxu0 0.0
        %2380 = vmatpush1.msra.mxu0 %v2366
        %2381 = vmatprep.subr.mxu0 0.0
        %2382 = vmatpush1.msra.mxu0 %v2371
        %2383 = vmatprep.subr.mxu0 0.0
        %2384 = vmatpush1.msra.mxu0 0.0
        %2385 = vmatprep.subr.mxu0 0.0
        %2386 = vmatpush1.msra.mxu0 0.0
        %2387 = vmatprep.subr.mxu0 0.0
        %2388 = vmatpush1.msra.mxu0 0.0
        %2389 = vmatprep.subr.mxu0 0.0
        %2390 = vmatpush1.msra.mxu0 0.0
        %2391 = vmatprep.subr.mxu0 0.0
        %2392 = vmatpush1.msra.mxu0 0.0
        %2393 = vmatprep.subr.mxu0 0.0
        %2394 = vmatpush1.msra.mxu0 0.0
        %2395 = vmatprep.subr.mxu0 0.0
        %2396 = vmatpush1.msra.mxu0 0.0
        %2397 = vmatprep.subr.mxu0 0.0
        %2398 = vmatpush1.msra.mxu0 0.0
        %2399 = vmatprep.subr.mxu0 0.0
        %2400 = vmatpush1.msra.mxu0 0.0
        %2401 = vmatprep.subr.mxu0 0.0
        %2402 = vmatpush1.msra.mxu0 0.0
        %2403 = vmatprep.subr.mxu0 0.0
        %2404 = vmatpush1.msra.mxu0 0.0
        %2405 = vmatprep.subr.mxu0 0.0
        %2406 = vmatpush1.msra.mxu0 0.0
        %2407 = vmatprep.subr.mxu0 0.0
        %2408 = vmatpush1.msra.mxu0 0.0
        %2409 = vmatprep.subr.mxu0 0.0
        %2410 = vmatpush1.msra.mxu0 0.0
        %2411 = vmatprep.subr.mxu0 0.0
        %2412 = vmatpush1.msra.mxu0 0.0
        %2413 = vmatprep.subr.mxu0 0.0
        %2414 = vmatpush1.msra.mxu0 0.0
        %2415 = vmatprep.subr.mxu0 0.0
        %2416 = vmatpush1.msra.mxu0 0.0
        %2417 = vmatprep.subr.mxu0 0.0
        %2418 = vmatpush1.msra.mxu0 0.0
        %2419 = vmatprep.subr.mxu0 0.0
        %2420 = vmatpush1.msra.mxu0 0.0
        %2421 = vmatprep.subr.mxu0 0.0
        %2422 = vmatpush1.msra.mxu0 0.0
        %2423 = vmatprep.subr.mxu0 0.0
        %2424 = vmatpush1.msra.mxu0 0.0
        %2425 = vmatprep.subr.mxu0 0.0
        %2426 = vmatpush1.msra.mxu0 0.0
        %2427 = vmatprep.subr.mxu0 0.0
        %2428 = vmatpush1.msra.mxu0 0.0
        %2429 = vmatprep.subr.mxu0 0.0
        %2430 = vmatpush1.msra.mxu0 0.0
        %2431 = vmatprep.subr.mxu0 0.0
        %2432 = vmatpush1.msra.mxu0 0.0
        %2433 = vmatprep.subr.mxu0 0.0
        %2434 = vmatpush1.msra.mxu0 0.0
        %2435 = vmatprep.subr.mxu0 0.0
        %2436 = vmatpush1.msra.mxu0 0.0
        %2437 = vmatprep.subr.mxu0 0.0
        %2438 = vmatpush1.msra.mxu0 0.0
        %2439 = vmatprep.subr.mxu0 0.0
        %2440 = vmatpush1.msra.mxu0 0.0
        %2441 = vmatprep.subr.mxu0 0.0
        %2442 = vmatpush1.msra.mxu0 0.0
        %2443 = vmatprep.mubr.f32.mxu0 0.0
        %2444 = vmatmul.mubr.f32.gmra.mrb[0].mxu0 %v2377
        %v2445 = vpop.f32.mrb[0].mxu0
        %v2446 = vadd.f32 0.0, %v2445
        %v2447 = vpop.f32.mrb[0].mxu0
        %2448 = vdwg.mxu0
        %v2450 = vsel %vm1516, %v2281, 0
        %2452 = vmatprep.subr.mxu0 0.0
        %2453 = vmatpush1.msra.mxu0 %v2273
        %2454 = vmatprep.subr.mxu0 0.0
        %2455 = vmatpush1.msra.mxu0 %v2278
        %2456 = vmatprep.subr.mxu0 0.0
        %2457 = vmatpush1.msra.mxu0 0.0
        %2458 = vmatprep.subr.mxu0 0.0
        %2459 = vmatpush1.msra.mxu0 0.0
        %2460 = vmatprep.subr.mxu0 0.0
        %2461 = vmatpush1.msra.mxu0 0.0
        %2462 = vmatprep.subr.mxu0 0.0
        %2463 = vmatpush1.msra.mxu0 0.0
        %2464 = vmatprep.subr.mxu0 0.0
        %2465 = vmatpush1.msra.mxu0 0.0
        %2466 = vmatprep.subr.mxu0 0.0
        %2467 = vmatpush1.msra.mxu0 0.0
        %2468 = vmatprep.subr.mxu0 0.0
        %2469 = vmatpush1.msra.mxu0 0.0
        %2470 = vmatprep.subr.mxu0 0.0
        %2471 = vmatpush1.msra.mxu0 0.0
        %2472 = vmatprep.subr.mxu0 0.0
        %2473 = vmatpush1.msra.mxu0 0.0
        %2474 = vmatprep.subr.mxu0 0.0
        %2475 = vmatpush1.msra.mxu0 0.0
        %2476 = vmatprep.subr.mxu0 0.0
        %2477 = vmatpush1.msra.mxu0 0.0
        %2478 = vmatprep.subr.mxu0 0.0
        %2479 = vmatpush1.msra.mxu0 0.0
        %2480 = vmatprep.subr.mxu0 0.0
        %2481 = vmatpush1.msra.mxu0 0.0
        %2482 = vmatprep.subr.mxu0 0.0
        %2483 = vmatpush1.msra.mxu0 0.0
        %2484 = vmatprep.subr.mxu0 0.0
        %2485 = vmatpush1.msra.mxu0 0.0
        %2486 = vmatprep.subr.mxu0 0.0
        %2487 = vmatpush1.msra.mxu0 0.0
        %2488 = vmatprep.subr.mxu0 0.0
        %2489 = vmatpush1.msra.mxu0 0.0
        %2490 = vmatprep.subr.mxu0 0.0
        %2491 = vmatpush1.msra.mxu0 0.0
        %2492 = vmatprep.subr.mxu0 0.0
        %2493 = vmatpush1.msra.mxu0 0.0
        %2494 = vmatprep.subr.mxu0 0.0
        %2495 = vmatpush1.msra.mxu0 0.0
        %2496 = vmatprep.subr.mxu0 0.0
        %2497 = vmatpush1.msra.mxu0 0.0
        %2498 = vmatprep.subr.mxu0 0.0
        %2499 = vmatpush1.msra.mxu0 0.0
        %2500 = vmatprep.subr.mxu0 0.0
        %2501 = vmatpush1.msra.mxu0 0.0
        %2502 = vmatprep.subr.mxu0 0.0
        %2503 = vmatpush1.msra.mxu0 0.0
        %2504 = vmatprep.subr.mxu0 0.0
        %2505 = vmatpush1.msra.mxu0 0.0
        %2506 = vmatprep.subr.mxu0 0.0
        %2507 = vmatpush1.msra.mxu0 0.0
        %2508 = vmatprep.subr.mxu0 0.0
        %2509 = vmatpush1.msra.mxu0 0.0
        %2510 = vmatprep.subr.mxu0 0.0
        %2511 = vmatpush1.msra.mxu0 0.0
        %2512 = vmatprep.subr.mxu0 0.0
        %2513 = vmatpush1.msra.mxu0 0.0
        %2514 = vmatprep.subr.mxu0 0.0
        %2515 = vmatpush1.msra.mxu0 0.0
        %2516 = vmatprep.mubr.f32.mxu0 0.0
        %2517 = vmatmul.mubr.f32.gmra.mrb[0].mxu0 %v2450
        %v2518 = vpop.f32.mrb[0].mxu0
        %v2519 = vadd.f32 %v2446, %v2518
        %v2520 = vpop.f32.mrb[0].mxu0
        %2521 = vdwg.mxu0
        %s2522 = scalar_lea.vmem [#allocation10], 256
        %v2523 = vld [vmem:[%s2522] sm:$0xff]
        %v2524 = vld [vmem:[%s2522 + $0x8] sm:$0xff]
        %v2525 = vld [vmem:[%s2522 + $0x10] sm:$0xff]
        %v2526 = vld [vmem:[%s2522 + $0x18] sm:$0xff]
        %v2527 = vld [vmem:[%s2522 + $0x20] sm:$0xff]
        %v2528 = vld [vmem:[%s2522 + $0x28] sm:$0xff]
        %v2529 = vld [vmem:[%s2522 + $0x30] sm:$0xff]
        %v2530 = vld [vmem:[%s2522 + $0x38] sm:$0xff]
        %v2531 = vld [vmem:[%s2522 + $0x40] sm:$0xff]
        %v2532 = vld [vmem:[%s2522 + $0x48] sm:$0xff]
        %v2533 = vld [vmem:[%s2522 + $0x50] sm:$0xff]
        %v2534 = vld [vmem:[%s2522 + $0x58] sm:$0xff]
        %v2535 = vld [vmem:[%s2522 + $0x60] sm:$0xff]
        %v2536 = vld [vmem:[%s2522 + $0x68] sm:$0xff]
        %v2537 = vld [vmem:[%s2522 + $0x70] sm:$0xff]
        %v2538 = vld [vmem:[%s2522 + $0x78] sm:$0xff]
        %2539 = vmatprep.subr.mxu0 0.0
        %2540 = vmatpush1.msra.mxu0 %v2523
        %2541 = vmatprep.subr.mxu0 0.0
        %2542 = vmatpush1.msra.mxu0 %v2524
        %2543 = vmatprep.subr.mxu0 0.0
        %2544 = vmatpush1.msra.mxu0 %v2525
        %2545 = vmatprep.subr.mxu0 0.0
        %2546 = vmatpush1.msra.mxu0 %v2526
        %2547 = vmatprep.subr.mxu0 0.0
        %2548 = vmatpush1.msra.mxu0 %v2527
        %2549 = vmatprep.subr.mxu0 0.0
        %2550 = vmatpush1.msra.mxu0 %v2528
        %2551 = vmatprep.subr.mxu0 0.0
        %2552 = vmatpush1.msra.mxu0 %v2529
        %2553 = vmatprep.subr.mxu0 0.0
        %2554 = vmatpush1.msra.mxu0 %v2530
        %2555 = vmatprep.subr.mxu0 0.0
        %2556 = vmatpush1.msra.mxu0 %v2531
        %2557 = vmatprep.subr.mxu0 0.0
        %2558 = vmatpush1.msra.mxu0 %v2532
        %2559 = vmatprep.subr.mxu0 0.0
        %2560 = vmatpush1.msra.mxu0 %v2533
        %2561 = vmatprep.subr.mxu0 0.0
        %2562 = vmatpush1.msra.mxu0 %v2534
        %2563 = vmatprep.subr.mxu0 0.0
        %2564 = vmatpush1.msra.mxu0 %v2535
        %2565 = vmatprep.subr.mxu0 0.0
        %2566 = vmatpush1.msra.mxu0 %v2536
        %2567 = vmatprep.subr.mxu0 0.0
        %2568 = vmatpush1.msra.mxu0 %v2537
        %2569 = vmatprep.subr.mxu0 0.0
        %2570 = vmatpush1.msra.mxu0 %v2538
        %2571 = vmatprep.subr.mxu0 0.0
        %2572 = vmatpush1.msra.mxu0 0.0
        %2573 = vmatprep.subr.mxu0 0.0
        %2574 = vmatpush1.msra.mxu0 0.0
        %2575 = vmatprep.subr.mxu0 0.0
        %2576 = vmatpush1.msra.mxu0 0.0
        %2577 = vmatprep.subr.mxu0 0.0
        %2578 = vmatpush1.msra.mxu0 0.0
        %2579 = vmatprep.subr.mxu0 0.0
        %2580 = vmatpush1.msra.mxu0 0.0
        %2581 = vmatprep.subr.mxu0 0.0
        %2582 = vmatpush1.msra.mxu0 0.0
        %2583 = vmatprep.subr.mxu0 0.0
        %2584 = vmatpush1.msra.mxu0 0.0
        %2585 = vmatprep.subr.mxu0 0.0
        %2586 = vmatpush1.msra.mxu0 0.0
        %2587 = vmatprep.subr.mxu0 0.0
        %2588 = vmatpush1.msra.mxu0 0.0
        %2589 = vmatprep.subr.mxu0 0.0
        %2590 = vmatpush1.msra.mxu0 0.0
        %2591 = vmatprep.subr.mxu0 0.0
        %2592 = vmatpush1.msra.mxu0 0.0
        %2593 = vmatprep.subr.mxu0 0.0
        %2594 = vmatpush1.msra.mxu0 0.0
        %2595 = vmatprep.subr.mxu0 0.0
        %2596 = vmatpush1.msra.mxu0 0.0
        %2597 = vmatprep.subr.mxu0 0.0
        %2598 = vmatpush1.msra.mxu0 0.0
        %2599 = vmatprep.subr.mxu0 0.0
        %2600 = vmatpush1.msra.mxu0 0.0
        %2601 = vmatprep.subr.mxu0 0.0
        %2602 = vmatpush1.msra.mxu0 0.0
        %2603 = vmatprep.mubr.f32.mxu0 0.0
        %2604 = vmatmul.mubr.f32.gmra.mrb[0].mxu0 %v2016
        %v2605 = vpop.f32.mrb[0].mxu0
        %v2606 = vadd.f32 0.0, %v2605
        %v2607 = vpop.f32.mrb[0].mxu0
        %2608 = vmatprep.mubr.f32.mxu0 0.0
        %2609 = vmatmul.mubr.f32.gmra.mrb[0].mxu0 %v2017
        %v2610 = vpop.f32.mrb[0].mxu0
        %v2611 = vadd.f32 0.0, %v2610
        %v2612 = vpop.f32.mrb[0].mxu0
        %2613 = vdwg.mxu0
        %s2614 = scalar_lea.vmem [#allocation8], 16
        %v2615 = vld [vmem:[%s2614] sm:$0xff]
        %v2617 = vsel %vm1516, %v2615, 0
        %2619 = vmatprep.subr.mxu0 0.0
        %2620 = vmatpush1.msra.mxu0 %v2606
        %2621 = vmatprep.subr.mxu0 0.0
        %2622 = vmatpush1.msra.mxu0 %v2611
        %2623 = vmatprep.subr.mxu0 0.0
        %2624 = vmatpush1.msra.mxu0 0.0
        %2625 = vmatprep.subr.mxu0 0.0
        %2626 = vmatpush1.msra.mxu0 0.0
        %2627 = vmatprep.subr.mxu0 0.0
        %2628 = vmatpush1.msra.mxu0 0.0
        %2629 = vmatprep.subr.mxu0 0.0
        %2630 = vmatpush1.msra.mxu0 0.0
        %2631 = vmatprep.subr.mxu0 0.0
        %2632 = vmatpush1.msra.mxu0 0.0
        %2633 = vmatprep.subr.mxu0 0.0
        %2634 = vmatpush1.msra.mxu0 0.0
        %2635 = vmatprep.subr.mxu0 0.0
        %2636 = vmatpush1.msra.mxu0 0.0
        %2637 = vmatprep.subr.mxu0 0.0
        %2638 = vmatpush1.msra.mxu0 0.0
        %2639 = vmatprep.subr.mxu0 0.0
        %2640 = vmatpush1.msra.mxu0 0.0
        %2641 = vmatprep.subr.mxu0 0.0
        %2642 = vmatpush1.msra.mxu0 0.0
        %2643 = vmatprep.subr.mxu0 0.0
        %2644 = vmatpush1.msra.mxu0 0.0
        %2645 = vmatprep.subr.mxu0 0.0
        %2646 = vmatpush1.msra.mxu0 0.0
        %2647 = vmatprep.subr.mxu0 0.0
        %2648 = vmatpush1.msra.mxu0 0.0
        %2649 = vmatprep.subr.mxu0 0.0
        %2650 = vmatpush1.msra.mxu0 0.0
        %2651 = vmatprep.subr.mxu0 0.0
        %2652 = vmatpush1.msra.mxu0 0.0
        %2653 = vmatprep.subr.mxu0 0.0
        %2654 = vmatpush1.msra.mxu0 0.0
        %2655 = vmatprep.subr.mxu0 0.0
        %2656 = vmatpush1.msra.mxu0 0.0
        %2657 = vmatprep.subr.mxu0 0.0
        %2658 = vmatpush1.msra.mxu0 0.0
        %2659 = vmatprep.subr.mxu0 0.0
        %2660 = vmatpush1.msra.mxu0 0.0
        %2661 = vmatprep.subr.mxu0 0.0
        %2662 = vmatpush1.msra.mxu0 0.0
        %2663 = vmatprep.subr.mxu0 0.0
        %2664 = vmatpush1.msra.mxu0 0.0
        %2665 = vmatprep.subr.mxu0 0.0
        %2666 = vmatpush1.msra.mxu0 0.0
        %2667 = vmatprep.subr.mxu0 0.0
        %2668 = vmatpush1.msra.mxu0 0.0
        %2669 = vmatprep.subr.mxu0 0.0
        %2670 = vmatpush1.msra.mxu0 0.0
        %2671 = vmatprep.subr.mxu0 0.0
        %2672 = vmatpush1.msra.mxu0 0.0
        %2673 = vmatprep.subr.mxu0 0.0
        %2674 = vmatpush1.msra.mxu0 0.0
        %2675 = vmatprep.subr.mxu0 0.0
        %2676 = vmatpush1.msra.mxu0 0.0
        %2677 = vmatprep.subr.mxu0 0.0
        %2678 = vmatpush1.msra.mxu0 0.0
        %2679 = vmatprep.subr.mxu0 0.0
        %2680 = vmatpush1.msra.mxu0 0.0
        %2681 = vmatprep.subr.mxu0 0.0
        %2682 = vmatpush1.msra.mxu0 0.0
        %2683 = vmatprep.mubr.f32.mxu0 0.0
        %2684 = vmatmul.mubr.f32.gmra.mrb[0].mxu0 %v2617
        %v2685 = vpop.f32.mrb[0].mxu0
        %v2686 = vadd.f32 0.0, %v2685
        %v2687 = vpop.f32.mrb[0].mxu0
        %2688 = vdwg.mxu0
        %v2689 = vadd.f32 %v2519, %v2686
        %v2690 = vld [vmem:[#allocation11] sm:$0x1]
        %v2692 = vlaneseq
        %v2693 = vshrl.u32 %v2692, 7
        %v2694 = vsub.s32 0, %v2693
        %v2695 = vrot.slane %v2690, %v2694
        %v2697 = vadd.f32 %v2689, %v2695
        %v2698 = vmax.f32 %v2697, 0.0
        %v2699 = vld [vmem:[#allocation14] sm:$0xff]
        %v2700 = vld [vmem:[#allocation14 + $0x8] sm:$0xff]
        %v2701 = vld [vmem:[#allocation14 + $0x10] sm:$0xff]
        %v2702 = vld [vmem:[#allocation14 + $0x18] sm:$0xff]
        %v2703 = vld [vmem:[#allocation14 + $0x20] sm:$0xff]
        %v2704 = vld [vmem:[#allocation14 + $0x28] sm:$0xff]
        %v2705 = vld [vmem:[#allocation14 + $0x30] sm:$0xff]
        %v2706 = vld [vmem:[#allocation14 + $0x38] sm:$0xff]
        %v2707 = vld [vmem:[#allocation14 + $0x40] sm:$0xff]
        %v2708 = vld [vmem:[#allocation14 + $0x48] sm:$0xff]
        %v2709 = vld [vmem:[#allocation14 + $0x50] sm:$0xff]
        %v2710 = vld [vmem:[#allocation14 + $0x58] sm:$0xff]
        %v2711 = vld [vmem:[#allocation14 + $0x60] sm:$0xff]
        %v2712 = vld [vmem:[#allocation14 + $0x68] sm:$0xff]
        %v2713 = vld [vmem:[#allocation14 + $0x70] sm:$0xff]
        %v2714 = vld [vmem:[#allocation14 + $0x78] sm:$0xff]
        %2715 = vmatprep.subr.mxu0 0.0
        %2716 = vmatpush1.msra.mxu0 %v2699
        %2717 = vmatprep.subr.mxu0 0.0
        %2718 = vmatpush1.msra.mxu0 %v2700
        %2719 = vmatprep.subr.mxu0 0.0
        %2720 = vmatpush1.msra.mxu0 %v2701
        %2721 = vmatprep.subr.mxu0 0.0
        %2722 = vmatpush1.msra.mxu0 %v2702
        %2723 = vmatprep.subr.mxu0 0.0
        %2724 = vmatpush1.msra.mxu0 %v2703
        %2725 = vmatprep.subr.mxu0 0.0
        %2726 = vmatpush1.msra.mxu0 %v2704
        %2727 = vmatprep.subr.mxu0 0.0
        %2728 = vmatpush1.msra.mxu0 %v2705
        %2729 = vmatprep.subr.mxu0 0.0
        %2730 = vmatpush1.msra.mxu0 %v2706
        %2731 = vmatprep.subr.mxu0 0.0
        %2732 = vmatpush1.msra.mxu0 %v2707
        %2733 = vmatprep.subr.mxu0 0.0
        %2734 = vmatpush1.msra.mxu0 %v2708
        %2735 = vmatprep.subr.mxu0 0.0
        %2736 = vmatpush1.msra.mxu0 %v2709
        %2737 = vmatprep.subr.mxu0 0.0
        %2738 = vmatpush1.msra.mxu0 %v2710
        %2739 = vmatprep.subr.mxu0 0.0
        %2740 = vmatpush1.msra.mxu0 %v2711
        %2741 = vmatprep.subr.mxu0 0.0
        %2742 = vmatpush1.msra.mxu0 %v2712
        %2743 = vmatprep.subr.mxu0 0.0
        %2744 = vmatpush1.msra.mxu0 %v2713
        %2745 = vmatprep.subr.mxu0 0.0
        %2746 = vmatpush1.msra.mxu0 %v2714
        %2747 = vmatprep.subr.mxu0 0.0
        %2748 = vmatpush1.msra.mxu0 0.0
        %2749 = vmatprep.subr.mxu0 0.0
        %2750 = vmatpush1.msra.mxu0 0.0
        %2751 = vmatprep.subr.mxu0 0.0
        %2752 = vmatpush1.msra.mxu0 0.0
        %2753 = vmatprep.subr.mxu0 0.0
        %2754 = vmatpush1.msra.mxu0 0.0
        %2755 = vmatprep.subr.mxu0 0.0
        %2756 = vmatpush1.msra.mxu0 0.0
        %2757 = vmatprep.subr.mxu0 0.0
        %2758 = vmatpush1.msra.mxu0 0.0
        %2759 = vmatprep.subr.mxu0 0.0
        %2760 = vmatpush1.msra.mxu0 0.0
        %2761 = vmatprep.subr.mxu0 0.0
        %2762 = vmatpush1.msra.mxu0 0.0
        %2763 = vmatprep.subr.mxu0 0.0
        %2764 = vmatpush1.msra.mxu0 0.0
        %2765 = vmatprep.subr.mxu0 0.0
        %2766 = vmatpush1.msra.mxu0 0.0
        %2767 = vmatprep.subr.mxu0 0.0
        %2768 = vmatpush1.msra.mxu0 0.0
        %2769 = vmatprep.subr.mxu0 0.0
        %2770 = vmatpush1.msra.mxu0 0.0
        %2771 = vmatprep.subr.mxu0 0.0
        %2772 = vmatpush1.msra.mxu0 0.0
        %2773 = vmatprep.subr.mxu0 0.0
        %2774 = vmatpush1.msra.mxu0 0.0
        %2775 = vmatprep.subr.mxu0 0.0
        %2776 = vmatpush1.msra.mxu0 0.0
        %2777 = vmatprep.subr.mxu0 0.0
        %2778 = vmatpush1.msra.mxu0 0.0
        %2779 = vmatprep.mubr.f32.mxu0 0.0
        %2780 = vmatmul.mubr.f32.gmra.mrb[0].mxu0 %v2698
        %v2781 = vpop.f32.mrb[0].mxu0
        %v2782 = vadd.f32 0.0, %v2781
        %v2783 = vpop.f32.mrb[0].mxu0
        %2784 = vdwg.mxu0
        %v2785 = vld [vmem:[#allocation13] sm:$0xff]
        %s2786 = scalar_lea.vmem [#allocation14], 128
        %v2787 = vld [vmem:[%s2786] sm:$0xff]
        %v2788 = vld [vmem:[%s2786 + $0x8] sm:$0xff]
        %v2789 = vld [vmem:[%s2786 + $0x10] sm:$0xff]
        %v2790 = vld [vmem:[%s2786 + $0x18] sm:$0xff]
        %v2791 = vld [vmem:[%s2786 + $0x20] sm:$0xff]
        %v2792 = vld [vmem:[%s2786 + $0x28] sm:$0xff]
        %v2793 = vld [vmem:[%s2786 + $0x30] sm:$0xff]
        %v2794 = vld [vmem:[%s2786 + $0x38] sm:$0xff]
        %v2795 = vld [vmem:[%s2786 + $0x40] sm:$0xff]
        %v2796 = vld [vmem:[%s2786 + $0x48] sm:$0xff]
        %v2797 = vld [vmem:[%s2786 + $0x50] sm:$0xff]
        %v2798 = vld [vmem:[%s2786 + $0x58] sm:$0xff]
        %v2799 = vld [vmem:[%s2786 + $0x60] sm:$0xff]
        %v2800 = vld [vmem:[%s2786 + $0x68] sm:$0xff]
        %v2801 = vld [vmem:[%s2786 + $0x70] sm:$0xff]
        %v2802 = vld [vmem:[%s2786 + $0x78] sm:$0xff]
        %2803 = vmatprep.subr.mxu0 0.0
        %2804 = vmatpush1.msra.mxu0 %v2787
        %2805 = vmatprep.subr.mxu0 0.0
        %2806 = vmatpush1.msra.mxu0 %v2788
        %2807 = vmatprep.subr.mxu0 0.0
        %2808 = vmatpush1.msra.mxu0 %v2789
        %2809 = vmatprep.subr.mxu0 0.0
        %2810 = vmatpush1.msra.mxu0 %v2790
        %2811 = vmatprep.subr.mxu0 0.0
        %2812 = vmatpush1.msra.mxu0 %v2791
        %2813 = vmatprep.subr.mxu0 0.0
        %2814 = vmatpush1.msra.mxu0 %v2792
        %2815 = vmatprep.subr.mxu0 0.0
        %2816 = vmatpush1.msra.mxu0 %v2793
        %2817 = vmatprep.subr.mxu0 0.0
        %2818 = vmatpush1.msra.mxu0 %v2794
        %2819 = vmatprep.subr.mxu0 0.0
        %2820 = vmatpush1.msra.mxu0 %v2795
        %2821 = vmatprep.subr.mxu0 0.0
        %2822 = vmatpush1.msra.mxu0 %v2796
        %2823 = vmatprep.subr.mxu0 0.0
        %2824 = vmatpush1.msra.mxu0 %v2797
        %2825 = vmatprep.subr.mxu0 0.0
        %2826 = vmatpush1.msra.mxu0 %v2798
        %2827 = vmatprep.subr.mxu0 0.0
        %2828 = vmatpush1.msra.mxu0 %v2799
        %2829 = vmatprep.subr.mxu0 0.0
        %2830 = vmatpush1.msra.mxu0 %v2800
        %2831 = vmatprep.subr.mxu0 0.0
        %2832 = vmatpush1.msra.mxu0 %v2801
        %2833 = vmatprep.subr.mxu0 0.0
        %2834 = vmatpush1.msra.mxu0 %v2802
        %2835 = vmatprep.subr.mxu0 0.0
        %2836 = vmatpush1.msra.mxu0 0.0
        %2837 = vmatprep.subr.mxu0 0.0
        %2838 = vmatpush1.msra.mxu0 0.0
        %2839 = vmatprep.subr.mxu0 0.0
        %2840 = vmatpush1.msra.mxu0 0.0
        %2841 = vmatprep.subr.mxu0 0.0
        %2842 = vmatpush1.msra.mxu0 0.0
        %2843 = vmatprep.subr.mxu0 0.0
        %2844 = vmatpush1.msra.mxu0 0.0
        %2845 = vmatprep.subr.mxu0 0.0
        %2846 = vmatpush1.msra.mxu0 0.0
        %2847 = vmatprep.subr.mxu0 0.0
        %2848 = vmatpush1.msra.mxu0 0.0
        %2849 = vmatprep.subr.mxu0 0.0
        %2850 = vmatpush1.msra.mxu0 0.0
        %2851 = vmatprep.subr.mxu0 0.0
        %2852 = vmatpush1.msra.mxu0 0.0
        %2853 = vmatprep.subr.mxu0 0.0
        %2854 = vmatpush1.msra.mxu0 0.0
        %2855 = vmatprep.subr.mxu0 0.0
        %2856 = vmatpush1.msra.mxu0 0.0
        %2857 = vmatprep.subr.mxu0 0.0
        %2858 = vmatpush1.msra.mxu0 0.0
        %2859 = vmatprep.subr.mxu0 0.0
        %2860 = vmatpush1.msra.mxu0 0.0
        %2861 = vmatprep.subr.mxu0 0.0
        %2862 = vmatpush1.msra.mxu0 0.0
        %2863 = vmatprep.subr.mxu0 0.0
        %2864 = vmatpush1.msra.mxu0 0.0
        %2865 = vmatprep.subr.mxu0 0.0
        %2866 = vmatpush1.msra.mxu0 0.0
        %2867 = vmatprep.mubr.f32.mxu0 0.0
        %2868 = vmatmul.mubr.f32.gmra.mrb[0].mxu0 %v2698
        %v2869 = vpop.f32.mrb[0].mxu0
        %v2870 = vadd.f32 0.0, %v2869
        %v2871 = vpop.f32.mrb[0].mxu0
        %2872 = vdwg.mxu0
        %s2873 = scalar_lea.vmem [#allocation13], 8
        %v2874 = vld [vmem:[%s2873] sm:$0xff]
        %vm2875 = vcmask 64512
        %v2877 = vsel %vm2875, %v2874, 0
        %2879 = vmatprep.subr.mxu0 0.0
        %2880 = vmatpush1.msra.mxu0 %v2870
        %2881 = vmatprep.subr.mxu0 0.0
        %2882 = vmatpush1.msra.mxu0 0.0
        %2883 = vmatprep.subr.mxu0 0.0
        %2884 = vmatpush1.msra.mxu0 0.0
        %2885 = vmatprep.subr.mxu0 0.0
        %2886 = vmatpush1.msra.mxu0 0.0
        %2887 = vmatprep.subr.mxu0 0.0
        %2888 = vmatpush1.msra.mxu0 0.0
        %2889 = vmatprep.subr.mxu0 0.0
        %2890 = vmatpush1.msra.mxu0 0.0
        %2891 = vmatprep.subr.mxu0 0.0
        %2892 = vmatpush1.msra.mxu0 0.0
        %2893 = vmatprep.subr.mxu0 0.0
        %2894 = vmatpush1.msra.mxu0 0.0
        %2895 = vmatprep.subr.mxu0 0.0
        %2896 = vmatpush1.msra.mxu0 0.0
        %2897 = vmatprep.subr.mxu0 0.0
        %2898 = vmatpush1.msra.mxu0 0.0
        %2899 = vmatprep.subr.mxu0 0.0
        %2900 = vmatpush1.msra.mxu0 0.0
        %2901 = vmatprep.subr.mxu0 0.0
        %2902 = vmatpush1.msra.mxu0 0.0
        %2903 = vmatprep.subr.mxu0 0.0
        %2904 = vmatpush1.msra.mxu0 0.0
        %2905 = vmatprep.subr.mxu0 0.0
        %2906 = vmatpush1.msra.mxu0 0.0
        %2907 = vmatprep.subr.mxu0 0.0
        %2908 = vmatpush1.msra.mxu0 0.0
        %2909 = vmatprep.subr.mxu0 0.0
        %2910 = vmatpush1.msra.mxu0 0.0
        %2911 = vmatprep.subr.mxu0 0.0
        %2912 = vmatpush1.msra.mxu0 0.0
        %2913 = vmatprep.subr.mxu0 0.0
        %2914 = vmatpush1.msra.mxu0 0.0
        %2915 = vmatprep.subr.mxu0 0.0
        %2916 = vmatpush1.msra.mxu0 0.0
        %2917 = vmatprep.subr.mxu0 0.0
        %2918 = vmatpush1.msra.mxu0 0.0
        %2919 = vmatprep.subr.mxu0 0.0
        %2920 = vmatpush1.msra.mxu0 0.0
        %2921 = vmatprep.subr.mxu0 0.0
        %2922 = vmatpush1.msra.mxu0 0.0
        %2923 = vmatprep.subr.mxu0 0.0
        %2924 = vmatpush1.msra.mxu0 0.0
        %2925 = vmatprep.subr.mxu0 0.0
        %2926 = vmatpush1.msra.mxu0 0.0
        %2927 = vmatprep.subr.mxu0 0.0
        %2928 = vmatpush1.msra.mxu0 0.0
        %2929 = vmatprep.subr.mxu0 0.0
        %2930 = vmatpush1.msra.mxu0 0.0
        %2931 = vmatprep.subr.mxu0 0.0
        %2932 = vmatpush1.msra.mxu0 0.0
        %2933 = vmatprep.subr.mxu0 0.0
        %2934 = vmatpush1.msra.mxu0 0.0
        %2935 = vmatprep.subr.mxu0 0.0
        %2936 = vmatpush1.msra.mxu0 0.0
        %2937 = vmatprep.subr.mxu0 0.0
        %2938 = vmatpush1.msra.mxu0 0.0
        %2939 = vmatprep.subr.mxu0 0.0
        %2940 = vmatpush1.msra.mxu0 0.0
        %2941 = vmatprep.subr.mxu0 0.0
        %2942 = vmatpush1.msra.mxu0 0.0
        %2943 = vmatprep.mubr.f32.mxu0 0.0
        %2944 = vmatmul.mubr.f32.gmra.mrb[0].mxu0 %v2877
        %v2945 = vpop.f32.mrb[0].mxu0
        %v2946 = vadd.f32 0.0, %v2945
        %v2947 = vpop.f32.mrb[0].mxu0
        %2948 = vdwg.mxu0
        %v2950 = vsel %vm2875, %v2785, 0
        %2952 = vmatprep.subr.mxu0 0.0
        %2953 = vmatpush1.msra.mxu0 %v2782
        %2954 = vmatprep.subr.mxu0 0.0
        %2955 = vmatpush1.msra.mxu0 0.0
        %2956 = vmatprep.subr.mxu0 0.0
        %2957 = vmatpush1.msra.mxu0 0.0
        %2958 = vmatprep.subr.mxu0 0.0
        %2959 = vmatpush1.msra.mxu0 0.0
        %2960 = vmatprep.subr.mxu0 0.0
        %2961 = vmatpush1.msra.mxu0 0.0
        %2962 = vmatprep.subr.mxu0 0.0
        %2963 = vmatpush1.msra.mxu0 0.0
        %2964 = vmatprep.subr.mxu0 0.0
        %2965 = vmatpush1.msra.mxu0 0.0
        %2966 = vmatprep.subr.mxu0 0.0
        %2967 = vmatpush1.msra.mxu0 0.0
        %2968 = vmatprep.subr.mxu0 0.0
        %2969 = vmatpush1.msra.mxu0 0.0
        %2970 = vmatprep.subr.mxu0 0.0
        %2971 = vmatpush1.msra.mxu0 0.0
        %2972 = vmatprep.subr.mxu0 0.0
        %2973 = vmatpush1.msra.mxu0 0.0
        %2974 = vmatprep.subr.mxu0 0.0
        %2975 = vmatpush1.msra.mxu0 0.0
        %2976 = vmatprep.subr.mxu0 0.0
        %2977 = vmatpush1.msra.mxu0 0.0
        %2978 = vmatprep.subr.mxu0 0.0
        %2979 = vmatpush1.msra.mxu0 0.0
        %2980 = vmatprep.subr.mxu0 0.0
        %2981 = vmatpush1.msra.mxu0 0.0
        %2982 = vmatprep.subr.mxu0 0.0
        %2983 = vmatpush1.msra.mxu0 0.0
        %2984 = vmatprep.subr.mxu0 0.0
        %2985 = vmatpush1.msra.mxu0 0.0
        %2986 = vmatprep.subr.mxu0 0.0
        %2987 = vmatpush1.msra.mxu0 0.0
        %2988 = vmatprep.subr.mxu0 0.0
        %2989 = vmatpush1.msra.mxu0 0.0
        %2990 = vmatprep.subr.mxu0 0.0
        %2991 = vmatpush1.msra.mxu0 0.0
        %2992 = vmatprep.subr.mxu0 0.0
        %2993 = vmatpush1.msra.mxu0 0.0
        %2994 = vmatprep.subr.mxu0 0.0
        %2995 = vmatpush1.msra.mxu0 0.0
        %2996 = vmatprep.subr.mxu0 0.0
        %2997 = vmatpush1.msra.mxu0 0.0
        %2998 = vmatprep.subr.mxu0 0.0
        %2999 = vmatpush1.msra.mxu0 0.0
        %3000 = vmatprep.subr.mxu0 0.0
        %3001 = vmatpush1.msra.mxu0 0.0
        %3002 = vmatprep.subr.mxu0 0.0
        %3003 = vmatpush1.msra.mxu0 0.0
        %3004 = vmatprep.subr.mxu0 0.0
        %3005 = vmatpush1.msra.mxu0 0.0
        %3006 = vmatprep.subr.mxu0 0.0
        %3007 = vmatpush1.msra.mxu0 0.0
        %3008 = vmatprep.subr.mxu0 0.0
        %3009 = vmatpush1.msra.mxu0 0.0
        %3010 = vmatprep.subr.mxu0 0.0
        %3011 = vmatpush1.msra.mxu0 0.0
        %3012 = vmatprep.subr.mxu0 0.0
        %3013 = vmatpush1.msra.mxu0 0.0
        %3014 = vmatprep.subr.mxu0 0.0
        %3015 = vmatpush1.msra.mxu0 0.0
        %3016 = vmatprep.mubr.f32.mxu0 0.0
        %3017 = vmatmul.mubr.f32.gmra.mrb[0].mxu0 %v2950
        %v3018 = vpop.f32.mrb[0].mxu0
        %v3019 = vadd.f32 %v2946, %v3018
        %v3020 = vpop.f32.mrb[0].mxu0
        %3021 = vdwg.mxu0
        %s3022 = scalar_lea.vmem [#allocation14], 256
        %v3023 = vld [vmem:[%s3022] sm:$0xff]
        %v3024 = vld [vmem:[%s3022 + $0x8] sm:$0xff]
        %v3025 = vld [vmem:[%s3022 + $0x10] sm:$0xff]
        %v3026 = vld [vmem:[%s3022 + $0x18] sm:$0xff]
        %v3027 = vld [vmem:[%s3022 + $0x20] sm:$0xff]
        %v3028 = vld [vmem:[%s3022 + $0x28] sm:$0xff]
        %v3029 = vld [vmem:[%s3022 + $0x30] sm:$0xff]
        %v3030 = vld [vmem:[%s3022 + $0x38] sm:$0xff]
        %v3031 = vld [vmem:[%s3022 + $0x40] sm:$0xff]
        %v3032 = vld [vmem:[%s3022 + $0x48] sm:$0xff]
        %v3033 = vld [vmem:[%s3022 + $0x50] sm:$0xff]
        %v3034 = vld [vmem:[%s3022 + $0x58] sm:$0xff]
        %v3035 = vld [vmem:[%s3022 + $0x60] sm:$0xff]
        %v3036 = vld [vmem:[%s3022 + $0x68] sm:$0xff]
        %v3037 = vld [vmem:[%s3022 + $0x70] sm:$0xff]
        %v3038 = vld [vmem:[%s3022 + $0x78] sm:$0xff]
        %3039 = vmatprep.subr.mxu0 0.0
        %3040 = vmatpush1.msra.mxu0 %v3023
        %3041 = vmatprep.subr.mxu0 0.0
        %3042 = vmatpush1.msra.mxu0 %v3024
        %3043 = vmatprep.subr.mxu0 0.0
        %3044 = vmatpush1.msra.mxu0 %v3025
        %3045 = vmatprep.subr.mxu0 0.0
        %3046 = vmatpush1.msra.mxu0 %v3026
        %3047 = vmatprep.subr.mxu0 0.0
        %3048 = vmatpush1.msra.mxu0 %v3027
        %3049 = vmatprep.subr.mxu0 0.0
        %3050 = vmatpush1.msra.mxu0 %v3028
        %3051 = vmatprep.subr.mxu0 0.0
        %3052 = vmatpush1.msra.mxu0 %v3029
        %3053 = vmatprep.subr.mxu0 0.0
        %3054 = vmatpush1.msra.mxu0 %v3030
        %3055 = vmatprep.subr.mxu0 0.0
        %3056 = vmatpush1.msra.mxu0 %v3031
        %3057 = vmatprep.subr.mxu0 0.0
        %3058 = vmatpush1.msra.mxu0 %v3032
        %3059 = vmatprep.subr.mxu0 0.0
        %3060 = vmatpush1.msra.mxu0 %v3033
        %3061 = vmatprep.subr.mxu0 0.0
        %3062 = vmatpush1.msra.mxu0 %v3034
        %3063 = vmatprep.subr.mxu0 0.0
        %3064 = vmatpush1.msra.mxu0 %v3035
        %3065 = vmatprep.subr.mxu0 0.0
        %3066 = vmatpush1.msra.mxu0 %v3036
        %3067 = vmatprep.subr.mxu0 0.0
        %3068 = vmatpush1.msra.mxu0 %v3037
        %3069 = vmatprep.subr.mxu0 0.0
        %3070 = vmatpush1.msra.mxu0 %v3038
        %3071 = vmatprep.subr.mxu0 0.0
        %3072 = vmatpush1.msra.mxu0 0.0
        %3073 = vmatprep.subr.mxu0 0.0
        %3074 = vmatpush1.msra.mxu0 0.0
        %3075 = vmatprep.subr.mxu0 0.0
        %3076 = vmatpush1.msra.mxu0 0.0
        %3077 = vmatprep.subr.mxu0 0.0
        %3078 = vmatpush1.msra.mxu0 0.0
        %3079 = vmatprep.subr.mxu0 0.0
        %3080 = vmatpush1.msra.mxu0 0.0
        %3081 = vmatprep.subr.mxu0 0.0
        %3082 = vmatpush1.msra.mxu0 0.0
        %3083 = vmatprep.subr.mxu0 0.0
        %3084 = vmatpush1.msra.mxu0 0.0
        %3085 = vmatprep.subr.mxu0 0.0
        %3086 = vmatpush1.msra.mxu0 0.0
        %3087 = vmatprep.subr.mxu0 0.0
        %3088 = vmatpush1.msra.mxu0 0.0
        %3089 = vmatprep.subr.mxu0 0.0
        %3090 = vmatpush1.msra.mxu0 0.0
        %3091 = vmatprep.subr.mxu0 0.0
        %3092 = vmatpush1.msra.mxu0 0.0
        %3093 = vmatprep.subr.mxu0 0.0
        %3094 = vmatpush1.msra.mxu0 0.0
        %3095 = vmatprep.subr.mxu0 0.0
        %3096 = vmatpush1.msra.mxu0 0.0
        %3097 = vmatprep.subr.mxu0 0.0
        %3098 = vmatpush1.msra.mxu0 0.0
        %3099 = vmatprep.subr.mxu0 0.0
        %3100 = vmatpush1.msra.mxu0 0.0
        %3101 = vmatprep.subr.mxu0 0.0
        %3102 = vmatpush1.msra.mxu0 0.0
        %3103 = vmatprep.mubr.f32.mxu0 0.0
        %3104 = vmatmul.mubr.f32.gmra.mrb[0].mxu0 %v2698
        %v3105 = vpop.f32.mrb[0].mxu0
        %v3106 = vadd.f32 0.0, %v3105
        %v3107 = vpop.f32.mrb[0].mxu0
        %3108 = vdwg.mxu0
        %s3109 = scalar_lea.vmem [#allocation13], 16
        %v3110 = vld [vmem:[%s3109] sm:$0xff]
        %v3112 = vsel %vm2875, %v3110, 0
        %3114 = vmatprep.subr.mxu0 0.0
        %3115 = vmatpush1.msra.mxu0 %v3106
        %3116 = vmatprep.subr.mxu0 0.0
        %3117 = vmatpush1.msra.mxu0 0.0
        %3118 = vmatprep.subr.mxu0 0.0
        %3119 = vmatpush1.msra.mxu0 0.0
        %3120 = vmatprep.subr.mxu0 0.0
        %3121 = vmatpush1.msra.mxu0 0.0
        %3122 = vmatprep.subr.mxu0 0.0
        %3123 = vmatpush1.msra.mxu0 0.0
        %3124 = vmatprep.subr.mxu0 0.0
        %3125 = vmatpush1.msra.mxu0 0.0
        %3126 = vmatprep.subr.mxu0 0.0
        %3127 = vmatpush1.msra.mxu0 0.0
        %3128 = vmatprep.subr.mxu0 0.0
        %3129 = vmatpush1.msra.mxu0 0.0
        %3130 = vmatprep.subr.mxu0 0.0
        %3131 = vmatpush1.msra.mxu0 0.0
        %3132 = vmatprep.subr.mxu0 0.0
        %3133 = vmatpush1.msra.mxu0 0.0
        %3134 = vmatprep.subr.mxu0 0.0
        %3135 = vmatpush1.msra.mxu0 0.0
        %3136 = vmatprep.subr.mxu0 0.0
        %3137 = vmatpush1.msra.mxu0 0.0
        %3138 = vmatprep.subr.mxu0 0.0
        %3139 = vmatpush1.msra.mxu0 0.0
        %3140 = vmatprep.subr.mxu0 0.0
        %3141 = vmatpush1.msra.mxu0 0.0
        %3142 = vmatprep.subr.mxu0 0.0
        %3143 = vmatpush1.msra.mxu0 0.0
        %3144 = vmatprep.subr.mxu0 0.0
        %3145 = vmatpush1.msra.mxu0 0.0
        %3146 = vmatprep.subr.mxu0 0.0
        %3147 = vmatpush1.msra.mxu0 0.0
        %3148 = vmatprep.subr.mxu0 0.0
        %3149 = vmatpush1.msra.mxu0 0.0
        %3150 = vmatprep.subr.mxu0 0.0
        %3151 = vmatpush1.msra.mxu0 0.0
        %3152 = vmatprep.subr.mxu0 0.0
        %3153 = vmatpush1.msra.mxu0 0.0
        %3154 = vmatprep.subr.mxu0 0.0
        %3155 = vmatpush1.msra.mxu0 0.0
        %3156 = vmatprep.subr.mxu0 0.0
        %3157 = vmatpush1.msra.mxu0 0.0
        %3158 = vmatprep.subr.mxu0 0.0
        %3159 = vmatpush1.msra.mxu0 0.0
        %3160 = vmatprep.subr.mxu0 0.0
        %3161 = vmatpush1.msra.mxu0 0.0
        %3162 = vmatprep.subr.mxu0 0.0
        %3163 = vmatpush1.msra.mxu0 0.0
        %3164 = vmatprep.subr.mxu0 0.0
        %3165 = vmatpush1.msra.mxu0 0.0
        %3166 = vmatprep.subr.mxu0 0.0
        %3167 = vmatpush1.msra.mxu0 0.0
        %3168 = vmatprep.subr.mxu0 0.0
        %3169 = vmatpush1.msra.mxu0 0.0
        %3170 = vmatprep.subr.mxu0 0.0
        %3171 = vmatpush1.msra.mxu0 0.0
        %3172 = vmatprep.subr.mxu0 0.0
        %3173 = vmatpush1.msra.mxu0 0.0
        %3174 = vmatprep.subr.mxu0 0.0
        %3175 = vmatpush1.msra.mxu0 0.0
        %3176 = vmatprep.subr.mxu0 0.0
        %3177 = vmatpush1.msra.mxu0 0.0
        %3178 = vmatprep.mubr.f32.mxu0 0.0
        %3179 = vmatmul.mubr.f32.gmra.mrb[0].mxu0 %v3112
        %v3180 = vpop.f32.mrb[0].mxu0
        %v3181 = vadd.f32 0.0, %v3180
        %v3182 = vpop.f32.mrb[0].mxu0
        %3183 = vdwg.mxu0
        %v3184 = vadd.f32 %v3019, %v3181
        %v3185 = vld [vmem:[#allocation16] sm:$0x1]
        %v3187 = vlaneseq
        %v3188 = vshrl.u32 %v3187, 7
        %v3189 = vsub.s32 0, %v3188
        %v3190 = vrot.slane %v3185, %v3189
        %v3192 = vadd.f32 %v3184, %v3190
        %v3193 = vadd.f32 %v3192, %v2187
        %v3194 = vmax.f32 %v3193, 0.0
        %v3195 = vld [vmem:[#allocation31] sm:$0xff]
        %v3196 = vld [vmem:[#allocation31 + $0x8] sm:$0xff]
        %v3197 = vld [vmem:[#allocation31 + $0x10] sm:$0xff]
        %v3198 = vld [vmem:[#allocation31 + $0x18] sm:$0xff]
        %v3199 = vld [vmem:[#allocation31 + $0x20] sm:$0xff]
        %v3200 = vld [vmem:[#allocation31 + $0x28] sm:$0xff]
        %v3201 = vld [vmem:[#allocation31 + $0x30] sm:$0xff]
        %v3202 = vld [vmem:[#allocation31 + $0x38] sm:$0xff]
        %v3203 = vld [vmem:[#allocation31 + $0x40] sm:$0xff]
        %v3204 = vld [vmem:[#allocation31 + $0x48] sm:$0xff]
        %v3205 = vld [vmem:[#allocation31 + $0x50] sm:$0xff]
        %v3206 = vld [vmem:[#allocation31 + $0x58] sm:$0xff]
        %v3207 = vld [vmem:[#allocation31 + $0x60] sm:$0xff]
        %v3208 = vld [vmem:[#allocation31 + $0x68] sm:$0xff]
        %v3209 = vld [vmem:[#allocation31 + $0x70] sm:$0xff]
        %v3210 = vld [vmem:[#allocation31 + $0x78] sm:$0xff]
        %3211 = vmatprep.subr.mxu0 0.0
        %3212 = vmatpush1.msra.mxu0 %v3195
        %3213 = vmatprep.subr.mxu0 0.0
        %3214 = vmatpush1.msra.mxu0 %v3196
        %3215 = vmatprep.subr.mxu0 0.0
        %3216 = vmatpush1.msra.mxu0 %v3197
        %3217 = vmatprep.subr.mxu0 0.0
        %3218 = vmatpush1.msra.mxu0 %v3198
        %3219 = vmatprep.subr.mxu0 0.0
        %3220 = vmatpush1.msra.mxu0 %v3199
        %3221 = vmatprep.subr.mxu0 0.0
        %3222 = vmatpush1.msra.mxu0 %v3200
        %3223 = vmatprep.subr.mxu0 0.0
        %3224 = vmatpush1.msra.mxu0 %v3201
        %3225 = vmatprep.subr.mxu0 0.0
        %3226 = vmatpush1.msra.mxu0 %v3202
        %3227 = vmatprep.subr.mxu0 0.0
        %3228 = vmatpush1.msra.mxu0 %v3203
        %3229 = vmatprep.subr.mxu0 0.0
        %3230 = vmatpush1.msra.mxu0 %v3204
        %3231 = vmatprep.subr.mxu0 0.0
        %3232 = vmatpush1.msra.mxu0 %v3205
        %3233 = vmatprep.subr.mxu0 0.0
        %3234 = vmatpush1.msra.mxu0 %v3206
        %3235 = vmatprep.subr.mxu0 0.0
        %3236 = vmatpush1.msra.mxu0 %v3207
        %3237 = vmatprep.subr.mxu0 0.0
        %3238 = vmatpush1.msra.mxu0 %v3208
        %3239 = vmatprep.subr.mxu0 0.0
        %3240 = vmatpush1.msra.mxu0 %v3209
        %3241 = vmatprep.subr.mxu0 0.0
        %3242 = vmatpush1.msra.mxu0 %v3210
        %3243 = vmatprep.subr.mxu0 0.0
        %3244 = vmatpush1.msra.mxu0 0.0
        %3245 = vmatprep.subr.mxu0 0.0
        %3246 = vmatpush1.msra.mxu0 0.0
        %3247 = vmatprep.subr.mxu0 0.0
        %3248 = vmatpush1.msra.mxu0 0.0
        %3249 = vmatprep.subr.mxu0 0.0
        %3250 = vmatpush1.msra.mxu0 0.0
        %3251 = vmatprep.subr.mxu0 0.0
        %3252 = vmatpush1.msra.mxu0 0.0
        %3253 = vmatprep.subr.mxu0 0.0
        %3254 = vmatpush1.msra.mxu0 0.0
        %3255 = vmatprep.subr.mxu0 0.0
        %3256 = vmatpush1.msra.mxu0 0.0
        %3257 = vmatprep.subr.mxu0 0.0
        %3258 = vmatpush1.msra.mxu0 0.0
        %3259 = vmatprep.subr.mxu0 0.0
        %3260 = vmatpush1.msra.mxu0 0.0
        %3261 = vmatprep.subr.mxu0 0.0
        %3262 = vmatpush1.msra.mxu0 0.0
        %3263 = vmatprep.subr.mxu0 0.0
        %3264 = vmatpush1.msra.mxu0 0.0
        %3265 = vmatprep.subr.mxu0 0.0
        %3266 = vmatpush1.msra.mxu0 0.0
        %3267 = vmatprep.subr.mxu0 0.0
        %3268 = vmatpush1.msra.mxu0 0.0
        %3269 = vmatprep.subr.mxu0 0.0
        %3270 = vmatpush1.msra.mxu0 0.0
        %3271 = vmatprep.subr.mxu0 0.0
        %3272 = vmatpush1.msra.mxu0 0.0
        %3273 = vmatprep.subr.mxu0 0.0
        %3274 = vmatpush1.msra.mxu0 0.0
        %3275 = vmatprep.mubr.f32.mxu0 0.0
        %3276 = vmatmul.mubr.f32.gmra.mrb[0].mxu0 %v3194
        %v3277 = vpop.f32.mrb[0].mxu0
        %v3278 = vadd.f32 0.0, %v3277
        %v3279 = vpop.f32.mrb[0].mxu0
        %3280 = vdwg.mxu0
        %v3281 = vld [vmem:[#allocation29] sm:$0xf]
        %v3282 = vld [vmem:[#allocation32] sm:$0x1]
        %v3284 = vlaneseq
        %v3285 = vshrl.u32 %v3284, 7
        %v3286 = vsub.s32 0, %v3285
        %v3287 = vrot.slane %v3282, %v3286
        %v3290 = vsel %vm2875, %v3281, 0
        %3292 = vmatprep.subr.mxu0 0.0
        %3293 = vmatpush1.msra.mxu0 %v3278
        %3294 = vmatprep.subr.mxu0 0.0
        %3295 = vmatpush1.msra.mxu0 0.0
        %3296 = vmatprep.subr.mxu0 0.0
        %3297 = vmatpush1.msra.mxu0 0.0
        %3298 = vmatprep.subr.mxu0 0.0
        %3299 = vmatpush1.msra.mxu0 0.0
        %3300 = vmatprep.subr.mxu0 0.0
        %3301 = vmatpush1.msra.mxu0 0.0
        %3302 = vmatprep.subr.mxu0 0.0
        %3303 = vmatpush1.msra.mxu0 0.0
        %3304 = vmatprep.subr.mxu0 0.0
        %3305 = vmatpush1.msra.mxu0 0.0
        %3306 = vmatprep.subr.mxu0 0.0
        %3307 = vmatpush1.msra.mxu0 0.0
        %3308 = vmatprep.subr.mxu0 0.0
        %3309 = vmatpush1.msra.mxu0 0.0
        %3310 = vmatprep.subr.mxu0 0.0
        %3311 = vmatpush1.msra.mxu0 0.0
        %3312 = vmatprep.subr.mxu0 0.0
        %3313 = vmatpush1.msra.mxu0 0.0
        %3314 = vmatprep.subr.mxu0 0.0
        %3315 = vmatpush1.msra.mxu0 0.0
        %3316 = vmatprep.subr.mxu0 0.0
        %3317 = vmatpush1.msra.mxu0 0.0
        %3318 = vmatprep.subr.mxu0 0.0
        %3319 = vmatpush1.msra.mxu0 0.0
        %3320 = vmatprep.subr.mxu0 0.0
        %3321 = vmatpush1.msra.mxu0 0.0
        %3322 = vmatprep.subr.mxu0 0.0
        %3323 = vmatpush1.msra.mxu0 0.0
        %3324 = vmatprep.subr.mxu0 0.0
        %3325 = vmatpush1.msra.mxu0 0.0
        %3326 = vmatprep.subr.mxu0 0.0
        %3327 = vmatpush1.msra.mxu0 0.0
        %3328 = vmatprep.subr.mxu0 0.0
        %3329 = vmatpush1.msra.mxu0 0.0
        %3330 = vmatprep.subr.mxu0 0.0
        %3331 = vmatpush1.msra.mxu0 0.0
        %3332 = vmatprep.subr.mxu0 0.0
        %3333 = vmatpush1.msra.mxu0 0.0
        %3334 = vmatprep.subr.mxu0 0.0
        %3335 = vmatpush1.msra.mxu0 0.0
        %3336 = vmatprep.subr.mxu0 0.0
        %3337 = vmatpush1.msra.mxu0 0.0
        %3338 = vmatprep.subr.mxu0 0.0
        %3339 = vmatpush1.msra.mxu0 0.0
        %3340 = vmatprep.subr.mxu0 0.0
        %3341 = vmatpush1.msra.mxu0 0.0
        %3342 = vmatprep.subr.mxu0 0.0
        %3343 = vmatpush1.msra.mxu0 0.0
        %3344 = vmatprep.subr.mxu0 0.0
        %3345 = vmatpush1.msra.mxu0 0.0
        %3346 = vmatprep.subr.mxu0 0.0
        %3347 = vmatpush1.msra.mxu0 0.0
        %3348 = vmatprep.subr.mxu0 0.0
        %3349 = vmatpush1.msra.mxu0 0.0
        %3350 = vmatprep.subr.mxu0 0.0
        %3351 = vmatpush1.msra.mxu0 0.0
        %3352 = vmatprep.subr.mxu0 0.0
        %3353 = vmatpush1.msra.mxu0 0.0
        %3354 = vmatprep.subr.mxu0 0.0
        %3355 = vmatpush1.msra.mxu0 0.0
        %3356 = vmatprep.mubr.f32.mxu0 0.0
        %3357 = vmatmul.mubr.f32.gmra.mrb[0].mxu0 %v3290
        %v3358 = vpop.f32.mrb[0].mxu0
        %v3359 = vadd.f32 %v3287, %v3358
        %v3360 = vpop.f32.mrb[0].mxu0
        %3361 = vdwg.mxu0
        %v3362 = vld [vmem:[%s29] sm:$0xff]
        %v3363 = vld [vmem:[%s29 + $0x8] sm:$0xff]
        %v3364 = vld [vmem:[%s29 + $0x10] sm:$0xff]
        %v3365 = vld [vmem:[%s29 + $0x18] sm:$0xff]
        %v3366 = vld [vmem:[%s29 + $0x20] sm:$0xff]
        %v3367 = vld [vmem:[%s29 + $0x28] sm:$0xff]
        %v3368 = vld [vmem:[%s29 + $0x30] sm:$0xff]
        %v3369 = vld [vmem:[%s29 + $0x38] sm:$0xff]
        %v3370 = vld [vmem:[%s29 + $0x40] sm:$0xff]
        %v3371 = vld [vmem:[%s29 + $0x48] sm:$0xff]
        %v3372 = vld [vmem:[%s29 + $0x50] sm:$0xff]
        %v3373 = vld [vmem:[%s29 + $0x58] sm:$0xff]
        %v3374 = vld [vmem:[%s29 + $0x60] sm:$0xff]
        %v3375 = vld [vmem:[%s29 + $0x68] sm:$0xff]
        %v3376 = vld [vmem:[%s29 + $0x70] sm:$0xff]
        %v3377 = vld [vmem:[%s29 + $0x78] sm:$0xff]
        %3378 = vmatprep.subr.mxu0 0.0
        %3379 = vmatpush1.msra.mxu0 %v3362
        %3380 = vmatprep.subr.mxu0 0.0
        %3381 = vmatpush1.msra.mxu0 %v3363
        %3382 = vmatprep.subr.mxu0 0.0
        %3383 = vmatpush1.msra.mxu0 %v3364
        %3384 = vmatprep.subr.mxu0 0.0
        %3385 = vmatpush1.msra.mxu0 %v3365
        %3386 = vmatprep.subr.mxu0 0.0
        %3387 = vmatpush1.msra.mxu0 %v3366
        %3388 = vmatprep.subr.mxu0 0.0
        %3389 = vmatpush1.msra.mxu0 %v3367
        %3390 = vmatprep.subr.mxu0 0.0
        %3391 = vmatpush1.msra.mxu0 %v3368
        %3392 = vmatprep.subr.mxu0 0.0
        %3393 = vmatpush1.msra.mxu0 %v3369
        %3394 = vmatprep.subr.mxu0 0.0
        %3395 = vmatpush1.msra.mxu0 %v3370
        %3396 = vmatprep.subr.mxu0 0.0
        %3397 = vmatpush1.msra.mxu0 %v3371
        %3398 = vmatprep.subr.mxu0 0.0
        %3399 = vmatpush1.msra.mxu0 %v3372
        %3400 = vmatprep.subr.mxu0 0.0
        %3401 = vmatpush1.msra.mxu0 %v3373
        %3402 = vmatprep.subr.mxu0 0.0
        %3403 = vmatpush1.msra.mxu0 %v3374
        %3404 = vmatprep.subr.mxu0 0.0
        %3405 = vmatpush1.msra.mxu0 %v3375
        %3406 = vmatprep.subr.mxu0 0.0
        %3407 = vmatpush1.msra.mxu0 %v3376
        %3408 = vmatprep.subr.mxu0 0.0
        %3409 = vmatpush1.msra.mxu0 %v3377
        %3410 = vmatprep.subr.mxu0 0.0
        %3411 = vmatpush1.msra.mxu0 0.0
        %3412 = vmatprep.subr.mxu0 0.0
        %3413 = vmatpush1.msra.mxu0 0.0
        %3414 = vmatprep.subr.mxu0 0.0
        %3415 = vmatpush1.msra.mxu0 0.0
        %3416 = vmatprep.subr.mxu0 0.0
        %3417 = vmatpush1.msra.mxu0 0.0
        %3418 = vmatprep.subr.mxu0 0.0
        %3419 = vmatpush1.msra.mxu0 0.0
        %3420 = vmatprep.subr.mxu0 0.0
        %3421 = vmatpush1.msra.mxu0 0.0
        %3422 = vmatprep.subr.mxu0 0.0
        %3423 = vmatpush1.msra.mxu0 0.0
        %3424 = vmatprep.subr.mxu0 0.0
        %3425 = vmatpush1.msra.mxu0 0.0
        %3426 = vmatprep.subr.mxu0 0.0
        %3427 = vmatpush1.msra.mxu0 0.0
        %3428 = vmatprep.subr.mxu0 0.0
        %3429 = vmatpush1.msra.mxu0 0.0
        %3430 = vmatprep.subr.mxu0 0.0
        %3431 = vmatpush1.msra.mxu0 0.0
        %3432 = vmatprep.subr.mxu0 0.0
        %3433 = vmatpush1.msra.mxu0 0.0
        %3434 = vmatprep.subr.mxu0 0.0
        %3435 = vmatpush1.msra.mxu0 0.0
        %3436 = vmatprep.subr.mxu0 0.0
        %3437 = vmatpush1.msra.mxu0 0.0
        %3438 = vmatprep.subr.mxu0 0.0
        %3439 = vmatpush1.msra.mxu0 0.0
        %3440 = vmatprep.subr.mxu0 0.0
        %3441 = vmatpush1.msra.mxu0 0.0
        %3442 = vmatprep.mubr.f32.mxu0 0.0
        %3443 = vmatmul.mubr.f32.gmra.mrb[0].mxu0 %v3194
        %v3444 = vpop.f32.mrb[0].mxu0
        %v3445 = vadd.f32 0.0, %v3444
        %v3446 = vpop.f32.mrb[0].mxu0
        %3447 = vdwg.mxu0
        %v3448 = vld [vmem:[#allocation22] sm:$0xf]
        %s3449 = scalar_lea.vmem %s29, 128
        %v3450 = vld [vmem:[%s3449] sm:$0xff]
        %v3451 = vld [vmem:[%s3449 + $0x8] sm:$0xff]
        %v3452 = vld [vmem:[%s3449 + $0x10] sm:$0xff]
        %v3453 = vld [vmem:[%s3449 + $0x18] sm:$0xff]
        %v3454 = vld [vmem:[%s3449 + $0x20] sm:$0xff]
        %v3455 = vld [vmem:[%s3449 + $0x28] sm:$0xff]
        %v3456 = vld [vmem:[%s3449 + $0x30] sm:$0xff]
        %v3457 = vld [vmem:[%s3449 + $0x38] sm:$0xff]
        %v3458 = vld [vmem:[%s3449 + $0x40] sm:$0xff]
        %v3459 = vld [vmem:[%s3449 + $0x48] sm:$0xff]
        %v3460 = vld [vmem:[%s3449 + $0x50] sm:$0xff]
        %v3461 = vld [vmem:[%s3449 + $0x58] sm:$0xff]
        %v3462 = vld [vmem:[%s3449 + $0x60] sm:$0xff]
        %v3463 = vld [vmem:[%s3449 + $0x68] sm:$0xff]
        %v3464 = vld [vmem:[%s3449 + $0x70] sm:$0xff]
        %v3465 = vld [vmem:[%s3449 + $0x78] sm:$0xff]
        %3466 = vmatprep.subr.mxu0 0.0
        %3467 = vmatpush1.msra.mxu0 %v3450
        %3468 = vmatprep.subr.mxu0 0.0
        %3469 = vmatpush1.msra.mxu0 %v3451
        %3470 = vmatprep.subr.mxu0 0.0
        %3471 = vmatpush1.msra.mxu0 %v3452
        %3472 = vmatprep.subr.mxu0 0.0
        %3473 = vmatpush1.msra.mxu0 %v3453
        %3474 = vmatprep.subr.mxu0 0.0
        %3475 = vmatpush1.msra.mxu0 %v3454
        %3476 = vmatprep.subr.mxu0 0.0
        %3477 = vmatpush1.msra.mxu0 %v3455
        %3478 = vmatprep.subr.mxu0 0.0
        %3479 = vmatpush1.msra.mxu0 %v3456
        %3480 = vmatprep.subr.mxu0 0.0
        %3481 = vmatpush1.msra.mxu0 %v3457
        %3482 = vmatprep.subr.mxu0 0.0
        %3483 = vmatpush1.msra.mxu0 %v3458
        %3484 = vmatprep.subr.mxu0 0.0
        %3485 = vmatpush1.msra.mxu0 %v3459
        %3486 = vmatprep.subr.mxu0 0.0
        %3487 = vmatpush1.msra.mxu0 %v3460
        %3488 = vmatprep.subr.mxu0 0.0
        %3489 = vmatpush1.msra.mxu0 %v3461
        %3490 = vmatprep.subr.mxu0 0.0
        %3491 = vmatpush1.msra.mxu0 %v3462
        %3492 = vmatprep.subr.mxu0 0.0
        %3493 = vmatpush1.msra.mxu0 %v3463
        %3494 = vmatprep.subr.mxu0 0.0
        %3495 = vmatpush1.msra.mxu0 %v3464
        %3496 = vmatprep.subr.mxu0 0.0
        %3497 = vmatpush1.msra.mxu0 %v3465
        %3498 = vmatprep.subr.mxu0 0.0
        %3499 = vmatpush1.msra.mxu0 0.0
        %3500 = vmatprep.subr.mxu0 0.0
        %3501 = vmatpush1.msra.mxu0 0.0
        %3502 = vmatprep.subr.mxu0 0.0
        %3503 = vmatpush1.msra.mxu0 0.0
        %3504 = vmatprep.subr.mxu0 0.0
        %3505 = vmatpush1.msra.mxu0 0.0
        %3506 = vmatprep.subr.mxu0 0.0
        %3507 = vmatpush1.msra.mxu0 0.0
        %3508 = vmatprep.subr.mxu0 0.0
        %3509 = vmatpush1.msra.mxu0 0.0
        %3510 = vmatprep.subr.mxu0 0.0
        %3511 = vmatpush1.msra.mxu0 0.0
        %3512 = vmatprep.subr.mxu0 0.0
        %3513 = vmatpush1.msra.mxu0 0.0
        %3514 = vmatprep.subr.mxu0 0.0
        %3515 = vmatpush1.msra.mxu0 0.0
        %3516 = vmatprep.subr.mxu0 0.0
        %3517 = vmatpush1.msra.mxu0 0.0
        %3518 = vmatprep.subr.mxu0 0.0
        %3519 = vmatpush1.msra.mxu0 0.0
        %3520 = vmatprep.subr.mxu0 0.0
        %3521 = vmatpush1.msra.mxu0 0.0
        %3522 = vmatprep.subr.mxu0 0.0
        %3523 = vmatpush1.msra.mxu0 0.0
        %3524 = vmatprep.subr.mxu0 0.0
        %3525 = vmatpush1.msra.mxu0 0.0
        %3526 = vmatprep.subr.mxu0 0.0
        %3527 = vmatpush1.msra.mxu0 0.0
        %3528 = vmatprep.subr.mxu0 0.0
        %3529 = vmatpush1.msra.mxu0 0.0
        %3530 = vmatprep.mubr.f32.mxu0 0.0
        %3531 = vmatmul.mubr.f32.gmra.mrb[0].mxu0 %v3194
        %v3532 = vpop.f32.mrb[0].mxu0
        %v3533 = vadd.f32 0.0, %v3532
        %v3534 = vpop.f32.mrb[0].mxu0
        %3535 = vdwg.mxu0
        %s3536 = scalar_lea.vmem [#allocation22], 4
        %v3537 = vld [vmem:[%s3536] sm:$0xf]
        %v3539 = vsel %vm2875, %v3537, 0
        %3541 = vmatprep.subr.mxu0 0.0
        %3542 = vmatpush1.msra.mxu0 %v3533
        %3543 = vmatprep.subr.mxu0 0.0
        %3544 = vmatpush1.msra.mxu0 0.0
        %3545 = vmatprep.subr.mxu0 0.0
        %3546 = vmatpush1.msra.mxu0 0.0
        %3547 = vmatprep.subr.mxu0 0.0
        %3548 = vmatpush1.msra.mxu0 0.0
        %3549 = vmatprep.subr.mxu0 0.0
        %3550 = vmatpush1.msra.mxu0 0.0
        %3551 = vmatprep.subr.mxu0 0.0
        %3552 = vmatpush1.msra.mxu0 0.0
        %3553 = vmatprep.subr.mxu0 0.0
        %3554 = vmatpush1.msra.mxu0 0.0
        %3555 = vmatprep.subr.mxu0 0.0
        %3556 = vmatpush1.msra.mxu0 0.0
        %3557 = vmatprep.subr.mxu0 0.0
        %3558 = vmatpush1.msra.mxu0 0.0
        %3559 = vmatprep.subr.mxu0 0.0
        %3560 = vmatpush1.msra.mxu0 0.0
        %3561 = vmatprep.subr.mxu0 0.0
        %3562 = vmatpush1.msra.mxu0 0.0
        %3563 = vmatprep.subr.mxu0 0.0
        %3564 = vmatpush1.msra.mxu0 0.0
        %3565 = vmatprep.subr.mxu0 0.0
        %3566 = vmatpush1.msra.mxu0 0.0
        %3567 = vmatprep.subr.mxu0 0.0
        %3568 = vmatpush1.msra.mxu0 0.0
        %3569 = vmatprep.subr.mxu0 0.0
        %3570 = vmatpush1.msra.mxu0 0.0
        %3571 = vmatprep.subr.mxu0 0.0
        %3572 = vmatpush1.msra.mxu0 0.0
        %3573 = vmatprep.subr.mxu0 0.0
        %3574 = vmatpush1.msra.mxu0 0.0
        %3575 = vmatprep.subr.mxu0 0.0
        %3576 = vmatpush1.msra.mxu0 0.0
        %3577 = vmatprep.subr.mxu0 0.0
        %3578 = vmatpush1.msra.mxu0 0.0
        %3579 = vmatprep.subr.mxu0 0.0
        %3580 = vmatpush1.msra.mxu0 0.0
        %3581 = vmatprep.subr.mxu0 0.0
        %3582 = vmatpush1.msra.mxu0 0.0
        %3583 = vmatprep.subr.mxu0 0.0
        %3584 = vmatpush1.msra.mxu0 0.0
        %3585 = vmatprep.subr.mxu0 0.0
        %3586 = vmatpush1.msra.mxu0 0.0
        %3587 = vmatprep.subr.mxu0 0.0
        %3588 = vmatpush1.msra.mxu0 0.0
        %3589 = vmatprep.subr.mxu0 0.0
        %3590 = vmatpush1.msra.mxu0 0.0
        %3591 = vmatprep.subr.mxu0 0.0
        %3592 = vmatpush1.msra.mxu0 0.0
        %3593 = vmatprep.subr.mxu0 0.0
        %3594 = vmatpush1.msra.mxu0 0.0
        %3595 = vmatprep.subr.mxu0 0.0
        %3596 = vmatpush1.msra.mxu0 0.0
        %3597 = vmatprep.subr.mxu0 0.0
        %3598 = vmatpush1.msra.mxu0 0.0
        %3599 = vmatprep.subr.mxu0 0.0
        %3600 = vmatpush1.msra.mxu0 0.0
        %3601 = vmatprep.subr.mxu0 0.0
        %3602 = vmatpush1.msra.mxu0 0.0
        %3603 = vmatprep.subr.mxu0 0.0
        %3604 = vmatpush1.msra.mxu0 0.0
        %3605 = vmatprep.mubr.f32.mxu0 0.0
        %3606 = vmatmul.mubr.f32.gmra.mrb[0].mxu0 %v3539
        %v3607 = vpop.f32.mrb[0].mxu0
        %v3608 = vadd.f32 0.0, %v3607
        %v3609 = vpop.f32.mrb[0].mxu0
        %3610 = vdwg.mxu0
        %v3612 = vsel %vm2875, %v3448, 0
        %3614 = vmatprep.subr.mxu0 0.0
        %3615 = vmatpush1.msra.mxu0 %v3445
        %3616 = vmatprep.subr.mxu0 0.0
        %3617 = vmatpush1.msra.mxu0 0.0
        %3618 = vmatprep.subr.mxu0 0.0
        %3619 = vmatpush1.msra.mxu0 0.0
        %3620 = vmatprep.subr.mxu0 0.0
        %3621 = vmatpush1.msra.mxu0 0.0
        %3622 = vmatprep.subr.mxu0 0.0
        %3623 = vmatpush1.msra.mxu0 0.0
        %3624 = vmatprep.subr.mxu0 0.0
        %3625 = vmatpush1.msra.mxu0 0.0
        %3626 = vmatprep.subr.mxu0 0.0
        %3627 = vmatpush1.msra.mxu0 0.0
        %3628 = vmatprep.subr.mxu0 0.0
        %3629 = vmatpush1.msra.mxu0 0.0
        %3630 = vmatprep.subr.mxu0 0.0
        %3631 = vmatpush1.msra.mxu0 0.0
        %3632 = vmatprep.subr.mxu0 0.0
        %3633 = vmatpush1.msra.mxu0 0.0
        %3634 = vmatprep.subr.mxu0 0.0
        %3635 = vmatpush1.msra.mxu0 0.0
        %3636 = vmatprep.subr.mxu0 0.0
        %3637 = vmatpush1.msra.mxu0 0.0
        %3638 = vmatprep.subr.mxu0 0.0
        %3639 = vmatpush1.msra.mxu0 0.0
        %3640 = vmatprep.subr.mxu0 0.0
        %3641 = vmatpush1.msra.mxu0 0.0
        %3642 = vmatprep.subr.mxu0 0.0
        %3643 = vmatpush1.msra.mxu0 0.0
        %3644 = vmatprep.subr.mxu0 0.0
        %3645 = vmatpush1.msra.mxu0 0.0
        %3646 = vmatprep.subr.mxu0 0.0
        %3647 = vmatpush1.msra.mxu0 0.0
        %3648 = vmatprep.subr.mxu0 0.0
        %3649 = vmatpush1.msra.mxu0 0.0
        %3650 = vmatprep.subr.mxu0 0.0
        %3651 = vmatpush1.msra.mxu0 0.0
        %3652 = vmatprep.subr.mxu0 0.0
        %3653 = vmatpush1.msra.mxu0 0.0
        %3654 = vmatprep.subr.mxu0 0.0
        %3655 = vmatpush1.msra.mxu0 0.0
        %3656 = vmatprep.subr.mxu0 0.0
        %3657 = vmatpush1.msra.mxu0 0.0
        %3658 = vmatprep.subr.mxu0 0.0
        %3659 = vmatpush1.msra.mxu0 0.0
        %3660 = vmatprep.subr.mxu0 0.0
        %3661 = vmatpush1.msra.mxu0 0.0
        %3662 = vmatprep.subr.mxu0 0.0
        %3663 = vmatpush1.msra.mxu0 0.0
        %3664 = vmatprep.subr.mxu0 0.0
        %3665 = vmatpush1.msra.mxu0 0.0
        %3666 = vmatprep.subr.mxu0 0.0
        %3667 = vmatpush1.msra.mxu0 0.0
        %3668 = vmatprep.subr.mxu0 0.0
        %3669 = vmatpush1.msra.mxu0 0.0
        %3670 = vmatprep.subr.mxu0 0.0
        %3671 = vmatpush1.msra.mxu0 0.0
        %3672 = vmatprep.subr.mxu0 0.0
        %3673 = vmatpush1.msra.mxu0 0.0
        %3674 = vmatprep.subr.mxu0 0.0
        %3675 = vmatpush1.msra.mxu0 0.0
        %3676 = vmatprep.subr.mxu0 0.0
        %3677 = vmatpush1.msra.mxu0 0.0
        %3678 = vmatprep.mubr.f32.mxu0 0.0
        %3679 = vmatmul.mubr.f32.gmra.mrb[0].mxu0 %v3612
        %v3680 = vpop.f32.mrb[0].mxu0
        %v3681 = vadd.f32 %v3608, %v3680
        %v3682 = vpop.f32.mrb[0].mxu0
        %3683 = vdwg.mxu0
        %s3684 = scalar_lea.vmem %s29, 256
        %v3685 = vld [vmem:[%s3684] sm:$0xff]
        %v3686 = vld [vmem:[%s3684 + $0x8] sm:$0xff]
        %v3687 = vld [vmem:[%s3684 + $0x10] sm:$0xff]
        %v3688 = vld [vmem:[%s3684 + $0x18] sm:$0xff]
        %v3689 = vld [vmem:[%s3684 + $0x20] sm:$0xff]
        %v3690 = vld [vmem:[%s3684 + $0x28] sm:$0xff]
        %v3691 = vld [vmem:[%s3684 + $0x30] sm:$0xff]
        %v3692 = vld [vmem:[%s3684 + $0x38] sm:$0xff]
        %v3693 = vld [vmem:[%s3684 + $0x40] sm:$0xff]
        %v3694 = vld [vmem:[%s3684 + $0x48] sm:$0xff]
        %v3695 = vld [vmem:[%s3684 + $0x50] sm:$0xff]
        %v3696 = vld [vmem:[%s3684 + $0x58] sm:$0xff]
        %v3697 = vld [vmem:[%s3684 + $0x60] sm:$0xff]
        %v3698 = vld [vmem:[%s3684 + $0x68] sm:$0xff]
        %v3699 = vld [vmem:[%s3684 + $0x70] sm:$0xff]
        %v3700 = vld [vmem:[%s3684 + $0x78] sm:$0xff]
        %3701 = vmatprep.subr.mxu0 0.0
        %3702 = vmatpush1.msra.mxu0 %v3685
        %3703 = vmatprep.subr.mxu0 0.0
        %3704 = vmatpush1.msra.mxu0 %v3686
        %3705 = vmatprep.subr.mxu0 0.0
        %3706 = vmatpush1.msra.mxu0 %v3687
        %3707 = vmatprep.subr.mxu0 0.0
        %3708 = vmatpush1.msra.mxu0 %v3688
        %3709 = vmatprep.subr.mxu0 0.0
        %3710 = vmatpush1.msra.mxu0 %v3689
        %3711 = vmatprep.subr.mxu0 0.0
        %3712 = vmatpush1.msra.mxu0 %v3690
        %3713 = vmatprep.subr.mxu0 0.0
        %3714 = vmatpush1.msra.mxu0 %v3691
        %3715 = vmatprep.subr.mxu0 0.0
        %3716 = vmatpush1.msra.mxu0 %v3692
        %3717 = vmatprep.subr.mxu0 0.0
        %3718 = vmatpush1.msra.mxu0 %v3693
        %3719 = vmatprep.subr.mxu0 0.0
        %3720 = vmatpush1.msra.mxu0 %v3694
        %3721 = vmatprep.subr.mxu0 0.0
        %3722 = vmatpush1.msra.mxu0 %v3695
        %3723 = vmatprep.subr.mxu0 0.0
        %3724 = vmatpush1.msra.mxu0 %v3696
        %3725 = vmatprep.subr.mxu0 0.0
        %3726 = vmatpush1.msra.mxu0 %v3697
        %3727 = vmatprep.subr.mxu0 0.0
        %3728 = vmatpush1.msra.mxu0 %v3698
        %3729 = vmatprep.subr.mxu0 0.0
        %3730 = vmatpush1.msra.mxu0 %v3699
        %3731 = vmatprep.subr.mxu0 0.0
        %3732 = vmatpush1.msra.mxu0 %v3700
        %3733 = vmatprep.subr.mxu0 0.0
        %3734 = vmatpush1.msra.mxu0 0.0
        %3735 = vmatprep.subr.mxu0 0.0
        %3736 = vmatpush1.msra.mxu0 0.0
        %3737 = vmatprep.subr.mxu0 0.0
        %3738 = vmatpush1.msra.mxu0 0.0
        %3739 = vmatprep.subr.mxu0 0.0
        %3740 = vmatpush1.msra.mxu0 0.0
        %3741 = vmatprep.subr.mxu0 0.0
        %3742 = vmatpush1.msra.mxu0 0.0
        %3743 = vmatprep.subr.mxu0 0.0
        %3744 = vmatpush1.msra.mxu0 0.0
        %3745 = vmatprep.subr.mxu0 0.0
        %3746 = vmatpush1.msra.mxu0 0.0
        %3747 = vmatprep.subr.mxu0 0.0
        %3748 = vmatpush1.msra.mxu0 0.0
        %3749 = vmatprep.subr.mxu0 0.0
        %3750 = vmatpush1.msra.mxu0 0.0
        %3751 = vmatprep.subr.mxu0 0.0
        %3752 = vmatpush1.msra.mxu0 0.0
        %3753 = vmatprep.subr.mxu0 0.0
        %3754 = vmatpush1.msra.mxu0 0.0
        %3755 = vmatprep.subr.mxu0 0.0
        %3756 = vmatpush1.msra.mxu0 0.0
        %3757 = vmatprep.subr.mxu0 0.0
        %3758 = vmatpush1.msra.mxu0 0.0
        %3759 = vmatprep.subr.mxu0 0.0
        %3760 = vmatpush1.msra.mxu0 0.0
        %3761 = vmatprep.subr.mxu0 0.0
        %3762 = vmatpush1.msra.mxu0 0.0
        %3763 = vmatprep.subr.mxu0 0.0
        %3764 = vmatpush1.msra.mxu0 0.0
        %3765 = vmatprep.mubr.f32.mxu0 0.0
        %3766 = vmatmul.mubr.f32.gmra.mrb[0].mxu0 %v3194
        %v3767 = vpop.f32.mrb[0].mxu0
        %v3768 = vadd.f32 0.0, %v3767
        %v3769 = vpop.f32.mrb[0].mxu0
        %3770 = vdwg.mxu0
        %s3771 = scalar_lea.vmem [#allocation22], 8
        %v3772 = vld [vmem:[%s3771] sm:$0xf]
        %v3774 = vsel %vm2875, %v3772, 0
        %3776 = vmatprep.subr.mxu0 0.0
        %3777 = vmatpush1.msra.mxu0 %v3768
        %3778 = vmatprep.subr.mxu0 0.0
        %3779 = vmatpush1.msra.mxu0 0.0
        %3780 = vmatprep.subr.mxu0 0.0
        %3781 = vmatpush1.msra.mxu0 0.0
        %3782 = vmatprep.subr.mxu0 0.0
        %3783 = vmatpush1.msra.mxu0 0.0
        %3784 = vmatprep.subr.mxu0 0.0
        %3785 = vmatpush1.msra.mxu0 0.0
        %3786 = vmatprep.subr.mxu0 0.0
        %3787 = vmatpush1.msra.mxu0 0.0
        %3788 = vmatprep.subr.mxu0 0.0
        %3789 = vmatpush1.msra.mxu0 0.0
        %3790 = vmatprep.subr.mxu0 0.0
        %3791 = vmatpush1.msra.mxu0 0.0
        %3792 = vmatprep.subr.mxu0 0.0
        %3793 = vmatpush1.msra.mxu0 0.0
        %3794 = vmatprep.subr.mxu0 0.0
        %3795 = vmatpush1.msra.mxu0 0.0
        %3796 = vmatprep.subr.mxu0 0.0
        %3797 = vmatpush1.msra.mxu0 0.0
        %3798 = vmatprep.subr.mxu0 0.0
        %3799 = vmatpush1.msra.mxu0 0.0
        %3800 = vmatprep.subr.mxu0 0.0
        %3801 = vmatpush1.msra.mxu0 0.0
        %3802 = vmatprep.subr.mxu0 0.0
        %3803 = vmatpush1.msra.mxu0 0.0
        %3804 = vmatprep.subr.mxu0 0.0
        %3805 = vmatpush1.msra.mxu0 0.0
        %3806 = vmatprep.subr.mxu0 0.0
        %3807 = vmatpush1.msra.mxu0 0.0
        %3808 = vmatprep.subr.mxu0 0.0
        %3809 = vmatpush1.msra.mxu0 0.0
        %3810 = vmatprep.subr.mxu0 0.0
        %3811 = vmatpush1.msra.mxu0 0.0
        %3812 = vmatprep.subr.mxu0 0.0
        %3813 = vmatpush1.msra.mxu0 0.0
        %3814 = vmatprep.subr.mxu0 0.0
        %3815 = vmatpush1.msra.mxu0 0.0
        %3816 = vmatprep.subr.mxu0 0.0
        %3817 = vmatpush1.msra.mxu0 0.0
        %3818 = vmatprep.subr.mxu0 0.0
        %3819 = vmatpush1.msra.mxu0 0.0
        %3820 = vmatprep.subr.mxu0 0.0
        %3821 = vmatpush1.msra.mxu0 0.0
        %3822 = vmatprep.subr.mxu0 0.0
        %3823 = vmatpush1.msra.mxu0 0.0
        %3824 = vmatprep.subr.mxu0 0.0
        %3825 = vmatpush1.msra.mxu0 0.0
        %3826 = vmatprep.subr.mxu0 0.0
        %3827 = vmatpush1.msra.mxu0 0.0
        %3828 = vmatprep.subr.mxu0 0.0
        %3829 = vmatpush1.msra.mxu0 0.0
        %3830 = vmatprep.subr.mxu0 0.0
        %3831 = vmatpush1.msra.mxu0 0.0
        %3832 = vmatprep.subr.mxu0 0.0
        %3833 = vmatpush1.msra.mxu0 0.0
        %3834 = vmatprep.subr.mxu0 0.0
        %3835 = vmatpush1.msra.mxu0 0.0
        %3836 = vmatprep.subr.mxu0 0.0
        %3837 = vmatpush1.msra.mxu0 0.0
        %3838 = vmatprep.subr.mxu0 0.0
        %3839 = vmatpush1.msra.mxu0 0.0
        %3840 = vmatprep.mubr.f32.mxu0 0.0
        %3841 = vmatmul.mubr.f32.gmra.mrb[0].mxu0 %v3774
        %v3842 = vpop.f32.mrb[0].mxu0
        %v3843 = vadd.f32 0.0, %v3842
        %v3844 = vpop.f32.mrb[0].mxu0
        %3845 = vdwg.mxu0
        %v3846 = vadd.f32 %v3681, %v3843
        %v3847 = vld [vmem:[#allocation23] sm:$0x1]
        %v3849 = vlaneseq
        %v3850 = vshrl.u32 %v3849, 7
        %v3851 = vsub.s32 0, %v3850
        %v3852 = vrot.slane %v3847, %v3851
        %v3854 = vadd.f32 %v3846, %v3852
        %v3855 = vmax.f32 %v3854, 0.0
        %v3856 = vld [vmem:[#allocation26] sm:$0xff]
        %v3857 = vld [vmem:[#allocation26 + $0x8] sm:$0xff]
        %v3858 = vld [vmem:[#allocation26 + $0x10] sm:$0xff]
        %v3859 = vld [vmem:[#allocation26 + $0x18] sm:$0xff]
        %v3860 = vld [vmem:[#allocation26 + $0x20] sm:$0xff]
        %v3861 = vld [vmem:[#allocation26 + $0x28] sm:$0xff]
        %v3862 = vld [vmem:[#allocation26 + $0x30] sm:$0xff]
        %v3863 = vld [vmem:[#allocation26 + $0x38] sm:$0xff]
        %v3864 = vld [vmem:[#allocation26 + $0x40] sm:$0xff]
        %v3865 = vld [vmem:[#allocation26 + $0x48] sm:$0xff]
        %v3866 = vld [vmem:[#allocation26 + $0x50] sm:$0xff]
        %v3867 = vld [vmem:[#allocation26 + $0x58] sm:$0xff]
        %v3868 = vld [vmem:[#allocation26 + $0x60] sm:$0xff]
        %v3869 = vld [vmem:[#allocation26 + $0x68] sm:$0xff]
        %v3870 = vld [vmem:[#allocation26 + $0x70] sm:$0xff]
        %v3871 = vld [vmem:[#allocation26 + $0x78] sm:$0xff]
        %3872 = vmatprep.subr.mxu0 0.0
        %3873 = vmatpush1.msra.mxu0 %v3856
        %3874 = vmatprep.subr.mxu0 0.0
        %3875 = vmatpush1.msra.mxu0 %v3857
        %3876 = vmatprep.subr.mxu0 0.0
        %3877 = vmatpush1.msra.mxu0 %v3858
        %3878 = vmatprep.subr.mxu0 0.0
        %3879 = vmatpush1.msra.mxu0 %v3859
        %3880 = vmatprep.subr.mxu0 0.0
        %3881 = vmatpush1.msra.mxu0 %v3860
        %3882 = vmatprep.subr.mxu0 0.0
        %3883 = vmatpush1.msra.mxu0 %v3861
        %3884 = vmatprep.subr.mxu0 0.0
        %3885 = vmatpush1.msra.mxu0 %v3862
        %3886 = vmatprep.subr.mxu0 0.0
        %3887 = vmatpush1.msra.mxu0 %v3863
        %3888 = vmatprep.subr.mxu0 0.0
        %3889 = vmatpush1.msra.mxu0 %v3864
        %3890 = vmatprep.subr.mxu0 0.0
        %3891 = vmatpush1.msra.mxu0 %v3865
        %3892 = vmatprep.subr.mxu0 0.0
        %3893 = vmatpush1.msra.mxu0 %v3866
        %3894 = vmatprep.subr.mxu0 0.0
        %3895 = vmatpush1.msra.mxu0 %v3867
        %3896 = vmatprep.subr.mxu0 0.0
        %3897 = vmatpush1.msra.mxu0 %v3868
        %3898 = vmatprep.subr.mxu0 0.0
        %3899 = vmatpush1.msra.mxu0 %v3869
        %3900 = vmatprep.subr.mxu0 0.0
        %3901 = vmatpush1.msra.mxu0 %v3870
        %3902 = vmatprep.subr.mxu0 0.0
        %3903 = vmatpush1.msra.mxu0 %v3871
        %3904 = vmatprep.subr.mxu0 0.0
        %3905 = vmatpush1.msra.mxu0 0.0
        %3906 = vmatprep.subr.mxu0 0.0
        %3907 = vmatpush1.msra.mxu0 0.0
        %3908 = vmatprep.subr.mxu0 0.0
        %3909 = vmatpush1.msra.mxu0 0.0
        %3910 = vmatprep.subr.mxu0 0.0
        %3911 = vmatpush1.msra.mxu0 0.0
        %3912 = vmatprep.subr.mxu0 0.0
        %3913 = vmatpush1.msra.mxu0 0.0
        %3914 = vmatprep.subr.mxu0 0.0
        %3915 = vmatpush1.msra.mxu0 0.0
        %3916 = vmatprep.subr.mxu0 0.0
        %3917 = vmatpush1.msra.mxu0 0.0
        %3918 = vmatprep.subr.mxu0 0.0
        %3919 = vmatpush1.msra.mxu0 0.0
        %3920 = vmatprep.subr.mxu0 0.0
        %3921 = vmatpush1.msra.mxu0 0.0
        %3922 = vmatprep.subr.mxu0 0.0
        %3923 = vmatpush1.msra.mxu0 0.0
        %3924 = vmatprep.subr.mxu0 0.0
        %3925 = vmatpush1.msra.mxu0 0.0
        %3926 = vmatprep.subr.mxu0 0.0
        %3927 = vmatpush1.msra.mxu0 0.0
        %3928 = vmatprep.subr.mxu0 0.0
        %3929 = vmatpush1.msra.mxu0 0.0
        %3930 = vmatprep.subr.mxu0 0.0
        %3931 = vmatpush1.msra.mxu0 0.0
        %3932 = vmatprep.subr.mxu0 0.0
        %3933 = vmatpush1.msra.mxu0 0.0
        %3934 = vmatprep.subr.mxu0 0.0
        %3935 = vmatpush1.msra.mxu0 0.0
        %3936 = vmatprep.mubr.f32.mxu0 0.0
        %3937 = vmatmul.mubr.f32.gmra.mrb[0].mxu0 %v3855
        %v3938 = vpop.f32.mrb[0].mxu0
        %v3939 = vadd.f32 0.0, %v3938
        %v3940 = vpop.f32.mrb[0].mxu0
        %3941 = vdwg.mxu0
        %v3942 = vld [vmem:[#allocation25] sm:$0xf]
        %s3943 = scalar_lea.vmem [#allocation26], 128
        %v3944 = vld [vmem:[%s3943] sm:$0xff]
        %v3945 = vld [vmem:[%s3943 + $0x8] sm:$0xff]
        %v3946 = vld [vmem:[%s3943 + $0x10] sm:$0xff]
        %v3947 = vld [vmem:[%s3943 + $0x18] sm:$0xff]
        %v3948 = vld [vmem:[%s3943 + $0x20] sm:$0xff]
        %v3949 = vld [vmem:[%s3943 + $0x28] sm:$0xff]
        %v3950 = vld [vmem:[%s3943 + $0x30] sm:$0xff]
        %v3951 = vld [vmem:[%s3943 + $0x38] sm:$0xff]
        %v3952 = vld [vmem:[%s3943 + $0x40] sm:$0xff]
        %v3953 = vld [vmem:[%s3943 + $0x48] sm:$0xff]
        %v3954 = vld [vmem:[%s3943 + $0x50] sm:$0xff]
        %v3955 = vld [vmem:[%s3943 + $0x58] sm:$0xff]
        %v3956 = vld [vmem:[%s3943 + $0x60] sm:$0xff]
        %v3957 = vld [vmem:[%s3943 + $0x68] sm:$0xff]
        %v3958 = vld [vmem:[%s3943 + $0x70] sm:$0xff]
        %v3959 = vld [vmem:[%s3943 + $0x78] sm:$0xff]
        %3960 = vmatprep.subr.mxu0 0.0
        %3961 = vmatpush1.msra.mxu0 %v3944
        %3962 = vmatprep.subr.mxu0 0.0
        %3963 = vmatpush1.msra.mxu0 %v3945
        %3964 = vmatprep.subr.mxu0 0.0
        %3965 = vmatpush1.msra.mxu0 %v3946
        %3966 = vmatprep.subr.mxu0 0.0
        %3967 = vmatpush1.msra.mxu0 %v3947
        %3968 = vmatprep.subr.mxu0 0.0
        %3969 = vmatpush1.msra.mxu0 %v3948
        %3970 = vmatprep.subr.mxu0 0.0
        %3971 = vmatpush1.msra.mxu0 %v3949
        %3972 = vmatprep.subr.mxu0 0.0
        %3973 = vmatpush1.msra.mxu0 %v3950
        %3974 = vmatprep.subr.mxu0 0.0
        %3975 = vmatpush1.msra.mxu0 %v3951
        %3976 = vmatprep.subr.mxu0 0.0
        %3977 = vmatpush1.msra.mxu0 %v3952
        %3978 = vmatprep.subr.mxu0 0.0
        %3979 = vmatpush1.msra.mxu0 %v3953
        %3980 = vmatprep.subr.mxu0 0.0
        %3981 = vmatpush1.msra.mxu0 %v3954
        %3982 = vmatprep.subr.mxu0 0.0
        %3983 = vmatpush1.msra.mxu0 %v3955
        %3984 = vmatprep.subr.mxu0 0.0
        %3985 = vmatpush1.msra.mxu0 %v3956
        %3986 = vmatprep.subr.mxu0 0.0
        %3987 = vmatpush1.msra.mxu0 %v3957
        %3988 = vmatprep.subr.mxu0 0.0
        %3989 = vmatpush1.msra.mxu0 %v3958
        %3990 = vmatprep.subr.mxu0 0.0
        %3991 = vmatpush1.msra.mxu0 %v3959
        %3992 = vmatprep.subr.mxu0 0.0
        %3993 = vmatpush1.msra.mxu0 0.0
        %3994 = vmatprep.subr.mxu0 0.0
        %3995 = vmatpush1.msra.mxu0 0.0
        %3996 = vmatprep.subr.mxu0 0.0
        %3997 = vmatpush1.msra.mxu0 0.0
        %3998 = vmatprep.subr.mxu0 0.0
        %3999 = vmatpush1.msra.mxu0 0.0
        %4000 = vmatprep.subr.mxu0 0.0
        %4001 = vmatpush1.msra.mxu0 0.0
        %4002 = vmatprep.subr.mxu0 0.0
        %4003 = vmatpush1.msra.mxu0 0.0
        %4004 = vmatprep.subr.mxu0 0.0
        %4005 = vmatpush1.msra.mxu0 0.0
        %4006 = vmatprep.subr.mxu0 0.0
        %4007 = vmatpush1.msra.mxu0 0.0
        %4008 = vmatprep.subr.mxu0 0.0
        %4009 = vmatpush1.msra.mxu0 0.0
        %4010 = vmatprep.subr.mxu0 0.0
        %4011 = vmatpush1.msra.mxu0 0.0
        %4012 = vmatprep.subr.mxu0 0.0
        %4013 = vmatpush1.msra.mxu0 0.0
        %4014 = vmatprep.subr.mxu0 0.0
        %4015 = vmatpush1.msra.mxu0 0.0
        %4016 = vmatprep.subr.mxu0 0.0
        %4017 = vmatpush1.msra.mxu0 0.0
        %4018 = vmatprep.subr.mxu0 0.0
        %4019 = vmatpush1.msra.mxu0 0.0
        %4020 = vmatprep.subr.mxu0 0.0
        %4021 = vmatpush1.msra.mxu0 0.0
        %4022 = vmatprep.subr.mxu0 0.0
        %4023 = vmatpush1.msra.mxu0 0.0
        %4024 = vmatprep.mubr.f32.mxu0 0.0
        %4025 = vmatmul.mubr.f32.gmra.mrb[0].mxu0 %v3855
        %v4026 = vpop.f32.mrb[0].mxu0
        %v4027 = vadd.f32 0.0, %v4026
        %v4028 = vpop.f32.mrb[0].mxu0
        %4029 = vdwg.mxu0
        %s4030 = scalar_lea.vmem [#allocation25], 4
        %v4031 = vld [vmem:[%s4030] sm:$0xf]
        %vm4032 = vcmask 31744
        %v4034 = vsel %vm4032, %v4031, 0
        %vm4036 = vcmask 1043456
        %v4038 = vsel %vm4036, %v4027, 0
        %4040 = vmatprep.subr.mxu0 0.0
        %4041 = vmatpush1.msra.mxu0 %v4038
        %4042 = vmatprep.subr.mxu0 0.0
        %4043 = vmatpush1.msra.mxu0 0.0
        %4044 = vmatprep.subr.mxu0 0.0
        %4045 = vmatpush1.msra.mxu0 0.0
        %4046 = vmatprep.subr.mxu0 0.0
        %4047 = vmatpush1.msra.mxu0 0.0
        %4048 = vmatprep.subr.mxu0 0.0
        %4049 = vmatpush1.msra.mxu0 0.0
        %4050 = vmatprep.subr.mxu0 0.0
        %4051 = vmatpush1.msra.mxu0 0.0
        %4052 = vmatprep.subr.mxu0 0.0
        %4053 = vmatpush1.msra.mxu0 0.0
        %4054 = vmatprep.subr.mxu0 0.0
        %4055 = vmatpush1.msra.mxu0 0.0
        %4056 = vmatprep.subr.mxu0 0.0
        %4057 = vmatpush1.msra.mxu0 0.0
        %4058 = vmatprep.subr.mxu0 0.0
        %4059 = vmatpush1.msra.mxu0 0.0
        %4060 = vmatprep.subr.mxu0 0.0
        %4061 = vmatpush1.msra.mxu0 0.0
        %4062 = vmatprep.subr.mxu0 0.0
        %4063 = vmatpush1.msra.mxu0 0.0
        %4064 = vmatprep.subr.mxu0 0.0
        %4065 = vmatpush1.msra.mxu0 0.0
        %4066 = vmatprep.subr.mxu0 0.0
        %4067 = vmatpush1.msra.mxu0 0.0
        %4068 = vmatprep.subr.mxu0 0.0
        %4069 = vmatpush1.msra.mxu0 0.0
        %4070 = vmatprep.subr.mxu0 0.0
        %4071 = vmatpush1.msra.mxu0 0.0
        %4072 = vmatprep.subr.mxu0 0.0
        %4073 = vmatpush1.msra.mxu0 0.0
        %4074 = vmatprep.subr.mxu0 0.0
        %4075 = vmatpush1.msra.mxu0 0.0
        %4076 = vmatprep.subr.mxu0 0.0
        %4077 = vmatpush1.msra.mxu0 0.0
        %4078 = vmatprep.subr.mxu0 0.0
        %4079 = vmatpush1.msra.mxu0 0.0
        %4080 = vmatprep.subr.mxu0 0.0
        %4081 = vmatpush1.msra.mxu0 0.0
        %4082 = vmatprep.subr.mxu0 0.0
        %4083 = vmatpush1.msra.mxu0 0.0
        %4084 = vmatprep.subr.mxu0 0.0
        %4085 = vmatpush1.msra.mxu0 0.0
        %4086 = vmatprep.subr.mxu0 0.0
        %4087 = vmatpush1.msra.mxu0 0.0
        %4088 = vmatprep.subr.mxu0 0.0
        %4089 = vmatpush1.msra.mxu0 0.0
        %4090 = vmatprep.subr.mxu0 0.0
        %4091 = vmatpush1.msra.mxu0 0.0
        %4092 = vmatprep.subr.mxu0 0.0
        %4093 = vmatpush1.msra.mxu0 0.0
        %4094 = vmatprep.subr.mxu0 0.0
        %4095 = vmatpush1.msra.mxu0 0.0
        %4096 = vmatprep.subr.mxu0 0.0
        %4097 = vmatpush1.msra.mxu0 0.0
        %4098 = vmatprep.subr.mxu0 0.0
        %4099 = vmatpush1.msra.mxu0 0.0
        %4100 = vmatprep.subr.mxu0 0.0
        %4101 = vmatpush1.msra.mxu0 0.0
        %4102 = vmatprep.subr.mxu0 0.0
        %4103 = vmatpush1.msra.mxu0 0.0
        %4104 = vmatprep.mubr.f32.mxu0 0.0
        %4105 = vmatmul.mubr.f32.gmra.mrb[0].mxu0 %v4034
        %v4106 = vpop.f32.mrb[0].mxu0
        %v4107 = vadd.f32 0.0, %v4106
        %v4108 = vpop.f32.mrb[0].mxu0
        %4109 = vdwg.mxu0
        %v4111 = vsel %vm4032, %v3942, 0
        %v4114 = vsel %vm4036, %v3939, 0
        %4116 = vmatprep.subr.mxu0 0.0
        %4117 = vmatpush1.msra.mxu0 %v4114
        %4118 = vmatprep.subr.mxu0 0.0
        %4119 = vmatpush1.msra.mxu0 0.0
        %4120 = vmatprep.subr.mxu0 0.0
        %4121 = vmatpush1.msra.mxu0 0.0
        %4122 = vmatprep.subr.mxu0 0.0
        %4123 = vmatpush1.msra.mxu0 0.0
        %4124 = vmatprep.subr.mxu0 0.0
        %4125 = vmatpush1.msra.mxu0 0.0
        %4126 = vmatprep.subr.mxu0 0.0
        %4127 = vmatpush1.msra.mxu0 0.0
        %4128 = vmatprep.subr.mxu0 0.0
        %4129 = vmatpush1.msra.mxu0 0.0
        %4130 = vmatprep.subr.mxu0 0.0
        %4131 = vmatpush1.msra.mxu0 0.0
        %4132 = vmatprep.subr.mxu0 0.0
        %4133 = vmatpush1.msra.mxu0 0.0
        %4134 = vmatprep.subr.mxu0 0.0
        %4135 = vmatpush1.msra.mxu0 0.0
        %4136 = vmatprep.subr.mxu0 0.0
        %4137 = vmatpush1.msra.mxu0 0.0
        %4138 = vmatprep.subr.mxu0 0.0
        %4139 = vmatpush1.msra.mxu0 0.0
        %4140 = vmatprep.subr.mxu0 0.0
        %4141 = vmatpush1.msra.mxu0 0.0
        %4142 = vmatprep.subr.mxu0 0.0
        %4143 = vmatpush1.msra.mxu0 0.0
        %4144 = vmatprep.subr.mxu0 0.0
        %4145 = vmatpush1.msra.mxu0 0.0
        %4146 = vmatprep.subr.mxu0 0.0
        %4147 = vmatpush1.msra.mxu0 0.0
        %4148 = vmatprep.subr.mxu0 0.0
        %4149 = vmatpush1.msra.mxu0 0.0
        %4150 = vmatprep.subr.mxu0 0.0
        %4151 = vmatpush1.msra.mxu0 0.0
        %4152 = vmatprep.subr.mxu0 0.0
        %4153 = vmatpush1.msra.mxu0 0.0
        %4154 = vmatprep.subr.mxu0 0.0
        %4155 = vmatpush1.msra.mxu0 0.0
        %4156 = vmatprep.subr.mxu0 0.0
        %4157 = vmatpush1.msra.mxu0 0.0
        %4158 = vmatprep.subr.mxu0 0.0
        %4159 = vmatpush1.msra.mxu0 0.0
        %4160 = vmatprep.subr.mxu0 0.0
        %4161 = vmatpush1.msra.mxu0 0.0
        %4162 = vmatprep.subr.mxu0 0.0
        %4163 = vmatpush1.msra.mxu0 0.0
        %4164 = vmatprep.subr.mxu0 0.0
        %4165 = vmatpush1.msra.mxu0 0.0
        %4166 = vmatprep.subr.mxu0 0.0
        %4167 = vmatpush1.msra.mxu0 0.0
        %4168 = vmatprep.subr.mxu0 0.0
        %4169 = vmatpush1.msra.mxu0 0.0
        %4170 = vmatprep.subr.mxu0 0.0
        %4171 = vmatpush1.msra.mxu0 0.0
        %4172 = vmatprep.subr.mxu0 0.0
        %4173 = vmatpush1.msra.mxu0 0.0
        %4174 = vmatprep.subr.mxu0 0.0
        %4175 = vmatpush1.msra.mxu0 0.0
        %4176 = vmatprep.subr.mxu0 0.0
        %4177 = vmatpush1.msra.mxu0 0.0
        %4178 = vmatprep.subr.mxu0 0.0
        %4179 = vmatpush1.msra.mxu0 0.0
        %4180 = vmatprep.mubr.f32.mxu0 0.0
        %4181 = vmatmul.mubr.f32.gmra.mrb[0].mxu0 %v4111
        %v4182 = vpop.f32.mrb[0].mxu0
        %v4183 = vadd.f32 %v4107, %v4182
        %v4184 = vpop.f32.mrb[0].mxu0
        %4185 = vdwg.mxu0
        %s4186 = scalar_lea.vmem [#allocation26], 256
        %v4187 = vld [vmem:[%s4186] sm:$0xff]
        %v4188 = vld [vmem:[%s4186 + $0x8] sm:$0xff]
        %v4189 = vld [vmem:[%s4186 + $0x10] sm:$0xff]
        %v4190 = vld [vmem:[%s4186 + $0x18] sm:$0xff]
        %v4191 = vld [vmem:[%s4186 + $0x20] sm:$0xff]
        %v4192 = vld [vmem:[%s4186 + $0x28] sm:$0xff]
        %v4193 = vld [vmem:[%s4186 + $0x30] sm:$0xff]
        %v4194 = vld [vmem:[%s4186 + $0x38] sm:$0xff]
        %v4195 = vld [vmem:[%s4186 + $0x40] sm:$0xff]
        %v4196 = vld [vmem:[%s4186 + $0x48] sm:$0xff]
        %v4197 = vld [vmem:[%s4186 + $0x50] sm:$0xff]
        %v4198 = vld [vmem:[%s4186 + $0x58] sm:$0xff]
        %v4199 = vld [vmem:[%s4186 + $0x60] sm:$0xff]
        %v4200 = vld [vmem:[%s4186 + $0x68] sm:$0xff]
        %v4201 = vld [vmem:[%s4186 + $0x70] sm:$0xff]
        %v4202 = vld [vmem:[%s4186 + $0x78] sm:$0xff]
        %4203 = vmatprep.subr.mxu0 0.0
        %4204 = vmatpush1.msra.mxu0 %v4187
        %4205 = vmatprep.subr.mxu0 0.0
        %4206 = vmatpush1.msra.mxu0 %v4188
        %4207 = vmatprep.subr.mxu0 0.0
        %4208 = vmatpush1.msra.mxu0 %v4189
        %4209 = vmatprep.subr.mxu0 0.0
        %4210 = vmatpush1.msra.mxu0 %v4190
        %4211 = vmatprep.subr.mxu0 0.0
        %4212 = vmatpush1.msra.mxu0 %v4191
        %4213 = vmatprep.subr.mxu0 0.0
        %4214 = vmatpush1.msra.mxu0 %v4192
        %4215 = vmatprep.subr.mxu0 0.0
        %4216 = vmatpush1.msra.mxu0 %v4193
        %4217 = vmatprep.subr.mxu0 0.0
        %4218 = vmatpush1.msra.mxu0 %v4194
        %4219 = vmatprep.subr.mxu0 0.0
        %4220 = vmatpush1.msra.mxu0 %v4195
        %4221 = vmatprep.subr.mxu0 0.0
        %4222 = vmatpush1.msra.mxu0 %v4196
        %4223 = vmatprep.subr.mxu0 0.0
        %4224 = vmatpush1.msra.mxu0 %v4197
        %4225 = vmatprep.subr.mxu0 0.0
        %4226 = vmatpush1.msra.mxu0 %v4198
        %4227 = vmatprep.subr.mxu0 0.0
        %4228 = vmatpush1.msra.mxu0 %v4199
        %4229 = vmatprep.subr.mxu0 0.0
        %4230 = vmatpush1.msra.mxu0 %v4200
        %4231 = vmatprep.subr.mxu0 0.0
        %4232 = vmatpush1.msra.mxu0 %v4201
        %4233 = vmatprep.subr.mxu0 0.0
        %4234 = vmatpush1.msra.mxu0 %v4202
        %4235 = vmatprep.subr.mxu0 0.0
        %4236 = vmatpush1.msra.mxu0 0.0
        %4237 = vmatprep.subr.mxu0 0.0
        %4238 = vmatpush1.msra.mxu0 0.0
        %4239 = vmatprep.subr.mxu0 0.0
        %4240 = vmatpush1.msra.mxu0 0.0
        %4241 = vmatprep.subr.mxu0 0.0
        %4242 = vmatpush1.msra.mxu0 0.0
        %4243 = vmatprep.subr.mxu0 0.0
        %4244 = vmatpush1.msra.mxu0 0.0
        %4245 = vmatprep.subr.mxu0 0.0
        %4246 = vmatpush1.msra.mxu0 0.0
        %4247 = vmatprep.subr.mxu0 0.0
        %4248 = vmatpush1.msra.mxu0 0.0
        %4249 = vmatprep.subr.mxu0 0.0
        %4250 = vmatpush1.msra.mxu0 0.0
        %4251 = vmatprep.subr.mxu0 0.0
        %4252 = vmatpush1.msra.mxu0 0.0
        %4253 = vmatprep.subr.mxu0 0.0
        %4254 = vmatpush1.msra.mxu0 0.0
        %4255 = vmatprep.subr.mxu0 0.0
        %4256 = vmatpush1.msra.mxu0 0.0
        %4257 = vmatprep.subr.mxu0 0.0
        %4258 = vmatpush1.msra.mxu0 0.0
        %4259 = vmatprep.subr.mxu0 0.0
        %4260 = vmatpush1.msra.mxu0 0.0
        %4261 = vmatprep.subr.mxu0 0.0
        %4262 = vmatpush1.msra.mxu0 0.0
        %4263 = vmatprep.subr.mxu0 0.0
        %4264 = vmatpush1.msra.mxu0 0.0
        %4265 = vmatprep.subr.mxu0 0.0
        %4266 = vmatpush1.msra.mxu0 0.0
        %4267 = vmatprep.mubr.f32.mxu0 0.0
        %4268 = vmatmul.mubr.f32.gmra.mrb[0].mxu0 %v3855
        %v4269 = vpop.f32.mrb[0].mxu0
        %v4270 = vadd.f32 0.0, %v4269
        %v4271 = vpop.f32.mrb[0].mxu0
        %4272 = vdwg.mxu0
        %s4273 = scalar_lea.vmem [#allocation25], 8
        %v4274 = vld [vmem:[%s4273] sm:$0xf]
        %v4276 = vsel %vm4032, %v4274, 0
        %v4279 = vsel %vm4036, %v4270, 0
        %4281 = vmatprep.subr.mxu0 0.0
        %4282 = vmatpush1.msra.mxu0 %v4279
        %4283 = vmatprep.subr.mxu0 0.0
        %4284 = vmatpush1.msra.mxu0 0.0
        %4285 = vmatprep.subr.mxu0 0.0
        %4286 = vmatpush1.msra.mxu0 0.0
        %4287 = vmatprep.subr.mxu0 0.0
        %4288 = vmatpush1.msra.mxu0 0.0
        %4289 = vmatprep.subr.mxu0 0.0
        %4290 = vmatpush1.msra.mxu0 0.0
        %4291 = vmatprep.subr.mxu0 0.0
        %4292 = vmatpush1.msra.mxu0 0.0
        %4293 = vmatprep.subr.mxu0 0.0
        %4294 = vmatpush1.msra.mxu0 0.0
        %4295 = vmatprep.subr.mxu0 0.0
        %4296 = vmatpush1.msra.mxu0 0.0
        %4297 = vmatprep.subr.mxu0 0.0
        %4298 = vmatpush1.msra.mxu0 0.0
        %4299 = vmatprep.subr.mxu0 0.0
        %4300 = vmatpush1.msra.mxu0 0.0
        %4301 = vmatprep.subr.mxu0 0.0
        %4302 = vmatpush1.msra.mxu0 0.0
        %4303 = vmatprep.subr.mxu0 0.0
        %4304 = vmatpush1.msra.mxu0 0.0
        %4305 = vmatprep.subr.mxu0 0.0
        %4306 = vmatpush1.msra.mxu0 0.0
        %4307 = vmatprep.subr.mxu0 0.0
        %4308 = vmatpush1.msra.mxu0 0.0
        %4309 = vmatprep.subr.mxu0 0.0
        %4310 = vmatpush1.msra.mxu0 0.0
        %4311 = vmatprep.subr.mxu0 0.0
        %4312 = vmatpush1.msra.mxu0 0.0
        %4313 = vmatprep.subr.mxu0 0.0
        %4314 = vmatpush1.msra.mxu0 0.0
        %4315 = vmatprep.subr.mxu0 0.0
        %4316 = vmatpush1.msra.mxu0 0.0
        %4317 = vmatprep.subr.mxu0 0.0
        %4318 = vmatpush1.msra.mxu0 0.0
        %4319 = vmatprep.subr.mxu0 0.0
        %4320 = vmatpush1.msra.mxu0 0.0
        %4321 = vmatprep.subr.mxu0 0.0
        %4322 = vmatpush1.msra.mxu0 0.0
        %4323 = vmatprep.subr.mxu0 0.0
        %4324 = vmatpush1.msra.mxu0 0.0
        %4325 = vmatprep.subr.mxu0 0.0
        %4326 = vmatpush1.msra.mxu0 0.0
        %4327 = vmatprep.subr.mxu0 0.0
        %4328 = vmatpush1.msra.mxu0 0.0
        %4329 = vmatprep.subr.mxu0 0.0
        %4330 = vmatpush1.msra.mxu0 0.0
        %4331 = vmatprep.subr.mxu0 0.0
        %4332 = vmatpush1.msra.mxu0 0.0
        %4333 = vmatprep.subr.mxu0 0.0
        %4334 = vmatpush1.msra.mxu0 0.0
        %4335 = vmatprep.subr.mxu0 0.0
        %4336 = vmatpush1.msra.mxu0 0.0
        %4337 = vmatprep.subr.mxu0 0.0
        %4338 = vmatpush1.msra.mxu0 0.0
        %4339 = vmatprep.subr.mxu0 0.0
        %4340 = vmatpush1.msra.mxu0 0.0
        %4341 = vmatprep.subr.mxu0 0.0
        %4342 = vmatpush1.msra.mxu0 0.0
        %4343 = vmatprep.subr.mxu0 0.0
        %4344 = vmatpush1.msra.mxu0 0.0
        %4345 = vmatprep.mubr.f32.mxu0 0.0
        %4346 = vmatmul.mubr.f32.gmra.mrb[0].mxu0 %v4276
        %v4347 = vpop.f32.mrb[0].mxu0
        %v4348 = vadd.f32 0.0, %v4347
        %v4349 = vpop.f32.mrb[0].mxu0
        %4350 = vdwg.mxu0
        %v4351 = vadd.f32 %v4183, %v4348
        %v4352 = vld [vmem:[#allocation28] sm:$0x1]
        %v4354 = vlaneseq
        %v4355 = vshrl.u32 %v4354, 7
        %v4356 = vsub.s32 0, %v4355
        %v4357 = vrot.slane %v4352, %v4356
        %v4359 = vadd.f32 %v4351, %v4357
        %v4360 = vadd.f32 %v4359, %v3359
        %v4361 = vmax.f32 %v4360, 0.0
        %v4362 = vld [vmem:[#allocation41] sm:$0xff]
        %v4363 = vld [vmem:[#allocation41 + $0x8] sm:$0xff]
        %v4364 = vld [vmem:[#allocation41 + $0x10] sm:$0xff]
        %v4365 = vld [vmem:[#allocation41 + $0x18] sm:$0xff]
        %v4366 = vld [vmem:[#allocation41 + $0x20] sm:$0xff]
        %v4367 = vld [vmem:[#allocation41 + $0x28] sm:$0xff]
        %v4368 = vld [vmem:[#allocation41 + $0x30] sm:$0xff]
        %v4369 = vld [vmem:[#allocation41 + $0x38] sm:$0xff]
        %v4370 = vld [vmem:[#allocation41 + $0x40] sm:$0xff]
        %v4371 = vld [vmem:[#allocation41 + $0x48] sm:$0xff]
        %v4372 = vld [vmem:[#allocation41 + $0x50] sm:$0xff]
        %v4373 = vld [vmem:[#allocation41 + $0x58] sm:$0xff]
        %v4374 = vld [vmem:[#allocation41 + $0x60] sm:$0xff]
        %v4375 = vld [vmem:[#allocation41 + $0x68] sm:$0xff]
        %v4376 = vld [vmem:[#allocation41 + $0x70] sm:$0xff]
        %v4377 = vld [vmem:[#allocation41 + $0x78] sm:$0xff]
        %4378 = vmatprep.subr.mxu0 0.0
        %4379 = vmatpush1.msra.mxu0 %v4362
        %4380 = vmatprep.subr.mxu0 0.0
        %4381 = vmatpush1.msra.mxu0 %v4363
        %4382 = vmatprep.subr.mxu0 0.0
        %4383 = vmatpush1.msra.mxu0 %v4364
        %4384 = vmatprep.subr.mxu0 0.0
        %4385 = vmatpush1.msra.mxu0 %v4365
        %4386 = vmatprep.subr.mxu0 0.0
        %4387 = vmatpush1.msra.mxu0 %v4366
        %4388 = vmatprep.subr.mxu0 0.0
        %4389 = vmatpush1.msra.mxu0 %v4367
        %4390 = vmatprep.subr.mxu0 0.0
        %4391 = vmatpush1.msra.mxu0 %v4368
        %4392 = vmatprep.subr.mxu0 0.0
        %4393 = vmatpush1.msra.mxu0 %v4369
        %4394 = vmatprep.subr.mxu0 0.0
        %4395 = vmatpush1.msra.mxu0 %v4370
        %4396 = vmatprep.subr.mxu0 0.0
        %4397 = vmatpush1.msra.mxu0 %v4371
        %4398 = vmatprep.subr.mxu0 0.0
        %4399 = vmatpush1.msra.mxu0 %v4372
        %4400 = vmatprep.subr.mxu0 0.0
        %4401 = vmatpush1.msra.mxu0 %v4373
        %4402 = vmatprep.subr.mxu0 0.0
        %4403 = vmatpush1.msra.mxu0 %v4374
        %4404 = vmatprep.subr.mxu0 0.0
        %4405 = vmatpush1.msra.mxu0 %v4375
        %4406 = vmatprep.subr.mxu0 0.0
        %4407 = vmatpush1.msra.mxu0 %v4376
        %4408 = vmatprep.subr.mxu0 0.0
        %4409 = vmatpush1.msra.mxu0 %v4377
        %4410 = vmatprep.subr.mxu0 0.0
        %4411 = vmatpush1.msra.mxu0 0.0
        %4412 = vmatprep.subr.mxu0 0.0
        %4413 = vmatpush1.msra.mxu0 0.0
        %4414 = vmatprep.subr.mxu0 0.0
        %4415 = vmatpush1.msra.mxu0 0.0
        %4416 = vmatprep.subr.mxu0 0.0
        %4417 = vmatpush1.msra.mxu0 0.0
        %4418 = vmatprep.subr.mxu0 0.0
        %4419 = vmatpush1.msra.mxu0 0.0
        %4420 = vmatprep.subr.mxu0 0.0
        %4421 = vmatpush1.msra.mxu0 0.0
        %4422 = vmatprep.subr.mxu0 0.0
        %4423 = vmatpush1.msra.mxu0 0.0
        %4424 = vmatprep.subr.mxu0 0.0
        %4425 = vmatpush1.msra.mxu0 0.0
        %4426 = vmatprep.subr.mxu0 0.0
        %4427 = vmatpush1.msra.mxu0 0.0
        %4428 = vmatprep.subr.mxu0 0.0
        %4429 = vmatpush1.msra.mxu0 0.0
        %4430 = vmatprep.subr.mxu0 0.0
        %4431 = vmatpush1.msra.mxu0 0.0
        %4432 = vmatprep.subr.mxu0 0.0
        %4433 = vmatpush1.msra.mxu0 0.0
        %4434 = vmatprep.subr.mxu0 0.0
        %4435 = vmatpush1.msra.mxu0 0.0
        %4436 = vmatprep.subr.mxu0 0.0
        %4437 = vmatpush1.msra.mxu0 0.0
        %4438 = vmatprep.subr.mxu0 0.0
        %4439 = vmatpush1.msra.mxu0 0.0
        %4440 = vmatprep.subr.mxu0 0.0
        %4441 = vmatpush1.msra.mxu0 0.0
        %4442 = vmatprep.mubr.f32.mxu0 0.0
        %4443 = vmatmul.mubr.f32.gmra.mrb[0].mxu0 %v4361
        %v4444 = vpop.f32.mrb[0].mxu0
        %v4445 = vadd.f32 0.0, %v4444
        %v4446 = vpop.f32.mrb[0].mxu0
        %4447 = vdwg.mxu0
        %v4448 = vld [vmem:[%s57] sm:$0x3]
        %v4449 = vld [vmem:[#allocation43] sm:$0x1]
        %v4451 = vlaneseq
        %v4452 = vshrl.u32 %v4451, 7
        %v4453 = vsub.s32 0, %v4452
        %v4454 = vrot.slane %v4449, %v4453
        %v4457 = vsel %vm4032, %v4448, 0
        %v4460 = vsel %vm4036, %v4445, 0
        %4462 = vmatprep.subr.mxu0 0.0
        %4463 = vmatpush1.msra.mxu0 %v4460
        %4464 = vmatprep.subr.mxu0 0.0
        %4465 = vmatpush1.msra.mxu0 0.0
        %4466 = vmatprep.subr.mxu0 0.0
        %4467 = vmatpush1.msra.mxu0 0.0
        %4468 = vmatprep.subr.mxu0 0.0
        %4469 = vmatpush1.msra.mxu0 0.0
        %4470 = vmatprep.subr.mxu0 0.0
        %4471 = vmatpush1.msra.mxu0 0.0
        %4472 = vmatprep.subr.mxu0 0.0
        %4473 = vmatpush1.msra.mxu0 0.0
        %4474 = vmatprep.subr.mxu0 0.0
        %4475 = vmatpush1.msra.mxu0 0.0
        %4476 = vmatprep.subr.mxu0 0.0
        %4477 = vmatpush1.msra.mxu0 0.0
        %4478 = vmatprep.subr.mxu0 0.0
        %4479 = vmatpush1.msra.mxu0 0.0
        %4480 = vmatprep.subr.mxu0 0.0
        %4481 = vmatpush1.msra.mxu0 0.0
        %4482 = vmatprep.subr.mxu0 0.0
        %4483 = vmatpush1.msra.mxu0 0.0
        %4484 = vmatprep.subr.mxu0 0.0
        %4485 = vmatpush1.msra.mxu0 0.0
        %4486 = vmatprep.subr.mxu0 0.0
        %4487 = vmatpush1.msra.mxu0 0.0
        %4488 = vmatprep.subr.mxu0 0.0
        %4489 = vmatpush1.msra.mxu0 0.0
        %4490 = vmatprep.subr.mxu0 0.0
        %4491 = vmatpush1.msra.mxu0 0.0
        %4492 = vmatprep.subr.mxu0 0.0
        %4493 = vmatpush1.msra.mxu0 0.0
        %4494 = vmatprep.subr.mxu0 0.0
        %4495 = vmatpush1.msra.mxu0 0.0
        %4496 = vmatprep.subr.mxu0 0.0
        %4497 = vmatpush1.msra.mxu0 0.0
        %4498 = vmatprep.subr.mxu0 0.0
        %4499 = vmatpush1.msra.mxu0 0.0
        %4500 = vmatprep.subr.mxu0 0.0
        %4501 = vmatpush1.msra.mxu0 0.0
        %4502 = vmatprep.subr.mxu0 0.0
        %4503 = vmatpush1.msra.mxu0 0.0
        %4504 = vmatprep.subr.mxu0 0.0
        %4505 = vmatpush1.msra.mxu0 0.0
        %4506 = vmatprep.subr.mxu0 0.0
        %4507 = vmatpush1.msra.mxu0 0.0
        %4508 = vmatprep.subr.mxu0 0.0
        %4509 = vmatpush1.msra.mxu0 0.0
        %4510 = vmatprep.subr.mxu0 0.0
        %4511 = vmatpush1.msra.mxu0 0.0
        %4512 = vmatprep.subr.mxu0 0.0
        %4513 = vmatpush1.msra.mxu0 0.0
        %4514 = vmatprep.subr.mxu0 0.0
        %4515 = vmatpush1.msra.mxu0 0.0
        %4516 = vmatprep.subr.mxu0 0.0
        %4517 = vmatpush1.msra.mxu0 0.0
        %4518 = vmatprep.subr.mxu0 0.0
        %4519 = vmatpush1.msra.mxu0 0.0
        %4520 = vmatprep.subr.mxu0 0.0
        %4521 = vmatpush1.msra.mxu0 0.0
        %4522 = vmatprep.subr.mxu0 0.0
        %4523 = vmatpush1.msra.mxu0 0.0
        %4524 = vmatprep.subr.mxu0 0.0
        %4525 = vmatpush1.msra.mxu0 0.0
        %4526 = vmatprep.mubr.f32.mxu0 0.0
        %4527 = vmatmul.mubr.f32.gmra.mrb[0].mxu0 %v4457
        %v4528 = vpop.f32.mrb[0].mxu0
        %v4529 = vadd.f32 %v4454, %v4528
        %v4530 = vpop.f32.mrb[0].mxu0
        %4531 = vdwg.mxu0
        %v4532 = vld [vmem:[#allocation35] sm:$0xff]
        %v4533 = vld [vmem:[#allocation35 + $0x8] sm:$0xff]
        %v4534 = vld [vmem:[#allocation35 + $0x10] sm:$0xff]
        %v4535 = vld [vmem:[#allocation35 + $0x18] sm:$0xff]
        %v4536 = vld [vmem:[#allocation35 + $0x20] sm:$0xff]
        %v4537 = vld [vmem:[#allocation35 + $0x28] sm:$0xff]
        %v4538 = vld [vmem:[#allocation35 + $0x30] sm:$0xff]
        %v4539 = vld [vmem:[#allocation35 + $0x38] sm:$0xff]
        %v4540 = vld [vmem:[#allocation35 + $0x40] sm:$0xff]
        %v4541 = vld [vmem:[#allocation35 + $0x48] sm:$0xff]
        %v4542 = vld [vmem:[#allocation35 + $0x50] sm:$0xff]
        %v4543 = vld [vmem:[#allocation35 + $0x58] sm:$0xff]
        %v4544 = vld [vmem:[#allocation35 + $0x60] sm:$0xff]
        %v4545 = vld [vmem:[#allocation35 + $0x68] sm:$0xff]
        %v4546 = vld [vmem:[#allocation35 + $0x70] sm:$0xff]
        %v4547 = vld [vmem:[#allocation35 + $0x78] sm:$0xff]
        %4548 = vmatprep.subr.mxu0 0.0
        %4549 = vmatpush1.msra.mxu0 %v4532
        %4550 = vmatprep.subr.mxu0 0.0
        %4551 = vmatpush1.msra.mxu0 %v4533
        %4552 = vmatprep.subr.mxu0 0.0
        %4553 = vmatpush1.msra.mxu0 %v4534
        %4554 = vmatprep.subr.mxu0 0.0
        %4555 = vmatpush1.msra.mxu0 %v4535
        %4556 = vmatprep.subr.mxu0 0.0
        %4557 = vmatpush1.msra.mxu0 %v4536
        %4558 = vmatprep.subr.mxu0 0.0
        %4559 = vmatpush1.msra.mxu0 %v4537
        %4560 = vmatprep.subr.mxu0 0.0
        %4561 = vmatpush1.msra.mxu0 %v4538
        %4562 = vmatprep.subr.mxu0 0.0
        %4563 = vmatpush1.msra.mxu0 %v4539
        %4564 = vmatprep.subr.mxu0 0.0
        %4565 = vmatpush1.msra.mxu0 %v4540
        %4566 = vmatprep.subr.mxu0 0.0
        %4567 = vmatpush1.msra.mxu0 %v4541
        %4568 = vmatprep.subr.mxu0 0.0
        %4569 = vmatpush1.msra.mxu0 %v4542
        %4570 = vmatprep.subr.mxu0 0.0
        %4571 = vmatpush1.msra.mxu0 %v4543
        %4572 = vmatprep.subr.mxu0 0.0
        %4573 = vmatpush1.msra.mxu0 %v4544
        %4574 = vmatprep.subr.mxu0 0.0
        %4575 = vmatpush1.msra.mxu0 %v4545
        %4576 = vmatprep.subr.mxu0 0.0
        %4577 = vmatpush1.msra.mxu0 %v4546
        %4578 = vmatprep.subr.mxu0 0.0
        %4579 = vmatpush1.msra.mxu0 %v4547
        %4580 = vmatprep.subr.mxu0 0.0
        %4581 = vmatpush1.msra.mxu0 0.0
        %4582 = vmatprep.subr.mxu0 0.0
        %4583 = vmatpush1.msra.mxu0 0.0
        %4584 = vmatprep.subr.mxu0 0.0
        %4585 = vmatpush1.msra.mxu0 0.0
        %4586 = vmatprep.subr.mxu0 0.0
        %4587 = vmatpush1.msra.mxu0 0.0
        %4588 = vmatprep.subr.mxu0 0.0
        %4589 = vmatpush1.msra.mxu0 0.0
        %4590 = vmatprep.subr.mxu0 0.0
        %4591 = vmatpush1.msra.mxu0 0.0
        %4592 = vmatprep.subr.mxu0 0.0
        %4593 = vmatpush1.msra.mxu0 0.0
        %4594 = vmatprep.subr.mxu0 0.0
        %4595 = vmatpush1.msra.mxu0 0.0
        %4596 = vmatprep.subr.mxu0 0.0
        %4597 = vmatpush1.msra.mxu0 0.0
        %4598 = vmatprep.subr.mxu0 0.0
        %4599 = vmatpush1.msra.mxu0 0.0
        %4600 = vmatprep.subr.mxu0 0.0
        %4601 = vmatpush1.msra.mxu0 0.0
        %4602 = vmatprep.subr.mxu0 0.0
        %4603 = vmatpush1.msra.mxu0 0.0
        %4604 = vmatprep.subr.mxu0 0.0
        %4605 = vmatpush1.msra.mxu0 0.0
        %4606 = vmatprep.subr.mxu0 0.0
        %4607 = vmatpush1.msra.mxu0 0.0
        %4608 = vmatprep.subr.mxu0 0.0
        %4609 = vmatpush1.msra.mxu0 0.0
        %4610 = vmatprep.subr.mxu0 0.0
        %4611 = vmatpush1.msra.mxu0 0.0
        %4612 = vmatprep.mubr.f32.mxu0 0.0
        %4613 = vmatmul.mubr.f32.gmra.mrb[0].mxu0 %v4361
        %v4614 = vpop.f32.mrb[0].mxu0
        %v4615 = vadd.f32 0.0, %v4614
        %v4616 = vpop.f32.mrb[0].mxu0
        %4617 = vdwg.mxu0
        %v4618 = vld [vmem:[#allocation34] sm:$0x3]
        %s4619 = scalar_lea.vmem [#allocation35], 128
        %v4620 = vld [vmem:[%s4619] sm:$0xff]
        %v4621 = vld [vmem:[%s4619 + $0x8] sm:$0xff]
        %v4622 = vld [vmem:[%s4619 + $0x10] sm:$0xff]
        %v4623 = vld [vmem:[%s4619 + $0x18] sm:$0xff]
        %v4624 = vld [vmem:[%s4619 + $0x20] sm:$0xff]
        %v4625 = vld [vmem:[%s4619 + $0x28] sm:$0xff]
        %v4626 = vld [vmem:[%s4619 + $0x30] sm:$0xff]
        %v4627 = vld [vmem:[%s4619 + $0x38] sm:$0xff]
        %v4628 = vld [vmem:[%s4619 + $0x40] sm:$0xff]
        %v4629 = vld [vmem:[%s4619 + $0x48] sm:$0xff]
        %v4630 = vld [vmem:[%s4619 + $0x50] sm:$0xff]
        %v4631 = vld [vmem:[%s4619 + $0x58] sm:$0xff]
        %v4632 = vld [vmem:[%s4619 + $0x60] sm:$0xff]
        %v4633 = vld [vmem:[%s4619 + $0x68] sm:$0xff]
        %v4634 = vld [vmem:[%s4619 + $0x70] sm:$0xff]
        %v4635 = vld [vmem:[%s4619 + $0x78] sm:$0xff]
        %4636 = vmatprep.subr.mxu0 0.0
        %4637 = vmatpush1.msra.mxu0 %v4620
        %4638 = vmatprep.subr.mxu0 0.0
        %4639 = vmatpush1.msra.mxu0 %v4621
        %4640 = vmatprep.subr.mxu0 0.0
        %4641 = vmatpush1.msra.mxu0 %v4622
        %4642 = vmatprep.subr.mxu0 0.0
        %4643 = vmatpush1.msra.mxu0 %v4623
        %4644 = vmatprep.subr.mxu0 0.0
        %4645 = vmatpush1.msra.mxu0 %v4624
        %4646 = vmatprep.subr.mxu0 0.0
        %4647 = vmatpush1.msra.mxu0 %v4625
        %4648 = vmatprep.subr.mxu0 0.0
        %4649 = vmatpush1.msra.mxu0 %v4626
        %4650 = vmatprep.subr.mxu0 0.0
        %4651 = vmatpush1.msra.mxu0 %v4627
        %4652 = vmatprep.subr.mxu0 0.0
        %4653 = vmatpush1.msra.mxu0 %v4628
        %4654 = vmatprep.subr.mxu0 0.0
        %4655 = vmatpush1.msra.mxu0 %v4629
        %4656 = vmatprep.subr.mxu0 0.0
        %4657 = vmatpush1.msra.mxu0 %v4630
        %4658 = vmatprep.subr.mxu0 0.0
        %4659 = vmatpush1.msra.mxu0 %v4631
        %4660 = vmatprep.subr.mxu0 0.0
        %4661 = vmatpush1.msra.mxu0 %v4632
        %4662 = vmatprep.subr.mxu0 0.0
        %4663 = vmatpush1.msra.mxu0 %v4633
        %4664 = vmatprep.subr.mxu0 0.0
        %4665 = vmatpush1.msra.mxu0 %v4634
        %4666 = vmatprep.subr.mxu0 0.0
        %4667 = vmatpush1.msra.mxu0 %v4635
        %4668 = vmatprep.subr.mxu0 0.0
        %4669 = vmatpush1.msra.mxu0 0.0
        %4670 = vmatprep.subr.mxu0 0.0
        %4671 = vmatpush1.msra.mxu0 0.0
        %4672 = vmatprep.subr.mxu0 0.0
        %4673 = vmatpush1.msra.mxu0 0.0
        %4674 = vmatprep.subr.mxu0 0.0
        %4675 = vmatpush1.msra.mxu0 0.0
        %4676 = vmatprep.subr.mxu0 0.0
        %4677 = vmatpush1.msra.mxu0 0.0
        %4678 = vmatprep.subr.mxu0 0.0
        %4679 = vmatpush1.msra.mxu0 0.0
        %4680 = vmatprep.subr.mxu0 0.0
        %4681 = vmatpush1.msra.mxu0 0.0
        %4682 = vmatprep.subr.mxu0 0.0
        %4683 = vmatpush1.msra.mxu0 0.0
        %4684 = vmatprep.subr.mxu0 0.0
        %4685 = vmatpush1.msra.mxu0 0.0
        %4686 = vmatprep.subr.mxu0 0.0
        %4687 = vmatpush1.msra.mxu0 0.0
        %4688 = vmatprep.subr.mxu0 0.0
        %4689 = vmatpush1.msra.mxu0 0.0
        %4690 = vmatprep.subr.mxu0 0.0
        %4691 = vmatpush1.msra.mxu0 0.0
        %4692 = vmatprep.subr.mxu0 0.0
        %4693 = vmatpush1.msra.mxu0 0.0
        %4694 = vmatprep.subr.mxu0 0.0
        %4695 = vmatpush1.msra.mxu0 0.0
        %4696 = vmatprep.subr.mxu0 0.0
        %4697 = vmatpush1.msra.mxu0 0.0
        %4698 = vmatprep.subr.mxu0 0.0
        %4699 = vmatpush1.msra.mxu0 0.0
        %4700 = vmatprep.mubr.f32.mxu0 0.0
        %4701 = vmatmul.mubr.f32.gmra.mrb[0].mxu0 %v4361
        %v4702 = vpop.f32.mrb[0].mxu0
        %v4703 = vadd.f32 0.0, %v4702
        %v4704 = vpop.f32.mrb[0].mxu0
        %4705 = vdwg.mxu0
        %s4706 = scalar_lea.vmem [#allocation34], 2
        %v4707 = vld [vmem:[%s4706] sm:$0x3]
        %v4709 = vsel %vm4032, %v4707, 0
        %v4712 = vsel %vm4036, %v4703, 0
        %4714 = vmatprep.subr.mxu0 0.0
        %4715 = vmatpush1.msra.mxu0 %v4712
        %4716 = vmatprep.subr.mxu0 0.0
        %4717 = vmatpush1.msra.mxu0 0.0
        %4718 = vmatprep.subr.mxu0 0.0
        %4719 = vmatpush1.msra.mxu0 0.0
        %4720 = vmatprep.subr.mxu0 0.0
        %4721 = vmatpush1.msra.mxu0 0.0
        %4722 = vmatprep.subr.mxu0 0.0
        %4723 = vmatpush1.msra.mxu0 0.0
        %4724 = vmatprep.subr.mxu0 0.0
        %4725 = vmatpush1.msra.mxu0 0.0
        %4726 = vmatprep.subr.mxu0 0.0
        %4727 = vmatpush1.msra.mxu0 0.0
        %4728 = vmatprep.subr.mxu0 0.0
        %4729 = vmatpush1.msra.mxu0 0.0
        %4730 = vmatprep.subr.mxu0 0.0
        %4731 = vmatpush1.msra.mxu0 0.0
        %4732 = vmatprep.subr.mxu0 0.0
        %4733 = vmatpush1.msra.mxu0 0.0
        %4734 = vmatprep.subr.mxu0 0.0
        %4735 = vmatpush1.msra.mxu0 0.0
        %4736 = vmatprep.subr.mxu0 0.0
        %4737 = vmatpush1.msra.mxu0 0.0
        %4738 = vmatprep.subr.mxu0 0.0
        %4739 = vmatpush1.msra.mxu0 0.0
        %4740 = vmatprep.subr.mxu0 0.0
        %4741 = vmatpush1.msra.mxu0 0.0
        %4742 = vmatprep.subr.mxu0 0.0
        %4743 = vmatpush1.msra.mxu0 0.0
        %4744 = vmatprep.subr.mxu0 0.0
        %4745 = vmatpush1.msra.mxu0 0.0
        %4746 = vmatprep.subr.mxu0 0.0
        %4747 = vmatpush1.msra.mxu0 0.0
        %4748 = vmatprep.subr.mxu0 0.0
        %4749 = vmatpush1.msra.mxu0 0.0
        %4750 = vmatprep.subr.mxu0 0.0
        %4751 = vmatpush1.msra.mxu0 0.0
        %4752 = vmatprep.subr.mxu0 0.0
        %4753 = vmatpush1.msra.mxu0 0.0
        %4754 = vmatprep.subr.mxu0 0.0
        %4755 = vmatpush1.msra.mxu0 0.0
        %4756 = vmatprep.subr.mxu0 0.0
        %4757 = vmatpush1.msra.mxu0 0.0
        %4758 = vmatprep.subr.mxu0 0.0
        %4759 = vmatpush1.msra.mxu0 0.0
        %4760 = vmatprep.subr.mxu0 0.0
        %4761 = vmatpush1.msra.mxu0 0.0
        %4762 = vmatprep.subr.mxu0 0.0
        %4763 = vmatpush1.msra.mxu0 0.0
        %4764 = vmatprep.subr.mxu0 0.0
        %4765 = vmatpush1.msra.mxu0 0.0
        %4766 = vmatprep.subr.mxu0 0.0
        %4767 = vmatpush1.msra.mxu0 0.0
        %4768 = vmatprep.subr.mxu0 0.0
        %4769 = vmatpush1.msra.mxu0 0.0
        %4770 = vmatprep.subr.mxu0 0.0
        %4771 = vmatpush1.msra.mxu0 0.0
        %4772 = vmatprep.subr.mxu0 0.0
        %4773 = vmatpush1.msra.mxu0 0.0
        %4774 = vmatprep.subr.mxu0 0.0
        %4775 = vmatpush1.msra.mxu0 0.0
        %4776 = vmatprep.subr.mxu0 0.0
        %4777 = vmatpush1.msra.mxu0 0.0
        %4778 = vmatprep.mubr.f32.mxu0 0.0
        %4779 = vmatmul.mubr.f32.gmra.mrb[0].mxu0 %v4709
        %v4780 = vpop.f32.mrb[0].mxu0
        %v4781 = vadd.f32 0.0, %v4780
        %v4782 = vpop.f32.mrb[0].mxu0
        %4783 = vdwg.mxu0
        %v4785 = vsel %vm4032, %v4618, 0
        %v4788 = vsel %vm4036, %v4615, 0
        %4790 = vmatprep.subr.mxu0 0.0
        %4791 = vmatpush1.msra.mxu0 %v4788
        %4792 = vmatprep.subr.mxu0 0.0
        %4793 = vmatpush1.msra.mxu0 0.0
        %4794 = vmatprep.subr.mxu0 0.0
        %4795 = vmatpush1.msra.mxu0 0.0
        %4796 = vmatprep.subr.mxu0 0.0
        %4797 = vmatpush1.msra.mxu0 0.0
        %4798 = vmatprep.subr.mxu0 0.0
        %4799 = vmatpush1.msra.mxu0 0.0
        %4800 = vmatprep.subr.mxu0 0.0
        %4801 = vmatpush1.msra.mxu0 0.0
        %4802 = vmatprep.subr.mxu0 0.0
        %4803 = vmatpush1.msra.mxu0 0.0
        %4804 = vmatprep.subr.mxu0 0.0
        %4805 = vmatpush1.msra.mxu0 0.0
        %4806 = vmatprep.subr.mxu0 0.0
        %4807 = vmatpush1.msra.mxu0 0.0
        %4808 = vmatprep.subr.mxu0 0.0
        %4809 = vmatpush1.msra.mxu0 0.0
        %4810 = vmatprep.subr.mxu0 0.0
        %4811 = vmatpush1.msra.mxu0 0.0
        %4812 = vmatprep.subr.mxu0 0.0
        %4813 = vmatpush1.msra.mxu0 0.0
        %4814 = vmatprep.subr.mxu0 0.0
        %4815 = vmatpush1.msra.mxu0 0.0
        %4816 = vmatprep.subr.mxu0 0.0
        %4817 = vmatpush1.msra.mxu0 0.0
        %4818 = vmatprep.subr.mxu0 0.0
        %4819 = vmatpush1.msra.mxu0 0.0
        %4820 = vmatprep.subr.mxu0 0.0
        %4821 = vmatpush1.msra.mxu0 0.0
        %4822 = vmatprep.subr.mxu0 0.0
        %4823 = vmatpush1.msra.mxu0 0.0
        %4824 = vmatprep.subr.mxu0 0.0
        %4825 = vmatpush1.msra.mxu0 0.0
        %4826 = vmatprep.subr.mxu0 0.0
        %4827 = vmatpush1.msra.mxu0 0.0
        %4828 = vmatprep.subr.mxu0 0.0
        %4829 = vmatpush1.msra.mxu0 0.0
        %4830 = vmatprep.subr.mxu0 0.0
        %4831 = vmatpush1.msra.mxu0 0.0
        %4832 = vmatprep.subr.mxu0 0.0
        %4833 = vmatpush1.msra.mxu0 0.0
        %4834 = vmatprep.subr.mxu0 0.0
        %4835 = vmatpush1.msra.mxu0 0.0
        %4836 = vmatprep.subr.mxu0 0.0
        %4837 = vmatpush1.msra.mxu0 0.0
        %4838 = vmatprep.subr.mxu0 0.0
        %4839 = vmatpush1.msra.mxu0 0.0
        %4840 = vmatprep.subr.mxu0 0.0
        %4841 = vmatpush1.msra.mxu0 0.0
        %4842 = vmatprep.subr.mxu0 0.0
        %4843 = vmatpush1.msra.mxu0 0.0
        %4844 = vmatprep.subr.mxu0 0.0
        %4845 = vmatpush1.msra.mxu0 0.0
        %4846 = vmatprep.subr.mxu0 0.0
        %4847 = vmatpush1.msra.mxu0 0.0
        %4848 = vmatprep.subr.mxu0 0.0
        %4849 = vmatpush1.msra.mxu0 0.0
        %4850 = vmatprep.subr.mxu0 0.0
        %4851 = vmatpush1.msra.mxu0 0.0
        %4852 = vmatprep.subr.mxu0 0.0
        %4853 = vmatpush1.msra.mxu0 0.0
        %4854 = vmatprep.mubr.f32.mxu0 0.0
        %4855 = vmatmul.mubr.f32.gmra.mrb[0].mxu0 %v4785
        %v4856 = vpop.f32.mrb[0].mxu0
        %v4857 = vadd.f32 %v4781, %v4856
        %v4858 = vpop.f32.mrb[0].mxu0
        %4859 = vdwg.mxu0
        %s4860 = scalar_lea.vmem [#allocation35], 256
        %v4861 = vld [vmem:[%s4860] sm:$0xff]
        %v4862 = vld [vmem:[%s4860 + $0x8] sm:$0xff]
        %v4863 = vld [vmem:[%s4860 + $0x10] sm:$0xff]
        %v4864 = vld [vmem:[%s4860 + $0x18] sm:$0xff]
        %v4865 = vld [vmem:[%s4860 + $0x20] sm:$0xff]
        %v4866 = vld [vmem:[%s4860 + $0x28] sm:$0xff]
        %v4867 = vld [vmem:[%s4860 + $0x30] sm:$0xff]
        %v4868 = vld [vmem:[%s4860 + $0x38] sm:$0xff]
        %v4869 = vld [vmem:[%s4860 + $0x40] sm:$0xff]
        %v4870 = vld [vmem:[%s4860 + $0x48] sm:$0xff]
        %v4871 = vld [vmem:[%s4860 + $0x50] sm:$0xff]
        %v4872 = vld [vmem:[%s4860 + $0x58] sm:$0xff]
        %v4873 = vld [vmem:[%s4860 + $0x60] sm:$0xff]
        %v4874 = vld [vmem:[%s4860 + $0x68] sm:$0xff]
        %v4875 = vld [vmem:[%s4860 + $0x70] sm:$0xff]
        %v4876 = vld [vmem:[%s4860 + $0x78] sm:$0xff]
        %4877 = vmatprep.subr.mxu0 0.0
        %4878 = vmatpush1.msra.mxu0 %v4861
        %4879 = vmatprep.subr.mxu0 0.0
        %4880 = vmatpush1.msra.mxu0 %v4862
        %4881 = vmatprep.subr.mxu0 0.0
        %4882 = vmatpush1.msra.mxu0 %v4863
        %4883 = vmatprep.subr.mxu0 0.0
        %4884 = vmatpush1.msra.mxu0 %v4864
        %4885 = vmatprep.subr.mxu0 0.0
        %4886 = vmatpush1.msra.mxu0 %v4865
        %4887 = vmatprep.subr.mxu0 0.0
        %4888 = vmatpush1.msra.mxu0 %v4866
        %4889 = vmatprep.subr.mxu0 0.0
        %4890 = vmatpush1.msra.mxu0 %v4867
        %4891 = vmatprep.subr.mxu0 0.0
        %4892 = vmatpush1.msra.mxu0 %v4868
        %4893 = vmatprep.subr.mxu0 0.0
        %4894 = vmatpush1.msra.mxu0 %v4869
        %4895 = vmatprep.subr.mxu0 0.0
        %4896 = vmatpush1.msra.mxu0 %v4870
        %4897 = vmatprep.subr.mxu0 0.0
        %4898 = vmatpush1.msra.mxu0 %v4871
        %4899 = vmatprep.subr.mxu0 0.0
        %4900 = vmatpush1.msra.mxu0 %v4872
        %4901 = vmatprep.subr.mxu0 0.0
        %4902 = vmatpush1.msra.mxu0 %v4873
        %4903 = vmatprep.subr.mxu0 0.0
        %4904 = vmatpush1.msra.mxu0 %v4874
        %4905 = vmatprep.subr.mxu0 0.0
        %4906 = vmatpush1.msra.mxu0 %v4875
        %4907 = vmatprep.subr.mxu0 0.0
        %4908 = vmatpush1.msra.mxu0 %v4876
        %4909 = vmatprep.subr.mxu0 0.0
        %4910 = vmatpush1.msra.mxu0 0.0
        %4911 = vmatprep.subr.mxu0 0.0
        %4912 = vmatpush1.msra.mxu0 0.0
        %4913 = vmatprep.subr.mxu0 0.0
        %4914 = vmatpush1.msra.mxu0 0.0
        %4915 = vmatprep.subr.mxu0 0.0
        %4916 = vmatpush1.msra.mxu0 0.0
        %4917 = vmatprep.subr.mxu0 0.0
        %4918 = vmatpush1.msra.mxu0 0.0
        %4919 = vmatprep.subr.mxu0 0.0
        %4920 = vmatpush1.msra.mxu0 0.0
        %4921 = vmatprep.subr.mxu0 0.0
        %4922 = vmatpush1.msra.mxu0 0.0
        %4923 = vmatprep.subr.mxu0 0.0
        %4924 = vmatpush1.msra.mxu0 0.0
        %4925 = vmatprep.subr.mxu0 0.0
        %4926 = vmatpush1.msra.mxu0 0.0
        %4927 = vmatprep.subr.mxu0 0.0
        %4928 = vmatpush1.msra.mxu0 0.0
        %4929 = vmatprep.subr.mxu0 0.0
        %4930 = vmatpush1.msra.mxu0 0.0
        %4931 = vmatprep.subr.mxu0 0.0
        %4932 = vmatpush1.msra.mxu0 0.0
        %4933 = vmatprep.subr.mxu0 0.0
        %4934 = vmatpush1.msra.mxu0 0.0
        %4935 = vmatprep.subr.mxu0 0.0
        %4936 = vmatpush1.msra.mxu0 0.0
        %4937 = vmatprep.subr.mxu0 0.0
        %4938 = vmatpush1.msra.mxu0 0.0
        %4939 = vmatprep.subr.mxu0 0.0
        %4940 = vmatpush1.msra.mxu0 0.0
        %4941 = vmatprep.mubr.f32.mxu0 0.0
        %4942 = vmatmul.mubr.f32.gmra.mrb[0].mxu0 %v4361
        %v4943 = vpop.f32.mrb[0].mxu0
        %v4944 = vadd.f32 0.0, %v4943
        %v4945 = vpop.f32.mrb[0].mxu0
        %4946 = vdwg.mxu0
        %s4947 = scalar_lea.vmem [#allocation34], 4
        %v4948 = vld [vmem:[%s4947] sm:$0x3]
        %v4950 = vsel %vm4032, %v4948, 0
        %v4953 = vsel %vm4036, %v4944, 0
        %4955 = vmatprep.subr.mxu0 0.0
        %4956 = vmatpush1.msra.mxu0 %v4953
        %4957 = vmatprep.subr.mxu0 0.0
        %4958 = vmatpush1.msra.mxu0 0.0
        %4959 = vmatprep.subr.mxu0 0.0
        %4960 = vmatpush1.msra.mxu0 0.0
        %4961 = vmatprep.subr.mxu0 0.0
        %4962 = vmatpush1.msra.mxu0 0.0
        %4963 = vmatprep.subr.mxu0 0.0
        %4964 = vmatpush1.msra.mxu0 0.0
        %4965 = vmatprep.subr.mxu0 0.0
        %4966 = vmatpush1.msra.mxu0 0.0
        %4967 = vmatprep.subr.mxu0 0.0
        %4968 = vmatpush1.msra.mxu0 0.0
        %4969 = vmatprep.subr.mxu0 0.0
        %4970 = vmatpush1.msra.mxu0 0.0
        %4971 = vmatprep.subr.mxu0 0.0
        %4972 = vmatpush1.msra.mxu0 0.0
        %4973 = vmatprep.subr.mxu0 0.0
        %4974 = vmatpush1.msra.mxu0 0.0
        %4975 = vmatprep.subr.mxu0 0.0
        %4976 = vmatpush1.msra.mxu0 0.0
        %4977 = vmatprep.subr.mxu0 0.0
        %4978 = vmatpush1.msra.mxu0 0.0
        %4979 = vmatprep.subr.mxu0 0.0
        %4980 = vmatpush1.msra.mxu0 0.0
        %4981 = vmatprep.subr.mxu0 0.0
        %4982 = vmatpush1.msra.mxu0 0.0
        %4983 = vmatprep.subr.mxu0 0.0
        %4984 = vmatpush1.msra.mxu0 0.0
        %4985 = vmatprep.subr.mxu0 0.0
        %4986 = vmatpush1.msra.mxu0 0.0
        %4987 = vmatprep.subr.mxu0 0.0
        %4988 = vmatpush1.msra.mxu0 0.0
        %4989 = vmatprep.subr.mxu0 0.0
        %4990 = vmatpush1.msra.mxu0 0.0
        %4991 = vmatprep.subr.mxu0 0.0
        %4992 = vmatpush1.msra.mxu0 0.0
        %4993 = vmatprep.subr.mxu0 0.0
        %4994 = vmatpush1.msra.mxu0 0.0
        %4995 = vmatprep.subr.mxu0 0.0
        %4996 = vmatpush1.msra.mxu0 0.0
        %4997 = vmatprep.subr.mxu0 0.0
        %4998 = vmatpush1.msra.mxu0 0.0
        %4999 = vmatprep.subr.mxu0 0.0
        %5000 = vmatpush1.msra.mxu0 0.0
        %5001 = vmatprep.subr.mxu0 0.0
        %5002 = vmatpush1.msra.mxu0 0.0
        %5003 = vmatprep.subr.mxu0 0.0
        %5004 = vmatpush1.msra.mxu0 0.0
        %5005 = vmatprep.subr.mxu0 0.0
        %5006 = vmatpush1.msra.mxu0 0.0
        %5007 = vmatprep.subr.mxu0 0.0
        %5008 = vmatpush1.msra.mxu0 0.0
        %5009 = vmatprep.subr.mxu0 0.0
        %5010 = vmatpush1.msra.mxu0 0.0
        %5011 = vmatprep.subr.mxu0 0.0
        %5012 = vmatpush1.msra.mxu0 0.0
        %5013 = vmatprep.subr.mxu0 0.0
        %5014 = vmatpush1.msra.mxu0 0.0
        %5015 = vmatprep.subr.mxu0 0.0
        %5016 = vmatpush1.msra.mxu0 0.0
        %5017 = vmatprep.subr.mxu0 0.0
        %5018 = vmatpush1.msra.mxu0 0.0
        %5019 = vmatprep.mubr.f32.mxu0 0.0
        %5020 = vmatmul.mubr.f32.gmra.mrb[0].mxu0 %v4950
        %v5021 = vpop.f32.mrb[0].mxu0
        %v5022 = vadd.f32 0.0, %v5021
        %v5023 = vpop.f32.mrb[0].mxu0
        %5024 = vdwg.mxu0
        %v5025 = vadd.f32 %v4857, %v5022
        %v5026 = vld [vmem:[#allocation37] sm:$0x1]
        %v5028 = vlaneseq
        %v5029 = vshrl.u32 %v5028, 7
        %v5030 = vsub.s32 0, %v5029
        %v5031 = vrot.slane %v5026, %v5030
        %v5033 = vadd.f32 %v5025, %v5031
        %v5034 = vmax.f32 %v5033, 0.0
        %v5035 = vld [vmem:[#allocation38] sm:$0xff]
        %v5036 = vld [vmem:[#allocation38 + $0x8] sm:$0xff]
        %v5037 = vld [vmem:[#allocation38 + $0x10] sm:$0xff]
        %v5038 = vld [vmem:[#allocation38 + $0x18] sm:$0xff]
        %v5039 = vld [vmem:[#allocation38 + $0x20] sm:$0xff]
        %v5040 = vld [vmem:[#allocation38 + $0x28] sm:$0xff]
        %v5041 = vld [vmem:[#allocation38 + $0x30] sm:$0xff]
        %v5042 = vld [vmem:[#allocation38 + $0x38] sm:$0xff]
        %v5043 = vld [vmem:[#allocation38 + $0x40] sm:$0xff]
        %v5044 = vld [vmem:[#allocation38 + $0x48] sm:$0xff]
        %v5045 = vld [vmem:[#allocation38 + $0x50] sm:$0xff]
        %v5046 = vld [vmem:[#allocation38 + $0x58] sm:$0xff]
        %v5047 = vld [vmem:[#allocation38 + $0x60] sm:$0xff]
        %v5048 = vld [vmem:[#allocation38 + $0x68] sm:$0xff]
        %v5049 = vld [vmem:[#allocation38 + $0x70] sm:$0xff]
        %v5050 = vld [vmem:[#allocation38 + $0x78] sm:$0xff]
        %5051 = vmatprep.subr.mxu0 0.0
        %5052 = vmatpush1.msra.mxu0 %v5035
        %5053 = vmatprep.subr.mxu0 0.0
        %5054 = vmatpush1.msra.mxu0 %v5036
        %5055 = vmatprep.subr.mxu0 0.0
        %5056 = vmatpush1.msra.mxu0 %v5037
        %5057 = vmatprep.subr.mxu0 0.0
        %5058 = vmatpush1.msra.mxu0 %v5038
        %5059 = vmatprep.subr.mxu0 0.0
        %5060 = vmatpush1.msra.mxu0 %v5039
        %5061 = vmatprep.subr.mxu0 0.0
        %5062 = vmatpush1.msra.mxu0 %v5040
        %5063 = vmatprep.subr.mxu0 0.0
        %5064 = vmatpush1.msra.mxu0 %v5041
        %5065 = vmatprep.subr.mxu0 0.0
        %5066 = vmatpush1.msra.mxu0 %v5042
        %5067 = vmatprep.subr.mxu0 0.0
        %5068 = vmatpush1.msra.mxu0 %v5043
        %5069 = vmatprep.subr.mxu0 0.0
        %5070 = vmatpush1.msra.mxu0 %v5044
        %5071 = vmatprep.subr.mxu0 0.0
        %5072 = vmatpush1.msra.mxu0 %v5045
        %5073 = vmatprep.subr.mxu0 0.0
        %5074 = vmatpush1.msra.mxu0 %v5046
        %5075 = vmatprep.subr.mxu0 0.0
        %5076 = vmatpush1.msra.mxu0 %v5047
        %5077 = vmatprep.subr.mxu0 0.0
        %5078 = vmatpush1.msra.mxu0 %v5048
        %5079 = vmatprep.subr.mxu0 0.0
        %5080 = vmatpush1.msra.mxu0 %v5049
        %5081 = vmatprep.subr.mxu0 0.0
        %5082 = vmatpush1.msra.mxu0 %v5050
        %5083 = vmatprep.subr.mxu0 0.0
        %5084 = vmatpush1.msra.mxu0 0.0
        %5085 = vmatprep.subr.mxu0 0.0
        %5086 = vmatpush1.msra.mxu0 0.0
        %5087 = vmatprep.subr.mxu0 0.0
        %5088 = vmatpush1.msra.mxu0 0.0
        %5089 = vmatprep.subr.mxu0 0.0
        %5090 = vmatpush1.msra.mxu0 0.0
        %5091 = vmatprep.subr.mxu0 0.0
        %5092 = vmatpush1.msra.mxu0 0.0
        %5093 = vmatprep.subr.mxu0 0.0
        %5094 = vmatpush1.msra.mxu0 0.0
        %5095 = vmatprep.subr.mxu0 0.0
        %5096 = vmatpush1.msra.mxu0 0.0
        %5097 = vmatprep.subr.mxu0 0.0
        %5098 = vmatpush1.msra.mxu0 0.0
        %5099 = vmatprep.subr.mxu0 0.0
        %5100 = vmatpush1.msra.mxu0 0.0
        %5101 = vmatprep.subr.mxu0 0.0
        %5102 = vmatpush1.msra.mxu0 0.0
        %5103 = vmatprep.subr.mxu0 0.0
        %5104 = vmatpush1.msra.mxu0 0.0
        %5105 = vmatprep.subr.mxu0 0.0
        %5106 = vmatpush1.msra.mxu0 0.0
        %5107 = vmatprep.subr.mxu0 0.0
        %5108 = vmatpush1.msra.mxu0 0.0
        %5109 = vmatprep.subr.mxu0 0.0
        %5110 = vmatpush1.msra.mxu0 0.0
        %5111 = vmatprep.subr.mxu0 0.0
        %5112 = vmatpush1.msra.mxu0 0.0
        %5113 = vmatprep.subr.mxu0 0.0
        %5114 = vmatpush1.msra.mxu0 0.0
        %5115 = vmatprep.mubr.f32.mxu0 0.0
        %5116 = vmatmul.mubr.f32.gmra.mrb[0].mxu0 %v5034
        %v5117 = vpop.f32.mrb[0].mxu0
        %v5118 = vadd.f32 0.0, %v5117
        %v5119 = vpop.f32.mrb[0].mxu0
        %5120 = vdwg.mxu0
        %v5121 = vld [vmem:[%s51] sm:$0x3]
        %s5122 = scalar_lea.vmem [#allocation38], 128
        %v5123 = vld [vmem:[%s5122] sm:$0xff]
        %v5124 = vld [vmem:[%s5122 + $0x8] sm:$0xff]
        %v5125 = vld [vmem:[%s5122 + $0x10] sm:$0xff]
        %v5126 = vld [vmem:[%s5122 + $0x18] sm:$0xff]
        %v5127 = vld [vmem:[%s5122 + $0x20] sm:$0xff]
        %v5128 = vld [vmem:[%s5122 + $0x28] sm:$0xff]
        %v5129 = vld [vmem:[%s5122 + $0x30] sm:$0xff]
        %v5130 = vld [vmem:[%s5122 + $0x38] sm:$0xff]
        %v5131 = vld [vmem:[%s5122 + $0x40] sm:$0xff]
        %v5132 = vld [vmem:[%s5122 + $0x48] sm:$0xff]
        %v5133 = vld [vmem:[%s5122 + $0x50] sm:$0xff]
        %v5134 = vld [vmem:[%s5122 + $0x58] sm:$0xff]
        %v5135 = vld [vmem:[%s5122 + $0x60] sm:$0xff]
        %v5136 = vld [vmem:[%s5122 + $0x68] sm:$0xff]
        %v5137 = vld [vmem:[%s5122 + $0x70] sm:$0xff]
        %v5138 = vld [vmem:[%s5122 + $0x78] sm:$0xff]
        %5139 = vmatprep.subr.mxu0 0.0
        %5140 = vmatpush1.msra.mxu0 %v5123
        %5141 = vmatprep.subr.mxu0 0.0
        %5142 = vmatpush1.msra.mxu0 %v5124
        %5143 = vmatprep.subr.mxu0 0.0
        %5144 = vmatpush1.msra.mxu0 %v5125
        %5145 = vmatprep.subr.mxu0 0.0
        %5146 = vmatpush1.msra.mxu0 %v5126
        %5147 = vmatprep.subr.mxu0 0.0
        %5148 = vmatpush1.msra.mxu0 %v5127
        %5149 = vmatprep.subr.mxu0 0.0
        %5150 = vmatpush1.msra.mxu0 %v5128
        %5151 = vmatprep.subr.mxu0 0.0
        %5152 = vmatpush1.msra.mxu0 %v5129
        %5153 = vmatprep.subr.mxu0 0.0
        %5154 = vmatpush1.msra.mxu0 %v5130
        %5155 = vmatprep.subr.mxu0 0.0
        %5156 = vmatpush1.msra.mxu0 %v5131
        %5157 = vmatprep.subr.mxu0 0.0
        %5158 = vmatpush1.msra.mxu0 %v5132
        %5159 = vmatprep.subr.mxu0 0.0
        %5160 = vmatpush1.msra.mxu0 %v5133
        %5161 = vmatprep.subr.mxu0 0.0
        %5162 = vmatpush1.msra.mxu0 %v5134
        %5163 = vmatprep.subr.mxu0 0.0
        %5164 = vmatpush1.msra.mxu0 %v5135
        %5165 = vmatprep.subr.mxu0 0.0
        %5166 = vmatpush1.msra.mxu0 %v5136
        %5167 = vmatprep.subr.mxu0 0.0
        %5168 = vmatpush1.msra.mxu0 %v5137
        %5169 = vmatprep.subr.mxu0 0.0
        %5170 = vmatpush1.msra.mxu0 %v5138
        %5171 = vmatprep.subr.mxu0 0.0
        %5172 = vmatpush1.msra.mxu0 0.0
        %5173 = vmatprep.subr.mxu0 0.0
        %5174 = vmatpush1.msra.mxu0 0.0
        %5175 = vmatprep.subr.mxu0 0.0
        %5176 = vmatpush1.msra.mxu0 0.0
        %5177 = vmatprep.subr.mxu0 0.0
        %5178 = vmatpush1.msra.mxu0 0.0
        %5179 = vmatprep.subr.mxu0 0.0
        %5180 = vmatpush1.msra.mxu0 0.0
        %5181 = vmatprep.subr.mxu0 0.0
        %5182 = vmatpush1.msra.mxu0 0.0
        %5183 = vmatprep.subr.mxu0 0.0
        %5184 = vmatpush1.msra.mxu0 0.0
        %5185 = vmatprep.subr.mxu0 0.0
        %5186 = vmatpush1.msra.mxu0 0.0
        %5187 = vmatprep.subr.mxu0 0.0
        %5188 = vmatpush1.msra.mxu0 0.0
        %5189 = vmatprep.subr.mxu0 0.0
        %5190 = vmatpush1.msra.mxu0 0.0
        %5191 = vmatprep.subr.mxu0 0.0
        %5192 = vmatpush1.msra.mxu0 0.0
        %5193 = vmatprep.subr.mxu0 0.0
        %5194 = vmatpush1.msra.mxu0 0.0
        %5195 = vmatprep.subr.mxu0 0.0
        %5196 = vmatpush1.msra.mxu0 0.0
        %5197 = vmatprep.subr.mxu0 0.0
        %5198 = vmatpush1.msra.mxu0 0.0
        %5199 = vmatprep.subr.mxu0 0.0
        %5200 = vmatpush1.msra.mxu0 0.0
        %5201 = vmatprep.subr.mxu0 0.0
        %5202 = vmatpush1.msra.mxu0 0.0
        %5203 = vmatprep.mubr.f32.mxu0 0.0
        %5204 = vmatmul.mubr.f32.gmra.mrb[0].mxu0 %v5034
        %v5205 = vpop.f32.mrb[0].mxu0
        %v5206 = vadd.f32 0.0, %v5205
        %v5207 = vpop.f32.mrb[0].mxu0
        %5208 = vdwg.mxu0
        %s5209 = scalar_lea.vmem %s51, 2
        %v5210 = vld [vmem:[%s5209] sm:$0x3]
        %vm5211 = vcmask 15360
        %v5213 = vsel %vm5211, %v5210, 0
        %vm5215 = vcmask 1041408
        %v5217 = vsel %vm5215, %v5206, 0
        %5219 = vmatprep.subr.mxu0 0.0
        %5220 = vmatpush1.msra.mxu0 %v5217
        %5221 = vmatprep.subr.mxu0 0.0
        %5222 = vmatpush1.msra.mxu0 0.0
        %5223 = vmatprep.subr.mxu0 0.0
        %5224 = vmatpush1.msra.mxu0 0.0
        %5225 = vmatprep.subr.mxu0 0.0
        %5226 = vmatpush1.msra.mxu0 0.0
        %5227 = vmatprep.subr.mxu0 0.0
        %5228 = vmatpush1.msra.mxu0 0.0
        %5229 = vmatprep.subr.mxu0 0.0
        %5230 = vmatpush1.msra.mxu0 0.0
        %5231 = vmatprep.subr.mxu0 0.0
        %5232 = vmatpush1.msra.mxu0 0.0
        %5233 = vmatprep.subr.mxu0 0.0
        %5234 = vmatpush1.msra.mxu0 0.0
        %5235 = vmatprep.subr.mxu0 0.0
        %5236 = vmatpush1.msra.mxu0 0.0
        %5237 = vmatprep.subr.mxu0 0.0
        %5238 = vmatpush1.msra.mxu0 0.0
        %5239 = vmatprep.subr.mxu0 0.0
        %5240 = vmatpush1.msra.mxu0 0.0
        %5241 = vmatprep.subr.mxu0 0.0
        %5242 = vmatpush1.msra.mxu0 0.0
        %5243 = vmatprep.subr.mxu0 0.0
        %5244 = vmatpush1.msra.mxu0 0.0
        %5245 = vmatprep.subr.mxu0 0.0
        %5246 = vmatpush1.msra.mxu0 0.0
        %5247 = vmatprep.subr.mxu0 0.0
        %5248 = vmatpush1.msra.mxu0 0.0
        %5249 = vmatprep.subr.mxu0 0.0
        %5250 = vmatpush1.msra.mxu0 0.0
        %5251 = vmatprep.subr.mxu0 0.0
        %5252 = vmatpush1.msra.mxu0 0.0
        %5253 = vmatprep.subr.mxu0 0.0
        %5254 = vmatpush1.msra.mxu0 0.0
        %5255 = vmatprep.subr.mxu0 0.0
        %5256 = vmatpush1.msra.mxu0 0.0
        %5257 = vmatprep.subr.mxu0 0.0
        %5258 = vmatpush1.msra.mxu0 0.0
        %5259 = vmatprep.subr.mxu0 0.0
        %5260 = vmatpush1.msra.mxu0 0.0
        %5261 = vmatprep.subr.mxu0 0.0
        %5262 = vmatpush1.msra.mxu0 0.0
        %5263 = vmatprep.subr.mxu0 0.0
        %5264 = vmatpush1.msra.mxu0 0.0
        %5265 = vmatprep.subr.mxu0 0.0
        %5266 = vmatpush1.msra.mxu0 0.0
        %5267 = vmatprep.subr.mxu0 0.0
        %5268 = vmatpush1.msra.mxu0 0.0
        %5269 = vmatprep.subr.mxu0 0.0
        %5270 = vmatpush1.msra.mxu0 0.0
        %5271 = vmatprep.subr.mxu0 0.0
        %5272 = vmatpush1.msra.mxu0 0.0
        %5273 = vmatprep.subr.mxu0 0.0
        %5274 = vmatpush1.msra.mxu0 0.0
        %5275 = vmatprep.subr.mxu0 0.0
        %5276 = vmatpush1.msra.mxu0 0.0
        %5277 = vmatprep.subr.mxu0 0.0
        %5278 = vmatpush1.msra.mxu0 0.0
        %5279 = vmatprep.subr.mxu0 0.0
        %5280 = vmatpush1.msra.mxu0 0.0
        %5281 = vmatprep.subr.mxu0 0.0
        %5282 = vmatpush1.msra.mxu0 0.0
        %5283 = vmatprep.mubr.f32.mxu0 0.0
        %5284 = vmatmul.mubr.f32.gmra.mrb[0].mxu0 %v5213
        %v5285 = vpop.f32.mrb[0].mxu0
        %v5286 = vadd.f32 0.0, %v5285
        %v5287 = vpop.f32.mrb[0].mxu0
        %5288 = vdwg.mxu0
        %v5290 = vsel %vm5211, %v5121, 0
        %v5293 = vsel %vm5215, %v5118, 0
        %5295 = vmatprep.subr.mxu0 0.0
        %5296 = vmatpush1.msra.mxu0 %v5293
        %5297 = vmatprep.subr.mxu0 0.0
        %5298 = vmatpush1.msra.mxu0 0.0
        %5299 = vmatprep.subr.mxu0 0.0
        %5300 = vmatpush1.msra.mxu0 0.0
        %5301 = vmatprep.subr.mxu0 0.0
        %5302 = vmatpush1.msra.mxu0 0.0
        %5303 = vmatprep.subr.mxu0 0.0
        %5304 = vmatpush1.msra.mxu0 0.0
        %5305 = vmatprep.subr.mxu0 0.0
        %5306 = vmatpush1.msra.mxu0 0.0
        %5307 = vmatprep.subr.mxu0 0.0
        %5308 = vmatpush1.msra.mxu0 0.0
        %5309 = vmatprep.subr.mxu0 0.0
        %5310 = vmatpush1.msra.mxu0 0.0
        %5311 = vmatprep.subr.mxu0 0.0
        %5312 = vmatpush1.msra.mxu0 0.0
        %5313 = vmatprep.subr.mxu0 0.0
        %5314 = vmatpush1.msra.mxu0 0.0
        %5315 = vmatprep.subr.mxu0 0.0
        %5316 = vmatpush1.msra.mxu0 0.0
        %5317 = vmatprep.subr.mxu0 0.0
        %5318 = vmatpush1.msra.mxu0 0.0
        %5319 = vmatprep.subr.mxu0 0.0
        %5320 = vmatpush1.msra.mxu0 0.0
        %5321 = vmatprep.subr.mxu0 0.0
        %5322 = vmatpush1.msra.mxu0 0.0
        %5323 = vmatprep.subr.mxu0 0.0
        %5324 = vmatpush1.msra.mxu0 0.0
        %5325 = vmatprep.subr.mxu0 0.0
        %5326 = vmatpush1.msra.mxu0 0.0
        %5327 = vmatprep.subr.mxu0 0.0
        %5328 = vmatpush1.msra.mxu0 0.0
        %5329 = vmatprep.subr.mxu0 0.0
        %5330 = vmatpush1.msra.mxu0 0.0
        %5331 = vmatprep.subr.mxu0 0.0
        %5332 = vmatpush1.msra.mxu0 0.0
        %5333 = vmatprep.subr.mxu0 0.0
        %5334 = vmatpush1.msra.mxu0 0.0
        %5335 = vmatprep.subr.mxu0 0.0
        %5336 = vmatpush1.msra.mxu0 0.0
        %5337 = vmatprep.subr.mxu0 0.0
        %5338 = vmatpush1.msra.mxu0 0.0
        %5339 = vmatprep.subr.mxu0 0.0
        %5340 = vmatpush1.msra.mxu0 0.0
        %5341 = vmatprep.subr.mxu0 0.0
        %5342 = vmatpush1.msra.mxu0 0.0
        %5343 = vmatprep.subr.mxu0 0.0
        %5344 = vmatpush1.msra.mxu0 0.0
        %5345 = vmatprep.subr.mxu0 0.0
        %5346 = vmatpush1.msra.mxu0 0.0
        %5347 = vmatprep.subr.mxu0 0.0
        %5348 = vmatpush1.msra.mxu0 0.0
        %5349 = vmatprep.subr.mxu0 0.0
        %5350 = vmatpush1.msra.mxu0 0.0
        %5351 = vmatprep.subr.mxu0 0.0
        %5352 = vmatpush1.msra.mxu0 0.0
        %5353 = vmatprep.subr.mxu0 0.0
        %5354 = vmatpush1.msra.mxu0 0.0
        %5355 = vmatprep.subr.mxu0 0.0
        %5356 = vmatpush1.msra.mxu0 0.0
        %5357 = vmatprep.subr.mxu0 0.0
        %5358 = vmatpush1.msra.mxu0 0.0
        %5359 = vmatprep.mubr.f32.mxu0 0.0
        %5360 = vmatmul.mubr.f32.gmra.mrb[0].mxu0 %v5290
        %v5361 = vpop.f32.mrb[0].mxu0
        %v5362 = vadd.f32 %v5286, %v5361
        %v5363 = vpop.f32.mrb[0].mxu0
        %5364 = vdwg.mxu0
        %s5365 = scalar_lea.vmem [#allocation38], 256
        %v5366 = vld [vmem:[%s5365] sm:$0xff]
        %v5367 = vld [vmem:[%s5365 + $0x8] sm:$0xff]
        %v5368 = vld [vmem:[%s5365 + $0x10] sm:$0xff]
        %v5369 = vld [vmem:[%s5365 + $0x18] sm:$0xff]
        %v5370 = vld [vmem:[%s5365 + $0x20] sm:$0xff]
        %v5371 = vld [vmem:[%s5365 + $0x28] sm:$0xff]
        %v5372 = vld [vmem:[%s5365 + $0x30] sm:$0xff]
        %v5373 = vld [vmem:[%s5365 + $0x38] sm:$0xff]
        %v5374 = vld [vmem:[%s5365 + $0x40] sm:$0xff]
        %v5375 = vld [vmem:[%s5365 + $0x48] sm:$0xff]
        %v5376 = vld [vmem:[%s5365 + $0x50] sm:$0xff]
        %v5377 = vld [vmem:[%s5365 + $0x58] sm:$0xff]
        %v5378 = vld [vmem:[%s5365 + $0x60] sm:$0xff]
        %v5379 = vld [vmem:[%s5365 + $0x68] sm:$0xff]
        %v5380 = vld [vmem:[%s5365 + $0x70] sm:$0xff]
        %v5381 = vld [vmem:[%s5365 + $0x78] sm:$0xff]
        %5382 = vmatprep.subr.mxu0 0.0
        %5383 = vmatpush1.msra.mxu0 %v5366
        %5384 = vmatprep.subr.mxu0 0.0
        %5385 = vmatpush1.msra.mxu0 %v5367
        %5386 = vmatprep.subr.mxu0 0.0
        %5387 = vmatpush1.msra.mxu0 %v5368
        %5388 = vmatprep.subr.mxu0 0.0
        %5389 = vmatpush1.msra.mxu0 %v5369
        %5390 = vmatprep.subr.mxu0 0.0
        %5391 = vmatpush1.msra.mxu0 %v5370
        %5392 = vmatprep.subr.mxu0 0.0
        %5393 = vmatpush1.msra.mxu0 %v5371
        %5394 = vmatprep.subr.mxu0 0.0
        %5395 = vmatpush1.msra.mxu0 %v5372
        %5396 = vmatprep.subr.mxu0 0.0
        %5397 = vmatpush1.msra.mxu0 %v5373
        %5398 = vmatprep.subr.mxu0 0.0
        %5399 = vmatpush1.msra.mxu0 %v5374
        %5400 = vmatprep.subr.mxu0 0.0
        %5401 = vmatpush1.msra.mxu0 %v5375
        %5402 = vmatprep.subr.mxu0 0.0
        %5403 = vmatpush1.msra.mxu0 %v5376
        %5404 = vmatprep.subr.mxu0 0.0
        %5405 = vmatpush1.msra.mxu0 %v5377
        %5406 = vmatprep.subr.mxu0 0.0
        %5407 = vmatpush1.msra.mxu0 %v5378
        %5408 = vmatprep.subr.mxu0 0.0
        %5409 = vmatpush1.msra.mxu0 %v5379
        %5410 = vmatprep.subr.mxu0 0.0
        %5411 = vmatpush1.msra.mxu0 %v5380
        %5412 = vmatprep.subr.mxu0 0.0
        %5413 = vmatpush1.msra.mxu0 %v5381
        %5414 = vmatprep.subr.mxu0 0.0
        %5415 = vmatpush1.msra.mxu0 0.0
        %5416 = vmatprep.subr.mxu0 0.0
        %5417 = vmatpush1.msra.mxu0 0.0
        %5418 = vmatprep.subr.mxu0 0.0
        %5419 = vmatpush1.msra.mxu0 0.0
        %5420 = vmatprep.subr.mxu0 0.0
        %5421 = vmatpush1.msra.mxu0 0.0
        %5422 = vmatprep.subr.mxu0 0.0
        %5423 = vmatpush1.msra.mxu0 0.0
        %5424 = vmatprep.subr.mxu0 0.0
        %5425 = vmatpush1.msra.mxu0 0.0
        %5426 = vmatprep.subr.mxu0 0.0
        %5427 = vmatpush1.msra.mxu0 0.0
        %5428 = vmatprep.subr.mxu0 0.0
        %5429 = vmatpush1.msra.mxu0 0.0
        %5430 = vmatprep.subr.mxu0 0.0
        %5431 = vmatpush1.msra.mxu0 0.0
        %5432 = vmatprep.subr.mxu0 0.0
        %5433 = vmatpush1.msra.mxu0 0.0
        %5434 = vmatprep.subr.mxu0 0.0
        %5435 = vmatpush1.msra.mxu0 0.0
        %5436 = vmatprep.subr.mxu0 0.0
        %5437 = vmatpush1.msra.mxu0 0.0
        %5438 = vmatprep.subr.mxu0 0.0
        %5439 = vmatpush1.msra.mxu0 0.0
        %5440 = vmatprep.subr.mxu0 0.0
        %5441 = vmatpush1.msra.mxu0 0.0
        %5442 = vmatprep.subr.mxu0 0.0
        %5443 = vmatpush1.msra.mxu0 0.0
        %5444 = vmatprep.subr.mxu0 0.0
        %5445 = vmatpush1.msra.mxu0 0.0
        %5446 = vmatprep.mubr.f32.mxu0 0.0
        %5447 = vmatmul.mubr.f32.gmra.mrb[0].mxu0 %v5034
        %v5448 = vpop.f32.mrb[0].mxu0
        %v5449 = vadd.f32 0.0, %v5448
        %v5450 = vpop.f32.mrb[0].mxu0
        %5451 = vdwg.mxu0
        %s5452 = scalar_lea.vmem %s51, 4
        %v5453 = vld [vmem:[%s5452] sm:$0x3]
        %v5455 = vsel %vm5211, %v5453, 0
        %v5458 = vsel %vm5215, %v5449, 0
        %5460 = vmatprep.subr.mxu0 0.0
        %5461 = vmatpush1.msra.mxu0 %v5458
        %5462 = vmatprep.subr.mxu0 0.0
        %5463 = vmatpush1.msra.mxu0 0.0
        %5464 = vmatprep.subr.mxu0 0.0
        %5465 = vmatpush1.msra.mxu0 0.0
        %5466 = vmatprep.subr.mxu0 0.0
        %5467 = vmatpush1.msra.mxu0 0.0
        %5468 = vmatprep.subr.mxu0 0.0
        %5469 = vmatpush1.msra.mxu0 0.0
        %5470 = vmatprep.subr.mxu0 0.0
        %5471 = vmatpush1.msra.mxu0 0.0
        %5472 = vmatprep.subr.mxu0 0.0
        %5473 = vmatpush1.msra.mxu0 0.0
        %5474 = vmatprep.subr.mxu0 0.0
        %5475 = vmatpush1.msra.mxu0 0.0
        %5476 = vmatprep.subr.mxu0 0.0
        %5477 = vmatpush1.msra.mxu0 0.0
        %5478 = vmatprep.subr.mxu0 0.0
        %5479 = vmatpush1.msra.mxu0 0.0
        %5480 = vmatprep.subr.mxu0 0.0
        %5481 = vmatpush1.msra.mxu0 0.0
        %5482 = vmatprep.subr.mxu0 0.0
        %5483 = vmatpush1.msra.mxu0 0.0
        %5484 = vmatprep.subr.mxu0 0.0
        %5485 = vmatpush1.msra.mxu0 0.0
        %5486 = vmatprep.subr.mxu0 0.0
        %5487 = vmatpush1.msra.mxu0 0.0
        %5488 = vmatprep.subr.mxu0 0.0
        %5489 = vmatpush1.msra.mxu0 0.0
        %5490 = vmatprep.subr.mxu0 0.0
        %5491 = vmatpush1.msra.mxu0 0.0
        %5492 = vmatprep.subr.mxu0 0.0
        %5493 = vmatpush1.msra.mxu0 0.0
        %5494 = vmatprep.subr.mxu0 0.0
        %5495 = vmatpush1.msra.mxu0 0.0
        %5496 = vmatprep.subr.mxu0 0.0
        %5497 = vmatpush1.msra.mxu0 0.0
        %5498 = vmatprep.subr.mxu0 0.0
        %5499 = vmatpush1.msra.mxu0 0.0
        %5500 = vmatprep.subr.mxu0 0.0
        %5501 = vmatpush1.msra.mxu0 0.0
        %5502 = vmatprep.subr.mxu0 0.0
        %5503 = vmatpush1.msra.mxu0 0.0
        %5504 = vmatprep.subr.mxu0 0.0
        %5505 = vmatpush1.msra.mxu0 0.0
        %5506 = vmatprep.subr.mxu0 0.0
        %5507 = vmatpush1.msra.mxu0 0.0
        %5508 = vmatprep.subr.mxu0 0.0
        %5509 = vmatpush1.msra.mxu0 0.0
        %5510 = vmatprep.subr.mxu0 0.0
        %5511 = vmatpush1.msra.mxu0 0.0
        %5512 = vmatprep.subr.mxu0 0.0
        %5513 = vmatpush1.msra.mxu0 0.0
        %5514 = vmatprep.subr.mxu0 0.0
        %5515 = vmatpush1.msra.mxu0 0.0
        %5516 = vmatprep.subr.mxu0 0.0
        %5517 = vmatpush1.msra.mxu0 0.0
        %5518 = vmatprep.subr.mxu0 0.0
        %5519 = vmatpush1.msra.mxu0 0.0
        %5520 = vmatprep.subr.mxu0 0.0
        %5521 = vmatpush1.msra.mxu0 0.0
        %5522 = vmatprep.subr.mxu0 0.0
        %5523 = vmatpush1.msra.mxu0 0.0
        %5524 = vmatprep.mubr.f32.mxu0 0.0
        %5525 = vmatmul.mubr.f32.gmra.mrb[0].mxu0 %v5455
        %v5526 = vpop.f32.mrb[0].mxu0
        %v5527 = vadd.f32 0.0, %v5526
        %v5528 = vpop.f32.mrb[0].mxu0
        %5529 = vdwg.mxu0
        %v5530 = vadd.f32 %v5362, %v5527
        %v5531 = vld [vmem:[#allocation40] sm:$0x1]
        %v5533 = vlaneseq
        %v5534 = vshrl.u32 %v5533, 7
        %v5535 = vsub.s32 0, %v5534
        %v5536 = vrot.slane %v5531, %v5535
        %v5538 = vadd.f32 %v5530, %v5536
        %v5539 = vadd.f32 %v5538, %v4529
        %v5540 = vmax.f32 %v5539, 0.0
        %v5541 = vld [vmem:[#allocation44] sm:$0x1]
        %v5543 = vsel %vm5211, %v5541, 0
        %v5546 = vsel %vm5215, %v5540, 0
        %5548 = vmatprep.subr.mxu0 0.0
        %5549 = vmatpush1.msra.mxu0 %v5546
        %5550 = vmatprep.subr.mxu0 0.0
        %5551 = vmatpush1.msra.mxu0 0.0
        %5552 = vmatprep.subr.mxu0 0.0
        %5553 = vmatpush1.msra.mxu0 0.0
        %5554 = vmatprep.subr.mxu0 0.0
        %5555 = vmatpush1.msra.mxu0 0.0
        %5556 = vmatprep.subr.mxu0 0.0
        %5557 = vmatpush1.msra.mxu0 0.0
        %5558 = vmatprep.subr.mxu0 0.0
        %5559 = vmatpush1.msra.mxu0 0.0
        %5560 = vmatprep.subr.mxu0 0.0
        %5561 = vmatpush1.msra.mxu0 0.0
        %5562 = vmatprep.subr.mxu0 0.0
        %5563 = vmatpush1.msra.mxu0 0.0
        %5564 = vmatprep.subr.mxu0 0.0
        %5565 = vmatpush1.msra.mxu0 0.0
        %5566 = vmatprep.subr.mxu0 0.0
        %5567 = vmatpush1.msra.mxu0 0.0
        %5568 = vmatprep.subr.mxu0 0.0
        %5569 = vmatpush1.msra.mxu0 0.0
        %5570 = vmatprep.subr.mxu0 0.0
        %5571 = vmatpush1.msra.mxu0 0.0
        %5572 = vmatprep.subr.mxu0 0.0
        %5573 = vmatpush1.msra.mxu0 0.0
        %5574 = vmatprep.subr.mxu0 0.0
        %5575 = vmatpush1.msra.mxu0 0.0
        %5576 = vmatprep.subr.mxu0 0.0
        %5577 = vmatpush1.msra.mxu0 0.0
        %5578 = vmatprep.subr.mxu0 0.0
        %5579 = vmatpush1.msra.mxu0 0.0
        %5580 = vmatprep.subr.mxu0 0.0
        %5581 = vmatpush1.msra.mxu0 0.0
        %5582 = vmatprep.subr.mxu0 0.0
        %5583 = vmatpush1.msra.mxu0 0.0
        %5584 = vmatprep.subr.mxu0 0.0
        %5585 = vmatpush1.msra.mxu0 0.0
        %5586 = vmatprep.subr.mxu0 0.0
        %5587 = vmatpush1.msra.mxu0 0.0
        %5588 = vmatprep.subr.mxu0 0.0
        %5589 = vmatpush1.msra.mxu0 0.0
        %5590 = vmatprep.subr.mxu0 0.0
        %5591 = vmatpush1.msra.mxu0 0.0
        %5592 = vmatprep.subr.mxu0 0.0
        %5593 = vmatpush1.msra.mxu0 0.0
        %5594 = vmatprep.subr.mxu0 0.0
        %5595 = vmatpush1.msra.mxu0 0.0
        %5596 = vmatprep.subr.mxu0 0.0
        %5597 = vmatpush1.msra.mxu0 0.0
        %5598 = vmatprep.subr.mxu0 0.0
        %5599 = vmatpush1.msra.mxu0 0.0
        %5600 = vmatprep.subr.mxu0 0.0
        %5601 = vmatpush1.msra.mxu0 0.0
        %5602 = vmatprep.subr.mxu0 0.0
        %5603 = vmatpush1.msra.mxu0 0.0
        %5604 = vmatprep.subr.mxu0 0.0
        %5605 = vmatpush1.msra.mxu0 0.0
        %5606 = vmatprep.subr.mxu0 0.0
        %5607 = vmatpush1.msra.mxu0 0.0
        %5608 = vmatprep.subr.mxu0 0.0
        %5609 = vmatpush1.msra.mxu0 0.0
        %5610 = vmatprep.subr.mxu0 0.0
        %5611 = vmatpush1.msra.mxu0 0.0
        %5612 = vmatprep.mubr.f32.mxu0 0.0
        %5613 = vmatmul.mubr.f32.gmra.mrb[0].mxu0 %v5543
        %v5614 = vpop.f32.mrb[0].mxu0
        %v5615 = vadd.f32 0.0, %v5614
        %v5616 = vpop.f32.mrb[0].mxu0
        %5617 = vdwg.mxu0
        %v5618 = vld [vmem:[%s65] sm:$0xff]
        %v5619 = vld [vmem:[%s65 + $0x8] sm:$0xff]
        %v5620 = vld [vmem:[%s65 + $0x10] sm:$0xff]
        %v5621 = vld [vmem:[%s65 + $0x18] sm:$0xff]
        %v5622 = vld [vmem:[%s65 + $0x20] sm:$0xff]
        %v5623 = vld [vmem:[%s65 + $0x28] sm:$0xff]
        %v5624 = vld [vmem:[%s65 + $0x30] sm:$0xff]
        %v5625 = vld [vmem:[%s65 + $0x38] sm:$0xff]
        %v5626 = vld [vmem:[%s65 + $0x40] sm:$0xff]
        %v5627 = vld [vmem:[%s65 + $0x48] sm:$0xff]
        %v5628 = vld [vmem:[%s65 + $0x50] sm:$0xff]
        %v5629 = vld [vmem:[%s65 + $0x58] sm:$0xff]
        %v5630 = vld [vmem:[%s65 + $0x60] sm:$0xff]
        %v5631 = vld [vmem:[%s65 + $0x68] sm:$0xff]
        %v5632 = vld [vmem:[%s65 + $0x70] sm:$0xff]
        %v5633 = vld [vmem:[%s65 + $0x78] sm:$0xff]
        %5634 = vmatprep.subr.mxu0 0.0
        %5635 = vmatpush1.msra.mxu0 %v5618
        %5636 = vmatprep.subr.mxu0 0.0
        %5637 = vmatpush1.msra.mxu0 %v5619
        %5638 = vmatprep.subr.mxu0 0.0
        %5639 = vmatpush1.msra.mxu0 %v5620
        %5640 = vmatprep.subr.mxu0 0.0
        %5641 = vmatpush1.msra.mxu0 %v5621
        %5642 = vmatprep.subr.mxu0 0.0
        %5643 = vmatpush1.msra.mxu0 %v5622
        %5644 = vmatprep.subr.mxu0 0.0
        %5645 = vmatpush1.msra.mxu0 %v5623
        %5646 = vmatprep.subr.mxu0 0.0
        %5647 = vmatpush1.msra.mxu0 %v5624
        %5648 = vmatprep.subr.mxu0 0.0
        %5649 = vmatpush1.msra.mxu0 %v5625
        %5650 = vmatprep.subr.mxu0 0.0
        %5651 = vmatpush1.msra.mxu0 %v5626
        %5652 = vmatprep.subr.mxu0 0.0
        %5653 = vmatpush1.msra.mxu0 %v5627
        %5654 = vmatprep.subr.mxu0 0.0
        %5655 = vmatpush1.msra.mxu0 %v5628
        %5656 = vmatprep.subr.mxu0 0.0
        %5657 = vmatpush1.msra.mxu0 %v5629
        %5658 = vmatprep.subr.mxu0 0.0
        %5659 = vmatpush1.msra.mxu0 %v5630
        %5660 = vmatprep.subr.mxu0 0.0
        %5661 = vmatpush1.msra.mxu0 %v5631
        %5662 = vmatprep.subr.mxu0 0.0
        %5663 = vmatpush1.msra.mxu0 %v5632
        %5664 = vmatprep.subr.mxu0 0.0
        %5665 = vmatpush1.msra.mxu0 %v5633
        %5666 = vmatprep.subr.mxu0 0.0
        %5667 = vmatpush1.msra.mxu0 0.0
        %5668 = vmatprep.subr.mxu0 0.0
        %5669 = vmatpush1.msra.mxu0 0.0
        %5670 = vmatprep.subr.mxu0 0.0
        %5671 = vmatpush1.msra.mxu0 0.0
        %5672 = vmatprep.subr.mxu0 0.0
        %5673 = vmatpush1.msra.mxu0 0.0
        %5674 = vmatprep.subr.mxu0 0.0
        %5675 = vmatpush1.msra.mxu0 0.0
        %5676 = vmatprep.subr.mxu0 0.0
        %5677 = vmatpush1.msra.mxu0 0.0
        %5678 = vmatprep.subr.mxu0 0.0
        %5679 = vmatpush1.msra.mxu0 0.0
        %5680 = vmatprep.subr.mxu0 0.0
        %5681 = vmatpush1.msra.mxu0 0.0
        %5682 = vmatprep.subr.mxu0 0.0
        %5683 = vmatpush1.msra.mxu0 0.0
        %5684 = vmatprep.subr.mxu0 0.0
        %5685 = vmatpush1.msra.mxu0 0.0
        %5686 = vmatprep.subr.mxu0 0.0
        %5687 = vmatpush1.msra.mxu0 0.0
        %5688 = vmatprep.subr.mxu0 0.0
        %5689 = vmatpush1.msra.mxu0 0.0
        %5690 = vmatprep.subr.mxu0 0.0
        %5691 = vmatpush1.msra.mxu0 0.0
        %5692 = vmatprep.subr.mxu0 0.0
        %5693 = vmatpush1.msra.mxu0 0.0
        %5694 = vmatprep.subr.mxu0 0.0
        %5695 = vmatpush1.msra.mxu0 0.0
        %5696 = vmatprep.subr.mxu0 0.0
        %5697 = vmatpush1.msra.mxu0 0.0
        %5698 = vmatprep.mubr.f32.mxu0 0.0
        %5699 = vmatmul.mubr.f32.gmra.mrb[0].mxu0 %v5615
        %v5700 = vpop.f32.mrb[0].mxu0
        %v5701 = vadd.f32 0.0, %v5700
        %v5702 = vpop.f32.mrb[0].mxu0
        %5703 = vdwg.mxu0
        %v5704 = vld [vmem:[%s67] sm:$0xff]
        %v5705 = vld [vmem:[%s67 + $0x8] sm:$0xff]
        %v5706 = vld [vmem:[%s67 + $0x10] sm:$0xff]
        %v5707 = vld [vmem:[%s67 + $0x18] sm:$0xff]
        %v5708 = vld [vmem:[%s67 + $0x20] sm:$0xff]
        %v5709 = vld [vmem:[%s67 + $0x28] sm:$0xff]
        %v5710 = vld [vmem:[%s67 + $0x30] sm:$0xff]
        %v5711 = vld [vmem:[%s67 + $0x38] sm:$0xff]
        %v5712 = vld [vmem:[%s69] sm:$0x1]
        %vm5713 = vcmask 523264
        %v5715 = vsel %vm5713, %v5701, 0
        %5717 = vmatprep.subr.mxu0 0.0
        %5718 = vmatpush1.msra.mxu0 %v5704
        %5719 = vmatprep.subr.mxu0 0.0
        %5720 = vmatpush1.msra.mxu0 %v5705
        %5721 = vmatprep.subr.mxu0 0.0
        %5722 = vmatpush1.msra.mxu0 %v5706
        %5723 = vmatprep.subr.mxu0 0.0
        %5724 = vmatpush1.msra.mxu0 %v5707
        %5725 = vmatprep.subr.mxu0 0.0
        %5726 = vmatpush1.msra.mxu0 %v5708
        %5727 = vmatprep.subr.mxu0 0.0
        %5728 = vmatpush1.msra.mxu0 %v5709
        %5729 = vmatprep.subr.mxu0 0.0
        %5730 = vmatpush1.msra.mxu0 %v5710
        %5731 = vmatprep.subr.mxu0 0.0
        %5732 = vmatpush1.msra.mxu0 %v5711
        %5733 = vmatprep.subr.mxu0 0.0
        %5734 = vmatpush1.msra.mxu0 0.0
        %5735 = vmatprep.subr.mxu0 0.0
        %5736 = vmatpush1.msra.mxu0 0.0
        %5737 = vmatprep.subr.mxu0 0.0
        %5738 = vmatpush1.msra.mxu0 0.0
        %5739 = vmatprep.subr.mxu0 0.0
        %5740 = vmatpush1.msra.mxu0 0.0
        %5741 = vmatprep.subr.mxu0 0.0
        %5742 = vmatpush1.msra.mxu0 0.0
        %5743 = vmatprep.subr.mxu0 0.0
        %5744 = vmatpush1.msra.mxu0 0.0
        %5745 = vmatprep.subr.mxu0 0.0
        %5746 = vmatpush1.msra.mxu0 0.0
        %5747 = vmatprep.subr.mxu0 0.0
        %5748 = vmatpush1.msra.mxu0 0.0
        %5749 = vmatprep.subr.mxu0 0.0
        %5750 = vmatpush1.msra.mxu0 0.0
        %5751 = vmatprep.subr.mxu0 0.0
        %5752 = vmatpush1.msra.mxu0 0.0
        %5753 = vmatprep.subr.mxu0 0.0
        %5754 = vmatpush1.msra.mxu0 0.0
        %5755 = vmatprep.subr.mxu0 0.0
        %5756 = vmatpush1.msra.mxu0 0.0
        %5757 = vmatprep.subr.mxu0 0.0
        %5758 = vmatpush1.msra.mxu0 0.0
        %5759 = vmatprep.subr.mxu0 0.0
        %5760 = vmatpush1.msra.mxu0 0.0
        %5761 = vmatprep.subr.mxu0 0.0
        %5762 = vmatpush1.msra.mxu0 0.0
        %5763 = vmatprep.subr.mxu0 0.0
        %5764 = vmatpush1.msra.mxu0 0.0
        %5765 = vmatprep.subr.mxu0 0.0
        %5766 = vmatpush1.msra.mxu0 0.0
        %5767 = vmatprep.subr.mxu0 0.0
        %5768 = vmatpush1.msra.mxu0 0.0
        %5769 = vmatprep.subr.mxu0 0.0
        %5770 = vmatpush1.msra.mxu0 0.0
        %5771 = vmatprep.subr.mxu0 0.0
        %5772 = vmatpush1.msra.mxu0 0.0
        %5773 = vmatprep.subr.mxu0 0.0
        %5774 = vmatpush1.msra.mxu0 0.0
        %5775 = vmatprep.subr.mxu0 0.0
        %5776 = vmatpush1.msra.mxu0 0.0
        %5777 = vmatprep.subr.mxu0 0.0
        %5778 = vmatpush1.msra.mxu0 0.0
        %5779 = vmatprep.subr.mxu0 0.0
        %5780 = vmatpush1.msra.mxu0 0.0
        %5781 = vmatprep.mubr.f32.mxu0 0.0
        %5782 = vmatmul.mubr.f32.gmra.mrb[0].mxu0 %v5715
        %v5783 = vpop.f32.mrb[0].mxu0
        %v5784 = vadd.f32 %v5712, %v5783
        %v5785 = vpop.f32.mrb[0].mxu0
        %5786 = vdwg.mxu0
        %v5787 = vmax.f32 %v5784, 0.0
        %v5788 = vld [vmem:[%s71] sm:$0xff]
        %v5789 = vld [vmem:[%s71 + $0x8] sm:$0xff]
        %v5790 = vld [vmem:[%s71 + $0x10] sm:$0xff]
        %v5791 = vld [vmem:[%s71 + $0x18] sm:$0xff]
        %v5792 = vld [vmem:[%s73] sm:$0x1]
        %vm5793 = vcmask 261120
        %v5795 = vsel %vm5793, %v5787, 0
        %5797 = vmatprep.subr.mxu0 0.0
        %5798 = vmatpush1.msra.mxu0 %v5788
        %5799 = vmatprep.subr.mxu0 0.0
        %5800 = vmatpush1.msra.mxu0 %v5789
        %5801 = vmatprep.subr.mxu0 0.0
        %5802 = vmatpush1.msra.mxu0 %v5790
        %5803 = vmatprep.subr.mxu0 0.0
        %5804 = vmatpush1.msra.mxu0 %v5791
        %5805 = vmatprep.subr.mxu0 0.0
        %5806 = vmatpush1.msra.mxu0 0.0
        %5807 = vmatprep.subr.mxu0 0.0
        %5808 = vmatpush1.msra.mxu0 0.0
        %5809 = vmatprep.subr.mxu0 0.0
        %5810 = vmatpush1.msra.mxu0 0.0
        %5811 = vmatprep.subr.mxu0 0.0
        %5812 = vmatpush1.msra.mxu0 0.0
        %5813 = vmatprep.subr.mxu0 0.0
        %5814 = vmatpush1.msra.mxu0 0.0
        %5815 = vmatprep.subr.mxu0 0.0
        %5816 = vmatpush1.msra.mxu0 0.0
        %5817 = vmatprep.subr.mxu0 0.0
        %5818 = vmatpush1.msra.mxu0 0.0
        %5819 = vmatprep.subr.mxu0 0.0
        %5820 = vmatpush1.msra.mxu0 0.0
        %5821 = vmatprep.subr.mxu0 0.0
        %5822 = vmatpush1.msra.mxu0 0.0
        %5823 = vmatprep.subr.mxu0 0.0
        %5824 = vmatpush1.msra.mxu0 0.0
        %5825 = vmatprep.subr.mxu0 0.0
        %5826 = vmatpush1.msra.mxu0 0.0
        %5827 = vmatprep.subr.mxu0 0.0
        %5828 = vmatpush1.msra.mxu0 0.0
        %5829 = vmatprep.subr.mxu0 0.0
        %5830 = vmatpush1.msra.mxu0 0.0
        %5831 = vmatprep.subr.mxu0 0.0
        %5832 = vmatpush1.msra.mxu0 0.0
        %5833 = vmatprep.subr.mxu0 0.0
        %5834 = vmatpush1.msra.mxu0 0.0
        %5835 = vmatprep.subr.mxu0 0.0
        %5836 = vmatpush1.msra.mxu0 0.0
        %5837 = vmatprep.subr.mxu0 0.0
        %5838 = vmatpush1.msra.mxu0 0.0
        %5839 = vmatprep.subr.mxu0 0.0
        %5840 = vmatpush1.msra.mxu0 0.0
        %5841 = vmatprep.subr.mxu0 0.0
        %5842 = vmatpush1.msra.mxu0 0.0
        %5843 = vmatprep.subr.mxu0 0.0
        %5844 = vmatpush1.msra.mxu0 0.0
        %5845 = vmatprep.subr.mxu0 0.0
        %5846 = vmatpush1.msra.mxu0 0.0
        %5847 = vmatprep.subr.mxu0 0.0
        %5848 = vmatpush1.msra.mxu0 0.0
        %5849 = vmatprep.subr.mxu0 0.0
        %5850 = vmatpush1.msra.mxu0 0.0
        %5851 = vmatprep.subr.mxu0 0.0
        %5852 = vmatpush1.msra.mxu0 0.0
        %5853 = vmatprep.subr.mxu0 0.0
        %5854 = vmatpush1.msra.mxu0 0.0
        %5855 = vmatprep.subr.mxu0 0.0
        %5856 = vmatpush1.msra.mxu0 0.0
        %5857 = vmatprep.subr.mxu0 0.0
        %5858 = vmatpush1.msra.mxu0 0.0
        %5859 = vmatprep.subr.mxu0 0.0
        %5860 = vmatpush1.msra.mxu0 0.0
        %5861 = vmatprep.mubr.f32.mxu0 0.0
        %5862 = vmatmul.mubr.f32.gmra.mrb[0].mxu0 %v5795
        %v5863 = vpop.f32.mrb[0].mxu0
        %v5864 = vadd.f32 %v5792, %v5863
        %v5865 = vpop.f32.mrb[0].mxu0
        %5866 = vdwg.mxu0
        %vm5867 = vcmask 40960
        %5868 = vst.msk [vmem:[%s1511] sm:$0x1] %vm5867, %v5864
        %s5869 = sand.u32 %s896, 1
        %s5870 = scalar_lea.sflag [#allocation4], %s5869
        %s5871 = sand.u32 %s896, 1
        %s5872 = scalar_lea.vmem [#allocation46], %s5871
        // Predicated region
        $region281: #{tpu_custom_call.1} parent=167 // pred_check
          %p5873 = pneg %p906
        $region282: #{tpu_custom_call.1} parent=167 // pred_check_branch
          %5875 = sbr.rel (%p5873) target = $region284
        $region283: #{tpu_custom_call.1} parent=167 // pred_region
          %s5877 = ssub.s32 16, 16
          %5878 = vsyncadd %s5870, %s5877
          %s5879 = smul.addr %s106, 16
          %s5880 = scalar_lea.hbm %s75, %s5879
          %s5882 = sshll.u32 %s5872, 4
          %s5883 = int_to_ptr.vmem [resolvable:$true] %s5882
          %5885 = dma.vmem_to_hbm [thread:$0]  %s5883, 16, %s5880, %s5870
        $region284: #{tpu_custom_call.1} parent=167 // pred_fallthru
          _
      $region168: #{tpu_custom_call.1} parent=5 // pred_fallthru
        _
      %p5886 = scmp.le.s32.totalorder 2, %s101
      // Predicated region
      $region285: #{tpu_custom_call.1} parent=5 // pred_check
        %p5887 = pneg %p5886
      $region286: #{tpu_custom_call.1} parent=5 // pred_check_branch
        %5889 = sbr.rel (%p5887) target = $region288
      $region287: #{tpu_custom_call.1} parent=5 // pred_region
        %s5890 = ssub.s32 %s101, 2
        // Predicated region
        $region289: #{tpu_custom_call.1} parent=287 // pred_check
          %p5891 = pneg %p912
        $region290: #{tpu_custom_call.1} parent=287 // pred_check_branch
          %5893 = sbr.rel (%p5891) target = $region292
        $region291: #{tpu_custom_call.1} parent=287 // pred_region
          %s5894 = sand.u32 %s897, 1
          %s5895 = scalar_lea.sflag [#allocation4], %s5894
          %s5896 = sand.u32 %s897, 1
          %s5897 = scalar_lea.vmem [#allocation46], %s5896
          %5898 = dma.done %s5895, 16
        $region292: #{tpu_custom_call.1} parent=287 // pred_fallthru
          _
      $region288: #{tpu_custom_call.1} parent=5 // pred_fallthru
        _
    $region6: #{tpu_custom_call.1} parent=1 // loop_footer
      %s105 = sadd.s32 1, %s101
    $region7: #{tpu_custom_call.1} parent=1 // loop_footer_branch
      %100 = sbr.rel target = $region3
    $region8: #{tpu_custom_call.1} parent=1 // loop_exit
      _
    %5899 = vsyncpa [#allocation3], 1
    %s5900 = scalar_lea.sflag [#allocation3], 1
    %5901 = vsyncpa %s5900, 1
    %5902 = vsyncpa [#allocation6], 1
    %5903 = vsyncpa [#allocation9], 1
    %5904 = vsyncpa [#allocation12], 1
    %5905 = vsyncpa [#allocation15], 1
    %5906 = vsyncpa [#allocation18], 1
    %5907 = vsyncpa [#allocation21], 1
    %5908 = vsyncpa [#allocation24], 1
    %5909 = vsyncpa [#allocation27], 1
    %5910 = vsyncpa [#allocation30], 1
    %5911 = vsyncpa [#allocation33], 1
    %5912 = vsyncpa [#allocation36], 1
    %5913 = vsyncpa [#allocation39], 1
    %5914 = vsyncpa [#allocation42], 1
    %5915 = vsyncpa [#allocation45], 1
    %5916 = vsyncpa [#allocation4], 1
    %s5917 = scalar_lea.sflag [#allocation4], 1
    %5918 = vsyncpa %s5917, 1

</llo_original>
